<compile_context>
chip_gen: v7x
topology: tpu7x:2x2x1
jax: 0.10.0
libtpu: 0.0.40
codegen_flags: <defaults>
</compile_context>

<pallas_src>
import jax
import jax.numpy as jnp
from jax.experimental import pallas as pl
from jax.experimental.pallas import tpu as pltpu

C_OUT = 16  # every conv layer has 16 output channels


# ---------------------------------------------------------------------------
# Fused kernel: conv1..conv4 (+bias, +ReLU) for one block of `spb` 16x16 tiles.
#   x_ref    : (1, 64, 4*c0, spb)  conv1 patch slabs.  Axis 1 enumerates the
#              finer spatial bits (h1,w1,h2,w2,h0,w0) = (q3, q4, q2) taps,
#              axis 2 is the conv1 contraction (kh, kw, cin), axis 3 = tile.
#   w1_ref   : (16, 4*c0)          conv1 weight, columns ordered (kh, kw, cin)
#   w234_ref : (3, 16, 64)         conv2..4 weights, columns ordered (tap, cin)
#   b_ref    : (4, 16, 1)          per-layer biases as column vectors
#   o_ref    : (1, 16, spb)        conv4 output, one lane per input tile
# ---------------------------------------------------------------------------
def _fused_conv_kernel(x_ref, w1_ref, w234_ref, b_ref, o_ref):
    spb = x_ref.shape[-1]
    f32 = jnp.float32
    w1 = w1_ref[...]
    w2 = w234_ref[0]
    w3 = w234_ref[1]
    w4 = w234_ref[2]
    # Lane-broadcast biases, hoisted once (JAX does not CSE broadcast_in_dim).
    b1 = jnp.broadcast_to(b_ref[0], (C_OUT, spb))
    b2 = jnp.broadcast_to(b_ref[1], (C_OUT, spb))
    b3 = jnp.broadcast_to(b_ref[2], (C_OUT, spb))
    b4 = jnp.broadcast_to(b_ref[3], (C_OUT, spb))

    # conv1 + conv2, one (q3, q4) group at a time.  Stacking conv2's four q2
    # taps on the contraction (sublane) axis makes conv2 a single K=64 matmul
    # per group, and the full conv1 activation is never materialised.
    a2 = []
    for g in range(16):                                   # g = q3*4 + q4
        a1 = jnp.concatenate(
            [jnp.maximum(
                jnp.dot(w1, x_ref[0, 4 * g + t], preferred_element_type=f32)
                + b1, 0.0)
             for t in range(4)], axis=0)                  # (64, spb)
        a2.append(
            jnp.maximum(jnp.dot(w2, a1, preferred_element_type=f32) + b2, 0.0))

    # conv3: output tap-group q4 consumes a2[q3*4 + q4] for q3 = 0..3.
    a3 = []
    for q4 in range(4):
        s = jnp.concatenate([a2[4 * q3 + q4] for q3 in range(4)], axis=0)
        a3.append(
            jnp.maximum(jnp.dot(w3, s, preferred_element_type=f32) + b3, 0.0))

    # conv4: one output pixel per 16x16 input tile (lane-dense, channel-major).
    s = jnp.concatenate(a3, axis=0)                       # (64, spb)
    o_ref[0] = jnp.maximum(
        jnp.dot(w4, s, preferred_element_type=f32) + b4, 0.0
    ).astype(o_ref.dtype)


# ---------------------------------------------------------------------------
# Block sizing: tiles are indexed by (batch, tile-row, tile-col); a grid block
# owns an (n_lo, a_lo, b_lo) sub-box of that index space (a divisor triple).
# ---------------------------------------------------------------------------
def _divisors(v):
    return [d for d in range(1, v + 1) if v % d == 0]


def _choose_tile_split(n, ht, wt, cap):
    """Pick (n_lo, a_lo, b_lo): tiles-per-block = n_lo*a_lo*b_lo.

    Preference: (1) at least two grid blocks so both v7x TensorCores get work,
    (2) the largest block <= cap to amortise the ~0.35us per-grid-step cost.
    Degenerate shapes (e.g. prime tile counts) simply fall back to smaller
    blocks; the kernel stays correct for any divisor triple.
    """
    s_total = n * ht * wt
    best, best_key = (1, 1, 1), None
    for nl in _divisors(n):
        for al in _divisors(ht):
            for bl in _divisors(wt):
                spb = nl * al * bl
                if spb > cap:
                    continue
                nb = s_total // spb
                key = (min(nb, 2), spb)
                if best_key is None or key > best_key:
                    best, best_key = (nl, al, bl), key
    return best


# ---------------------------------------------------------------------------
# Full module forward (matches torch ConvModule.forward).
#   x: (N, 3, H, W) NCHW with H, W divisible by 16  ->  (N, 16 * H/16 * W/16)
# ---------------------------------------------------------------------------
def conv_module_forward(x_nchw, params, *, tiles_per_block_cap=1024):
    n, c0, h, w = x_nchw.shape
    assert h % 16 == 0 and w % 16 == 0, "H and W must be divisible by 16"
    ht, wt = h // 16, w // 16                 # conv4 output spatial dims
    s_total = n * ht * wt                     # number of 16x16 input tiles

    n_lo, a_lo, b_lo = _choose_tile_split(n, ht, wt, tiles_per_block_cap)
    n_hi, a_hi, b_hi = n // n_lo, ht // a_lo, wt // b_lo
    spb = n_lo * a_lo * b_lo                  # tiles (lanes) per grid block
    nb = n_hi * a_hi * b_hi                   # grid size

    # --- single hierarchical space-to-depth: ONE transpose pass over x ------
    # h = (a_hi*A_lo + a_lo)*16 + h2*8 + h1*4 + h0*2 + hk   (same for w)
    xr = x_nchw.reshape(n_hi, n_lo, c0, a_hi, a_lo, 2, 2, 2, 2,
                        b_hi, b_lo, 2, 2, 2, 2)
    #  axes: 0 n_hi, 1 n_lo, 2 c, 3 a_hi, 4 a_lo, 5 h2, 6 h1, 7 h0, 8 hk,
    #        9 b_hi, 10 b_lo, 11 w2, 12 w1, 13 w0, 14 wk
    xt = jnp.transpose(xr, (0, 3, 9, 6, 12, 5, 11, 7, 13, 8, 14, 2, 1, 4, 10))
    #  -> (n_hi,a_hi,b_hi, h1,w1,h2,w2, h0,w0, hk,wk,c, n_lo,a_lo,b_lo)
    xt = xt.reshape(nb, 64, 4 * c0, spb)

    # --- weights: torch OIHW -> cout x (kh, kw, cin); biases as columns -----
    w1 = jnp.transpose(params[0][0], (0, 2, 3, 1)).reshape(C_OUT, 4 * c0)
    w234 = jnp.stack(
        [jnp.transpose(wl, (0, 2, 3, 1)).reshape(C_OUT, 4 * C_OUT)
         for wl, _ in params[1:]], axis=0)
    bias = jnp.stack([bl for _, bl in params], axis=0).reshape(4, C_OUT, 1)

    out = pl.pallas_call(
        _fused_conv_kernel,
        out_shape=jax.ShapeDtypeStruct((nb, C_OUT, spb), jnp.float32),
        grid=(nb,),
        in_specs=[
            pl.BlockSpec((1, 64, 4 * c0, spb), lambda i: (i, 0, 0, 0)),
            pl.BlockSpec((C_OUT, 4 * c0), lambda i: (0, 0)),
            pl.BlockSpec((3, C_OUT, 4 * C_OUT), lambda i: (0, 0, 0)),
            pl.BlockSpec((4, C_OUT, 1), lambda i: (0, 0, 0)),
        ],
        out_specs=pl.BlockSpec((1, C_OUT, spb), lambda i: (i, 0, 0)),
        compiler_params=pltpu.CompilerParams(
            dimension_semantics=("parallel",),   # shard blocks across TCs (v7x)
            vmem_limit_bytes=32 * 1024 * 1024,   # ~10 MiB used at the cap
        ),
    )(xt, w1, w234, bias)

    # out[block, c, tile]; block = (n_hi, a_hi, b_hi), tile = (n_lo, a_lo, b_lo).
    # Only the tiny conv4 output is re-ordered into torch's NCHW flatten.
    y = out.reshape(n_hi, a_hi, b_hi, C_OUT, n_lo, a_lo, b_lo)
    y = jnp.transpose(y, (0, 4, 3, 1, 5, 2, 6))  # (n_hi,n_lo,C,a_hi,a_lo,b_hi,b_lo)
    return y.reshape(n, C_OUT * ht * wt)


# ---------------------------------------------------------------------------
# Deterministic parameter init (PyTorch-default-style uniform(+-1/sqrt(fan_in)))
# ---------------------------------------------------------------------------
def init_params(key):
    shapes = [(16, 3, 2, 2), (16, 16, 2, 2), (16, 16, 2, 2), (16, 16, 2, 2)]
    params = []
    for shp in shapes:
        key, kw_, kb_ = jax.random.split(key, 3)
        fan_in = shp[1] * shp[2] * shp[3]
        bound = 1.0 / jnp.sqrt(fan_in)
        wl = jax.random.uniform(kw_, shp, jnp.float32, -bound, bound)
        bl = jax.random.uniform(kb_, (shp[0],), jnp.float32, -bound, bound)
        params.append((wl, bl))
    return params


# ---------------------------------------------------------------------------
# Pure-JAX reference (lax.conv) for correctness check.
# ---------------------------------------------------------------------------
def reference_forward(x_nchw, params):
    x = x_nchw
    for (wl, bl) in params:
        x = jax.lax.conv_general_dilated(
            x, wl, window_strides=(2, 2), padding="VALID",
            dimension_numbers=("NCHW", "OIHW", "NCHW"))
        x = jax.nn.relu(x + bl[None, :, None, None])
    return x.reshape(x.shape[0], -1)


if __name__ == "__main__":
    key = jax.random.PRNGKey(0)
    kparam, kx = jax.random.split(key)
    params = init_params(kparam)

    fwd = jax.jit(conv_module_forward)

    # Test 1: small input (batch=2, 3x32x32) -> 2 grid blocks of 4 tiles each.
    x1 = jax.random.normal(kx, (2, 3, 32, 32), jnp.float32)
    out1 = jax.block_until_ready(fwd(x1, params))
    ref1 = reference_forward(x1, params)
    assert out1.shape == (2, 16 * 2 * 2), out1.shape
    assert jnp.allclose(out1, ref1, atol=2e-4, rtol=2e-4), "mismatch (test 1)"

    # Test 2: larger batch.
    x2 = jax.random.normal(jax.random.PRNGKey(1), (8, 3, 32, 32), jnp.float32)
    out2 = jax.block_until_ready(fwd(x2, params))
    ref2 = reference_forward(x2, params)
    assert out2.shape == (8, 64), out2.shape
    assert jnp.allclose(out2, ref2, atol=2e-4, rtol=2e-4), "mismatch (test 2)"

    # Test 3: non-square spatial dims.
    x3 = jax.random.normal(jax.random.PRNGKey(2), (2, 3, 32, 64), jnp.float32)
    out3 = jax.block_until_ready(fwd(x3, params))
    ref3 = reference_forward(x3, params)
    assert out3.shape == (2, 16 * 2 * 4), out3.shape
    assert jnp.allclose(out3, ref3, atol=2e-4, rtol=2e-4), "mismatch (test 3)"

    # Test 4: larger spatial extent -> wider lane-dense blocks (64 tiles/block).
    x4 = jax.random.normal(jax.random.PRNGKey(3), (2, 3, 128, 128), jnp.float32)
    out4 = jax.block_until_ready(fwd(x4, params))
    ref4 = reference_forward(x4, params)
    assert out4.shape == (2, 16 * 8 * 8), out4.shape
    assert jnp.allclose(out4, ref4, atol=2e-4, rtol=2e-4), "mismatch (test 4)"

    print("KERNEL_OK")
</pallas_src>

<mosaic_0001>
module attributes {stable_mosaic.version = 11 : i64} {
  func.func @_fused_conv_kernel(%arg0: i32, %arg1: memref<1x64x12x4xf32, #tpu.memory_space<vmem>>, %arg2: memref<16x12xf32, #tpu.memory_space<vmem>>, %arg3: memref<3x16x64xf32, #tpu.memory_space<vmem>>, %arg4: memref<4x16x1xf32, #tpu.memory_space<vmem>>, %arg5: memref<1x16x4xf32, #tpu.memory_space<vmem>>) attributes {dimension_semantics = [#tpu.dimension_semantics<parallel>], iteration_bounds = array<i64: 2>, scalar_prefetch = 0 : i64, scratch_operands = 0 : i64, tpu.core_type = #tpu.core_type<tc>, window_params = [{transform_indices = @transform_0, window_bounds = array<i64: 1, 64, 12, 4>}, {pipeline_mode = #tpu.pipeline_mode<synchronous>, transform_indices = @transform_1, window_bounds = array<i64: 16, 12>}, {pipeline_mode = #tpu.pipeline_mode<synchronous>, transform_indices = @transform_2, window_bounds = array<i64: 3, 16, 64>}, {pipeline_mode = #tpu.pipeline_mode<synchronous>, transform_indices = @transform_3, window_bounds = array<i64: 4, 16, 1>}, {transform_indices = @transform_4, window_bounds = array<i64: 1, 16, 4>}]} {
    %c0 = arith.constant 0 : index
    %c0_0 = arith.constant 0 : index
    %0 = vector.load %arg2[%c0, %c0_0] : memref<16x12xf32, #tpu.memory_space<vmem>>, vector<16x12xf32>
    %c0_1 = arith.constant 0 : index
    %c0_2 = arith.constant 0 : index
    %c0_3 = arith.constant 0 : index
    %1 = vector.load %arg3[%c0_1, %c0_2, %c0_3] : memref<3x16x64xf32, #tpu.memory_space<vmem>>, vector<1x16x64xf32>
    %2 = vector.shape_cast %1 : vector<1x16x64xf32> to vector<16x64xf32>
    %c1 = arith.constant 1 : index
    %c0_4 = arith.constant 0 : index
    %c0_5 = arith.constant 0 : index
    %3 = vector.load %arg3[%c1, %c0_4, %c0_5] : memref<3x16x64xf32, #tpu.memory_space<vmem>>, vector<1x16x64xf32>
    %4 = vector.shape_cast %3 : vector<1x16x64xf32> to vector<16x64xf32>
    %c2 = arith.constant 2 : index
    %c0_6 = arith.constant 0 : index
    %c0_7 = arith.constant 0 : index
    %5 = vector.load %arg3[%c2, %c0_6, %c0_7] : memref<3x16x64xf32, #tpu.memory_space<vmem>>, vector<1x16x64xf32>
    %6 = vector.shape_cast %5 : vector<1x16x64xf32> to vector<16x64xf32>
    %c0_8 = arith.constant 0 : index
    %c0_9 = arith.constant 0 : index
    %c0_10 = arith.constant 0 : index
    %7 = vector.load %arg4[%c0_8, %c0_9, %c0_10] : memref<4x16x1xf32, #tpu.memory_space<vmem>>, vector<1x16x1xf32>
    %8 = vector.shape_cast %7 : vector<1x16x1xf32> to vector<16x1xf32>
    %9 = vector.shape_cast %8 : vector<16x1xf32> to vector<16x1xf32>
    %10 = vector.broadcast %9 : vector<16x1xf32> to vector<16x4xf32>
    %c1_11 = arith.constant 1 : index
    %c0_12 = arith.constant 0 : index
    %c0_13 = arith.constant 0 : index
    %11 = vector.load %arg4[%c1_11, %c0_12, %c0_13] : memref<4x16x1xf32, #tpu.memory_space<vmem>>, vector<1x16x1xf32>
    %12 = vector.shape_cast %11 : vector<1x16x1xf32> to vector<16x1xf32>
    %13 = vector.shape_cast %12 : vector<16x1xf32> to vector<16x1xf32>
    %14 = vector.broadcast %13 : vector<16x1xf32> to vector<16x4xf32>
    %c2_14 = arith.constant 2 : index
    %c0_15 = arith.constant 0 : index
    %c0_16 = arith.constant 0 : index
    %15 = vector.load %arg4[%c2_14, %c0_15, %c0_16] : memref<4x16x1xf32, #tpu.memory_space<vmem>>, vector<1x16x1xf32>
    %16 = vector.shape_cast %15 : vector<1x16x1xf32> to vector<16x1xf32>
    %17 = vector.shape_cast %16 : vector<16x1xf32> to vector<16x1xf32>
    %18 = vector.broadcast %17 : vector<16x1xf32> to vector<16x4xf32>
    %c3 = arith.constant 3 : index
    %c0_17 = arith.constant 0 : index
    %c0_18 = arith.constant 0 : index
    %19 = vector.load %arg4[%c3, %c0_17, %c0_18] : memref<4x16x1xf32, #tpu.memory_space<vmem>>, vector<1x16x1xf32>
    %20 = vector.shape_cast %19 : vector<1x16x1xf32> to vector<16x1xf32>
    %21 = vector.shape_cast %20 : vector<16x1xf32> to vector<16x1xf32>
    %22 = vector.broadcast %21 : vector<16x1xf32> to vector<16x4xf32>
    %c0_19 = arith.constant 0 : index
    %c0_20 = arith.constant 0 : index
    %c0_21 = arith.constant 0 : index
    %c0_22 = arith.constant 0 : index
    %23 = vector.load %arg1[%c0_19, %c0_20, %c0_21, %c0_22] : memref<1x64x12x4xf32, #tpu.memory_space<vmem>>, vector<1x1x12x4xf32>
    %24 = vector.shape_cast %23 : vector<1x1x12x4xf32> to vector<12x4xf32>
    %cst = arith.constant dense<0.000000e+00> : vector<16x4xf32>
    %25 = tpu.matmul %0, %24, %cst {dimension_numbers = #tpu.dot_dimension_numbers<[1], [0], [0], [1], [0, 0, 1, 1], [], []>} : vector<16x12xf32>, vector<12x4xf32>, vector<16x4xf32> -> vector<16x4xf32>
    %26 = arith.addf %25, %10 : vector<16x4xf32>
    %cst_23 = arith.constant 0.000000e+00 : f32
    %27 = vector.broadcast %cst_23 : f32 to vector<16x4xf32>
    %28 = arith.maximumf %26, %27 : vector<16x4xf32>
    %c0_24 = arith.constant 0 : index
    %c1_25 = arith.constant 1 : index
    %c0_26 = arith.constant 0 : index
    %c0_27 = arith.constant 0 : index
    %29 = vector.load %arg1[%c0_24, %c1_25, %c0_26, %c0_27] : memref<1x64x12x4xf32, #tpu.memory_space<vmem>>, vector<1x1x12x4xf32>
    %30 = vector.shape_cast %29 : vector<1x1x12x4xf32> to vector<12x4xf32>
    %cst_28 = arith.constant dense<0.000000e+00> : vector<16x4xf32>
    %31 = tpu.matmul %0, %30, %cst_28 {dimension_numbers = #tpu.dot_dimension_numbers<[1], [0], [0], [1], [0, 0, 1, 1], [], []>} : vector<16x12xf32>, vector<12x4xf32>, vector<16x4xf32> -> vector<16x4xf32>
    %32 = arith.addf %31, %10 : vector<16x4xf32>
    %cst_29 = arith.constant 0.000000e+00 : f32
    %33 = vector.broadcast %cst_29 : f32 to vector<16x4xf32>
    %34 = arith.maximumf %32, %33 : vector<16x4xf32>
    %c0_30 = arith.constant 0 : index
    %c2_31 = arith.constant 2 : index
    %c0_32 = arith.constant 0 : index
    %c0_33 = arith.constant 0 : index
    %35 = vector.load %arg1[%c0_30, %c2_31, %c0_32, %c0_33] : memref<1x64x12x4xf32, #tpu.memory_space<vmem>>, vector<1x1x12x4xf32>
    %36 = vector.shape_cast %35 : vector<1x1x12x4xf32> to vector<12x4xf32>
    %cst_34 = arith.constant dense<0.000000e+00> : vector<16x4xf32>
    %37 = tpu.matmul %0, %36, %cst_34 {dimension_numbers = #tpu.dot_dimension_numbers<[1], [0], [0], [1], [0, 0, 1, 1], [], []>} : vector<16x12xf32>, vector<12x4xf32>, vector<16x4xf32> -> vector<16x4xf32>
    %38 = arith.addf %37, %10 : vector<16x4xf32>
    %cst_35 = arith.constant 0.000000e+00 : f32
    %39 = vector.broadcast %cst_35 : f32 to vector<16x4xf32>
    %40 = arith.maximumf %38, %39 : vector<16x4xf32>
    %c0_36 = arith.constant 0 : index
    %c3_37 = arith.constant 3 : index
    %c0_38 = arith.constant 0 : index
    %c0_39 = arith.constant 0 : index
    %41 = vector.load %arg1[%c0_36, %c3_37, %c0_38, %c0_39] : memref<1x64x12x4xf32, #tpu.memory_space<vmem>>, vector<1x1x12x4xf32>
    %42 = vector.shape_cast %41 : vector<1x1x12x4xf32> to vector<12x4xf32>
    %cst_40 = arith.constant dense<0.000000e+00> : vector<16x4xf32>
    %43 = tpu.matmul %0, %42, %cst_40 {dimension_numbers = #tpu.dot_dimension_numbers<[1], [0], [0], [1], [0, 0, 1, 1], [], []>} : vector<16x12xf32>, vector<12x4xf32>, vector<16x4xf32> -> vector<16x4xf32>
    %44 = arith.addf %43, %10 : vector<16x4xf32>
    %cst_41 = arith.constant 0.000000e+00 : f32
    %45 = vector.broadcast %cst_41 : f32 to vector<16x4xf32>
    %46 = arith.maximumf %44, %45 : vector<16x4xf32>
    %47 = tpu.concatenate %28, %34, %40, %46 in 0 : vector<16x4xf32>, vector<16x4xf32>, vector<16x4xf32>, vector<16x4xf32> -> vector<64x4xf32>
    %cst_42 = arith.constant dense<0.000000e+00> : vector<16x4xf32>
    %48 = tpu.matmul %2, %47, %cst_42 {dimension_numbers = #tpu.dot_dimension_numbers<[1], [0], [0], [1], [0, 0, 1, 1], [], []>} : vector<16x64xf32>, vector<64x4xf32>, vector<16x4xf32> -> vector<16x4xf32>
    %49 = arith.addf %48, %14 : vector<16x4xf32>
    %cst_43 = arith.constant 0.000000e+00 : f32
    %50 = vector.broadcast %cst_43 : f32 to vector<16x4xf32>
    %51 = arith.maximumf %49, %50 : vector<16x4xf32>
    %c0_44 = arith.constant 0 : index
    %c4 = arith.constant 4 : index
    %c0_45 = arith.constant 0 : index
    %c0_46 = arith.constant 0 : index
    %52 = vector.load %arg1[%c0_44, %c4, %c0_45, %c0_46] : memref<1x64x12x4xf32, #tpu.memory_space<vmem>>, vector<1x1x12x4xf32>
    %53 = vector.shape_cast %52 : vector<1x1x12x4xf32> to vector<12x4xf32>
    %cst_47 = arith.constant dense<0.000000e+00> : vector<16x4xf32>
    %54 = tpu.matmul %0, %53, %cst_47 {dimension_numbers = #tpu.dot_dimension_numbers<[1], [0], [0], [1], [0, 0, 1, 1], [], []>} : vector<16x12xf32>, vector<12x4xf32>, vector<16x4xf32> -> vector<16x4xf32>
    %55 = arith.addf %54, %10 : vector<16x4xf32>
    %cst_48 = arith.constant 0.000000e+00 : f32
    %56 = vector.broadcast %cst_48 : f32 to vector<16x4xf32>
    %57 = arith.maximumf %55, %56 : vector<16x4xf32>
    %c0_49 = arith.constant 0 : index
    %c5 = arith.constant 5 : index
    %c0_50 = arith.constant 0 : index
    %c0_51 = arith.constant 0 : index
    %58 = vector.load %arg1[%c0_49, %c5, %c0_50, %c0_51] : memref<1x64x12x4xf32, #tpu.memory_space<vmem>>, vector<1x1x12x4xf32>
    %59 = vector.shape_cast %58 : vector<1x1x12x4xf32> to vector<12x4xf32>
    %cst_52 = arith.constant dense<0.000000e+00> : vector<16x4xf32>
    %60 = tpu.matmul %0, %59, %cst_52 {dimension_numbers = #tpu.dot_dimension_numbers<[1], [0], [0], [1], [0, 0, 1, 1], [], []>} : vector<16x12xf32>, vector<12x4xf32>, vector<16x4xf32> -> vector<16x4xf32>
    %61 = arith.addf %60, %10 : vector<16x4xf32>
    %cst_53 = arith.constant 0.000000e+00 : f32
    %62 = vector.broadcast %cst_53 : f32 to vector<16x4xf32>
    %63 = arith.maximumf %61, %62 : vector<16x4xf32>
    %c0_54 = arith.constant 0 : index
    %c6 = arith.constant 6 : index
    %c0_55 = arith.constant 0 : index
    %c0_56 = arith.constant 0 : index
    %64 = vector.load %arg1[%c0_54, %c6, %c0_55, %c0_56] : memref<1x64x12x4xf32, #tpu.memory_space<vmem>>, vector<1x1x12x4xf32>
    %65 = vector.shape_cast %64 : vector<1x1x12x4xf32> to vector<12x4xf32>
    %cst_57 = arith.constant dense<0.000000e+00> : vector<16x4xf32>
    %66 = tpu.matmul %0, %65, %cst_57 {dimension_numbers = #tpu.dot_dimension_numbers<[1], [0], [0], [1], [0, 0, 1, 1], [], []>} : vector<16x12xf32>, vector<12x4xf32>, vector<16x4xf32> -> vector<16x4xf32>
    %67 = arith.addf %66, %10 : vector<16x4xf32>
    %cst_58 = arith.constant 0.000000e+00 : f32
    %68 = vector.broadcast %cst_58 : f32 to vector<16x4xf32>
    %69 = arith.maximumf %67, %68 : vector<16x4xf32>
    %c0_59 = arith.constant 0 : index
    %c7 = arith.constant 7 : index
    %c0_60 = arith.constant 0 : index
    %c0_61 = arith.constant 0 : index
    %70 = vector.load %arg1[%c0_59, %c7, %c0_60, %c0_61] : memref<1x64x12x4xf32, #tpu.memory_space<vmem>>, vector<1x1x12x4xf32>
    %71 = vector.shape_cast %70 : vector<1x1x12x4xf32> to vector<12x4xf32>
    %cst_62 = arith.constant dense<0.000000e+00> : vector<16x4xf32>
    %72 = tpu.matmul %0, %71, %cst_62 {dimension_numbers = #tpu.dot_dimension_numbers<[1], [0], [0], [1], [0, 0, 1, 1], [], []>} : vector<16x12xf32>, vector<12x4xf32>, vector<16x4xf32> -> vector<16x4xf32>
    %73 = arith.addf %72, %10 : vector<16x4xf32>
    %cst_63 = arith.constant 0.000000e+00 : f32
    %74 = vector.broadcast %cst_63 : f32 to vector<16x4xf32>
    %75 = arith.maximumf %73, %74 : vector<16x4xf32>
    %76 = tpu.concatenate %57, %63, %69, %75 in 0 : vector<16x4xf32>, vector<16x4xf32>, vector<16x4xf32>, vector<16x4xf32> -> vector<64x4xf32>
    %cst_64 = arith.constant dense<0.000000e+00> : vector<16x4xf32>
    %77 = tpu.matmul %2, %76, %cst_64 {dimension_numbers = #tpu.dot_dimension_numbers<[1], [0], [0], [1], [0, 0, 1, 1], [], []>} : vector<16x64xf32>, vector<64x4xf32>, vector<16x4xf32> -> vector<16x4xf32>
    %78 = arith.addf %77, %14 : vector<16x4xf32>
    %cst_65 = arith.constant 0.000000e+00 : f32
    %79 = vector.broadcast %cst_65 : f32 to vector<16x4xf32>
    %80 = arith.maximumf %78, %79 : vector<16x4xf32>
    %c0_66 = arith.constant 0 : index
    %c8 = arith.constant 8 : index
    %c0_67 = arith.constant 0 : index
    %c0_68 = arith.constant 0 : index
    %81 = vector.load %arg1[%c0_66, %c8, %c0_67, %c0_68] : memref<1x64x12x4xf32, #tpu.memory_space<vmem>>, vector<1x1x12x4xf32>
    %82 = vector.shape_cast %81 : vector<1x1x12x4xf32> to vector<12x4xf32>
    %cst_69 = arith.constant dense<0.000000e+00> : vector<16x4xf32>
    %83 = tpu.matmul %0, %82, %cst_69 {dimension_numbers = #tpu.dot_dimension_numbers<[1], [0], [0], [1], [0, 0, 1, 1], [], []>} : vector<16x12xf32>, vector<12x4xf32>, vector<16x4xf32> -> vector<16x4xf32>
    %84 = arith.addf %83, %10 : vector<16x4xf32>
    %cst_70 = arith.constant 0.000000e+00 : f32
    %85 = vector.broadcast %cst_70 : f32 to vector<16x4xf32>
    %86 = arith.maximumf %84, %85 : vector<16x4xf32>
    %c0_71 = arith.constant 0 : index
    %c9 = arith.constant 9 : index
    %c0_72 = arith.constant 0 : index
    %c0_73 = arith.constant 0 : index
    %87 = vector.load %arg1[%c0_71, %c9, %c0_72, %c0_73] : memref<1x64x12x4xf32, #tpu.memory_space<vmem>>, vector<1x1x12x4xf32>
    %88 = vector.shape_cast %87 : vector<1x1x12x4xf32> to vector<12x4xf32>
    %cst_74 = arith.constant dense<0.000000e+00> : vector<16x4xf32>
    %89 = tpu.matmul %0, %88, %cst_74 {dimension_numbers = #tpu.dot_dimension_numbers<[1], [0], [0], [1], [0, 0, 1, 1], [], []>} : vector<16x12xf32>, vector<12x4xf32>, vector<16x4xf32> -> vector<16x4xf32>
    %90 = arith.addf %89, %10 : vector<16x4xf32>
    %cst_75 = arith.constant 0.000000e+00 : f32
    %91 = vector.broadcast %cst_75 : f32 to vector<16x4xf32>
    %92 = arith.maximumf %90, %91 : vector<16x4xf32>
    %c0_76 = arith.constant 0 : index
    %c10 = arith.constant 10 : index
    %c0_77 = arith.constant 0 : index
    %c0_78 = arith.constant 0 : index
    %93 = vector.load %arg1[%c0_76, %c10, %c0_77, %c0_78] : memref<1x64x12x4xf32, #tpu.memory_space<vmem>>, vector<1x1x12x4xf32>
    %94 = vector.shape_cast %93 : vector<1x1x12x4xf32> to vector<12x4xf32>
    %cst_79 = arith.constant dense<0.000000e+00> : vector<16x4xf32>
    %95 = tpu.matmul %0, %94, %cst_79 {dimension_numbers = #tpu.dot_dimension_numbers<[1], [0], [0], [1], [0, 0, 1, 1], [], []>} : vector<16x12xf32>, vector<12x4xf32>, vector<16x4xf32> -> vector<16x4xf32>
    %96 = arith.addf %95, %10 : vector<16x4xf32>
    %cst_80 = arith.constant 0.000000e+00 : f32
    %97 = vector.broadcast %cst_80 : f32 to vector<16x4xf32>
    %98 = arith.maximumf %96, %97 : vector<16x4xf32>
    %c0_81 = arith.constant 0 : index
    %c11 = arith.constant 11 : index
    %c0_82 = arith.constant 0 : index
    %c0_83 = arith.constant 0 : index
    %99 = vector.load %arg1[%c0_81, %c11, %c0_82, %c0_83] : memref<1x64x12x4xf32, #tpu.memory_space<vmem>>, vector<1x1x12x4xf32>
    %100 = vector.shape_cast %99 : vector<1x1x12x4xf32> to vector<12x4xf32>
    %cst_84 = arith.constant dense<0.000000e+00> : vector<16x4xf32>
    %101 = tpu.matmul %0, %100, %cst_84 {dimension_numbers = #tpu.dot_dimension_numbers<[1], [0], [0], [1], [0, 0, 1, 1], [], []>} : vector<16x12xf32>, vector<12x4xf32>, vector<16x4xf32> -> vector<16x4xf32>
    %102 = arith.addf %101, %10 : vector<16x4xf32>
    %cst_85 = arith.constant 0.000000e+00 : f32
    %103 = vector.broadcast %cst_85 : f32 to vector<16x4xf32>
    %104 = arith.maximumf %102, %103 : vector<16x4xf32>
    %105 = tpu.concatenate %86, %92, %98, %104 in 0 : vector<16x4xf32>, vector<16x4xf32>, vector<16x4xf32>, vector<16x4xf32> -> vector<64x4xf32>
    %cst_86 = arith.constant dense<0.000000e+00> : vector<16x4xf32>
    %106 = tpu.matmul %2, %105, %cst_86 {dimension_numbers = #tpu.dot_dimension_numbers<[1], [0], [0], [1], [0, 0, 1, 1], [], []>} : vector<16x64xf32>, vector<64x4xf32>, vector<16x4xf32> -> vector<16x4xf32>
    %107 = arith.addf %106, %14 : vector<16x4xf32>
    %cst_87 = arith.constant 0.000000e+00 : f32
    %108 = vector.broadcast %cst_87 : f32 to vector<16x4xf32>
    %109 = arith.maximumf %107, %108 : vector<16x4xf32>
    %c0_88 = arith.constant 0 : index
    %c12 = arith.constant 12 : index
    %c0_89 = arith.constant 0 : index
    %c0_90 = arith.constant 0 : index
    %110 = vector.load %arg1[%c0_88, %c12, %c0_89, %c0_90] : memref<1x64x12x4xf32, #tpu.memory_space<vmem>>, vector<1x1x12x4xf32>
    %111 = vector.shape_cast %110 : vector<1x1x12x4xf32> to vector<12x4xf32>
    %cst_91 = arith.constant dense<0.000000e+00> : vector<16x4xf32>
    %112 = tpu.matmul %0, %111, %cst_91 {dimension_numbers = #tpu.dot_dimension_numbers<[1], [0], [0], [1], [0, 0, 1, 1], [], []>} : vector<16x12xf32>, vector<12x4xf32>, vector<16x4xf32> -> vector<16x4xf32>
    %113 = arith.addf %112, %10 : vector<16x4xf32>
    %cst_92 = arith.constant 0.000000e+00 : f32
    %114 = vector.broadcast %cst_92 : f32 to vector<16x4xf32>
    %115 = arith.maximumf %113, %114 : vector<16x4xf32>
    %c0_93 = arith.constant 0 : index
    %c13 = arith.constant 13 : index
    %c0_94 = arith.constant 0 : index
    %c0_95 = arith.constant 0 : index
    %116 = vector.load %arg1[%c0_93, %c13, %c0_94, %c0_95] : memref<1x64x12x4xf32, #tpu.memory_space<vmem>>, vector<1x1x12x4xf32>
    %117 = vector.shape_cast %116 : vector<1x1x12x4xf32> to vector<12x4xf32>
    %cst_96 = arith.constant dense<0.000000e+00> : vector<16x4xf32>
    %118 = tpu.matmul %0, %117, %cst_96 {dimension_numbers = #tpu.dot_dimension_numbers<[1], [0], [0], [1], [0, 0, 1, 1], [], []>} : vector<16x12xf32>, vector<12x4xf32>, vector<16x4xf32> -> vector<16x4xf32>
    %119 = arith.addf %118, %10 : vector<16x4xf32>
    %cst_97 = arith.constant 0.000000e+00 : f32
    %120 = vector.broadcast %cst_97 : f32 to vector<16x4xf32>
    %121 = arith.maximumf %119, %120 : vector<16x4xf32>
    %c0_98 = arith.constant 0 : index
    %c14 = arith.constant 14 : index
    %c0_99 = arith.constant 0 : index
    %c0_100 = arith.constant 0 : index
    %122 = vector.load %arg1[%c0_98, %c14, %c0_99, %c0_100] : memref<1x64x12x4xf32, #tpu.memory_space<vmem>>, vector<1x1x12x4xf32>
    %123 = vector.shape_cast %122 : vector<1x1x12x4xf32> to vector<12x4xf32>
    %cst_101 = arith.constant dense<0.000000e+00> : vector<16x4xf32>
    %124 = tpu.matmul %0, %123, %cst_101 {dimension_numbers = #tpu.dot_dimension_numbers<[1], [0], [0], [1], [0, 0, 1, 1], [], []>} : vector<16x12xf32>, vector<12x4xf32>, vector<16x4xf32> -> vector<16x4xf32>
    %125 = arith.addf %124, %10 : vector<16x4xf32>
    %cst_102 = arith.constant 0.000000e+00 : f32
    %126 = vector.broadcast %cst_102 : f32 to vector<16x4xf32>
    %127 = arith.maximumf %125, %126 : vector<16x4xf32>
    %c0_103 = arith.constant 0 : index
    %c15 = arith.constant 15 : index
    %c0_104 = arith.constant 0 : index
    %c0_105 = arith.constant 0 : index
    %128 = vector.load %arg1[%c0_103, %c15, %c0_104, %c0_105] : memref<1x64x12x4xf32, #tpu.memory_space<vmem>>, vector<1x1x12x4xf32>
    %129 = vector.shape_cast %128 : vector<1x1x12x4xf32> to vector<12x4xf32>
    %cst_106 = arith.constant dense<0.000000e+00> : vector<16x4xf32>
    %130 = tpu.matmul %0, %129, %cst_106 {dimension_numbers = #tpu.dot_dimension_numbers<[1], [0], [0], [1], [0, 0, 1, 1], [], []>} : vector<16x12xf32>, vector<12x4xf32>, vector<16x4xf32> -> vector<16x4xf32>
    %131 = arith.addf %130, %10 : vector<16x4xf32>
    %cst_107 = arith.constant 0.000000e+00 : f32
    %132 = vector.broadcast %cst_107 : f32 to vector<16x4xf32>
    %133 = arith.maximumf %131, %132 : vector<16x4xf32>
    %134 = tpu.concatenate %115, %121, %127, %133 in 0 : vector<16x4xf32>, vector<16x4xf32>, vector<16x4xf32>, vector<16x4xf32> -> vector<64x4xf32>
    %cst_108 = arith.constant dense<0.000000e+00> : vector<16x4xf32>
    %135 = tpu.matmul %2, %134, %cst_108 {dimension_numbers = #tpu.dot_dimension_numbers<[1], [0], [0], [1], [0, 0, 1, 1], [], []>} : vector<16x64xf32>, vector<64x4xf32>, vector<16x4xf32> -> vector<16x4xf32>
    %136 = arith.addf %135, %14 : vector<16x4xf32>
    %cst_109 = arith.constant 0.000000e+00 : f32
    %137 = vector.broadcast %cst_109 : f32 to vector<16x4xf32>
    %138 = arith.maximumf %136, %137 : vector<16x4xf32>
    %c0_110 = arith.constant 0 : index
    %c16 = arith.constant 16 : index
    %c0_111 = arith.constant 0 : index
    %c0_112 = arith.constant 0 : index
    %139 = vector.load %arg1[%c0_110, %c16, %c0_111, %c0_112] : memref<1x64x12x4xf32, #tpu.memory_space<vmem>>, vector<1x1x12x4xf32>
    %140 = vector.shape_cast %139 : vector<1x1x12x4xf32> to vector<12x4xf32>
    %cst_113 = arith.constant dense<0.000000e+00> : vector<16x4xf32>
    %141 = tpu.matmul %0, %140, %cst_113 {dimension_numbers = #tpu.dot_dimension_numbers<[1], [0], [0], [1], [0, 0, 1, 1], [], []>} : vector<16x12xf32>, vector<12x4xf32>, vector<16x4xf32> -> vector<16x4xf32>
    %142 = arith.addf %141, %10 : vector<16x4xf32>
    %cst_114 = arith.constant 0.000000e+00 : f32
    %143 = vector.broadcast %cst_114 : f32 to vector<16x4xf32>
    %144 = arith.maximumf %142, %143 : vector<16x4xf32>
    %c0_115 = arith.constant 0 : index
    %c17 = arith.constant 17 : index
    %c0_116 = arith.constant 0 : index
    %c0_117 = arith.constant 0 : index
    %145 = vector.load %arg1[%c0_115, %c17, %c0_116, %c0_117] : memref<1x64x12x4xf32, #tpu.memory_space<vmem>>, vector<1x1x12x4xf32>
    %146 = vector.shape_cast %145 : vector<1x1x12x4xf32> to vector<12x4xf32>
    %cst_118 = arith.constant dense<0.000000e+00> : vector<16x4xf32>
    %147 = tpu.matmul %0, %146, %cst_118 {dimension_numbers = #tpu.dot_dimension_numbers<[1], [0], [0], [1], [0, 0, 1, 1], [], []>} : vector<16x12xf32>, vector<12x4xf32>, vector<16x4xf32> -> vector<16x4xf32>
    %148 = arith.addf %147, %10 : vector<16x4xf32>
    %cst_119 = arith.constant 0.000000e+00 : f32
    %149 = vector.broadcast %cst_119 : f32 to vector<16x4xf32>
    %150 = arith.maximumf %148, %149 : vector<16x4xf32>
    %c0_120 = arith.constant 0 : index
    %c18 = arith.constant 18 : index
    %c0_121 = arith.constant 0 : index
    %c0_122 = arith.constant 0 : index
    %151 = vector.load %arg1[%c0_120, %c18, %c0_121, %c0_122] : memref<1x64x12x4xf32, #tpu.memory_space<vmem>>, vector<1x1x12x4xf32>
    %152 = vector.shape_cast %151 : vector<1x1x12x4xf32> to vector<12x4xf32>
    %cst_123 = arith.constant dense<0.000000e+00> : vector<16x4xf32>
    %153 = tpu.matmul %0, %152, %cst_123 {dimension_numbers = #tpu.dot_dimension_numbers<[1], [0], [0], [1], [0, 0, 1, 1], [], []>} : vector<16x12xf32>, vector<12x4xf32>, vector<16x4xf32> -> vector<16x4xf32>
    %154 = arith.addf %153, %10 : vector<16x4xf32>
    %cst_124 = arith.constant 0.000000e+00 : f32
    %155 = vector.broadcast %cst_124 : f32 to vector<16x4xf32>
    %156 = arith.maximumf %154, %155 : vector<16x4xf32>
    %c0_125 = arith.constant 0 : index
    %c19 = arith.constant 19 : index
    %c0_126 = arith.constant 0 : index
    %c0_127 = arith.constant 0 : index
    %157 = vector.load %arg1[%c0_125, %c19, %c0_126, %c0_127] : memref<1x64x12x4xf32, #tpu.memory_space<vmem>>, vector<1x1x12x4xf32>
    %158 = vector.shape_cast %157 : vector<1x1x12x4xf32> to vector<12x4xf32>
    %cst_128 = arith.constant dense<0.000000e+00> : vector<16x4xf32>
    %159 = tpu.matmul %0, %158, %cst_128 {dimension_numbers = #tpu.dot_dimension_numbers<[1], [0], [0], [1], [0, 0, 1, 1], [], []>} : vector<16x12xf32>, vector<12x4xf32>, vector<16x4xf32> -> vector<16x4xf32>
    %160 = arith.addf %159, %10 : vector<16x4xf32>
    %cst_129 = arith.constant 0.000000e+00 : f32
    %161 = vector.broadcast %cst_129 : f32 to vector<16x4xf32>
    %162 = arith.maximumf %160, %161 : vector<16x4xf32>
    %163 = tpu.concatenate %144, %150, %156, %162 in 0 : vector<16x4xf32>, vector<16x4xf32>, vector<16x4xf32>, vector<16x4xf32> -> vector<64x4xf32>
    %cst_130 = arith.constant dense<0.000000e+00> : vector<16x4xf32>
    %164 = tpu.matmul %2, %163, %cst_130 {dimension_numbers = #tpu.dot_dimension_numbers<[1], [0], [0], [1], [0, 0, 1, 1], [], []>} : vector<16x64xf32>, vector<64x4xf32>, vector<16x4xf32> -> vector<16x4xf32>
    %165 = arith.addf %164, %14 : vector<16x4xf32>
    %cst_131 = arith.constant 0.000000e+00 : f32
    %166 = vector.broadcast %cst_131 : f32 to vector<16x4xf32>
    %167 = arith.maximumf %165, %166 : vector<16x4xf32>
    %c0_132 = arith.constant 0 : index
    %c20 = arith.constant 20 : index
    %c0_133 = arith.constant 0 : index
    %c0_134 = arith.constant 0 : index
    %168 = vector.load %arg1[%c0_132, %c20, %c0_133, %c0_134] : memref<1x64x12x4xf32, #tpu.memory_space<vmem>>, vector<1x1x12x4xf32>
    %169 = vector.shape_cast %168 : vector<1x1x12x4xf32> to vector<12x4xf32>
    %cst_135 = arith.constant dense<0.000000e+00> : vector<16x4xf32>
    %170 = tpu.matmul %0, %169, %cst_135 {dimension_numbers = #tpu.dot_dimension_numbers<[1], [0], [0], [1], [0, 0, 1, 1], [], []>} : vector<16x12xf32>, vector<12x4xf32>, vector<16x4xf32> -> vector<16x4xf32>
    %171 = arith.addf %170, %10 : vector<16x4xf32>
    %cst_136 = arith.constant 0.000000e+00 : f32
    %172 = vector.broadcast %cst_136 : f32 to vector<16x4xf32>
    %173 = arith.maximumf %171, %172 : vector<16x4xf32>
    %c0_137 = arith.constant 0 : index
    %c21 = arith.constant 21 : index
    %c0_138 = arith.constant 0 : index
    %c0_139 = arith.constant 0 : index
    %174 = vector.load %arg1[%c0_137, %c21, %c0_138, %c0_139] : memref<1x64x12x4xf32, #tpu.memory_space<vmem>>, vector<1x1x12x4xf32>
    %175 = vector.shape_cast %174 : vector<1x1x12x4xf32> to vector<12x4xf32>
    %cst_140 = arith.constant dense<0.000000e+00> : vector<16x4xf32>
    %176 = tpu.matmul %0, %175, %cst_140 {dimension_numbers = #tpu.dot_dimension_numbers<[1], [0], [0], [1], [0, 0, 1, 1], [], []>} : vector<16x12xf32>, vector<12x4xf32>, vector<16x4xf32> -> vector<16x4xf32>
    %177 = arith.addf %176, %10 : vector<16x4xf32>
    %cst_141 = arith.constant 0.000000e+00 : f32
    %178 = vector.broadcast %cst_141 : f32 to vector<16x4xf32>
    %179 = arith.maximumf %177, %178 : vector<16x4xf32>
    %c0_142 = arith.constant 0 : index
    %c22 = arith.constant 22 : index
    %c0_143 = arith.constant 0 : index
    %c0_144 = arith.constant 0 : index
    %180 = vector.load %arg1[%c0_142, %c22, %c0_143, %c0_144] : memref<1x64x12x4xf32, #tpu.memory_space<vmem>>, vector<1x1x12x4xf32>
    %181 = vector.shape_cast %180 : vector<1x1x12x4xf32> to vector<12x4xf32>
    %cst_145 = arith.constant dense<0.000000e+00> : vector<16x4xf32>
    %182 = tpu.matmul %0, %181, %cst_145 {dimension_numbers = #tpu.dot_dimension_numbers<[1], [0], [0], [1], [0, 0, 1, 1], [], []>} : vector<16x12xf32>, vector<12x4xf32>, vector<16x4xf32> -> vector<16x4xf32>
    %183 = arith.addf %182, %10 : vector<16x4xf32>
    %cst_146 = arith.constant 0.000000e+00 : f32
    %184 = vector.broadcast %cst_146 : f32 to vector<16x4xf32>
    %185 = arith.maximumf %183, %184 : vector<16x4xf32>
    %c0_147 = arith.constant 0 : index
    %c23 = arith.constant 23 : index
    %c0_148 = arith.constant 0 : index
    %c0_149 = arith.constant 0 : index
    %186 = vector.load %arg1[%c0_147, %c23, %c0_148, %c0_149] : memref<1x64x12x4xf32, #tpu.memory_space<vmem>>, vector<1x1x12x4xf32>
    %187 = vector.shape_cast %186 : vector<1x1x12x4xf32> to vector<12x4xf32>
    %cst_150 = arith.constant dense<0.000000e+00> : vector<16x4xf32>
    %188 = tpu.matmul %0, %187, %cst_150 {dimension_numbers = #tpu.dot_dimension_numbers<[1], [0], [0], [1], [0, 0, 1, 1], [], []>} : vector<16x12xf32>, vector<12x4xf32>, vector<16x4xf32> -> vector<16x4xf32>
    %189 = arith.addf %188, %10 : vector<16x4xf32>
    %cst_151 = arith.constant 0.000000e+00 : f32
    %190 = vector.broadcast %cst_151 : f32 to vector<16x4xf32>
    %191 = arith.maximumf %189, %190 : vector<16x4xf32>
    %192 = tpu.concatenate %173, %179, %185, %191 in 0 : vector<16x4xf32>, vector<16x4xf32>, vector<16x4xf32>, vector<16x4xf32> -> vector<64x4xf32>
    %cst_152 = arith.constant dense<0.000000e+00> : vector<16x4xf32>
    %193 = tpu.matmul %2, %192, %cst_152 {dimension_numbers = #tpu.dot_dimension_numbers<[1], [0], [0], [1], [0, 0, 1, 1], [], []>} : vector<16x64xf32>, vector<64x4xf32>, vector<16x4xf32> -> vector<16x4xf32>
    %194 = arith.addf %193, %14 : vector<16x4xf32>
    %cst_153 = arith.constant 0.000000e+00 : f32
    %195 = vector.broadcast %cst_153 : f32 to vector<16x4xf32>
    %196 = arith.maximumf %194, %195 : vector<16x4xf32>
    %c0_154 = arith.constant 0 : index
    %c24 = arith.constant 24 : index
    %c0_155 = arith.constant 0 : index
    %c0_156 = arith.constant 0 : index
    %197 = vector.load %arg1[%c0_154, %c24, %c0_155, %c0_156] : memref<1x64x12x4xf32, #tpu.memory_space<vmem>>, vector<1x1x12x4xf32>
    %198 = vector.shape_cast %197 : vector<1x1x12x4xf32> to vector<12x4xf32>
    %cst_157 = arith.constant dense<0.000000e+00> : vector<16x4xf32>
    %199 = tpu.matmul %0, %198, %cst_157 {dimension_numbers = #tpu.dot_dimension_numbers<[1], [0], [0], [1], [0, 0, 1, 1], [], []>} : vector<16x12xf32>, vector<12x4xf32>, vector<16x4xf32> -> vector<16x4xf32>
    %200 = arith.addf %199, %10 : vector<16x4xf32>
    %cst_158 = arith.constant 0.000000e+00 : f32
    %201 = vector.broadcast %cst_158 : f32 to vector<16x4xf32>
    %202 = arith.maximumf %200, %201 : vector<16x4xf32>
    %c0_159 = arith.constant 0 : index
    %c25 = arith.constant 25 : index
    %c0_160 = arith.constant 0 : index
    %c0_161 = arith.constant 0 : index
    %203 = vector.load %arg1[%c0_159, %c25, %c0_160, %c0_161] : memref<1x64x12x4xf32, #tpu.memory_space<vmem>>, vector<1x1x12x4xf32>
    %204 = vector.shape_cast %203 : vector<1x1x12x4xf32> to vector<12x4xf32>
    %cst_162 = arith.constant dense<0.000000e+00> : vector<16x4xf32>
    %205 = tpu.matmul %0, %204, %cst_162 {dimension_numbers = #tpu.dot_dimension_numbers<[1], [0], [0], [1], [0, 0, 1, 1], [], []>} : vector<16x12xf32>, vector<12x4xf32>, vector<16x4xf32> -> vector<16x4xf32>
    %206 = arith.addf %205, %10 : vector<16x4xf32>
    %cst_163 = arith.constant 0.000000e+00 : f32
    %207 = vector.broadcast %cst_163 : f32 to vector<16x4xf32>
    %208 = arith.maximumf %206, %207 : vector<16x4xf32>
    %c0_164 = arith.constant 0 : index
    %c26 = arith.constant 26 : index
    %c0_165 = arith.constant 0 : index
    %c0_166 = arith.constant 0 : index
    %209 = vector.load %arg1[%c0_164, %c26, %c0_165, %c0_166] : memref<1x64x12x4xf32, #tpu.memory_space<vmem>>, vector<1x1x12x4xf32>
    %210 = vector.shape_cast %209 : vector<1x1x12x4xf32> to vector<12x4xf32>
    %cst_167 = arith.constant dense<0.000000e+00> : vector<16x4xf32>
    %211 = tpu.matmul %0, %210, %cst_167 {dimension_numbers = #tpu.dot_dimension_numbers<[1], [0], [0], [1], [0, 0, 1, 1], [], []>} : vector<16x12xf32>, vector<12x4xf32>, vector<16x4xf32> -> vector<16x4xf32>
    %212 = arith.addf %211, %10 : vector<16x4xf32>
    %cst_168 = arith.constant 0.000000e+00 : f32
    %213 = vector.broadcast %cst_168 : f32 to vector<16x4xf32>
    %214 = arith.maximumf %212, %213 : vector<16x4xf32>
    %c0_169 = arith.constant 0 : index
    %c27 = arith.constant 27 : index
    %c0_170 = arith.constant 0 : index
    %c0_171 = arith.constant 0 : index
    %215 = vector.load %arg1[%c0_169, %c27, %c0_170, %c0_171] : memref<1x64x12x4xf32, #tpu.memory_space<vmem>>, vector<1x1x12x4xf32>
    %216 = vector.shape_cast %215 : vector<1x1x12x4xf32> to vector<12x4xf32>
    %cst_172 = arith.constant dense<0.000000e+00> : vector<16x4xf32>
    %217 = tpu.matmul %0, %216, %cst_172 {dimension_numbers = #tpu.dot_dimension_numbers<[1], [0], [0], [1], [0, 0, 1, 1], [], []>} : vector<16x12xf32>, vector<12x4xf32>, vector<16x4xf32> -> vector<16x4xf32>
    %218 = arith.addf %217, %10 : vector<16x4xf32>
    %cst_173 = arith.constant 0.000000e+00 : f32
    %219 = vector.broadcast %cst_173 : f32 to vector<16x4xf32>
    %220 = arith.maximumf %218, %219 : vector<16x4xf32>
    %221 = tpu.concatenate %202, %208, %214, %220 in 0 : vector<16x4xf32>, vector<16x4xf32>, vector<16x4xf32>, vector<16x4xf32> -> vector<64x4xf32>
    %cst_174 = arith.constant dense<0.000000e+00> : vector<16x4xf32>
    %222 = tpu.matmul %2, %221, %cst_174 {dimension_numbers = #tpu.dot_dimension_numbers<[1], [0], [0], [1], [0, 0, 1, 1], [], []>} : vector<16x64xf32>, vector<64x4xf32>, vector<16x4xf32> -> vector<16x4xf32>
    %223 = arith.addf %222, %14 : vector<16x4xf32>
    %cst_175 = arith.constant 0.000000e+00 : f32
    %224 = vector.broadcast %cst_175 : f32 to vector<16x4xf32>
    %225 = arith.maximumf %223, %224 : vector<16x4xf32>
    %c0_176 = arith.constant 0 : index
    %c28 = arith.constant 28 : index
    %c0_177 = arith.constant 0 : index
    %c0_178 = arith.constant 0 : index
    %226 = vector.load %arg1[%c0_176, %c28, %c0_177, %c0_178] : memref<1x64x12x4xf32, #tpu.memory_space<vmem>>, vector<1x1x12x4xf32>
    %227 = vector.shape_cast %226 : vector<1x1x12x4xf32> to vector<12x4xf32>
    %cst_179 = arith.constant dense<0.000000e+00> : vector<16x4xf32>
    %228 = tpu.matmul %0, %227, %cst_179 {dimension_numbers = #tpu.dot_dimension_numbers<[1], [0], [0], [1], [0, 0, 1, 1], [], []>} : vector<16x12xf32>, vector<12x4xf32>, vector<16x4xf32> -> vector<16x4xf32>
    %229 = arith.addf %228, %10 : vector<16x4xf32>
    %cst_180 = arith.constant 0.000000e+00 : f32
    %230 = vector.broadcast %cst_180 : f32 to vector<16x4xf32>
    %231 = arith.maximumf %229, %230 : vector<16x4xf32>
    %c0_181 = arith.constant 0 : index
    %c29 = arith.constant 29 : index
    %c0_182 = arith.constant 0 : index
    %c0_183 = arith.constant 0 : index
    %232 = vector.load %arg1[%c0_181, %c29, %c0_182, %c0_183] : memref<1x64x12x4xf32, #tpu.memory_space<vmem>>, vector<1x1x12x4xf32>
    %233 = vector.shape_cast %232 : vector<1x1x12x4xf32> to vector<12x4xf32>
    %cst_184 = arith.constant dense<0.000000e+00> : vector<16x4xf32>
    %234 = tpu.matmul %0, %233, %cst_184 {dimension_numbers = #tpu.dot_dimension_numbers<[1], [0], [0], [1], [0, 0, 1, 1], [], []>} : vector<16x12xf32>, vector<12x4xf32>, vector<16x4xf32> -> vector<16x4xf32>
    %235 = arith.addf %234, %10 : vector<16x4xf32>
    %cst_185 = arith.constant 0.000000e+00 : f32
    %236 = vector.broadcast %cst_185 : f32 to vector<16x4xf32>
    %237 = arith.maximumf %235, %236 : vector<16x4xf32>
    %c0_186 = arith.constant 0 : index
    %c30 = arith.constant 30 : index
    %c0_187 = arith.constant 0 : index
    %c0_188 = arith.constant 0 : index
    %238 = vector.load %arg1[%c0_186, %c30, %c0_187, %c0_188] : memref<1x64x12x4xf32, #tpu.memory_space<vmem>>, vector<1x1x12x4xf32>
    %239 = vector.shape_cast %238 : vector<1x1x12x4xf32> to vector<12x4xf32>
    %cst_189 = arith.constant dense<0.000000e+00> : vector<16x4xf32>
    %240 = tpu.matmul %0, %239, %cst_189 {dimension_numbers = #tpu.dot_dimension_numbers<[1], [0], [0], [1], [0, 0, 1, 1], [], []>} : vector<16x12xf32>, vector<12x4xf32>, vector<16x4xf32> -> vector<16x4xf32>
    %241 = arith.addf %240, %10 : vector<16x4xf32>
    %cst_190 = arith.constant 0.000000e+00 : f32
    %242 = vector.broadcast %cst_190 : f32 to vector<16x4xf32>
    %243 = arith.maximumf %241, %242 : vector<16x4xf32>
    %c0_191 = arith.constant 0 : index
    %c31 = arith.constant 31 : index
    %c0_192 = arith.constant 0 : index
    %c0_193 = arith.constant 0 : index
    %244 = vector.load %arg1[%c0_191, %c31, %c0_192, %c0_193] : memref<1x64x12x4xf32, #tpu.memory_space<vmem>>, vector<1x1x12x4xf32>
    %245 = vector.shape_cast %244 : vector<1x1x12x4xf32> to vector<12x4xf32>
    %cst_194 = arith.constant dense<0.000000e+00> : vector<16x4xf32>
    %246 = tpu.matmul %0, %245, %cst_194 {dimension_numbers = #tpu.dot_dimension_numbers<[1], [0], [0], [1], [0, 0, 1, 1], [], []>} : vector<16x12xf32>, vector<12x4xf32>, vector<16x4xf32> -> vector<16x4xf32>
    %247 = arith.addf %246, %10 : vector<16x4xf32>
    %cst_195 = arith.constant 0.000000e+00 : f32
    %248 = vector.broadcast %cst_195 : f32 to vector<16x4xf32>
    %249 = arith.maximumf %247, %248 : vector<16x4xf32>
    %250 = tpu.concatenate %231, %237, %243, %249 in 0 : vector<16x4xf32>, vector<16x4xf32>, vector<16x4xf32>, vector<16x4xf32> -> vector<64x4xf32>
    %cst_196 = arith.constant dense<0.000000e+00> : vector<16x4xf32>
    %251 = tpu.matmul %2, %250, %cst_196 {dimension_numbers = #tpu.dot_dimension_numbers<[1], [0], [0], [1], [0, 0, 1, 1], [], []>} : vector<16x64xf32>, vector<64x4xf32>, vector<16x4xf32> -> vector<16x4xf32>
    %252 = arith.addf %251, %14 : vector<16x4xf32>
    %cst_197 = arith.constant 0.000000e+00 : f32
    %253 = vector.broadcast %cst_197 : f32 to vector<16x4xf32>
    %254 = arith.maximumf %252, %253 : vector<16x4xf32>
    %c0_198 = arith.constant 0 : index
    %c32 = arith.constant 32 : index
    %c0_199 = arith.constant 0 : index
    %c0_200 = arith.constant 0 : index
    %255 = vector.load %arg1[%c0_198, %c32, %c0_199, %c0_200] : memref<1x64x12x4xf32, #tpu.memory_space<vmem>>, vector<1x1x12x4xf32>
    %256 = vector.shape_cast %255 : vector<1x1x12x4xf32> to vector<12x4xf32>
    %cst_201 = arith.constant dense<0.000000e+00> : vector<16x4xf32>
    %257 = tpu.matmul %0, %256, %cst_201 {dimension_numbers = #tpu.dot_dimension_numbers<[1], [0], [0], [1], [0, 0, 1, 1], [], []>} : vector<16x12xf32>, vector<12x4xf32>, vector<16x4xf32> -> vector<16x4xf32>
    %258 = arith.addf %257, %10 : vector<16x4xf32>
    %cst_202 = arith.constant 0.000000e+00 : f32
    %259 = vector.broadcast %cst_202 : f32 to vector<16x4xf32>
    %260 = arith.maximumf %258, %259 : vector<16x4xf32>
    %c0_203 = arith.constant 0 : index
    %c33 = arith.constant 33 : index
    %c0_204 = arith.constant 0 : index
    %c0_205 = arith.constant 0 : index
    %261 = vector.load %arg1[%c0_203, %c33, %c0_204, %c0_205] : memref<1x64x12x4xf32, #tpu.memory_space<vmem>>, vector<1x1x12x4xf32>
    %262 = vector.shape_cast %261 : vector<1x1x12x4xf32> to vector<12x4xf32>
    %cst_206 = arith.constant dense<0.000000e+00> : vector<16x4xf32>
    %263 = tpu.matmul %0, %262, %cst_206 {dimension_numbers = #tpu.dot_dimension_numbers<[1], [0], [0], [1], [0, 0, 1, 1], [], []>} : vector<16x12xf32>, vector<12x4xf32>, vector<16x4xf32> -> vector<16x4xf32>
    %264 = arith.addf %263, %10 : vector<16x4xf32>
    %cst_207 = arith.constant 0.000000e+00 : f32
    %265 = vector.broadcast %cst_207 : f32 to vector<16x4xf32>
    %266 = arith.maximumf %264, %265 : vector<16x4xf32>
    %c0_208 = arith.constant 0 : index
    %c34 = arith.constant 34 : index
    %c0_209 = arith.constant 0 : index
    %c0_210 = arith.constant 0 : index
    %267 = vector.load %arg1[%c0_208, %c34, %c0_209, %c0_210] : memref<1x64x12x4xf32, #tpu.memory_space<vmem>>, vector<1x1x12x4xf32>
    %268 = vector.shape_cast %267 : vector<1x1x12x4xf32> to vector<12x4xf32>
    %cst_211 = arith.constant dense<0.000000e+00> : vector<16x4xf32>
    %269 = tpu.matmul %0, %268, %cst_211 {dimension_numbers = #tpu.dot_dimension_numbers<[1], [0], [0], [1], [0, 0, 1, 1], [], []>} : vector<16x12xf32>, vector<12x4xf32>, vector<16x4xf32> -> vector<16x4xf32>
    %270 = arith.addf %269, %10 : vector<16x4xf32>
    %cst_212 = arith.constant 0.000000e+00 : f32
    %271 = vector.broadcast %cst_212 : f32 to vector<16x4xf32>
    %272 = arith.maximumf %270, %271 : vector<16x4xf32>
    %c0_213 = arith.constant 0 : index
    %c35 = arith.constant 35 : index
    %c0_214 = arith.constant 0 : index
    %c0_215 = arith.constant 0 : index
    %273 = vector.load %arg1[%c0_213, %c35, %c0_214, %c0_215] : memref<1x64x12x4xf32, #tpu.memory_space<vmem>>, vector<1x1x12x4xf32>
    %274 = vector.shape_cast %273 : vector<1x1x12x4xf32> to vector<12x4xf32>
    %cst_216 = arith.constant dense<0.000000e+00> : vector<16x4xf32>
    %275 = tpu.matmul %0, %274, %cst_216 {dimension_numbers = #tpu.dot_dimension_numbers<[1], [0], [0], [1], [0, 0, 1, 1], [], []>} : vector<16x12xf32>, vector<12x4xf32>, vector<16x4xf32> -> vector<16x4xf32>
    %276 = arith.addf %275, %10 : vector<16x4xf32>
    %cst_217 = arith.constant 0.000000e+00 : f32
    %277 = vector.broadcast %cst_217 : f32 to vector<16x4xf32>
    %278 = arith.maximumf %276, %277 : vector<16x4xf32>
    %279 = tpu.concatenate %260, %266, %272, %278 in 0 : vector<16x4xf32>, vector<16x4xf32>, vector<16x4xf32>, vector<16x4xf32> -> vector<64x4xf32>
    %cst_218 = arith.constant dense<0.000000e+00> : vector<16x4xf32>
    %280 = tpu.matmul %2, %279, %cst_218 {dimension_numbers = #tpu.dot_dimension_numbers<[1], [0], [0], [1], [0, 0, 1, 1], [], []>} : vector<16x64xf32>, vector<64x4xf32>, vector<16x4xf32> -> vector<16x4xf32>
    %281 = arith.addf %280, %14 : vector<16x4xf32>
    %cst_219 = arith.constant 0.000000e+00 : f32
    %282 = vector.broadcast %cst_219 : f32 to vector<16x4xf32>
    %283 = arith.maximumf %281, %282 : vector<16x4xf32>
    %c0_220 = arith.constant 0 : index
    %c36 = arith.constant 36 : index
    %c0_221 = arith.constant 0 : index
    %c0_222 = arith.constant 0 : index
    %284 = vector.load %arg1[%c0_220, %c36, %c0_221, %c0_222] : memref<1x64x12x4xf32, #tpu.memory_space<vmem>>, vector<1x1x12x4xf32>
    %285 = vector.shape_cast %284 : vector<1x1x12x4xf32> to vector<12x4xf32>
    %cst_223 = arith.constant dense<0.000000e+00> : vector<16x4xf32>
    %286 = tpu.matmul %0, %285, %cst_223 {dimension_numbers = #tpu.dot_dimension_numbers<[1], [0], [0], [1], [0, 0, 1, 1], [], []>} : vector<16x12xf32>, vector<12x4xf32>, vector<16x4xf32> -> vector<16x4xf32>
    %287 = arith.addf %286, %10 : vector<16x4xf32>
    %cst_224 = arith.constant 0.000000e+00 : f32
    %288 = vector.broadcast %cst_224 : f32 to vector<16x4xf32>
    %289 = arith.maximumf %287, %288 : vector<16x4xf32>
    %c0_225 = arith.constant 0 : index
    %c37 = arith.constant 37 : index
    %c0_226 = arith.constant 0 : index
    %c0_227 = arith.constant 0 : index
    %290 = vector.load %arg1[%c0_225, %c37, %c0_226, %c0_227] : memref<1x64x12x4xf32, #tpu.memory_space<vmem>>, vector<1x1x12x4xf32>
    %291 = vector.shape_cast %290 : vector<1x1x12x4xf32> to vector<12x4xf32>
    %cst_228 = arith.constant dense<0.000000e+00> : vector<16x4xf32>
    %292 = tpu.matmul %0, %291, %cst_228 {dimension_numbers = #tpu.dot_dimension_numbers<[1], [0], [0], [1], [0, 0, 1, 1], [], []>} : vector<16x12xf32>, vector<12x4xf32>, vector<16x4xf32> -> vector<16x4xf32>
    %293 = arith.addf %292, %10 : vector<16x4xf32>
    %cst_229 = arith.constant 0.000000e+00 : f32
    %294 = vector.broadcast %cst_229 : f32 to vector<16x4xf32>
    %295 = arith.maximumf %293, %294 : vector<16x4xf32>
    %c0_230 = arith.constant 0 : index
    %c38 = arith.constant 38 : index
    %c0_231 = arith.constant 0 : index
    %c0_232 = arith.constant 0 : index
    %296 = vector.load %arg1[%c0_230, %c38, %c0_231, %c0_232] : memref<1x64x12x4xf32, #tpu.memory_space<vmem>>, vector<1x1x12x4xf32>
    %297 = vector.shape_cast %296 : vector<1x1x12x4xf32> to vector<12x4xf32>
    %cst_233 = arith.constant dense<0.000000e+00> : vector<16x4xf32>
    %298 = tpu.matmul %0, %297, %cst_233 {dimension_numbers = #tpu.dot_dimension_numbers<[1], [0], [0], [1], [0, 0, 1, 1], [], []>} : vector<16x12xf32>, vector<12x4xf32>, vector<16x4xf32> -> vector<16x4xf32>
    %299 = arith.addf %298, %10 : vector<16x4xf32>
    %cst_234 = arith.constant 0.000000e+00 : f32
    %300 = vector.broadcast %cst_234 : f32 to vector<16x4xf32>
    %301 = arith.maximumf %299, %300 : vector<16x4xf32>
    %c0_235 = arith.constant 0 : index
    %c39 = arith.constant 39 : index
    %c0_236 = arith.constant 0 : index
    %c0_237 = arith.constant 0 : index
    %302 = vector.load %arg1[%c0_235, %c39, %c0_236, %c0_237] : memref<1x64x12x4xf32, #tpu.memory_space<vmem>>, vector<1x1x12x4xf32>
    %303 = vector.shape_cast %302 : vector<1x1x12x4xf32> to vector<12x4xf32>
    %cst_238 = arith.constant dense<0.000000e+00> : vector<16x4xf32>
    %304 = tpu.matmul %0, %303, %cst_238 {dimension_numbers = #tpu.dot_dimension_numbers<[1], [0], [0], [1], [0, 0, 1, 1], [], []>} : vector<16x12xf32>, vector<12x4xf32>, vector<16x4xf32> -> vector<16x4xf32>
    %305 = arith.addf %304, %10 : vector<16x4xf32>
    %cst_239 = arith.constant 0.000000e+00 : f32
    %306 = vector.broadcast %cst_239 : f32 to vector<16x4xf32>
    %307 = arith.maximumf %305, %306 : vector<16x4xf32>
    %308 = tpu.concatenate %289, %295, %301, %307 in 0 : vector<16x4xf32>, vector<16x4xf32>, vector<16x4xf32>, vector<16x4xf32> -> vector<64x4xf32>
    %cst_240 = arith.constant dense<0.000000e+00> : vector<16x4xf32>
    %309 = tpu.matmul %2, %308, %cst_240 {dimension_numbers = #tpu.dot_dimension_numbers<[1], [0], [0], [1], [0, 0, 1, 1], [], []>} : vector<16x64xf32>, vector<64x4xf32>, vector<16x4xf32> -> vector<16x4xf32>
    %310 = arith.addf %309, %14 : vector<16x4xf32>
    %cst_241 = arith.constant 0.000000e+00 : f32
    %311 = vector.broadcast %cst_241 : f32 to vector<16x4xf32>
    %312 = arith.maximumf %310, %311 : vector<16x4xf32>
    %c0_242 = arith.constant 0 : index
    %c40 = arith.constant 40 : index
    %c0_243 = arith.constant 0 : index
    %c0_244 = arith.constant 0 : index
    %313 = vector.load %arg1[%c0_242, %c40, %c0_243, %c0_244] : memref<1x64x12x4xf32, #tpu.memory_space<vmem>>, vector<1x1x12x4xf32>
    %314 = vector.shape_cast %313 : vector<1x1x12x4xf32> to vector<12x4xf32>
    %cst_245 = arith.constant dense<0.000000e+00> : vector<16x4xf32>
    %315 = tpu.matmul %0, %314, %cst_245 {dimension_numbers = #tpu.dot_dimension_numbers<[1], [0], [0], [1], [0, 0, 1, 1], [], []>} : vector<16x12xf32>, vector<12x4xf32>, vector<16x4xf32> -> vector<16x4xf32>
    %316 = arith.addf %315, %10 : vector<16x4xf32>
    %cst_246 = arith.constant 0.000000e+00 : f32
    %317 = vector.broadcast %cst_246 : f32 to vector<16x4xf32>
    %318 = arith.maximumf %316, %317 : vector<16x4xf32>
    %c0_247 = arith.constant 0 : index
    %c41 = arith.constant 41 : index
    %c0_248 = arith.constant 0 : index
    %c0_249 = arith.constant 0 : index
    %319 = vector.load %arg1[%c0_247, %c41, %c0_248, %c0_249] : memref<1x64x12x4xf32, #tpu.memory_space<vmem>>, vector<1x1x12x4xf32>
    %320 = vector.shape_cast %319 : vector<1x1x12x4xf32> to vector<12x4xf32>
    %cst_250 = arith.constant dense<0.000000e+00> : vector<16x4xf32>
    %321 = tpu.matmul %0, %320, %cst_250 {dimension_numbers = #tpu.dot_dimension_numbers<[1], [0], [0], [1], [0, 0, 1, 1], [], []>} : vector<16x12xf32>, vector<12x4xf32>, vector<16x4xf32> -> vector<16x4xf32>
    %322 = arith.addf %321, %10 : vector<16x4xf32>
    %cst_251 = arith.constant 0.000000e+00 : f32
    %323 = vector.broadcast %cst_251 : f32 to vector<16x4xf32>
    %324 = arith.maximumf %322, %323 : vector<16x4xf32>
    %c0_252 = arith.constant 0 : index
    %c42 = arith.constant 42 : index
    %c0_253 = arith.constant 0 : index
    %c0_254 = arith.constant 0 : index
    %325 = vector.load %arg1[%c0_252, %c42, %c0_253, %c0_254] : memref<1x64x12x4xf32, #tpu.memory_space<vmem>>, vector<1x1x12x4xf32>
    %326 = vector.shape_cast %325 : vector<1x1x12x4xf32> to vector<12x4xf32>
    %cst_255 = arith.constant dense<0.000000e+00> : vector<16x4xf32>
    %327 = tpu.matmul %0, %326, %cst_255 {dimension_numbers = #tpu.dot_dimension_numbers<[1], [0], [0], [1], [0, 0, 1, 1], [], []>} : vector<16x12xf32>, vector<12x4xf32>, vector<16x4xf32> -> vector<16x4xf32>
    %328 = arith.addf %327, %10 : vector<16x4xf32>
    %cst_256 = arith.constant 0.000000e+00 : f32
    %329 = vector.broadcast %cst_256 : f32 to vector<16x4xf32>
    %330 = arith.maximumf %328, %329 : vector<16x4xf32>
    %c0_257 = arith.constant 0 : index
    %c43 = arith.constant 43 : index
    %c0_258 = arith.constant 0 : index
    %c0_259 = arith.constant 0 : index
    %331 = vector.load %arg1[%c0_257, %c43, %c0_258, %c0_259] : memref<1x64x12x4xf32, #tpu.memory_space<vmem>>, vector<1x1x12x4xf32>
    %332 = vector.shape_cast %331 : vector<1x1x12x4xf32> to vector<12x4xf32>
    %cst_260 = arith.constant dense<0.000000e+00> : vector<16x4xf32>
    %333 = tpu.matmul %0, %332, %cst_260 {dimension_numbers = #tpu.dot_dimension_numbers<[1], [0], [0], [1], [0, 0, 1, 1], [], []>} : vector<16x12xf32>, vector<12x4xf32>, vector<16x4xf32> -> vector<16x4xf32>
    %334 = arith.addf %333, %10 : vector<16x4xf32>
    %cst_261 = arith.constant 0.000000e+00 : f32
    %335 = vector.broadcast %cst_261 : f32 to vector<16x4xf32>
    %336 = arith.maximumf %334, %335 : vector<16x4xf32>
    %337 = tpu.concatenate %318, %324, %330, %336 in 0 : vector<16x4xf32>, vector<16x4xf32>, vector<16x4xf32>, vector<16x4xf32> -> vector<64x4xf32>
    %cst_262 = arith.constant dense<0.000000e+00> : vector<16x4xf32>
    %338 = tpu.matmul %2, %337, %cst_262 {dimension_numbers = #tpu.dot_dimension_numbers<[1], [0], [0], [1], [0, 0, 1, 1], [], []>} : vector<16x64xf32>, vector<64x4xf32>, vector<16x4xf32> -> vector<16x4xf32>
    %339 = arith.addf %338, %14 : vector<16x4xf32>
    %cst_263 = arith.constant 0.000000e+00 : f32
    %340 = vector.broadcast %cst_263 : f32 to vector<16x4xf32>
    %341 = arith.maximumf %339, %340 : vector<16x4xf32>
    %c0_264 = arith.constant 0 : index
    %c44 = arith.constant 44 : index
    %c0_265 = arith.constant 0 : index
    %c0_266 = arith.constant 0 : index
    %342 = vector.load %arg1[%c0_264, %c44, %c0_265, %c0_266] : memref<1x64x12x4xf32, #tpu.memory_space<vmem>>, vector<1x1x12x4xf32>
    %343 = vector.shape_cast %342 : vector<1x1x12x4xf32> to vector<12x4xf32>
    %cst_267 = arith.constant dense<0.000000e+00> : vector<16x4xf32>
    %344 = tpu.matmul %0, %343, %cst_267 {dimension_numbers = #tpu.dot_dimension_numbers<[1], [0], [0], [1], [0, 0, 1, 1], [], []>} : vector<16x12xf32>, vector<12x4xf32>, vector<16x4xf32> -> vector<16x4xf32>
    %345 = arith.addf %344, %10 : vector<16x4xf32>
    %cst_268 = arith.constant 0.000000e+00 : f32
    %346 = vector.broadcast %cst_268 : f32 to vector<16x4xf32>
    %347 = arith.maximumf %345, %346 : vector<16x4xf32>
    %c0_269 = arith.constant 0 : index
    %c45 = arith.constant 45 : index
    %c0_270 = arith.constant 0 : index
    %c0_271 = arith.constant 0 : index
    %348 = vector.load %arg1[%c0_269, %c45, %c0_270, %c0_271] : memref<1x64x12x4xf32, #tpu.memory_space<vmem>>, vector<1x1x12x4xf32>
    %349 = vector.shape_cast %348 : vector<1x1x12x4xf32> to vector<12x4xf32>
    %cst_272 = arith.constant dense<0.000000e+00> : vector<16x4xf32>
    %350 = tpu.matmul %0, %349, %cst_272 {dimension_numbers = #tpu.dot_dimension_numbers<[1], [0], [0], [1], [0, 0, 1, 1], [], []>} : vector<16x12xf32>, vector<12x4xf32>, vector<16x4xf32> -> vector<16x4xf32>
    %351 = arith.addf %350, %10 : vector<16x4xf32>
    %cst_273 = arith.constant 0.000000e+00 : f32
    %352 = vector.broadcast %cst_273 : f32 to vector<16x4xf32>
    %353 = arith.maximumf %351, %352 : vector<16x4xf32>
    %c0_274 = arith.constant 0 : index
    %c46 = arith.constant 46 : index
    %c0_275 = arith.constant 0 : index
    %c0_276 = arith.constant 0 : index
    %354 = vector.load %arg1[%c0_274, %c46, %c0_275, %c0_276] : memref<1x64x12x4xf32, #tpu.memory_space<vmem>>, vector<1x1x12x4xf32>
    %355 = vector.shape_cast %354 : vector<1x1x12x4xf32> to vector<12x4xf32>
    %cst_277 = arith.constant dense<0.000000e+00> : vector<16x4xf32>
    %356 = tpu.matmul %0, %355, %cst_277 {dimension_numbers = #tpu.dot_dimension_numbers<[1], [0], [0], [1], [0, 0, 1, 1], [], []>} : vector<16x12xf32>, vector<12x4xf32>, vector<16x4xf32> -> vector<16x4xf32>
    %357 = arith.addf %356, %10 : vector<16x4xf32>
    %cst_278 = arith.constant 0.000000e+00 : f32
    %358 = vector.broadcast %cst_278 : f32 to vector<16x4xf32>
    %359 = arith.maximumf %357, %358 : vector<16x4xf32>
    %c0_279 = arith.constant 0 : index
    %c47 = arith.constant 47 : index
    %c0_280 = arith.constant 0 : index
    %c0_281 = arith.constant 0 : index
    %360 = vector.load %arg1[%c0_279, %c47, %c0_280, %c0_281] : memref<1x64x12x4xf32, #tpu.memory_space<vmem>>, vector<1x1x12x4xf32>
    %361 = vector.shape_cast %360 : vector<1x1x12x4xf32> to vector<12x4xf32>
    %cst_282 = arith.constant dense<0.000000e+00> : vector<16x4xf32>
    %362 = tpu.matmul %0, %361, %cst_282 {dimension_numbers = #tpu.dot_dimension_numbers<[1], [0], [0], [1], [0, 0, 1, 1], [], []>} : vector<16x12xf32>, vector<12x4xf32>, vector<16x4xf32> -> vector<16x4xf32>
    %363 = arith.addf %362, %10 : vector<16x4xf32>
    %cst_283 = arith.constant 0.000000e+00 : f32
    %364 = vector.broadcast %cst_283 : f32 to vector<16x4xf32>
    %365 = arith.maximumf %363, %364 : vector<16x4xf32>
    %366 = tpu.concatenate %347, %353, %359, %365 in 0 : vector<16x4xf32>, vector<16x4xf32>, vector<16x4xf32>, vector<16x4xf32> -> vector<64x4xf32>
    %cst_284 = arith.constant dense<0.000000e+00> : vector<16x4xf32>
    %367 = tpu.matmul %2, %366, %cst_284 {dimension_numbers = #tpu.dot_dimension_numbers<[1], [0], [0], [1], [0, 0, 1, 1], [], []>} : vector<16x64xf32>, vector<64x4xf32>, vector<16x4xf32> -> vector<16x4xf32>
    %368 = arith.addf %367, %14 : vector<16x4xf32>
    %cst_285 = arith.constant 0.000000e+00 : f32
    %369 = vector.broadcast %cst_285 : f32 to vector<16x4xf32>
    %370 = arith.maximumf %368, %369 : vector<16x4xf32>
    %c0_286 = arith.constant 0 : index
    %c48 = arith.constant 48 : index
    %c0_287 = arith.constant 0 : index
    %c0_288 = arith.constant 0 : index
    %371 = vector.load %arg1[%c0_286, %c48, %c0_287, %c0_288] : memref<1x64x12x4xf32, #tpu.memory_space<vmem>>, vector<1x1x12x4xf32>
    %372 = vector.shape_cast %371 : vector<1x1x12x4xf32> to vector<12x4xf32>
    %cst_289 = arith.constant dense<0.000000e+00> : vector<16x4xf32>
    %373 = tpu.matmul %0, %372, %cst_289 {dimension_numbers = #tpu.dot_dimension_numbers<[1], [0], [0], [1], [0, 0, 1, 1], [], []>} : vector<16x12xf32>, vector<12x4xf32>, vector<16x4xf32> -> vector<16x4xf32>
    %374 = arith.addf %373, %10 : vector<16x4xf32>
    %cst_290 = arith.constant 0.000000e+00 : f32
    %375 = vector.broadcast %cst_290 : f32 to vector<16x4xf32>
    %376 = arith.maximumf %374, %375 : vector<16x4xf32>
    %c0_291 = arith.constant 0 : index
    %c49 = arith.constant 49 : index
    %c0_292 = arith.constant 0 : index
    %c0_293 = arith.constant 0 : index
    %377 = vector.load %arg1[%c0_291, %c49, %c0_292, %c0_293] : memref<1x64x12x4xf32, #tpu.memory_space<vmem>>, vector<1x1x12x4xf32>
    %378 = vector.shape_cast %377 : vector<1x1x12x4xf32> to vector<12x4xf32>
    %cst_294 = arith.constant dense<0.000000e+00> : vector<16x4xf32>
    %379 = tpu.matmul %0, %378, %cst_294 {dimension_numbers = #tpu.dot_dimension_numbers<[1], [0], [0], [1], [0, 0, 1, 1], [], []>} : vector<16x12xf32>, vector<12x4xf32>, vector<16x4xf32> -> vector<16x4xf32>
    %380 = arith.addf %379, %10 : vector<16x4xf32>
    %cst_295 = arith.constant 0.000000e+00 : f32
    %381 = vector.broadcast %cst_295 : f32 to vector<16x4xf32>
    %382 = arith.maximumf %380, %381 : vector<16x4xf32>
    %c0_296 = arith.constant 0 : index
    %c50 = arith.constant 50 : index
    %c0_297 = arith.constant 0 : index
    %c0_298 = arith.constant 0 : index
    %383 = vector.load %arg1[%c0_296, %c50, %c0_297, %c0_298] : memref<1x64x12x4xf32, #tpu.memory_space<vmem>>, vector<1x1x12x4xf32>
    %384 = vector.shape_cast %383 : vector<1x1x12x4xf32> to vector<12x4xf32>
    %cst_299 = arith.constant dense<0.000000e+00> : vector<16x4xf32>
    %385 = tpu.matmul %0, %384, %cst_299 {dimension_numbers = #tpu.dot_dimension_numbers<[1], [0], [0], [1], [0, 0, 1, 1], [], []>} : vector<16x12xf32>, vector<12x4xf32>, vector<16x4xf32> -> vector<16x4xf32>
    %386 = arith.addf %385, %10 : vector<16x4xf32>
    %cst_300 = arith.constant 0.000000e+00 : f32
    %387 = vector.broadcast %cst_300 : f32 to vector<16x4xf32>
    %388 = arith.maximumf %386, %387 : vector<16x4xf32>
    %c0_301 = arith.constant 0 : index
    %c51 = arith.constant 51 : index
    %c0_302 = arith.constant 0 : index
    %c0_303 = arith.constant 0 : index
    %389 = vector.load %arg1[%c0_301, %c51, %c0_302, %c0_303] : memref<1x64x12x4xf32, #tpu.memory_space<vmem>>, vector<1x1x12x4xf32>
    %390 = vector.shape_cast %389 : vector<1x1x12x4xf32> to vector<12x4xf32>
    %cst_304 = arith.constant dense<0.000000e+00> : vector<16x4xf32>
    %391 = tpu.matmul %0, %390, %cst_304 {dimension_numbers = #tpu.dot_dimension_numbers<[1], [0], [0], [1], [0, 0, 1, 1], [], []>} : vector<16x12xf32>, vector<12x4xf32>, vector<16x4xf32> -> vector<16x4xf32>
    %392 = arith.addf %391, %10 : vector<16x4xf32>
    %cst_305 = arith.constant 0.000000e+00 : f32
    %393 = vector.broadcast %cst_305 : f32 to vector<16x4xf32>
    %394 = arith.maximumf %392, %393 : vector<16x4xf32>
    %395 = tpu.concatenate %376, %382, %388, %394 in 0 : vector<16x4xf32>, vector<16x4xf32>, vector<16x4xf32>, vector<16x4xf32> -> vector<64x4xf32>
    %cst_306 = arith.constant dense<0.000000e+00> : vector<16x4xf32>
    %396 = tpu.matmul %2, %395, %cst_306 {dimension_numbers = #tpu.dot_dimension_numbers<[1], [0], [0], [1], [0, 0, 1, 1], [], []>} : vector<16x64xf32>, vector<64x4xf32>, vector<16x4xf32> -> vector<16x4xf32>
    %397 = arith.addf %396, %14 : vector<16x4xf32>
    %cst_307 = arith.constant 0.000000e+00 : f32
    %398 = vector.broadcast %cst_307 : f32 to vector<16x4xf32>
    %399 = arith.maximumf %397, %398 : vector<16x4xf32>
    %c0_308 = arith.constant 0 : index
    %c52 = arith.constant 52 : index
    %c0_309 = arith.constant 0 : index
    %c0_310 = arith.constant 0 : index
    %400 = vector.load %arg1[%c0_308, %c52, %c0_309, %c0_310] : memref<1x64x12x4xf32, #tpu.memory_space<vmem>>, vector<1x1x12x4xf32>
    %401 = vector.shape_cast %400 : vector<1x1x12x4xf32> to vector<12x4xf32>
    %cst_311 = arith.constant dense<0.000000e+00> : vector<16x4xf32>
    %402 = tpu.matmul %0, %401, %cst_311 {dimension_numbers = #tpu.dot_dimension_numbers<[1], [0], [0], [1], [0, 0, 1, 1], [], []>} : vector<16x12xf32>, vector<12x4xf32>, vector<16x4xf32> -> vector<16x4xf32>
    %403 = arith.addf %402, %10 : vector<16x4xf32>
    %cst_312 = arith.constant 0.000000e+00 : f32
    %404 = vector.broadcast %cst_312 : f32 to vector<16x4xf32>
    %405 = arith.maximumf %403, %404 : vector<16x4xf32>
    %c0_313 = arith.constant 0 : index
    %c53 = arith.constant 53 : index
    %c0_314 = arith.constant 0 : index
    %c0_315 = arith.constant 0 : index
    %406 = vector.load %arg1[%c0_313, %c53, %c0_314, %c0_315] : memref<1x64x12x4xf32, #tpu.memory_space<vmem>>, vector<1x1x12x4xf32>
    %407 = vector.shape_cast %406 : vector<1x1x12x4xf32> to vector<12x4xf32>
    %cst_316 = arith.constant dense<0.000000e+00> : vector<16x4xf32>
    %408 = tpu.matmul %0, %407, %cst_316 {dimension_numbers = #tpu.dot_dimension_numbers<[1], [0], [0], [1], [0, 0, 1, 1], [], []>} : vector<16x12xf32>, vector<12x4xf32>, vector<16x4xf32> -> vector<16x4xf32>
    %409 = arith.addf %408, %10 : vector<16x4xf32>
    %cst_317 = arith.constant 0.000000e+00 : f32
    %410 = vector.broadcast %cst_317 : f32 to vector<16x4xf32>
    %411 = arith.maximumf %409, %410 : vector<16x4xf32>
    %c0_318 = arith.constant 0 : index
    %c54 = arith.constant 54 : index
    %c0_319 = arith.constant 0 : index
    %c0_320 = arith.constant 0 : index
    %412 = vector.load %arg1[%c0_318, %c54, %c0_319, %c0_320] : memref<1x64x12x4xf32, #tpu.memory_space<vmem>>, vector<1x1x12x4xf32>
    %413 = vector.shape_cast %412 : vector<1x1x12x4xf32> to vector<12x4xf32>
    %cst_321 = arith.constant dense<0.000000e+00> : vector<16x4xf32>
    %414 = tpu.matmul %0, %413, %cst_321 {dimension_numbers = #tpu.dot_dimension_numbers<[1], [0], [0], [1], [0, 0, 1, 1], [], []>} : vector<16x12xf32>, vector<12x4xf32>, vector<16x4xf32> -> vector<16x4xf32>
    %415 = arith.addf %414, %10 : vector<16x4xf32>
    %cst_322 = arith.constant 0.000000e+00 : f32
    %416 = vector.broadcast %cst_322 : f32 to vector<16x4xf32>
    %417 = arith.maximumf %415, %416 : vector<16x4xf32>
    %c0_323 = arith.constant 0 : index
    %c55 = arith.constant 55 : index
    %c0_324 = arith.constant 0 : index
    %c0_325 = arith.constant 0 : index
    %418 = vector.load %arg1[%c0_323, %c55, %c0_324, %c0_325] : memref<1x64x12x4xf32, #tpu.memory_space<vmem>>, vector<1x1x12x4xf32>
    %419 = vector.shape_cast %418 : vector<1x1x12x4xf32> to vector<12x4xf32>
    %cst_326 = arith.constant dense<0.000000e+00> : vector<16x4xf32>
    %420 = tpu.matmul %0, %419, %cst_326 {dimension_numbers = #tpu.dot_dimension_numbers<[1], [0], [0], [1], [0, 0, 1, 1], [], []>} : vector<16x12xf32>, vector<12x4xf32>, vector<16x4xf32> -> vector<16x4xf32>
    %421 = arith.addf %420, %10 : vector<16x4xf32>
    %cst_327 = arith.constant 0.000000e+00 : f32
    %422 = vector.broadcast %cst_327 : f32 to vector<16x4xf32>
    %423 = arith.maximumf %421, %422 : vector<16x4xf32>
    %424 = tpu.concatenate %405, %411, %417, %423 in 0 : vector<16x4xf32>, vector<16x4xf32>, vector<16x4xf32>, vector<16x4xf32> -> vector<64x4xf32>
    %cst_328 = arith.constant dense<0.000000e+00> : vector<16x4xf32>
    %425 = tpu.matmul %2, %424, %cst_328 {dimension_numbers = #tpu.dot_dimension_numbers<[1], [0], [0], [1], [0, 0, 1, 1], [], []>} : vector<16x64xf32>, vector<64x4xf32>, vector<16x4xf32> -> vector<16x4xf32>
    %426 = arith.addf %425, %14 : vector<16x4xf32>
    %cst_329 = arith.constant 0.000000e+00 : f32
    %427 = vector.broadcast %cst_329 : f32 to vector<16x4xf32>
    %428 = arith.maximumf %426, %427 : vector<16x4xf32>
    %c0_330 = arith.constant 0 : index
    %c56 = arith.constant 56 : index
    %c0_331 = arith.constant 0 : index
    %c0_332 = arith.constant 0 : index
    %429 = vector.load %arg1[%c0_330, %c56, %c0_331, %c0_332] : memref<1x64x12x4xf32, #tpu.memory_space<vmem>>, vector<1x1x12x4xf32>
    %430 = vector.shape_cast %429 : vector<1x1x12x4xf32> to vector<12x4xf32>
    %cst_333 = arith.constant dense<0.000000e+00> : vector<16x4xf32>
    %431 = tpu.matmul %0, %430, %cst_333 {dimension_numbers = #tpu.dot_dimension_numbers<[1], [0], [0], [1], [0, 0, 1, 1], [], []>} : vector<16x12xf32>, vector<12x4xf32>, vector<16x4xf32> -> vector<16x4xf32>
    %432 = arith.addf %431, %10 : vector<16x4xf32>
    %cst_334 = arith.constant 0.000000e+00 : f32
    %433 = vector.broadcast %cst_334 : f32 to vector<16x4xf32>
    %434 = arith.maximumf %432, %433 : vector<16x4xf32>
    %c0_335 = arith.constant 0 : index
    %c57 = arith.constant 57 : index
    %c0_336 = arith.constant 0 : index
    %c0_337 = arith.constant 0 : index
    %435 = vector.load %arg1[%c0_335, %c57, %c0_336, %c0_337] : memref<1x64x12x4xf32, #tpu.memory_space<vmem>>, vector<1x1x12x4xf32>
    %436 = vector.shape_cast %435 : vector<1x1x12x4xf32> to vector<12x4xf32>
    %cst_338 = arith.constant dense<0.000000e+00> : vector<16x4xf32>
    %437 = tpu.matmul %0, %436, %cst_338 {dimension_numbers = #tpu.dot_dimension_numbers<[1], [0], [0], [1], [0, 0, 1, 1], [], []>} : vector<16x12xf32>, vector<12x4xf32>, vector<16x4xf32> -> vector<16x4xf32>
    %438 = arith.addf %437, %10 : vector<16x4xf32>
    %cst_339 = arith.constant 0.000000e+00 : f32
    %439 = vector.broadcast %cst_339 : f32 to vector<16x4xf32>
    %440 = arith.maximumf %438, %439 : vector<16x4xf32>
    %c0_340 = arith.constant 0 : index
    %c58 = arith.constant 58 : index
    %c0_341 = arith.constant 0 : index
    %c0_342 = arith.constant 0 : index
    %441 = vector.load %arg1[%c0_340, %c58, %c0_341, %c0_342] : memref<1x64x12x4xf32, #tpu.memory_space<vmem>>, vector<1x1x12x4xf32>
    %442 = vector.shape_cast %441 : vector<1x1x12x4xf32> to vector<12x4xf32>
    %cst_343 = arith.constant dense<0.000000e+00> : vector<16x4xf32>
    %443 = tpu.matmul %0, %442, %cst_343 {dimension_numbers = #tpu.dot_dimension_numbers<[1], [0], [0], [1], [0, 0, 1, 1], [], []>} : vector<16x12xf32>, vector<12x4xf32>, vector<16x4xf32> -> vector<16x4xf32>
    %444 = arith.addf %443, %10 : vector<16x4xf32>
    %cst_344 = arith.constant 0.000000e+00 : f32
    %445 = vector.broadcast %cst_344 : f32 to vector<16x4xf32>
    %446 = arith.maximumf %444, %445 : vector<16x4xf32>
    %c0_345 = arith.constant 0 : index
    %c59 = arith.constant 59 : index
    %c0_346 = arith.constant 0 : index
    %c0_347 = arith.constant 0 : index
    %447 = vector.load %arg1[%c0_345, %c59, %c0_346, %c0_347] : memref<1x64x12x4xf32, #tpu.memory_space<vmem>>, vector<1x1x12x4xf32>
    %448 = vector.shape_cast %447 : vector<1x1x12x4xf32> to vector<12x4xf32>
    %cst_348 = arith.constant dense<0.000000e+00> : vector<16x4xf32>
    %449 = tpu.matmul %0, %448, %cst_348 {dimension_numbers = #tpu.dot_dimension_numbers<[1], [0], [0], [1], [0, 0, 1, 1], [], []>} : vector<16x12xf32>, vector<12x4xf32>, vector<16x4xf32> -> vector<16x4xf32>
    %450 = arith.addf %449, %10 : vector<16x4xf32>
    %cst_349 = arith.constant 0.000000e+00 : f32
    %451 = vector.broadcast %cst_349 : f32 to vector<16x4xf32>
    %452 = arith.maximumf %450, %451 : vector<16x4xf32>
    %453 = tpu.concatenate %434, %440, %446, %452 in 0 : vector<16x4xf32>, vector<16x4xf32>, vector<16x4xf32>, vector<16x4xf32> -> vector<64x4xf32>
    %cst_350 = arith.constant dense<0.000000e+00> : vector<16x4xf32>
    %454 = tpu.matmul %2, %453, %cst_350 {dimension_numbers = #tpu.dot_dimension_numbers<[1], [0], [0], [1], [0, 0, 1, 1], [], []>} : vector<16x64xf32>, vector<64x4xf32>, vector<16x4xf32> -> vector<16x4xf32>
    %455 = arith.addf %454, %14 : vector<16x4xf32>
    %cst_351 = arith.constant 0.000000e+00 : f32
    %456 = vector.broadcast %cst_351 : f32 to vector<16x4xf32>
    %457 = arith.maximumf %455, %456 : vector<16x4xf32>
    %c0_352 = arith.constant 0 : index
    %c60 = arith.constant 60 : index
    %c0_353 = arith.constant 0 : index
    %c0_354 = arith.constant 0 : index
    %458 = vector.load %arg1[%c0_352, %c60, %c0_353, %c0_354] : memref<1x64x12x4xf32, #tpu.memory_space<vmem>>, vector<1x1x12x4xf32>
    %459 = vector.shape_cast %458 : vector<1x1x12x4xf32> to vector<12x4xf32>
    %cst_355 = arith.constant dense<0.000000e+00> : vector<16x4xf32>
    %460 = tpu.matmul %0, %459, %cst_355 {dimension_numbers = #tpu.dot_dimension_numbers<[1], [0], [0], [1], [0, 0, 1, 1], [], []>} : vector<16x12xf32>, vector<12x4xf32>, vector<16x4xf32> -> vector<16x4xf32>
    %461 = arith.addf %460, %10 : vector<16x4xf32>
    %cst_356 = arith.constant 0.000000e+00 : f32
    %462 = vector.broadcast %cst_356 : f32 to vector<16x4xf32>
    %463 = arith.maximumf %461, %462 : vector<16x4xf32>
    %c0_357 = arith.constant 0 : index
    %c61 = arith.constant 61 : index
    %c0_358 = arith.constant 0 : index
    %c0_359 = arith.constant 0 : index
    %464 = vector.load %arg1[%c0_357, %c61, %c0_358, %c0_359] : memref<1x64x12x4xf32, #tpu.memory_space<vmem>>, vector<1x1x12x4xf32>
    %465 = vector.shape_cast %464 : vector<1x1x12x4xf32> to vector<12x4xf32>
    %cst_360 = arith.constant dense<0.000000e+00> : vector<16x4xf32>
    %466 = tpu.matmul %0, %465, %cst_360 {dimension_numbers = #tpu.dot_dimension_numbers<[1], [0], [0], [1], [0, 0, 1, 1], [], []>} : vector<16x12xf32>, vector<12x4xf32>, vector<16x4xf32> -> vector<16x4xf32>
    %467 = arith.addf %466, %10 : vector<16x4xf32>
    %cst_361 = arith.constant 0.000000e+00 : f32
    %468 = vector.broadcast %cst_361 : f32 to vector<16x4xf32>
    %469 = arith.maximumf %467, %468 : vector<16x4xf32>
    %c0_362 = arith.constant 0 : index
    %c62 = arith.constant 62 : index
    %c0_363 = arith.constant 0 : index
    %c0_364 = arith.constant 0 : index
    %470 = vector.load %arg1[%c0_362, %c62, %c0_363, %c0_364] : memref<1x64x12x4xf32, #tpu.memory_space<vmem>>, vector<1x1x12x4xf32>
    %471 = vector.shape_cast %470 : vector<1x1x12x4xf32> to vector<12x4xf32>
    %cst_365 = arith.constant dense<0.000000e+00> : vector<16x4xf32>
    %472 = tpu.matmul %0, %471, %cst_365 {dimension_numbers = #tpu.dot_dimension_numbers<[1], [0], [0], [1], [0, 0, 1, 1], [], []>} : vector<16x12xf32>, vector<12x4xf32>, vector<16x4xf32> -> vector<16x4xf32>
    %473 = arith.addf %472, %10 : vector<16x4xf32>
    %cst_366 = arith.constant 0.000000e+00 : f32
    %474 = vector.broadcast %cst_366 : f32 to vector<16x4xf32>
    %475 = arith.maximumf %473, %474 : vector<16x4xf32>
    %c0_367 = arith.constant 0 : index
    %c63 = arith.constant 63 : index
    %c0_368 = arith.constant 0 : index
    %c0_369 = arith.constant 0 : index
    %476 = vector.load %arg1[%c0_367, %c63, %c0_368, %c0_369] : memref<1x64x12x4xf32, #tpu.memory_space<vmem>>, vector<1x1x12x4xf32>
    %477 = vector.shape_cast %476 : vector<1x1x12x4xf32> to vector<12x4xf32>
    %cst_370 = arith.constant dense<0.000000e+00> : vector<16x4xf32>
    %478 = tpu.matmul %0, %477, %cst_370 {dimension_numbers = #tpu.dot_dimension_numbers<[1], [0], [0], [1], [0, 0, 1, 1], [], []>} : vector<16x12xf32>, vector<12x4xf32>, vector<16x4xf32> -> vector<16x4xf32>
    %479 = arith.addf %478, %10 : vector<16x4xf32>
    %cst_371 = arith.constant 0.000000e+00 : f32
    %480 = vector.broadcast %cst_371 : f32 to vector<16x4xf32>
    %481 = arith.maximumf %479, %480 : vector<16x4xf32>
    %482 = tpu.concatenate %463, %469, %475, %481 in 0 : vector<16x4xf32>, vector<16x4xf32>, vector<16x4xf32>, vector<16x4xf32> -> vector<64x4xf32>
    %cst_372 = arith.constant dense<0.000000e+00> : vector<16x4xf32>
    %483 = tpu.matmul %2, %482, %cst_372 {dimension_numbers = #tpu.dot_dimension_numbers<[1], [0], [0], [1], [0, 0, 1, 1], [], []>} : vector<16x64xf32>, vector<64x4xf32>, vector<16x4xf32> -> vector<16x4xf32>
    %484 = arith.addf %483, %14 : vector<16x4xf32>
    %cst_373 = arith.constant 0.000000e+00 : f32
    %485 = vector.broadcast %cst_373 : f32 to vector<16x4xf32>
    %486 = arith.maximumf %484, %485 : vector<16x4xf32>
    %487 = tpu.concatenate %51, %167, %283, %399 in 0 : vector<16x4xf32>, vector<16x4xf32>, vector<16x4xf32>, vector<16x4xf32> -> vector<64x4xf32>
    %cst_374 = arith.constant dense<0.000000e+00> : vector<16x4xf32>
    %488 = tpu.matmul %4, %487, %cst_374 {dimension_numbers = #tpu.dot_dimension_numbers<[1], [0], [0], [1], [0, 0, 1, 1], [], []>} : vector<16x64xf32>, vector<64x4xf32>, vector<16x4xf32> -> vector<16x4xf32>
    %489 = arith.addf %488, %18 : vector<16x4xf32>
    %cst_375 = arith.constant 0.000000e+00 : f32
    %490 = vector.broadcast %cst_375 : f32 to vector<16x4xf32>
    %491 = arith.maximumf %489, %490 : vector<16x4xf32>
    %492 = tpu.concatenate %80, %196, %312, %428 in 0 : vector<16x4xf32>, vector<16x4xf32>, vector<16x4xf32>, vector<16x4xf32> -> vector<64x4xf32>
    %cst_376 = arith.constant dense<0.000000e+00> : vector<16x4xf32>
    %493 = tpu.matmul %4, %492, %cst_376 {dimension_numbers = #tpu.dot_dimension_numbers<[1], [0], [0], [1], [0, 0, 1, 1], [], []>} : vector<16x64xf32>, vector<64x4xf32>, vector<16x4xf32> -> vector<16x4xf32>
    %494 = arith.addf %493, %18 : vector<16x4xf32>
    %cst_377 = arith.constant 0.000000e+00 : f32
    %495 = vector.broadcast %cst_377 : f32 to vector<16x4xf32>
    %496 = arith.maximumf %494, %495 : vector<16x4xf32>
    %497 = tpu.concatenate %109, %225, %341, %457 in 0 : vector<16x4xf32>, vector<16x4xf32>, vector<16x4xf32>, vector<16x4xf32> -> vector<64x4xf32>
    %cst_378 = arith.constant dense<0.000000e+00> : vector<16x4xf32>
    %498 = tpu.matmul %4, %497, %cst_378 {dimension_numbers = #tpu.dot_dimension_numbers<[1], [0], [0], [1], [0, 0, 1, 1], [], []>} : vector<16x64xf32>, vector<64x4xf32>, vector<16x4xf32> -> vector<16x4xf32>
    %499 = arith.addf %498, %18 : vector<16x4xf32>
    %cst_379 = arith.constant 0.000000e+00 : f32
    %500 = vector.broadcast %cst_379 : f32 to vector<16x4xf32>
    %501 = arith.maximumf %499, %500 : vector<16x4xf32>
    %502 = tpu.concatenate %138, %254, %370, %486 in 0 : vector<16x4xf32>, vector<16x4xf32>, vector<16x4xf32>, vector<16x4xf32> -> vector<64x4xf32>
    %cst_380 = arith.constant dense<0.000000e+00> : vector<16x4xf32>
    %503 = tpu.matmul %4, %502, %cst_380 {dimension_numbers = #tpu.dot_dimension_numbers<[1], [0], [0], [1], [0, 0, 1, 1], [], []>} : vector<16x64xf32>, vector<64x4xf32>, vector<16x4xf32> -> vector<16x4xf32>
    %504 = arith.addf %503, %18 : vector<16x4xf32>
    %cst_381 = arith.constant 0.000000e+00 : f32
    %505 = vector.broadcast %cst_381 : f32 to vector<16x4xf32>
    %506 = arith.maximumf %504, %505 : vector<16x4xf32>
    %507 = tpu.concatenate %491, %496, %501, %506 in 0 : vector<16x4xf32>, vector<16x4xf32>, vector<16x4xf32>, vector<16x4xf32> -> vector<64x4xf32>
    %cst_382 = arith.constant dense<0.000000e+00> : vector<16x4xf32>
    %508 = tpu.matmul %6, %507, %cst_382 {dimension_numbers = #tpu.dot_dimension_numbers<[1], [0], [0], [1], [0, 0, 1, 1], [], []>} : vector<16x64xf32>, vector<64x4xf32>, vector<16x4xf32> -> vector<16x4xf32>
    %509 = arith.addf %508, %22 : vector<16x4xf32>
    %cst_383 = arith.constant 0.000000e+00 : f32
    %510 = vector.broadcast %cst_383 : f32 to vector<16x4xf32>
    %511 = arith.maximumf %509, %510 : vector<16x4xf32>
    %c0_384 = arith.constant 0 : index
    %c0_385 = arith.constant 0 : index
    %c0_386 = arith.constant 0 : index
    %512 = vector.load %arg5[%c0_384, %c0_385, %c0_386] : memref<1x16x4xf32, #tpu.memory_space<vmem>>, vector<1x16x4xf32>
    %513 = vector.shape_cast %512 : vector<1x16x4xf32> to vector<16x4xf32>
    %514 = vector.shape_cast %511 : vector<16x4xf32> to vector<1x16x4xf32>
    tpu.vector_store %arg5[%c0_384, %c0_385, %c0_386], %514 {strides = array<i32>} : memref<1x16x4xf32, #tpu.memory_space<vmem>>, vector<1x16x4xf32>,
    return
  }
  func.func @transform_0(%arg0: i32) -> (i32, i32, i32, i32) {
    %c0_i32 = arith.constant 0 : i32
    %c0_i32_0 = arith.constant 0 : i32
    %c0_i32_1 = arith.constant 0 : i32
    %c0_i32_2 = arith.constant 0 : i32
    return %arg0, %c0_i32, %c0_i32_0, %c0_i32_1 : i32, i32, i32, i32
  }
  func.func @transform_1(%arg0: i32) -> (i32, i32) {
    %c0_i32 = arith.constant 0 : i32
    %c0_i32_0 = arith.constant 0 : i32
    %c0_i32_1 = arith.constant 0 : i32
    return %c0_i32, %c0_i32_0 : i32, i32
  }
  func.func @transform_2(%arg0: i32) -> (i32, i32, i32) {
    %c0_i32 = arith.constant 0 : i32
    %c0_i32_0 = arith.constant 0 : i32
    %c0_i32_1 = arith.constant 0 : i32
    %c0_i32_2 = arith.constant 0 : i32
    return %c0_i32, %c0_i32_0, %c0_i32_1 : i32, i32, i32
  }
  func.func @transform_3(%arg0: i32) -> (i32, i32, i32) {
    %c0_i32 = arith.constant 0 : i32
    %c0_i32_0 = arith.constant 0 : i32
    %c0_i32_1 = arith.constant 0 : i32
    %c0_i32_2 = arith.constant 0 : i32
    return %c0_i32, %c0_i32_0, %c0_i32_1 : i32, i32, i32
  }
  func.func @transform_4(%arg0: i32) -> (i32, i32, i32) {
    %c0_i32 = arith.constant 0 : i32
    %c0_i32_0 = arith.constant 0 : i32
    %c0_i32_1 = arith.constant 0 : i32
    return %arg0, %c0_i32, %c0_i32_0 : i32, i32, i32
  }
}

</mosaic_0001>

<llo_original>
// kernel: conv_module_forward.1
$region0: #{conv_module_forward.1}
  #allocation0 [shape = 'u32[]', space=smem, size = 0x4, offset = 0x4, fixed_abs, tag = 'smem constant byte address 0x4 - core index']
  #allocation1 [shape = 'u32[144,128]{1,0:T(1,128)}', space=vmem, size = 0x12000, scoped, tag = 'internal scratch']
  %s0 = inlined_call_operand.vmem [shape: f32[2,64,12,4], index: 0, kind: input, shape index: {}]
  %s1 = inlined_call_operand.vmem [shape: f32[16,12], index: 1, kind: input, shape index: {}]
  %s2 = inlined_call_operand.vmem [shape: f32[3,16,64], index: 2, kind: input, shape index: {}]
  %s3 = inlined_call_operand.vmem [shape: f32[4,16,1], index: 3, kind: input, shape index: {}]
  %s4 = inlined_call_operand.vmem [shape: f32[2,16,4], index: 4, kind: output, shape index: {}]
  %s5 = sld [smem:[#allocation0]]
  $region49: #{conv_module_forward.1} parent=0
    _
  %s7 = ssub.s32 1, %s5
  %s8 = scalar_select 0, %s7, %s5
  loop: start=0, step=1, limit=4
  $region2: #{conv_module_forward.1} parent=0 // loop_pre_header
    _
  $region3: #{conv_module_forward.1} parent=0 // loop_header
    %s10 = sphi 0, %s14
    %p11 = scmp.ge.s32.totalorder %s10, 4
    %s20 = sphi 0, %s22
    %s23 = sphi 0, %s20
    %s24 = sphi 0, %s23
    %s40 = sphi 0, %s24
    %s44 = sphi 0, %s44
    %s46 = sphi 0, %s44
    %s47 = sphi 0, %s46
    %s61 = sphi 0, %s47
    %s65 = sphi 0, %s65
    %s67 = sphi 0, %s65
    %s68 = sphi 0, %s67
    %s82 = sphi 0, %s68
    %s86 = sphi 0, %s86
    %s88 = sphi 0, %s86
    %s89 = sphi 0, %s88
    %s103 = sphi 0, %s89
    %s109 = sphi 0, %s111
    %s112 = sphi 0, %s109
    %s113 = sphi 0, %s112
    %s129 = sphi 0, %s113
  $region4: #{conv_module_forward.1} parent=0 // loop_header_branch
    %13 = sbr.rel (%p11) target = $region8
  $region5: #{conv_module_forward.1} parent=0 // loop_body
    %s15 = ssub.s32 %s10, 1
    %s16 = ssub.s32 %s10, 2
    %s17 = sadd.s32 %s10, 1
    %s18 = ssub.s32 %s10, %s17
    %p19 = scmp.eq.s32.totalorder %s18, 0
    %s21 = sadd.s32 %s20, 1
    %s22 = scalar_select %p19, %s20, %s21
    %p25 = pneg %p19
    %p26 = scmp.eq.s32.totalorder %s10, 1
    %p27 = por %p25, %p26
    %p28 = scmp.ne.s32.totalorder %s20, %s23
    %p29 = scmp.eq.s32.totalorder %s10, 0
    %p30 = por %p28, %p29
    %p31 = scmp.ne.s32.totalorder %s20, %s23
    %p32 = scmp.eq.s32.totalorder %s15, 1
    %p33 = por %p31, %p32
    %p34 = scmp.ne.s32.totalorder %s23, %s24
    %p35 = scmp.eq.s32.totalorder %s15, 0
    %p36 = por %p34, %p35
    %p37 = scmp.ne.s32.totalorder %s23, %s24
    %p38 = scmp.eq.s32.totalorder %s16, 1
    %p39 = por %p37, %p38
    %p41 = scmp.ne.s32.totalorder %s24, %s40
    %p42 = scmp.eq.s32.totalorder %s16, 0
    %p43 = por %p41, %p42
    %s45 = sadd.s32 %s44, 1
    %p48 = scmp.eq.s32.totalorder %s10, 1
    %p49 = scmp.ne.s32.totalorder %s44, %s46
    %p50 = scmp.eq.s32.totalorder %s10, 0
    %p51 = por %p49, %p50
    %p52 = scmp.ne.s32.totalorder %s44, %s46
    %p53 = scmp.eq.s32.totalorder %s15, 1
    %p54 = por %p52, %p53
    %p55 = scmp.ne.s32.totalorder %s46, %s47
    %p56 = scmp.eq.s32.totalorder %s15, 0
    %p57 = por %p55, %p56
    %p58 = scmp.ne.s32.totalorder %s46, %s47
    %p59 = scmp.eq.s32.totalorder %s16, 1
    %p60 = por %p58, %p59
    %p62 = scmp.ne.s32.totalorder %s47, %s61
    %p63 = scmp.eq.s32.totalorder %s16, 0
    %p64 = por %p62, %p63
    %s66 = sadd.s32 %s65, 1
    %p69 = scmp.eq.s32.totalorder %s10, 1
    %p70 = scmp.ne.s32.totalorder %s65, %s67
    %p71 = scmp.eq.s32.totalorder %s10, 0
    %p72 = por %p70, %p71
    %p73 = scmp.ne.s32.totalorder %s65, %s67
    %p74 = scmp.eq.s32.totalorder %s15, 1
    %p75 = por %p73, %p74
    %p76 = scmp.ne.s32.totalorder %s67, %s68
    %p77 = scmp.eq.s32.totalorder %s15, 0
    %p78 = por %p76, %p77
    %p79 = scmp.ne.s32.totalorder %s67, %s68
    %p80 = scmp.eq.s32.totalorder %s16, 1
    %p81 = por %p79, %p80
    %p83 = scmp.ne.s32.totalorder %s68, %s82
    %p84 = scmp.eq.s32.totalorder %s16, 0
    %p85 = por %p83, %p84
    %s87 = sadd.s32 %s86, 1
    %p90 = scmp.eq.s32.totalorder %s10, 1
    %p91 = scmp.ne.s32.totalorder %s86, %s88
    %p92 = scmp.eq.s32.totalorder %s10, 0
    %p93 = por %p91, %p92
    %p94 = scmp.ne.s32.totalorder %s86, %s88
    %p95 = scmp.eq.s32.totalorder %s15, 1
    %p96 = por %p94, %p95
    %p97 = scmp.ne.s32.totalorder %s88, %s89
    %p98 = scmp.eq.s32.totalorder %s15, 0
    %p99 = por %p97, %p98
    %p100 = scmp.ne.s32.totalorder %s88, %s89
    %p101 = scmp.eq.s32.totalorder %s16, 1
    %p102 = por %p100, %p101
    %p104 = scmp.ne.s32.totalorder %s89, %s103
    %p105 = scmp.eq.s32.totalorder %s16, 0
    %p106 = por %p104, %p105
    %s107 = ssub.s32 %s10, %s17
    %p108 = scmp.eq.s32.totalorder %s107, 0
    %s110 = sadd.s32 %s109, 1
    %s111 = scalar_select %p108, %s109, %s110
    %p114 = pneg %p108
    %p115 = scmp.eq.s32.totalorder %s10, 1
    %p116 = por %p114, %p115
    %p117 = scmp.ne.s32.totalorder %s109, %s112
    %p118 = scmp.eq.s32.totalorder %s10, 0
    %p119 = por %p117, %p118
    %p120 = scmp.ne.s32.totalorder %s109, %s112
    %p121 = scmp.eq.s32.totalorder %s15, 1
    %p122 = por %p120, %p121
    %p123 = scmp.ne.s32.totalorder %s112, %s113
    %p124 = scmp.eq.s32.totalorder %s15, 0
    %p125 = por %p123, %p124
    %p126 = scmp.ne.s32.totalorder %s112, %s113
    %p127 = scmp.eq.s32.totalorder %s16, 1
    %p128 = por %p126, %p127
    %p130 = scmp.ne.s32.totalorder %s113, %s129
    %p131 = scmp.eq.s32.totalorder %s16, 0
    %p132 = por %p130, %p131
    %p133 = scmp.le.s32.totalorder 1, %s10
    %p134 = scmp.lt.s32.totalorder %s10, 3
    %p135 = pnand %p133, %p134
    %p136 = pneg %p135
    // Predicated region
    $region9: #{conv_module_forward.1} parent=5 // pred_check
      _
    $region10: #{conv_module_forward.1} parent=5 // pred_check_branch
      %138 = sbr.rel (%p135) target = $region12
    $region11: #{conv_module_forward.1} parent=5 // pred_region
      %s139 = ssub.s32 %s10, 1
      // Predicated region
      $region13: #{conv_module_forward.1} parent=11 // pred_check
        %p140 = pneg %p57
      $region14: #{conv_module_forward.1} parent=11 // pred_check_branch
        %142 = sbr.rel (%p140) target = $region16
      $region15: #{conv_module_forward.1} parent=11 // pred_region
        _
      $region16: #{conv_module_forward.1} parent=11 // pred_fallthru
        _
      // Predicated region
      $region17: #{conv_module_forward.1} parent=11 // pred_check
        %p143 = pneg %p78
      $region18: #{conv_module_forward.1} parent=11 // pred_check_branch
        %145 = sbr.rel (%p143) target = $region20
      $region19: #{conv_module_forward.1} parent=11 // pred_region
        _
      $region20: #{conv_module_forward.1} parent=11 // pred_fallthru
        _
      // Predicated region
      $region21: #{conv_module_forward.1} parent=11 // pred_check
        %p146 = pneg %p99
      $region22: #{conv_module_forward.1} parent=11 // pred_check_branch
        %148 = sbr.rel (%p146) target = $region24
      $region23: #{conv_module_forward.1} parent=11 // pred_region
        _
      $region24: #{conv_module_forward.1} parent=11 // pred_fallthru
        _
    $region12: #{conv_module_forward.1} parent=5 // pred_fallthru
      _
    %p149 = scmp.lt.s32.totalorder %s10, 2
    // Predicated region
    $region25: #{conv_module_forward.1} parent=5 // pred_check
      %p150 = pneg %p149
    $region26: #{conv_module_forward.1} parent=5 // pred_check_branch
      %152 = sbr.rel (%p150) target = $region28
    $region27: #{conv_module_forward.1} parent=5 // pred_region
      // Predicated region
      $region29: #{conv_module_forward.1} parent=27 // pred_check
        %p153 = pneg %p30
      $region30: #{conv_module_forward.1} parent=27 // pred_check_branch
        %155 = sbr.rel (%p153) target = $region32
      $region31: #{conv_module_forward.1} parent=27 // pred_region
        %p156 = scmp.lt.s32.totalorder %s10, 1
        %s157 = scalar_select %p156, %s10, 1
        %s158 = smul.addr %s157, 128
        %s159 = smul.addr %s158, 8
        %s160 = scalar_lea.vmem %s0, %s159
      $region32: #{conv_module_forward.1} parent=27 // pred_fallthru
        _
    $region28: #{conv_module_forward.1} parent=5 // pred_fallthru
      _
    %p161 = scmp.le.s32.totalorder 1, %s10
    %p162 = scmp.lt.s32.totalorder %s10, 3
    %p163 = pnand %p161, %p162
    %p164 = pneg %p163
    // Predicated region
    $region33: #{conv_module_forward.1} parent=5 // pred_check
      _
    $region34: #{conv_module_forward.1} parent=5 // pred_check_branch
      %166 = sbr.rel (%p163) target = $region36
    $region35: #{conv_module_forward.1} parent=5 // pred_region
      %s167 = ssub.s32 %s10, 1
      %p168 = scmp.lt.s32.totalorder %s15, 1
      %s169 = scalar_select %p168, %s15, 1
      %s170 = smul.addr %s169, 128
      %s171 = smul.addr %s170, 8
      %s172 = scalar_lea.vmem %s0, %s171
      %p173 = pneg %p36
      %p174 = pneg %p33
      %p175 = pneg %p57
      %p176 = pneg %p54
      %p177 = pneg %p78
      %p178 = pneg %p75
      %p179 = pneg %p99
      %p180 = pneg %p96
      %p181 = pneg %p125
      %p182 = pneg %p122
      %p183 = scmp.lt.s32.totalorder %s15, 1
      %s184 = scalar_select %p183, %s15, 1
      %s185 = smul.addr %s184, 2
      %s186 = smul.addr %s185, 8
      %s187 = scalar_lea.vmem %s4, %s186
      %p188 = scmp.lt.s32.totalorder %s15, 1
      %s189 = scalar_select %p188, %s15, 1
      %s190 = smul.addr %s189, 128
      %s191 = smul.addr %s190, 8
      %s192 = scalar_lea.vmem %s0, %s191
      %p193 = scmp.lt.s32.totalorder %s15, 1
      %s194 = scalar_select %p193, %s15, 1
      %s195 = smul.addr %s194, 2
      %s196 = smul.addr %s195, 8
      %s197 = scalar_lea.vmem %s4, %s196
      %v198 = vld [vmem:[%s1] sm:$0xff]
      %v199 = vld [vmem:[%s1 + $0x8] sm:$0xff]
      %v200 = vld [vmem:[%s2] sm:$0xff]
      %v201 = vld [vmem:[%s2 + $0x8] sm:$0xff]
      %s202 = scalar_lea.vmem %s2, 16
      %v203 = vld [vmem:[%s202] sm:$0xff]
      %v204 = vld [vmem:[%s202 + $0x8] sm:$0xff]
      %s205 = scalar_lea.vmem %s2, 32
      %v206 = vld [vmem:[%s205] sm:$0xff]
      %v207 = vld [vmem:[%s205 + $0x8] sm:$0xff]
      %v208 = vld [vmem:[%s3] sm:$0xff]
      %v209 = vld [vmem:[%s3 + $0x8] sm:$0xff]
      %211 = vset.pattern.permute.xlu0 0
      %212 = vperm.xlu0 %211, %v208
      %v213 = vpop.permute.xlu0 %212
      %216 = vset.pattern.permute.xlu0 0
      %217 = vperm.xlu0 %216, %v209
      %v218 = vpop.permute.xlu0 %217
      %s220 = scalar_lea.vmem %s3, 16
      %v221 = vld [vmem:[%s220] sm:$0xff]
      %v222 = vld [vmem:[%s220 + $0x8] sm:$0xff]
      %224 = vset.pattern.permute.xlu0 0
      %225 = vperm.xlu0 %224, %v221
      %v226 = vpop.permute.xlu0 %225
      %229 = vset.pattern.permute.xlu0 0
      %230 = vperm.xlu0 %229, %v222
      %v231 = vpop.permute.xlu0 %230
      %s233 = scalar_lea.vmem %s3, 32
      %v234 = vld [vmem:[%s233] sm:$0xff]
      %v235 = vld [vmem:[%s233 + $0x8] sm:$0xff]
      %237 = vset.pattern.permute.xlu0 0
      %238 = vperm.xlu0 %237, %v234
      %v239 = vpop.permute.xlu0 %238
      %242 = vset.pattern.permute.xlu0 0
      %243 = vperm.xlu0 %242, %v235
      %v244 = vpop.permute.xlu0 %243
      %s246 = scalar_lea.vmem %s3, 48
      %v247 = vld [vmem:[%s246] sm:$0xff]
      %v248 = vld [vmem:[%s246 + $0x8] sm:$0xff]
      %250 = vset.pattern.permute.xlu0 0
      %251 = vperm.xlu0 %250, %v247
      %v252 = vpop.permute.xlu0 %251
      %255 = vset.pattern.permute.xlu0 0
      %256 = vperm.xlu0 %255, %v248
      %v257 = vpop.permute.xlu0 %256
      %v259 = vld [vmem:[%s192] sm:$0xff]
      %v260 = vld [vmem:[%s192 + $0x8] sm:$0xf]
      %vm261 = vcmask 97280
      %v263 = vsel %vm261, %v198, 0
      %v266 = vsel %vm261, %v199, 0
      %vm268 = vcmask 1043456
      %v270 = vsel %vm268, %v260, 0
      %272 = vmatprep.subr.mxu0 0.0
      %273 = vmatpush1.msra.mxu0 %v259
      %274 = vmatprep.subr.mxu0 0.0
      %275 = vmatpush1.msra.mxu0 %v270
      %276 = vmatprep.subr.mxu0 0.0
      %277 = vmatpush1.msra.mxu0 0.0
      %278 = vmatprep.subr.mxu0 0.0
      %279 = vmatpush1.msra.mxu0 0.0
      %280 = vmatprep.subr.mxu0 0.0
      %281 = vmatpush1.msra.mxu0 0.0
      %282 = vmatprep.subr.mxu0 0.0
      %283 = vmatpush1.msra.mxu0 0.0
      %284 = vmatprep.subr.mxu0 0.0
      %285 = vmatpush1.msra.mxu0 0.0
      %286 = vmatprep.subr.mxu0 0.0
      %287 = vmatpush1.msra.mxu0 0.0
      %288 = vmatprep.subr.mxu0 0.0
      %289 = vmatpush1.msra.mxu0 0.0
      %290 = vmatprep.subr.mxu0 0.0
      %291 = vmatpush1.msra.mxu0 0.0
      %292 = vmatprep.subr.mxu0 0.0
      %293 = vmatpush1.msra.mxu0 0.0
      %294 = vmatprep.subr.mxu0 0.0
      %295 = vmatpush1.msra.mxu0 0.0
      %296 = vmatprep.subr.mxu0 0.0
      %297 = vmatpush1.msra.mxu0 0.0
      %298 = vmatprep.subr.mxu0 0.0
      %299 = vmatpush1.msra.mxu0 0.0
      %300 = vmatprep.subr.mxu0 0.0
      %301 = vmatpush1.msra.mxu0 0.0
      %302 = vmatprep.subr.mxu0 0.0
      %303 = vmatpush1.msra.mxu0 0.0
      %304 = vmatprep.subr.mxu0 0.0
      %305 = vmatpush1.msra.mxu0 0.0
      %306 = vmatprep.subr.mxu0 0.0
      %307 = vmatpush1.msra.mxu0 0.0
      %308 = vmatprep.subr.mxu0 0.0
      %309 = vmatpush1.msra.mxu0 0.0
      %310 = vmatprep.subr.mxu0 0.0
      %311 = vmatpush1.msra.mxu0 0.0
      %312 = vmatprep.subr.mxu0 0.0
      %313 = vmatpush1.msra.mxu0 0.0
      %314 = vmatprep.subr.mxu0 0.0
      %315 = vmatpush1.msra.mxu0 0.0
      %316 = vmatprep.subr.mxu0 0.0
      %317 = vmatpush1.msra.mxu0 0.0
      %318 = vmatprep.subr.mxu0 0.0
      %319 = vmatpush1.msra.mxu0 0.0
      %320 = vmatprep.subr.mxu0 0.0
      %321 = vmatpush1.msra.mxu0 0.0
      %322 = vmatprep.subr.mxu0 0.0
      %323 = vmatpush1.msra.mxu0 0.0
      %324 = vmatprep.subr.mxu0 0.0
      %325 = vmatpush1.msra.mxu0 0.0
      %326 = vmatprep.subr.mxu0 0.0
      %327 = vmatpush1.msra.mxu0 0.0
      %328 = vmatprep.subr.mxu0 0.0
      %329 = vmatpush1.msra.mxu0 0.0
      %330 = vmatprep.subr.mxu0 0.0
      %331 = vmatpush1.msra.mxu0 0.0
      %332 = vmatprep.subr.mxu0 0.0
      %333 = vmatpush1.msra.mxu0 0.0
      %334 = vmatprep.subr.mxu0 0.0
      %335 = vmatpush1.msra.mxu0 0.0
      %336 = vmatprep.mubr.f32.mxu0 0.0
      %337 = vmatmul.mubr.f32.gmra.mrb[0].mxu0 %v263
      %v338 = vpop.f32.mrb[0].mxu0
      %v339 = vadd.f32 %v213, %v338
      %v340 = vpop.f32.mrb[0].mxu0
      %341 = vmatprep.mubr.f32.mxu0 0.0
      %342 = vmatmul.mubr.f32.gmra.mrb[0].mxu0 %v266
      %v343 = vpop.f32.mrb[0].mxu0
      %v344 = vadd.f32 %v218, %v343
      %v345 = vpop.f32.mrb[0].mxu0
      %346 = vdwg.mxu0
      %v347 = vmax.f32 %v339, 0.0
      %v348 = vmax.f32 %v344, 0.0
      %s349 = scalar_lea.vmem %s192, 16
      %v350 = vld [vmem:[%s349] sm:$0xff]
      %v351 = vld [vmem:[%s349 + $0x8] sm:$0xf]
      %v353 = vsel %vm268, %v351, 0
      %355 = vmatprep.subr.mxu0 0.0
      %356 = vmatpush1.msra.mxu0 %v350
      %357 = vmatprep.subr.mxu0 0.0
      %358 = vmatpush1.msra.mxu0 %v353
      %359 = vmatprep.subr.mxu0 0.0
      %360 = vmatpush1.msra.mxu0 0.0
      %361 = vmatprep.subr.mxu0 0.0
      %362 = vmatpush1.msra.mxu0 0.0
      %363 = vmatprep.subr.mxu0 0.0
      %364 = vmatpush1.msra.mxu0 0.0
      %365 = vmatprep.subr.mxu0 0.0
      %366 = vmatpush1.msra.mxu0 0.0
      %367 = vmatprep.subr.mxu0 0.0
      %368 = vmatpush1.msra.mxu0 0.0
      %369 = vmatprep.subr.mxu0 0.0
      %370 = vmatpush1.msra.mxu0 0.0
      %371 = vmatprep.subr.mxu0 0.0
      %372 = vmatpush1.msra.mxu0 0.0
      %373 = vmatprep.subr.mxu0 0.0
      %374 = vmatpush1.msra.mxu0 0.0
      %375 = vmatprep.subr.mxu0 0.0
      %376 = vmatpush1.msra.mxu0 0.0
      %377 = vmatprep.subr.mxu0 0.0
      %378 = vmatpush1.msra.mxu0 0.0
      %379 = vmatprep.subr.mxu0 0.0
      %380 = vmatpush1.msra.mxu0 0.0
      %381 = vmatprep.subr.mxu0 0.0
      %382 = vmatpush1.msra.mxu0 0.0
      %383 = vmatprep.subr.mxu0 0.0
      %384 = vmatpush1.msra.mxu0 0.0
      %385 = vmatprep.subr.mxu0 0.0
      %386 = vmatpush1.msra.mxu0 0.0
      %387 = vmatprep.subr.mxu0 0.0
      %388 = vmatpush1.msra.mxu0 0.0
      %389 = vmatprep.subr.mxu0 0.0
      %390 = vmatpush1.msra.mxu0 0.0
      %391 = vmatprep.subr.mxu0 0.0
      %392 = vmatpush1.msra.mxu0 0.0
      %393 = vmatprep.subr.mxu0 0.0
      %394 = vmatpush1.msra.mxu0 0.0
      %395 = vmatprep.subr.mxu0 0.0
      %396 = vmatpush1.msra.mxu0 0.0
      %397 = vmatprep.subr.mxu0 0.0
      %398 = vmatpush1.msra.mxu0 0.0
      %399 = vmatprep.subr.mxu0 0.0
      %400 = vmatpush1.msra.mxu0 0.0
      %401 = vmatprep.subr.mxu0 0.0
      %402 = vmatpush1.msra.mxu0 0.0
      %403 = vmatprep.subr.mxu0 0.0
      %404 = vmatpush1.msra.mxu0 0.0
      %405 = vmatprep.subr.mxu0 0.0
      %406 = vmatpush1.msra.mxu0 0.0
      %407 = vmatprep.subr.mxu0 0.0
      %408 = vmatpush1.msra.mxu0 0.0
      %409 = vmatprep.subr.mxu0 0.0
      %410 = vmatpush1.msra.mxu0 0.0
      %411 = vmatprep.subr.mxu0 0.0
      %412 = vmatpush1.msra.mxu0 0.0
      %413 = vmatprep.subr.mxu0 0.0
      %414 = vmatpush1.msra.mxu0 0.0
      %415 = vmatprep.subr.mxu0 0.0
      %416 = vmatpush1.msra.mxu0 0.0
      %417 = vmatprep.subr.mxu0 0.0
      %418 = vmatpush1.msra.mxu0 0.0
      %419 = vmatprep.mubr.f32.mxu0 0.0
      %420 = vmatmul.mubr.f32.gmra.mrb[0].mxu0 %v263
      %v421 = vpop.f32.mrb[0].mxu0
      %v422 = vadd.f32 %v213, %v421
      %v423 = vpop.f32.mrb[0].mxu0
      %424 = vmatprep.mubr.f32.mxu0 0.0
      %425 = vmatmul.mubr.f32.gmra.mrb[0].mxu0 %v266
      %v426 = vpop.f32.mrb[0].mxu0
      %v427 = vadd.f32 %v218, %v426
      %v428 = vpop.f32.mrb[0].mxu0
      %429 = vdwg.mxu0
      %v430 = vmax.f32 %v422, 0.0
      %v431 = vmax.f32 %v427, 0.0
      %s432 = scalar_lea.vmem %s192, 32
      %v433 = vld [vmem:[%s432] sm:$0xff]
      %v434 = vld [vmem:[%s432 + $0x8] sm:$0xf]
      %v436 = vsel %vm268, %v434, 0
      %438 = vmatprep.subr.mxu0 0.0
      %439 = vmatpush1.msra.mxu0 %v433
      %440 = vmatprep.subr.mxu0 0.0
      %441 = vmatpush1.msra.mxu0 %v436
      %442 = vmatprep.subr.mxu0 0.0
      %443 = vmatpush1.msra.mxu0 0.0
      %444 = vmatprep.subr.mxu0 0.0
      %445 = vmatpush1.msra.mxu0 0.0
      %446 = vmatprep.subr.mxu0 0.0
      %447 = vmatpush1.msra.mxu0 0.0
      %448 = vmatprep.subr.mxu0 0.0
      %449 = vmatpush1.msra.mxu0 0.0
      %450 = vmatprep.subr.mxu0 0.0
      %451 = vmatpush1.msra.mxu0 0.0
      %452 = vmatprep.subr.mxu0 0.0
      %453 = vmatpush1.msra.mxu0 0.0
      %454 = vmatprep.subr.mxu0 0.0
      %455 = vmatpush1.msra.mxu0 0.0
      %456 = vmatprep.subr.mxu0 0.0
      %457 = vmatpush1.msra.mxu0 0.0
      %458 = vmatprep.subr.mxu0 0.0
      %459 = vmatpush1.msra.mxu0 0.0
      %460 = vmatprep.subr.mxu0 0.0
      %461 = vmatpush1.msra.mxu0 0.0
      %462 = vmatprep.subr.mxu0 0.0
      %463 = vmatpush1.msra.mxu0 0.0
      %464 = vmatprep.subr.mxu0 0.0
      %465 = vmatpush1.msra.mxu0 0.0
      %466 = vmatprep.subr.mxu0 0.0
      %467 = vmatpush1.msra.mxu0 0.0
      %468 = vmatprep.subr.mxu0 0.0
      %469 = vmatpush1.msra.mxu0 0.0
      %470 = vmatprep.subr.mxu0 0.0
      %471 = vmatpush1.msra.mxu0 0.0
      %472 = vmatprep.subr.mxu0 0.0
      %473 = vmatpush1.msra.mxu0 0.0
      %474 = vmatprep.subr.mxu0 0.0
      %475 = vmatpush1.msra.mxu0 0.0
      %476 = vmatprep.subr.mxu0 0.0
      %477 = vmatpush1.msra.mxu0 0.0
      %478 = vmatprep.subr.mxu0 0.0
      %479 = vmatpush1.msra.mxu0 0.0
      %480 = vmatprep.subr.mxu0 0.0
      %481 = vmatpush1.msra.mxu0 0.0
      %482 = vmatprep.subr.mxu0 0.0
      %483 = vmatpush1.msra.mxu0 0.0
      %484 = vmatprep.subr.mxu0 0.0
      %485 = vmatpush1.msra.mxu0 0.0
      %486 = vmatprep.subr.mxu0 0.0
      %487 = vmatpush1.msra.mxu0 0.0
      %488 = vmatprep.subr.mxu0 0.0
      %489 = vmatpush1.msra.mxu0 0.0
      %490 = vmatprep.subr.mxu0 0.0
      %491 = vmatpush1.msra.mxu0 0.0
      %492 = vmatprep.subr.mxu0 0.0
      %493 = vmatpush1.msra.mxu0 0.0
      %494 = vmatprep.subr.mxu0 0.0
      %495 = vmatpush1.msra.mxu0 0.0
      %496 = vmatprep.subr.mxu0 0.0
      %497 = vmatpush1.msra.mxu0 0.0
      %498 = vmatprep.subr.mxu0 0.0
      %499 = vmatpush1.msra.mxu0 0.0
      %500 = vmatprep.subr.mxu0 0.0
      %501 = vmatpush1.msra.mxu0 0.0
      %502 = vmatprep.mubr.f32.mxu0 0.0
      %503 = vmatmul.mubr.f32.gmra.mrb[0].mxu0 %v263
      %v504 = vpop.f32.mrb[0].mxu0
      %v505 = vadd.f32 %v213, %v504
      %v506 = vpop.f32.mrb[0].mxu0
      %507 = vmatprep.mubr.f32.mxu0 0.0
      %508 = vmatmul.mubr.f32.gmra.mrb[0].mxu0 %v266
      %v509 = vpop.f32.mrb[0].mxu0
      %v510 = vadd.f32 %v218, %v509
      %v511 = vpop.f32.mrb[0].mxu0
      %512 = vdwg.mxu0
      %v513 = vmax.f32 %v505, 0.0
      %v514 = vmax.f32 %v510, 0.0
      %s515 = scalar_lea.vmem %s192, 48
      %v516 = vld [vmem:[%s515] sm:$0xff]
      %v517 = vld [vmem:[%s515 + $0x8] sm:$0xf]
      %v519 = vsel %vm268, %v517, 0
      %521 = vmatprep.subr.mxu0 0.0
      %522 = vmatpush1.msra.mxu0 %v516
      %523 = vmatprep.subr.mxu0 0.0
      %524 = vmatpush1.msra.mxu0 %v519
      %525 = vmatprep.subr.mxu0 0.0
      %526 = vmatpush1.msra.mxu0 0.0
      %527 = vmatprep.subr.mxu0 0.0
      %528 = vmatpush1.msra.mxu0 0.0
      %529 = vmatprep.subr.mxu0 0.0
      %530 = vmatpush1.msra.mxu0 0.0
      %531 = vmatprep.subr.mxu0 0.0
      %532 = vmatpush1.msra.mxu0 0.0
      %533 = vmatprep.subr.mxu0 0.0
      %534 = vmatpush1.msra.mxu0 0.0
      %535 = vmatprep.subr.mxu0 0.0
      %536 = vmatpush1.msra.mxu0 0.0
      %537 = vmatprep.subr.mxu0 0.0
      %538 = vmatpush1.msra.mxu0 0.0
      %539 = vmatprep.subr.mxu0 0.0
      %540 = vmatpush1.msra.mxu0 0.0
      %541 = vmatprep.subr.mxu0 0.0
      %542 = vmatpush1.msra.mxu0 0.0
      %543 = vmatprep.subr.mxu0 0.0
      %544 = vmatpush1.msra.mxu0 0.0
      %545 = vmatprep.subr.mxu0 0.0
      %546 = vmatpush1.msra.mxu0 0.0
      %547 = vmatprep.subr.mxu0 0.0
      %548 = vmatpush1.msra.mxu0 0.0
      %549 = vmatprep.subr.mxu0 0.0
      %550 = vmatpush1.msra.mxu0 0.0
      %551 = vmatprep.subr.mxu0 0.0
      %552 = vmatpush1.msra.mxu0 0.0
      %553 = vmatprep.subr.mxu0 0.0
      %554 = vmatpush1.msra.mxu0 0.0
      %555 = vmatprep.subr.mxu0 0.0
      %556 = vmatpush1.msra.mxu0 0.0
      %557 = vmatprep.subr.mxu0 0.0
      %558 = vmatpush1.msra.mxu0 0.0
      %559 = vmatprep.subr.mxu0 0.0
      %560 = vmatpush1.msra.mxu0 0.0
      %561 = vmatprep.subr.mxu0 0.0
      %562 = vmatpush1.msra.mxu0 0.0
      %563 = vmatprep.subr.mxu0 0.0
      %564 = vmatpush1.msra.mxu0 0.0
      %565 = vmatprep.subr.mxu0 0.0
      %566 = vmatpush1.msra.mxu0 0.0
      %567 = vmatprep.subr.mxu0 0.0
      %568 = vmatpush1.msra.mxu0 0.0
      %569 = vmatprep.subr.mxu0 0.0
      %570 = vmatpush1.msra.mxu0 0.0
      %571 = vmatprep.subr.mxu0 0.0
      %572 = vmatpush1.msra.mxu0 0.0
      %573 = vmatprep.subr.mxu0 0.0
      %574 = vmatpush1.msra.mxu0 0.0
      %575 = vmatprep.subr.mxu0 0.0
      %576 = vmatpush1.msra.mxu0 0.0
      %577 = vmatprep.subr.mxu0 0.0
      %578 = vmatpush1.msra.mxu0 0.0
      %579 = vmatprep.subr.mxu0 0.0
      %580 = vmatpush1.msra.mxu0 0.0
      %581 = vmatprep.subr.mxu0 0.0
      %582 = vmatpush1.msra.mxu0 0.0
      %583 = vmatprep.subr.mxu0 0.0
      %584 = vmatpush1.msra.mxu0 0.0
      %585 = vmatprep.mubr.f32.mxu0 0.0
      %586 = vmatmul.mubr.f32.gmra.mrb[0].mxu0 %v263
      %v587 = vpop.f32.mrb[0].mxu0
      %v588 = vadd.f32 %v213, %v587
      %v589 = vpop.f32.mrb[0].mxu0
      %590 = vmatprep.mubr.f32.mxu0 0.0
      %591 = vmatmul.mubr.f32.gmra.mrb[0].mxu0 %v266
      %v592 = vpop.f32.mrb[0].mxu0
      %v593 = vadd.f32 %v218, %v592
      %v594 = vpop.f32.mrb[0].mxu0
      %595 = vdwg.mxu0
      %v596 = vmax.f32 %v588, 0.0
      %v597 = vmax.f32 %v593, 0.0
      %vm598 = vcmask 523264
      %v600 = vsel %vm598, %v200, 0
      %v603 = vsel %vm598, %v201, 0
      %605 = vmatprep.subr.mxu0 0.0
      %606 = vmatpush1.msra.mxu0 %v347
      %607 = vmatprep.subr.mxu0 0.0
      %608 = vmatpush1.msra.mxu0 %v348
      %609 = vmatprep.subr.mxu0 0.0
      %610 = vmatpush1.msra.mxu0 %v430
      %611 = vmatprep.subr.mxu0 0.0
      %612 = vmatpush1.msra.mxu0 %v431
      %613 = vmatprep.subr.mxu0 0.0
      %614 = vmatpush1.msra.mxu0 %v513
      %615 = vmatprep.subr.mxu0 0.0
      %616 = vmatpush1.msra.mxu0 %v514
      %617 = vmatprep.subr.mxu0 0.0
      %618 = vmatpush1.msra.mxu0 %v596
      %619 = vmatprep.subr.mxu0 0.0
      %620 = vmatpush1.msra.mxu0 %v597
      %621 = vmatprep.subr.mxu0 0.0
      %622 = vmatpush1.msra.mxu0 0.0
      %623 = vmatprep.subr.mxu0 0.0
      %624 = vmatpush1.msra.mxu0 0.0
      %625 = vmatprep.subr.mxu0 0.0
      %626 = vmatpush1.msra.mxu0 0.0
      %627 = vmatprep.subr.mxu0 0.0
      %628 = vmatpush1.msra.mxu0 0.0
      %629 = vmatprep.subr.mxu0 0.0
      %630 = vmatpush1.msra.mxu0 0.0
      %631 = vmatprep.subr.mxu0 0.0
      %632 = vmatpush1.msra.mxu0 0.0
      %633 = vmatprep.subr.mxu0 0.0
      %634 = vmatpush1.msra.mxu0 0.0
      %635 = vmatprep.subr.mxu0 0.0
      %636 = vmatpush1.msra.mxu0 0.0
      %637 = vmatprep.subr.mxu0 0.0
      %638 = vmatpush1.msra.mxu0 0.0
      %639 = vmatprep.subr.mxu0 0.0
      %640 = vmatpush1.msra.mxu0 0.0
      %641 = vmatprep.subr.mxu0 0.0
      %642 = vmatpush1.msra.mxu0 0.0
      %643 = vmatprep.subr.mxu0 0.0
      %644 = vmatpush1.msra.mxu0 0.0
      %645 = vmatprep.subr.mxu0 0.0
      %646 = vmatpush1.msra.mxu0 0.0
      %647 = vmatprep.subr.mxu0 0.0
      %648 = vmatpush1.msra.mxu0 0.0
      %649 = vmatprep.subr.mxu0 0.0
      %650 = vmatpush1.msra.mxu0 0.0
      %651 = vmatprep.subr.mxu0 0.0
      %652 = vmatpush1.msra.mxu0 0.0
      %653 = vmatprep.subr.mxu0 0.0
      %654 = vmatpush1.msra.mxu0 0.0
      %655 = vmatprep.subr.mxu0 0.0
      %656 = vmatpush1.msra.mxu0 0.0
      %657 = vmatprep.subr.mxu0 0.0
      %658 = vmatpush1.msra.mxu0 0.0
      %659 = vmatprep.subr.mxu0 0.0
      %660 = vmatpush1.msra.mxu0 0.0
      %661 = vmatprep.subr.mxu0 0.0
      %662 = vmatpush1.msra.mxu0 0.0
      %663 = vmatprep.subr.mxu0 0.0
      %664 = vmatpush1.msra.mxu0 0.0
      %665 = vmatprep.subr.mxu0 0.0
      %666 = vmatpush1.msra.mxu0 0.0
      %667 = vmatprep.subr.mxu0 0.0
      %668 = vmatpush1.msra.mxu0 0.0
      %669 = vmatprep.mubr.f32.mxu0 0.0
      %670 = vmatmul.mubr.f32.gmra.mrb[0].mxu0 %v600
      %v671 = vpop.f32.mrb[0].mxu0
      %v672 = vadd.f32 %v226, %v671
      %v673 = vpop.f32.mrb[0].mxu0
      %674 = vmatprep.mubr.f32.mxu0 0.0
      %675 = vmatmul.mubr.f32.gmra.mrb[0].mxu0 %v603
      %v676 = vpop.f32.mrb[0].mxu0
      %v677 = vadd.f32 %v231, %v676
      %v678 = vpop.f32.mrb[0].mxu0
      %679 = vdwg.mxu0
      %v680 = vmax.f32 %v672, 0.0
      %v681 = vmax.f32 %v677, 0.0
      %s682 = scalar_lea.vmem %s192, 64
      %v683 = vld [vmem:[%s682] sm:$0xff]
      %v684 = vld [vmem:[%s682 + $0x8] sm:$0xf]
      %v686 = vsel %vm268, %v684, 0
      %688 = vmatprep.subr.mxu0 0.0
      %689 = vmatpush1.msra.mxu0 %v683
      %690 = vmatprep.subr.mxu0 0.0
      %691 = vmatpush1.msra.mxu0 %v686
      %692 = vmatprep.subr.mxu0 0.0
      %693 = vmatpush1.msra.mxu0 0.0
      %694 = vmatprep.subr.mxu0 0.0
      %695 = vmatpush1.msra.mxu0 0.0
      %696 = vmatprep.subr.mxu0 0.0
      %697 = vmatpush1.msra.mxu0 0.0
      %698 = vmatprep.subr.mxu0 0.0
      %699 = vmatpush1.msra.mxu0 0.0
      %700 = vmatprep.subr.mxu0 0.0
      %701 = vmatpush1.msra.mxu0 0.0
      %702 = vmatprep.subr.mxu0 0.0
      %703 = vmatpush1.msra.mxu0 0.0
      %704 = vmatprep.subr.mxu0 0.0
      %705 = vmatpush1.msra.mxu0 0.0
      %706 = vmatprep.subr.mxu0 0.0
      %707 = vmatpush1.msra.mxu0 0.0
      %708 = vmatprep.subr.mxu0 0.0
      %709 = vmatpush1.msra.mxu0 0.0
      %710 = vmatprep.subr.mxu0 0.0
      %711 = vmatpush1.msra.mxu0 0.0
      %712 = vmatprep.subr.mxu0 0.0
      %713 = vmatpush1.msra.mxu0 0.0
      %714 = vmatprep.subr.mxu0 0.0
      %715 = vmatpush1.msra.mxu0 0.0
      %716 = vmatprep.subr.mxu0 0.0
      %717 = vmatpush1.msra.mxu0 0.0
      %718 = vmatprep.subr.mxu0 0.0
      %719 = vmatpush1.msra.mxu0 0.0
      %720 = vmatprep.subr.mxu0 0.0
      %721 = vmatpush1.msra.mxu0 0.0
      %722 = vmatprep.subr.mxu0 0.0
      %723 = vmatpush1.msra.mxu0 0.0
      %724 = vmatprep.subr.mxu0 0.0
      %725 = vmatpush1.msra.mxu0 0.0
      %726 = vmatprep.subr.mxu0 0.0
      %727 = vmatpush1.msra.mxu0 0.0
      %728 = vmatprep.subr.mxu0 0.0
      %729 = vmatpush1.msra.mxu0 0.0
      %730 = vmatprep.subr.mxu0 0.0
      %731 = vmatpush1.msra.mxu0 0.0
      %732 = vmatprep.subr.mxu0 0.0
      %733 = vmatpush1.msra.mxu0 0.0
      %734 = vmatprep.subr.mxu0 0.0
      %735 = vmatpush1.msra.mxu0 0.0
      %736 = vmatprep.subr.mxu0 0.0
      %737 = vmatpush1.msra.mxu0 0.0
      %738 = vmatprep.subr.mxu0 0.0
      %739 = vmatpush1.msra.mxu0 0.0
      %740 = vmatprep.subr.mxu0 0.0
      %741 = vmatpush1.msra.mxu0 0.0
      %742 = vmatprep.subr.mxu0 0.0
      %743 = vmatpush1.msra.mxu0 0.0
      %744 = vmatprep.subr.mxu0 0.0
      %745 = vmatpush1.msra.mxu0 0.0
      %746 = vmatprep.subr.mxu0 0.0
      %747 = vmatpush1.msra.mxu0 0.0
      %748 = vmatprep.subr.mxu0 0.0
      %749 = vmatpush1.msra.mxu0 0.0
      %750 = vmatprep.subr.mxu0 0.0
      %751 = vmatpush1.msra.mxu0 0.0
      %752 = vmatprep.mubr.f32.mxu0 0.0
      %753 = vmatmul.mubr.f32.gmra.mrb[0].mxu0 %v263
      %v754 = vpop.f32.mrb[0].mxu0
      %v755 = vadd.f32 %v213, %v754
      %v756 = vpop.f32.mrb[0].mxu0
      %757 = vmatprep.mubr.f32.mxu0 0.0
      %758 = vmatmul.mubr.f32.gmra.mrb[0].mxu0 %v266
      %v759 = vpop.f32.mrb[0].mxu0
      %v760 = vadd.f32 %v218, %v759
      %v761 = vpop.f32.mrb[0].mxu0
      %762 = vdwg.mxu0
      %v763 = vmax.f32 %v755, 0.0
      %v764 = vmax.f32 %v760, 0.0
      %s765 = scalar_lea.vmem %s192, 80
      %v766 = vld [vmem:[%s765] sm:$0xff]
      %v767 = vld [vmem:[%s765 + $0x8] sm:$0xf]
      %v769 = vsel %vm268, %v767, 0
      %771 = vmatprep.subr.mxu0 0.0
      %772 = vmatpush1.msra.mxu0 %v766
      %773 = vmatprep.subr.mxu0 0.0
      %774 = vmatpush1.msra.mxu0 %v769
      %775 = vmatprep.subr.mxu0 0.0
      %776 = vmatpush1.msra.mxu0 0.0
      %777 = vmatprep.subr.mxu0 0.0
      %778 = vmatpush1.msra.mxu0 0.0
      %779 = vmatprep.subr.mxu0 0.0
      %780 = vmatpush1.msra.mxu0 0.0
      %781 = vmatprep.subr.mxu0 0.0
      %782 = vmatpush1.msra.mxu0 0.0
      %783 = vmatprep.subr.mxu0 0.0
      %784 = vmatpush1.msra.mxu0 0.0
      %785 = vmatprep.subr.mxu0 0.0
      %786 = vmatpush1.msra.mxu0 0.0
      %787 = vmatprep.subr.mxu0 0.0
      %788 = vmatpush1.msra.mxu0 0.0
      %789 = vmatprep.subr.mxu0 0.0
      %790 = vmatpush1.msra.mxu0 0.0
      %791 = vmatprep.subr.mxu0 0.0
      %792 = vmatpush1.msra.mxu0 0.0
      %793 = vmatprep.subr.mxu0 0.0
      %794 = vmatpush1.msra.mxu0 0.0
      %795 = vmatprep.subr.mxu0 0.0
      %796 = vmatpush1.msra.mxu0 0.0
      %797 = vmatprep.subr.mxu0 0.0
      %798 = vmatpush1.msra.mxu0 0.0
      %799 = vmatprep.subr.mxu0 0.0
      %800 = vmatpush1.msra.mxu0 0.0
      %801 = vmatprep.subr.mxu0 0.0
      %802 = vmatpush1.msra.mxu0 0.0
      %803 = vmatprep.subr.mxu0 0.0
      %804 = vmatpush1.msra.mxu0 0.0
      %805 = vmatprep.subr.mxu0 0.0
      %806 = vmatpush1.msra.mxu0 0.0
      %807 = vmatprep.subr.mxu0 0.0
      %808 = vmatpush1.msra.mxu0 0.0
      %809 = vmatprep.subr.mxu0 0.0
      %810 = vmatpush1.msra.mxu0 0.0
      %811 = vmatprep.subr.mxu0 0.0
      %812 = vmatpush1.msra.mxu0 0.0
      %813 = vmatprep.subr.mxu0 0.0
      %814 = vmatpush1.msra.mxu0 0.0
      %815 = vmatprep.subr.mxu0 0.0
      %816 = vmatpush1.msra.mxu0 0.0
      %817 = vmatprep.subr.mxu0 0.0
      %818 = vmatpush1.msra.mxu0 0.0
      %819 = vmatprep.subr.mxu0 0.0
      %820 = vmatpush1.msra.mxu0 0.0
      %821 = vmatprep.subr.mxu0 0.0
      %822 = vmatpush1.msra.mxu0 0.0
      %823 = vmatprep.subr.mxu0 0.0
      %824 = vmatpush1.msra.mxu0 0.0
      %825 = vmatprep.subr.mxu0 0.0
      %826 = vmatpush1.msra.mxu0 0.0
      %827 = vmatprep.subr.mxu0 0.0
      %828 = vmatpush1.msra.mxu0 0.0
      %829 = vmatprep.subr.mxu0 0.0
      %830 = vmatpush1.msra.mxu0 0.0
      %831 = vmatprep.subr.mxu0 0.0
      %832 = vmatpush1.msra.mxu0 0.0
      %833 = vmatprep.subr.mxu0 0.0
      %834 = vmatpush1.msra.mxu0 0.0
      %835 = vmatprep.mubr.f32.mxu0 0.0
      %836 = vmatmul.mubr.f32.gmra.mrb[0].mxu0 %v263
      %v837 = vpop.f32.mrb[0].mxu0
      %v838 = vadd.f32 %v213, %v837
      %v839 = vpop.f32.mrb[0].mxu0
      %840 = vmatprep.mubr.f32.mxu0 0.0
      %841 = vmatmul.mubr.f32.gmra.mrb[0].mxu0 %v266
      %v842 = vpop.f32.mrb[0].mxu0
      %v843 = vadd.f32 %v218, %v842
      %v844 = vpop.f32.mrb[0].mxu0
      %845 = vdwg.mxu0
      %v846 = vmax.f32 %v838, 0.0
      %v847 = vmax.f32 %v843, 0.0
      %s848 = scalar_lea.vmem %s192, 96
      %v849 = vld [vmem:[%s848] sm:$0xff]
      %v850 = vld [vmem:[%s848 + $0x8] sm:$0xf]
      %v852 = vsel %vm268, %v850, 0
      %854 = vmatprep.subr.mxu0 0.0
      %855 = vmatpush1.msra.mxu0 %v849
      %856 = vmatprep.subr.mxu0 0.0
      %857 = vmatpush1.msra.mxu0 %v852
      %858 = vmatprep.subr.mxu0 0.0
      %859 = vmatpush1.msra.mxu0 0.0
      %860 = vmatprep.subr.mxu0 0.0
      %861 = vmatpush1.msra.mxu0 0.0
      %862 = vmatprep.subr.mxu0 0.0
      %863 = vmatpush1.msra.mxu0 0.0
      %864 = vmatprep.subr.mxu0 0.0
      %865 = vmatpush1.msra.mxu0 0.0
      %866 = vmatprep.subr.mxu0 0.0
      %867 = vmatpush1.msra.mxu0 0.0
      %868 = vmatprep.subr.mxu0 0.0
      %869 = vmatpush1.msra.mxu0 0.0
      %870 = vmatprep.subr.mxu0 0.0
      %871 = vmatpush1.msra.mxu0 0.0
      %872 = vmatprep.subr.mxu0 0.0
      %873 = vmatpush1.msra.mxu0 0.0
      %874 = vmatprep.subr.mxu0 0.0
      %875 = vmatpush1.msra.mxu0 0.0
      %876 = vmatprep.subr.mxu0 0.0
      %877 = vmatpush1.msra.mxu0 0.0
      %878 = vmatprep.subr.mxu0 0.0
      %879 = vmatpush1.msra.mxu0 0.0
      %880 = vmatprep.subr.mxu0 0.0
      %881 = vmatpush1.msra.mxu0 0.0
      %882 = vmatprep.subr.mxu0 0.0
      %883 = vmatpush1.msra.mxu0 0.0
      %884 = vmatprep.subr.mxu0 0.0
      %885 = vmatpush1.msra.mxu0 0.0
      %886 = vmatprep.subr.mxu0 0.0
      %887 = vmatpush1.msra.mxu0 0.0
      %888 = vmatprep.subr.mxu0 0.0
      %889 = vmatpush1.msra.mxu0 0.0
      %890 = vmatprep.subr.mxu0 0.0
      %891 = vmatpush1.msra.mxu0 0.0
      %892 = vmatprep.subr.mxu0 0.0
      %893 = vmatpush1.msra.mxu0 0.0
      %894 = vmatprep.subr.mxu0 0.0
      %895 = vmatpush1.msra.mxu0 0.0
      %896 = vmatprep.subr.mxu0 0.0
      %897 = vmatpush1.msra.mxu0 0.0
      %898 = vmatprep.subr.mxu0 0.0
      %899 = vmatpush1.msra.mxu0 0.0
      %900 = vmatprep.subr.mxu0 0.0
      %901 = vmatpush1.msra.mxu0 0.0
      %902 = vmatprep.subr.mxu0 0.0
      %903 = vmatpush1.msra.mxu0 0.0
      %904 = vmatprep.subr.mxu0 0.0
      %905 = vmatpush1.msra.mxu0 0.0
      %906 = vmatprep.subr.mxu0 0.0
      %907 = vmatpush1.msra.mxu0 0.0
      %908 = vmatprep.subr.mxu0 0.0
      %909 = vmatpush1.msra.mxu0 0.0
      %910 = vmatprep.subr.mxu0 0.0
      %911 = vmatpush1.msra.mxu0 0.0
      %912 = vmatprep.subr.mxu0 0.0
      %913 = vmatpush1.msra.mxu0 0.0
      %914 = vmatprep.subr.mxu0 0.0
      %915 = vmatpush1.msra.mxu0 0.0
      %916 = vmatprep.subr.mxu0 0.0
      %917 = vmatpush1.msra.mxu0 0.0
      %918 = vmatprep.mubr.f32.mxu0 0.0
      %919 = vmatmul.mubr.f32.gmra.mrb[0].mxu0 %v263
      %v920 = vpop.f32.mrb[0].mxu0
      %v921 = vadd.f32 %v213, %v920
      %v922 = vpop.f32.mrb[0].mxu0
      %923 = vmatprep.mubr.f32.mxu0 0.0
      %924 = vmatmul.mubr.f32.gmra.mrb[0].mxu0 %v266
      %v925 = vpop.f32.mrb[0].mxu0
      %v926 = vadd.f32 %v218, %v925
      %v927 = vpop.f32.mrb[0].mxu0
      %928 = vdwg.mxu0
      %v929 = vmax.f32 %v921, 0.0
      %v930 = vmax.f32 %v926, 0.0
      %s931 = scalar_lea.vmem %s192, 112
      %v932 = vld [vmem:[%s931] sm:$0xff]
      %v933 = vld [vmem:[%s931 + $0x8] sm:$0xf]
      %v935 = vsel %vm268, %v933, 0
      %937 = vmatprep.subr.mxu0 0.0
      %938 = vmatpush1.msra.mxu0 %v932
      %939 = vmatprep.subr.mxu0 0.0
      %940 = vmatpush1.msra.mxu0 %v935
      %941 = vmatprep.subr.mxu0 0.0
      %942 = vmatpush1.msra.mxu0 0.0
      %943 = vmatprep.subr.mxu0 0.0
      %944 = vmatpush1.msra.mxu0 0.0
      %945 = vmatprep.subr.mxu0 0.0
      %946 = vmatpush1.msra.mxu0 0.0
      %947 = vmatprep.subr.mxu0 0.0
      %948 = vmatpush1.msra.mxu0 0.0
      %949 = vmatprep.subr.mxu0 0.0
      %950 = vmatpush1.msra.mxu0 0.0
      %951 = vmatprep.subr.mxu0 0.0
      %952 = vmatpush1.msra.mxu0 0.0
      %953 = vmatprep.subr.mxu0 0.0
      %954 = vmatpush1.msra.mxu0 0.0
      %955 = vmatprep.subr.mxu0 0.0
      %956 = vmatpush1.msra.mxu0 0.0
      %957 = vmatprep.subr.mxu0 0.0
      %958 = vmatpush1.msra.mxu0 0.0
      %959 = vmatprep.subr.mxu0 0.0
      %960 = vmatpush1.msra.mxu0 0.0
      %961 = vmatprep.subr.mxu0 0.0
      %962 = vmatpush1.msra.mxu0 0.0
      %963 = vmatprep.subr.mxu0 0.0
      %964 = vmatpush1.msra.mxu0 0.0
      %965 = vmatprep.subr.mxu0 0.0
      %966 = vmatpush1.msra.mxu0 0.0
      %967 = vmatprep.subr.mxu0 0.0
      %968 = vmatpush1.msra.mxu0 0.0
      %969 = vmatprep.subr.mxu0 0.0
      %970 = vmatpush1.msra.mxu0 0.0
      %971 = vmatprep.subr.mxu0 0.0
      %972 = vmatpush1.msra.mxu0 0.0
      %973 = vmatprep.subr.mxu0 0.0
      %974 = vmatpush1.msra.mxu0 0.0
      %975 = vmatprep.subr.mxu0 0.0
      %976 = vmatpush1.msra.mxu0 0.0
      %977 = vmatprep.subr.mxu0 0.0
      %978 = vmatpush1.msra.mxu0 0.0
      %979 = vmatprep.subr.mxu0 0.0
      %980 = vmatpush1.msra.mxu0 0.0
      %981 = vmatprep.subr.mxu0 0.0
      %982 = vmatpush1.msra.mxu0 0.0
      %983 = vmatprep.subr.mxu0 0.0
      %984 = vmatpush1.msra.mxu0 0.0
      %985 = vmatprep.subr.mxu0 0.0
      %986 = vmatpush1.msra.mxu0 0.0
      %987 = vmatprep.subr.mxu0 0.0
      %988 = vmatpush1.msra.mxu0 0.0
      %989 = vmatprep.subr.mxu0 0.0
      %990 = vmatpush1.msra.mxu0 0.0
      %991 = vmatprep.subr.mxu0 0.0
      %992 = vmatpush1.msra.mxu0 0.0
      %993 = vmatprep.subr.mxu0 0.0
      %994 = vmatpush1.msra.mxu0 0.0
      %995 = vmatprep.subr.mxu0 0.0
      %996 = vmatpush1.msra.mxu0 0.0
      %997 = vmatprep.subr.mxu0 0.0
      %998 = vmatpush1.msra.mxu0 0.0
      %999 = vmatprep.subr.mxu0 0.0
      %1000 = vmatpush1.msra.mxu0 0.0
      %1001 = vmatprep.mubr.f32.mxu0 0.0
      %1002 = vmatmul.mubr.f32.gmra.mrb[0].mxu0 %v263
      %v1003 = vpop.f32.mrb[0].mxu0
      %v1004 = vadd.f32 %v213, %v1003
      %v1005 = vpop.f32.mrb[0].mxu0
      %1006 = vmatprep.mubr.f32.mxu0 0.0
      %1007 = vmatmul.mubr.f32.gmra.mrb[0].mxu0 %v266
      %v1008 = vpop.f32.mrb[0].mxu0
      %v1009 = vadd.f32 %v218, %v1008
      %v1010 = vpop.f32.mrb[0].mxu0
      %1011 = vdwg.mxu0
      %v1012 = vmax.f32 %v1004, 0.0
      %v1013 = vmax.f32 %v1009, 0.0
      %1014 = vmatprep.subr.mxu0 0.0
      %1015 = vmatpush1.msra.mxu0 %v763
      %1016 = vmatprep.subr.mxu0 0.0
      %1017 = vmatpush1.msra.mxu0 %v764
      %1018 = vmatprep.subr.mxu0 0.0
      %1019 = vmatpush1.msra.mxu0 %v846
      %1020 = vmatprep.subr.mxu0 0.0
      %1021 = vmatpush1.msra.mxu0 %v847
      %1022 = vmatprep.subr.mxu0 0.0
      %1023 = vmatpush1.msra.mxu0 %v929
      %1024 = vmatprep.subr.mxu0 0.0
      %1025 = vmatpush1.msra.mxu0 %v930
      %1026 = vmatprep.subr.mxu0 0.0
      %1027 = vmatpush1.msra.mxu0 %v1012
      %1028 = vmatprep.subr.mxu0 0.0
      %1029 = vmatpush1.msra.mxu0 %v1013
      %1030 = vmatprep.subr.mxu0 0.0
      %1031 = vmatpush1.msra.mxu0 0.0
      %1032 = vmatprep.subr.mxu0 0.0
      %1033 = vmatpush1.msra.mxu0 0.0
      %1034 = vmatprep.subr.mxu0 0.0
      %1035 = vmatpush1.msra.mxu0 0.0
      %1036 = vmatprep.subr.mxu0 0.0
      %1037 = vmatpush1.msra.mxu0 0.0
      %1038 = vmatprep.subr.mxu0 0.0
      %1039 = vmatpush1.msra.mxu0 0.0
      %1040 = vmatprep.subr.mxu0 0.0
      %1041 = vmatpush1.msra.mxu0 0.0
      %1042 = vmatprep.subr.mxu0 0.0
      %1043 = vmatpush1.msra.mxu0 0.0
      %1044 = vmatprep.subr.mxu0 0.0
      %1045 = vmatpush1.msra.mxu0 0.0
      %1046 = vmatprep.subr.mxu0 0.0
      %1047 = vmatpush1.msra.mxu0 0.0
      %1048 = vmatprep.subr.mxu0 0.0
      %1049 = vmatpush1.msra.mxu0 0.0
      %1050 = vmatprep.subr.mxu0 0.0
      %1051 = vmatpush1.msra.mxu0 0.0
      %1052 = vmatprep.subr.mxu0 0.0
      %1053 = vmatpush1.msra.mxu0 0.0
      %1054 = vmatprep.subr.mxu0 0.0
      %1055 = vmatpush1.msra.mxu0 0.0
      %1056 = vmatprep.subr.mxu0 0.0
      %1057 = vmatpush1.msra.mxu0 0.0
      %1058 = vmatprep.subr.mxu0 0.0
      %1059 = vmatpush1.msra.mxu0 0.0
      %1060 = vmatprep.subr.mxu0 0.0
      %1061 = vmatpush1.msra.mxu0 0.0
      %1062 = vmatprep.subr.mxu0 0.0
      %1063 = vmatpush1.msra.mxu0 0.0
      %1064 = vmatprep.subr.mxu0 0.0
      %1065 = vmatpush1.msra.mxu0 0.0
      %1066 = vmatprep.subr.mxu0 0.0
      %1067 = vmatpush1.msra.mxu0 0.0
      %1068 = vmatprep.subr.mxu0 0.0
      %1069 = vmatpush1.msra.mxu0 0.0
      %1070 = vmatprep.subr.mxu0 0.0
      %1071 = vmatpush1.msra.mxu0 0.0
      %1072 = vmatprep.subr.mxu0 0.0
      %1073 = vmatpush1.msra.mxu0 0.0
      %1074 = vmatprep.subr.mxu0 0.0
      %1075 = vmatpush1.msra.mxu0 0.0
      %1076 = vmatprep.subr.mxu0 0.0
      %1077 = vmatpush1.msra.mxu0 0.0
      %1078 = vmatprep.mubr.f32.mxu0 0.0
      %1079 = vmatmul.mubr.f32.gmra.mrb[0].mxu0 %v600
      %v1080 = vpop.f32.mrb[0].mxu0
      %v1081 = vadd.f32 %v226, %v1080
      %v1082 = vpop.f32.mrb[0].mxu0
      %1083 = vmatprep.mubr.f32.mxu0 0.0
      %1084 = vmatmul.mubr.f32.gmra.mrb[0].mxu0 %v603
      %v1085 = vpop.f32.mrb[0].mxu0
      %v1086 = vadd.f32 %v231, %v1085
      %v1087 = vpop.f32.mrb[0].mxu0
      %1088 = vdwg.mxu0
      %v1089 = vmax.f32 %v1081, 0.0
      %v1090 = vmax.f32 %v1086, 0.0
      %s1091 = scalar_lea.vmem %s192, 128
      %v1092 = vld [vmem:[%s1091] sm:$0xff]
      %v1093 = vld [vmem:[%s1091 + $0x8] sm:$0xf]
      %v1095 = vsel %vm268, %v1093, 0
      %1097 = vmatprep.subr.mxu0 0.0
      %1098 = vmatpush1.msra.mxu0 %v1092
      %1099 = vmatprep.subr.mxu0 0.0
      %1100 = vmatpush1.msra.mxu0 %v1095
      %1101 = vmatprep.subr.mxu0 0.0
      %1102 = vmatpush1.msra.mxu0 0.0
      %1103 = vmatprep.subr.mxu0 0.0
      %1104 = vmatpush1.msra.mxu0 0.0
      %1105 = vmatprep.subr.mxu0 0.0
      %1106 = vmatpush1.msra.mxu0 0.0
      %1107 = vmatprep.subr.mxu0 0.0
      %1108 = vmatpush1.msra.mxu0 0.0
      %1109 = vmatprep.subr.mxu0 0.0
      %1110 = vmatpush1.msra.mxu0 0.0
      %1111 = vmatprep.subr.mxu0 0.0
      %1112 = vmatpush1.msra.mxu0 0.0
      %1113 = vmatprep.subr.mxu0 0.0
      %1114 = vmatpush1.msra.mxu0 0.0
      %1115 = vmatprep.subr.mxu0 0.0
      %1116 = vmatpush1.msra.mxu0 0.0
      %1117 = vmatprep.subr.mxu0 0.0
      %1118 = vmatpush1.msra.mxu0 0.0
      %1119 = vmatprep.subr.mxu0 0.0
      %1120 = vmatpush1.msra.mxu0 0.0
      %1121 = vmatprep.subr.mxu0 0.0
      %1122 = vmatpush1.msra.mxu0 0.0
      %1123 = vmatprep.subr.mxu0 0.0
      %1124 = vmatpush1.msra.mxu0 0.0
      %1125 = vmatprep.subr.mxu0 0.0
      %1126 = vmatpush1.msra.mxu0 0.0
      %1127 = vmatprep.subr.mxu0 0.0
      %1128 = vmatpush1.msra.mxu0 0.0
      %1129 = vmatprep.subr.mxu0 0.0
      %1130 = vmatpush1.msra.mxu0 0.0
      %1131 = vmatprep.subr.mxu0 0.0
      %1132 = vmatpush1.msra.mxu0 0.0
      %1133 = vmatprep.subr.mxu0 0.0
      %1134 = vmatpush1.msra.mxu0 0.0
      %1135 = vmatprep.subr.mxu0 0.0
      %1136 = vmatpush1.msra.mxu0 0.0
      %1137 = vmatprep.subr.mxu0 0.0
      %1138 = vmatpush1.msra.mxu0 0.0
      %1139 = vmatprep.subr.mxu0 0.0
      %1140 = vmatpush1.msra.mxu0 0.0
      %1141 = vmatprep.subr.mxu0 0.0
      %1142 = vmatpush1.msra.mxu0 0.0
      %1143 = vmatprep.subr.mxu0 0.0
      %1144 = vmatpush1.msra.mxu0 0.0
      %1145 = vmatprep.subr.mxu0 0.0
      %1146 = vmatpush1.msra.mxu0 0.0
      %1147 = vmatprep.subr.mxu0 0.0
      %1148 = vmatpush1.msra.mxu0 0.0
      %1149 = vmatprep.subr.mxu0 0.0
      %1150 = vmatpush1.msra.mxu0 0.0
      %1151 = vmatprep.subr.mxu0 0.0
      %1152 = vmatpush1.msra.mxu0 0.0
      %1153 = vmatprep.subr.mxu0 0.0
      %1154 = vmatpush1.msra.mxu0 0.0
      %1155 = vmatprep.subr.mxu0 0.0
      %1156 = vmatpush1.msra.mxu0 0.0
      %1157 = vmatprep.subr.mxu0 0.0
      %1158 = vmatpush1.msra.mxu0 0.0
      %1159 = vmatprep.subr.mxu0 0.0
      %1160 = vmatpush1.msra.mxu0 0.0
      %1161 = vmatprep.mubr.f32.mxu0 0.0
      %1162 = vmatmul.mubr.f32.gmra.mrb[0].mxu0 %v263
      %v1163 = vpop.f32.mrb[0].mxu0
      %v1164 = vadd.f32 %v213, %v1163
      %v1165 = vpop.f32.mrb[0].mxu0
      %1166 = vmatprep.mubr.f32.mxu0 0.0
      %1167 = vmatmul.mubr.f32.gmra.mrb[0].mxu0 %v266
      %v1168 = vpop.f32.mrb[0].mxu0
      %v1169 = vadd.f32 %v218, %v1168
      %v1170 = vpop.f32.mrb[0].mxu0
      %1171 = vdwg.mxu0
      %v1172 = vmax.f32 %v1164, 0.0
      %v1173 = vmax.f32 %v1169, 0.0
      %s1174 = scalar_lea.vmem %s192, 144
      %v1175 = vld [vmem:[%s1174] sm:$0xff]
      %v1176 = vld [vmem:[%s1174 + $0x8] sm:$0xf]
      %v1178 = vsel %vm268, %v1176, 0
      %1180 = vmatprep.subr.mxu0 0.0
      %1181 = vmatpush1.msra.mxu0 %v1175
      %1182 = vmatprep.subr.mxu0 0.0
      %1183 = vmatpush1.msra.mxu0 %v1178
      %1184 = vmatprep.subr.mxu0 0.0
      %1185 = vmatpush1.msra.mxu0 0.0
      %1186 = vmatprep.subr.mxu0 0.0
      %1187 = vmatpush1.msra.mxu0 0.0
      %1188 = vmatprep.subr.mxu0 0.0
      %1189 = vmatpush1.msra.mxu0 0.0
      %1190 = vmatprep.subr.mxu0 0.0
      %1191 = vmatpush1.msra.mxu0 0.0
      %1192 = vmatprep.subr.mxu0 0.0
      %1193 = vmatpush1.msra.mxu0 0.0
      %1194 = vmatprep.subr.mxu0 0.0
      %1195 = vmatpush1.msra.mxu0 0.0
      %1196 = vmatprep.subr.mxu0 0.0
      %1197 = vmatpush1.msra.mxu0 0.0
      %1198 = vmatprep.subr.mxu0 0.0
      %1199 = vmatpush1.msra.mxu0 0.0
      %1200 = vmatprep.subr.mxu0 0.0
      %1201 = vmatpush1.msra.mxu0 0.0
      %1202 = vmatprep.subr.mxu0 0.0
      %1203 = vmatpush1.msra.mxu0 0.0
      %1204 = vmatprep.subr.mxu0 0.0
      %1205 = vmatpush1.msra.mxu0 0.0
      %1206 = vmatprep.subr.mxu0 0.0
      %1207 = vmatpush1.msra.mxu0 0.0
      %1208 = vmatprep.subr.mxu0 0.0
      %1209 = vmatpush1.msra.mxu0 0.0
      %1210 = vmatprep.subr.mxu0 0.0
      %1211 = vmatpush1.msra.mxu0 0.0
      %1212 = vmatprep.subr.mxu0 0.0
      %1213 = vmatpush1.msra.mxu0 0.0
      %1214 = vmatprep.subr.mxu0 0.0
      %1215 = vmatpush1.msra.mxu0 0.0
      %1216 = vmatprep.subr.mxu0 0.0
      %1217 = vmatpush1.msra.mxu0 0.0
      %1218 = vmatprep.subr.mxu0 0.0
      %1219 = vmatpush1.msra.mxu0 0.0
      %1220 = vmatprep.subr.mxu0 0.0
      %1221 = vmatpush1.msra.mxu0 0.0
      %1222 = vmatprep.subr.mxu0 0.0
      %1223 = vmatpush1.msra.mxu0 0.0
      %1224 = vmatprep.subr.mxu0 0.0
      %1225 = vmatpush1.msra.mxu0 0.0
      %1226 = vmatprep.subr.mxu0 0.0
      %1227 = vmatpush1.msra.mxu0 0.0
      %1228 = vmatprep.subr.mxu0 0.0
      %1229 = vmatpush1.msra.mxu0 0.0
      %1230 = vmatprep.subr.mxu0 0.0
      %1231 = vmatpush1.msra.mxu0 0.0
      %1232 = vmatprep.subr.mxu0 0.0
      %1233 = vmatpush1.msra.mxu0 0.0
      %1234 = vmatprep.subr.mxu0 0.0
      %1235 = vmatpush1.msra.mxu0 0.0
      %1236 = vmatprep.subr.mxu0 0.0
      %1237 = vmatpush1.msra.mxu0 0.0
      %1238 = vmatprep.subr.mxu0 0.0
      %1239 = vmatpush1.msra.mxu0 0.0
      %1240 = vmatprep.subr.mxu0 0.0
      %1241 = vmatpush1.msra.mxu0 0.0
      %1242 = vmatprep.subr.mxu0 0.0
      %1243 = vmatpush1.msra.mxu0 0.0
      %1244 = vmatprep.mubr.f32.mxu0 0.0
      %1245 = vmatmul.mubr.f32.gmra.mrb[0].mxu0 %v263
      %v1246 = vpop.f32.mrb[0].mxu0
      %v1247 = vadd.f32 %v213, %v1246
      %v1248 = vpop.f32.mrb[0].mxu0
      %1249 = vmatprep.mubr.f32.mxu0 0.0
      %1250 = vmatmul.mubr.f32.gmra.mrb[0].mxu0 %v266
      %v1251 = vpop.f32.mrb[0].mxu0
      %v1252 = vadd.f32 %v218, %v1251
      %v1253 = vpop.f32.mrb[0].mxu0
      %1254 = vdwg.mxu0
      %v1255 = vmax.f32 %v1247, 0.0
      %v1256 = vmax.f32 %v1252, 0.0
      %s1257 = scalar_lea.vmem %s192, 160
      %v1258 = vld [vmem:[%s1257] sm:$0xff]
      %v1259 = vld [vmem:[%s1257 + $0x8] sm:$0xf]
      %v1261 = vsel %vm268, %v1259, 0
      %1263 = vmatprep.subr.mxu0 0.0
      %1264 = vmatpush1.msra.mxu0 %v1258
      %1265 = vmatprep.subr.mxu0 0.0
      %1266 = vmatpush1.msra.mxu0 %v1261
      %1267 = vmatprep.subr.mxu0 0.0
      %1268 = vmatpush1.msra.mxu0 0.0
      %1269 = vmatprep.subr.mxu0 0.0
      %1270 = vmatpush1.msra.mxu0 0.0
      %1271 = vmatprep.subr.mxu0 0.0
      %1272 = vmatpush1.msra.mxu0 0.0
      %1273 = vmatprep.subr.mxu0 0.0
      %1274 = vmatpush1.msra.mxu0 0.0
      %1275 = vmatprep.subr.mxu0 0.0
      %1276 = vmatpush1.msra.mxu0 0.0
      %1277 = vmatprep.subr.mxu0 0.0
      %1278 = vmatpush1.msra.mxu0 0.0
      %1279 = vmatprep.subr.mxu0 0.0
      %1280 = vmatpush1.msra.mxu0 0.0
      %1281 = vmatprep.subr.mxu0 0.0
      %1282 = vmatpush1.msra.mxu0 0.0
      %1283 = vmatprep.subr.mxu0 0.0
      %1284 = vmatpush1.msra.mxu0 0.0
      %1285 = vmatprep.subr.mxu0 0.0
      %1286 = vmatpush1.msra.mxu0 0.0
      %1287 = vmatprep.subr.mxu0 0.0
      %1288 = vmatpush1.msra.mxu0 0.0
      %1289 = vmatprep.subr.mxu0 0.0
      %1290 = vmatpush1.msra.mxu0 0.0
      %1291 = vmatprep.subr.mxu0 0.0
      %1292 = vmatpush1.msra.mxu0 0.0
      %1293 = vmatprep.subr.mxu0 0.0
      %1294 = vmatpush1.msra.mxu0 0.0
      %1295 = vmatprep.subr.mxu0 0.0
      %1296 = vmatpush1.msra.mxu0 0.0
      %1297 = vmatprep.subr.mxu0 0.0
      %1298 = vmatpush1.msra.mxu0 0.0
      %1299 = vmatprep.subr.mxu0 0.0
      %1300 = vmatpush1.msra.mxu0 0.0
      %1301 = vmatprep.subr.mxu0 0.0
      %1302 = vmatpush1.msra.mxu0 0.0
      %1303 = vmatprep.subr.mxu0 0.0
      %1304 = vmatpush1.msra.mxu0 0.0
      %1305 = vmatprep.subr.mxu0 0.0
      %1306 = vmatpush1.msra.mxu0 0.0
      %1307 = vmatprep.subr.mxu0 0.0
      %1308 = vmatpush1.msra.mxu0 0.0
      %1309 = vmatprep.subr.mxu0 0.0
      %1310 = vmatpush1.msra.mxu0 0.0
      %1311 = vmatprep.subr.mxu0 0.0
      %1312 = vmatpush1.msra.mxu0 0.0
      %1313 = vmatprep.subr.mxu0 0.0
      %1314 = vmatpush1.msra.mxu0 0.0
      %1315 = vmatprep.subr.mxu0 0.0
      %1316 = vmatpush1.msra.mxu0 0.0
      %1317 = vmatprep.subr.mxu0 0.0
      %1318 = vmatpush1.msra.mxu0 0.0
      %1319 = vmatprep.subr.mxu0 0.0
      %1320 = vmatpush1.msra.mxu0 0.0
      %1321 = vmatprep.subr.mxu0 0.0
      %1322 = vmatpush1.msra.mxu0 0.0
      %1323 = vmatprep.subr.mxu0 0.0
      %1324 = vmatpush1.msra.mxu0 0.0
      %1325 = vmatprep.subr.mxu0 0.0
      %1326 = vmatpush1.msra.mxu0 0.0
      %1327 = vmatprep.mubr.f32.mxu0 0.0
      %1328 = vmatmul.mubr.f32.gmra.mrb[0].mxu0 %v263
      %v1329 = vpop.f32.mrb[0].mxu0
      %v1330 = vadd.f32 %v213, %v1329
      %v1331 = vpop.f32.mrb[0].mxu0
      %1332 = vmatprep.mubr.f32.mxu0 0.0
      %1333 = vmatmul.mubr.f32.gmra.mrb[0].mxu0 %v266
      %v1334 = vpop.f32.mrb[0].mxu0
      %v1335 = vadd.f32 %v218, %v1334
      %v1336 = vpop.f32.mrb[0].mxu0
      %1337 = vdwg.mxu0
      %v1338 = vmax.f32 %v1330, 0.0
      %v1339 = vmax.f32 %v1335, 0.0
      %s1340 = scalar_lea.vmem %s192, 176
      %v1341 = vld [vmem:[%s1340] sm:$0xff]
      %v1342 = vld [vmem:[%s1340 + $0x8] sm:$0xf]
      %v1344 = vsel %vm268, %v1342, 0
      %1346 = vmatprep.subr.mxu0 0.0
      %1347 = vmatpush1.msra.mxu0 %v1341
      %1348 = vmatprep.subr.mxu0 0.0
      %1349 = vmatpush1.msra.mxu0 %v1344
      %1350 = vmatprep.subr.mxu0 0.0
      %1351 = vmatpush1.msra.mxu0 0.0
      %1352 = vmatprep.subr.mxu0 0.0
      %1353 = vmatpush1.msra.mxu0 0.0
      %1354 = vmatprep.subr.mxu0 0.0
      %1355 = vmatpush1.msra.mxu0 0.0
      %1356 = vmatprep.subr.mxu0 0.0
      %1357 = vmatpush1.msra.mxu0 0.0
      %1358 = vmatprep.subr.mxu0 0.0
      %1359 = vmatpush1.msra.mxu0 0.0
      %1360 = vmatprep.subr.mxu0 0.0
      %1361 = vmatpush1.msra.mxu0 0.0
      %1362 = vmatprep.subr.mxu0 0.0
      %1363 = vmatpush1.msra.mxu0 0.0
      %1364 = vmatprep.subr.mxu0 0.0
      %1365 = vmatpush1.msra.mxu0 0.0
      %1366 = vmatprep.subr.mxu0 0.0
      %1367 = vmatpush1.msra.mxu0 0.0
      %1368 = vmatprep.subr.mxu0 0.0
      %1369 = vmatpush1.msra.mxu0 0.0
      %1370 = vmatprep.subr.mxu0 0.0
      %1371 = vmatpush1.msra.mxu0 0.0
      %1372 = vmatprep.subr.mxu0 0.0
      %1373 = vmatpush1.msra.mxu0 0.0
      %1374 = vmatprep.subr.mxu0 0.0
      %1375 = vmatpush1.msra.mxu0 0.0
      %1376 = vmatprep.subr.mxu0 0.0
      %1377 = vmatpush1.msra.mxu0 0.0
      %1378 = vmatprep.subr.mxu0 0.0
      %1379 = vmatpush1.msra.mxu0 0.0
      %1380 = vmatprep.subr.mxu0 0.0
      %1381 = vmatpush1.msra.mxu0 0.0
      %1382 = vmatprep.subr.mxu0 0.0
      %1383 = vmatpush1.msra.mxu0 0.0
      %1384 = vmatprep.subr.mxu0 0.0
      %1385 = vmatpush1.msra.mxu0 0.0
      %1386 = vmatprep.subr.mxu0 0.0
      %1387 = vmatpush1.msra.mxu0 0.0
      %1388 = vmatprep.subr.mxu0 0.0
      %1389 = vmatpush1.msra.mxu0 0.0
      %1390 = vmatprep.subr.mxu0 0.0
      %1391 = vmatpush1.msra.mxu0 0.0
      %1392 = vmatprep.subr.mxu0 0.0
      %1393 = vmatpush1.msra.mxu0 0.0
      %1394 = vmatprep.subr.mxu0 0.0
      %1395 = vmatpush1.msra.mxu0 0.0
      %1396 = vmatprep.subr.mxu0 0.0
      %1397 = vmatpush1.msra.mxu0 0.0
      %1398 = vmatprep.subr.mxu0 0.0
      %1399 = vmatpush1.msra.mxu0 0.0
      %1400 = vmatprep.subr.mxu0 0.0
      %1401 = vmatpush1.msra.mxu0 0.0
      %1402 = vmatprep.subr.mxu0 0.0
      %1403 = vmatpush1.msra.mxu0 0.0
      %1404 = vmatprep.subr.mxu0 0.0
      %1405 = vmatpush1.msra.mxu0 0.0
      %1406 = vmatprep.subr.mxu0 0.0
      %1407 = vmatpush1.msra.mxu0 0.0
      %1408 = vmatprep.subr.mxu0 0.0
      %1409 = vmatpush1.msra.mxu0 0.0
      %1410 = vmatprep.mubr.f32.mxu0 0.0
      %1411 = vmatmul.mubr.f32.gmra.mrb[0].mxu0 %v263
      %v1412 = vpop.f32.mrb[0].mxu0
      %v1413 = vadd.f32 %v213, %v1412
      %v1414 = vpop.f32.mrb[0].mxu0
      %1415 = vmatprep.mubr.f32.mxu0 0.0
      %1416 = vmatmul.mubr.f32.gmra.mrb[0].mxu0 %v266
      %v1417 = vpop.f32.mrb[0].mxu0
      %v1418 = vadd.f32 %v218, %v1417
      %v1419 = vpop.f32.mrb[0].mxu0
      %1420 = vdwg.mxu0
      %v1421 = vmax.f32 %v1413, 0.0
      %v1422 = vmax.f32 %v1418, 0.0
      %1423 = vmatprep.subr.mxu0 0.0
      %1424 = vmatpush1.msra.mxu0 %v1172
      %1425 = vmatprep.subr.mxu0 0.0
      %1426 = vmatpush1.msra.mxu0 %v1173
      %1427 = vmatprep.subr.mxu0 0.0
      %1428 = vmatpush1.msra.mxu0 %v1255
      %1429 = vmatprep.subr.mxu0 0.0
      %1430 = vmatpush1.msra.mxu0 %v1256
      %1431 = vmatprep.subr.mxu0 0.0
      %1432 = vmatpush1.msra.mxu0 %v1338
      %1433 = vmatprep.subr.mxu0 0.0
      %1434 = vmatpush1.msra.mxu0 %v1339
      %1435 = vmatprep.subr.mxu0 0.0
      %1436 = vmatpush1.msra.mxu0 %v1421
      %1437 = vmatprep.subr.mxu0 0.0
      %1438 = vmatpush1.msra.mxu0 %v1422
      %1439 = vmatprep.subr.mxu0 0.0
      %1440 = vmatpush1.msra.mxu0 0.0
      %1441 = vmatprep.subr.mxu0 0.0
      %1442 = vmatpush1.msra.mxu0 0.0
      %1443 = vmatprep.subr.mxu0 0.0
      %1444 = vmatpush1.msra.mxu0 0.0
      %1445 = vmatprep.subr.mxu0 0.0
      %1446 = vmatpush1.msra.mxu0 0.0
      %1447 = vmatprep.subr.mxu0 0.0
      %1448 = vmatpush1.msra.mxu0 0.0
      %1449 = vmatprep.subr.mxu0 0.0
      %1450 = vmatpush1.msra.mxu0 0.0
      %1451 = vmatprep.subr.mxu0 0.0
      %1452 = vmatpush1.msra.mxu0 0.0
      %1453 = vmatprep.subr.mxu0 0.0
      %1454 = vmatpush1.msra.mxu0 0.0
      %1455 = vmatprep.subr.mxu0 0.0
      %1456 = vmatpush1.msra.mxu0 0.0
      %1457 = vmatprep.subr.mxu0 0.0
      %1458 = vmatpush1.msra.mxu0 0.0
      %1459 = vmatprep.subr.mxu0 0.0
      %1460 = vmatpush1.msra.mxu0 0.0
      %1461 = vmatprep.subr.mxu0 0.0
      %1462 = vmatpush1.msra.mxu0 0.0
      %1463 = vmatprep.subr.mxu0 0.0
      %1464 = vmatpush1.msra.mxu0 0.0
      %1465 = vmatprep.subr.mxu0 0.0
      %1466 = vmatpush1.msra.mxu0 0.0
      %1467 = vmatprep.subr.mxu0 0.0
      %1468 = vmatpush1.msra.mxu0 0.0
      %1469 = vmatprep.subr.mxu0 0.0
      %1470 = vmatpush1.msra.mxu0 0.0
      %1471 = vmatprep.subr.mxu0 0.0
      %1472 = vmatpush1.msra.mxu0 0.0
      %1473 = vmatprep.subr.mxu0 0.0
      %1474 = vmatpush1.msra.mxu0 0.0
      %1475 = vmatprep.subr.mxu0 0.0
      %1476 = vmatpush1.msra.mxu0 0.0
      %1477 = vmatprep.subr.mxu0 0.0
      %1478 = vmatpush1.msra.mxu0 0.0
      %1479 = vmatprep.subr.mxu0 0.0
      %1480 = vmatpush1.msra.mxu0 0.0
      %1481 = vmatprep.subr.mxu0 0.0
      %1482 = vmatpush1.msra.mxu0 0.0
      %1483 = vmatprep.subr.mxu0 0.0
      %1484 = vmatpush1.msra.mxu0 0.0
      %1485 = vmatprep.subr.mxu0 0.0
      %1486 = vmatpush1.msra.mxu0 0.0
      %1487 = vmatprep.mubr.f32.mxu0 0.0
      %1488 = vmatmul.mubr.f32.gmra.mrb[0].mxu0 %v600
      %v1489 = vpop.f32.mrb[0].mxu0
      %v1490 = vadd.f32 %v226, %v1489
      %v1491 = vpop.f32.mrb[0].mxu0
      %1492 = vmatprep.mubr.f32.mxu0 0.0
      %1493 = vmatmul.mubr.f32.gmra.mrb[0].mxu0 %v603
      %v1494 = vpop.f32.mrb[0].mxu0
      %v1495 = vadd.f32 %v231, %v1494
      %v1496 = vpop.f32.mrb[0].mxu0
      %1497 = vdwg.mxu0
      %v1498 = vmax.f32 %v1490, 0.0
      %v1499 = vmax.f32 %v1495, 0.0
      %s1500 = scalar_lea.vmem %s192, 192
      %v1501 = vld [vmem:[%s1500] sm:$0xff]
      %v1502 = vld [vmem:[%s1500 + $0x8] sm:$0xf]
      %v1504 = vsel %vm268, %v1502, 0
      %1506 = vmatprep.subr.mxu0 0.0
      %1507 = vmatpush1.msra.mxu0 %v1501
      %1508 = vmatprep.subr.mxu0 0.0
      %1509 = vmatpush1.msra.mxu0 %v1504
      %1510 = vmatprep.subr.mxu0 0.0
      %1511 = vmatpush1.msra.mxu0 0.0
      %1512 = vmatprep.subr.mxu0 0.0
      %1513 = vmatpush1.msra.mxu0 0.0
      %1514 = vmatprep.subr.mxu0 0.0
      %1515 = vmatpush1.msra.mxu0 0.0
      %1516 = vmatprep.subr.mxu0 0.0
      %1517 = vmatpush1.msra.mxu0 0.0
      %1518 = vmatprep.subr.mxu0 0.0
      %1519 = vmatpush1.msra.mxu0 0.0
      %1520 = vmatprep.subr.mxu0 0.0
      %1521 = vmatpush1.msra.mxu0 0.0
      %1522 = vmatprep.subr.mxu0 0.0
      %1523 = vmatpush1.msra.mxu0 0.0
      %1524 = vmatprep.subr.mxu0 0.0
      %1525 = vmatpush1.msra.mxu0 0.0
      %1526 = vmatprep.subr.mxu0 0.0
      %1527 = vmatpush1.msra.mxu0 0.0
      %1528 = vmatprep.subr.mxu0 0.0
      %1529 = vmatpush1.msra.mxu0 0.0
      %1530 = vmatprep.subr.mxu0 0.0
      %1531 = vmatpush1.msra.mxu0 0.0
      %1532 = vmatprep.subr.mxu0 0.0
      %1533 = vmatpush1.msra.mxu0 0.0
      %1534 = vmatprep.subr.mxu0 0.0
      %1535 = vmatpush1.msra.mxu0 0.0
      %1536 = vmatprep.subr.mxu0 0.0
      %1537 = vmatpush1.msra.mxu0 0.0
      %1538 = vmatprep.subr.mxu0 0.0
      %1539 = vmatpush1.msra.mxu0 0.0
      %1540 = vmatprep.subr.mxu0 0.0
      %1541 = vmatpush1.msra.mxu0 0.0
      %1542 = vmatprep.subr.mxu0 0.0
      %1543 = vmatpush1.msra.mxu0 0.0
      %1544 = vmatprep.subr.mxu0 0.0
      %1545 = vmatpush1.msra.mxu0 0.0
      %1546 = vmatprep.subr.mxu0 0.0
      %1547 = vmatpush1.msra.mxu0 0.0
      %1548 = vmatprep.subr.mxu0 0.0
      %1549 = vmatpush1.msra.mxu0 0.0
      %1550 = vmatprep.subr.mxu0 0.0
      %1551 = vmatpush1.msra.mxu0 0.0
      %1552 = vmatprep.subr.mxu0 0.0
      %1553 = vmatpush1.msra.mxu0 0.0
      %1554 = vmatprep.subr.mxu0 0.0
      %1555 = vmatpush1.msra.mxu0 0.0
      %1556 = vmatprep.subr.mxu0 0.0
      %1557 = vmatpush1.msra.mxu0 0.0
      %1558 = vmatprep.subr.mxu0 0.0
      %1559 = vmatpush1.msra.mxu0 0.0
      %1560 = vmatprep.subr.mxu0 0.0
      %1561 = vmatpush1.msra.mxu0 0.0
      %1562 = vmatprep.subr.mxu0 0.0
      %1563 = vmatpush1.msra.mxu0 0.0
      %1564 = vmatprep.subr.mxu0 0.0
      %1565 = vmatpush1.msra.mxu0 0.0
      %1566 = vmatprep.subr.mxu0 0.0
      %1567 = vmatpush1.msra.mxu0 0.0
      %1568 = vmatprep.subr.mxu0 0.0
      %1569 = vmatpush1.msra.mxu0 0.0
      %1570 = vmatprep.mubr.f32.mxu0 0.0
      %1571 = vmatmul.mubr.f32.gmra.mrb[0].mxu0 %v263
      %v1572 = vpop.f32.mrb[0].mxu0
      %v1573 = vadd.f32 %v213, %v1572
      %v1574 = vpop.f32.mrb[0].mxu0
      %1575 = vmatprep.mubr.f32.mxu0 0.0
      %1576 = vmatmul.mubr.f32.gmra.mrb[0].mxu0 %v266
      %v1577 = vpop.f32.mrb[0].mxu0
      %v1578 = vadd.f32 %v218, %v1577
      %v1579 = vpop.f32.mrb[0].mxu0
      %1580 = vdwg.mxu0
      %v1581 = vmax.f32 %v1573, 0.0
      %v1582 = vmax.f32 %v1578, 0.0
      %s1583 = scalar_lea.vmem %s192, 208
      %v1584 = vld [vmem:[%s1583] sm:$0xff]
      %v1585 = vld [vmem:[%s1583 + $0x8] sm:$0xf]
      %v1587 = vsel %vm268, %v1585, 0
      %1589 = vmatprep.subr.mxu0 0.0
      %1590 = vmatpush1.msra.mxu0 %v1584
      %1591 = vmatprep.subr.mxu0 0.0
      %1592 = vmatpush1.msra.mxu0 %v1587
      %1593 = vmatprep.subr.mxu0 0.0
      %1594 = vmatpush1.msra.mxu0 0.0
      %1595 = vmatprep.subr.mxu0 0.0
      %1596 = vmatpush1.msra.mxu0 0.0
      %1597 = vmatprep.subr.mxu0 0.0
      %1598 = vmatpush1.msra.mxu0 0.0
      %1599 = vmatprep.subr.mxu0 0.0
      %1600 = vmatpush1.msra.mxu0 0.0
      %1601 = vmatprep.subr.mxu0 0.0
      %1602 = vmatpush1.msra.mxu0 0.0
      %1603 = vmatprep.subr.mxu0 0.0
      %1604 = vmatpush1.msra.mxu0 0.0
      %1605 = vmatprep.subr.mxu0 0.0
      %1606 = vmatpush1.msra.mxu0 0.0
      %1607 = vmatprep.subr.mxu0 0.0
      %1608 = vmatpush1.msra.mxu0 0.0
      %1609 = vmatprep.subr.mxu0 0.0
      %1610 = vmatpush1.msra.mxu0 0.0
      %1611 = vmatprep.subr.mxu0 0.0
      %1612 = vmatpush1.msra.mxu0 0.0
      %1613 = vmatprep.subr.mxu0 0.0
      %1614 = vmatpush1.msra.mxu0 0.0
      %1615 = vmatprep.subr.mxu0 0.0
      %1616 = vmatpush1.msra.mxu0 0.0
      %1617 = vmatprep.subr.mxu0 0.0
      %1618 = vmatpush1.msra.mxu0 0.0
      %1619 = vmatprep.subr.mxu0 0.0
      %1620 = vmatpush1.msra.mxu0 0.0
      %1621 = vmatprep.subr.mxu0 0.0
      %1622 = vmatpush1.msra.mxu0 0.0
      %1623 = vmatprep.subr.mxu0 0.0
      %1624 = vmatpush1.msra.mxu0 0.0
      %1625 = vmatprep.subr.mxu0 0.0
      %1626 = vmatpush1.msra.mxu0 0.0
      %1627 = vmatprep.subr.mxu0 0.0
      %1628 = vmatpush1.msra.mxu0 0.0
      %1629 = vmatprep.subr.mxu0 0.0
      %1630 = vmatpush1.msra.mxu0 0.0
      %1631 = vmatprep.subr.mxu0 0.0
      %1632 = vmatpush1.msra.mxu0 0.0
      %1633 = vmatprep.subr.mxu0 0.0
      %1634 = vmatpush1.msra.mxu0 0.0
      %1635 = vmatprep.subr.mxu0 0.0
      %1636 = vmatpush1.msra.mxu0 0.0
      %1637 = vmatprep.subr.mxu0 0.0
      %1638 = vmatpush1.msra.mxu0 0.0
      %1639 = vmatprep.subr.mxu0 0.0
      %1640 = vmatpush1.msra.mxu0 0.0
      %1641 = vmatprep.subr.mxu0 0.0
      %1642 = vmatpush1.msra.mxu0 0.0
      %1643 = vmatprep.subr.mxu0 0.0
      %1644 = vmatpush1.msra.mxu0 0.0
      %1645 = vmatprep.subr.mxu0 0.0
      %1646 = vmatpush1.msra.mxu0 0.0
      %1647 = vmatprep.subr.mxu0 0.0
      %1648 = vmatpush1.msra.mxu0 0.0
      %1649 = vmatprep.subr.mxu0 0.0
      %1650 = vmatpush1.msra.mxu0 0.0
      %1651 = vmatprep.subr.mxu0 0.0
      %1652 = vmatpush1.msra.mxu0 0.0
      %1653 = vmatprep.mubr.f32.mxu0 0.0
      %1654 = vmatmul.mubr.f32.gmra.mrb[0].mxu0 %v263
      %v1655 = vpop.f32.mrb[0].mxu0
      %v1656 = vadd.f32 %v213, %v1655
      %v1657 = vpop.f32.mrb[0].mxu0
      %1658 = vmatprep.mubr.f32.mxu0 0.0
      %1659 = vmatmul.mubr.f32.gmra.mrb[0].mxu0 %v266
      %v1660 = vpop.f32.mrb[0].mxu0
      %v1661 = vadd.f32 %v218, %v1660
      %v1662 = vpop.f32.mrb[0].mxu0
      %1663 = vdwg.mxu0
      %v1664 = vmax.f32 %v1656, 0.0
      %v1665 = vmax.f32 %v1661, 0.0
      %s1666 = scalar_lea.vmem %s192, 224
      %v1667 = vld [vmem:[%s1666] sm:$0xff]
      %v1668 = vld [vmem:[%s1666 + $0x8] sm:$0xf]
      %v1670 = vsel %vm268, %v1668, 0
      %1672 = vmatprep.subr.mxu0 0.0
      %1673 = vmatpush1.msra.mxu0 %v1667
      %1674 = vmatprep.subr.mxu0 0.0
      %1675 = vmatpush1.msra.mxu0 %v1670
      %1676 = vmatprep.subr.mxu0 0.0
      %1677 = vmatpush1.msra.mxu0 0.0
      %1678 = vmatprep.subr.mxu0 0.0
      %1679 = vmatpush1.msra.mxu0 0.0
      %1680 = vmatprep.subr.mxu0 0.0
      %1681 = vmatpush1.msra.mxu0 0.0
      %1682 = vmatprep.subr.mxu0 0.0
      %1683 = vmatpush1.msra.mxu0 0.0
      %1684 = vmatprep.subr.mxu0 0.0
      %1685 = vmatpush1.msra.mxu0 0.0
      %1686 = vmatprep.subr.mxu0 0.0
      %1687 = vmatpush1.msra.mxu0 0.0
      %1688 = vmatprep.subr.mxu0 0.0
      %1689 = vmatpush1.msra.mxu0 0.0
      %1690 = vmatprep.subr.mxu0 0.0
      %1691 = vmatpush1.msra.mxu0 0.0
      %1692 = vmatprep.subr.mxu0 0.0
      %1693 = vmatpush1.msra.mxu0 0.0
      %1694 = vmatprep.subr.mxu0 0.0
      %1695 = vmatpush1.msra.mxu0 0.0
      %1696 = vmatprep.subr.mxu0 0.0
      %1697 = vmatpush1.msra.mxu0 0.0
      %1698 = vmatprep.subr.mxu0 0.0
      %1699 = vmatpush1.msra.mxu0 0.0
      %1700 = vmatprep.subr.mxu0 0.0
      %1701 = vmatpush1.msra.mxu0 0.0
      %1702 = vmatprep.subr.mxu0 0.0
      %1703 = vmatpush1.msra.mxu0 0.0
      %1704 = vmatprep.subr.mxu0 0.0
      %1705 = vmatpush1.msra.mxu0 0.0
      %1706 = vmatprep.subr.mxu0 0.0
      %1707 = vmatpush1.msra.mxu0 0.0
      %1708 = vmatprep.subr.mxu0 0.0
      %1709 = vmatpush1.msra.mxu0 0.0
      %1710 = vmatprep.subr.mxu0 0.0
      %1711 = vmatpush1.msra.mxu0 0.0
      %1712 = vmatprep.subr.mxu0 0.0
      %1713 = vmatpush1.msra.mxu0 0.0
      %1714 = vmatprep.subr.mxu0 0.0
      %1715 = vmatpush1.msra.mxu0 0.0
      %1716 = vmatprep.subr.mxu0 0.0
      %1717 = vmatpush1.msra.mxu0 0.0
      %1718 = vmatprep.subr.mxu0 0.0
      %1719 = vmatpush1.msra.mxu0 0.0
      %1720 = vmatprep.subr.mxu0 0.0
      %1721 = vmatpush1.msra.mxu0 0.0
      %1722 = vmatprep.subr.mxu0 0.0
      %1723 = vmatpush1.msra.mxu0 0.0
      %1724 = vmatprep.subr.mxu0 0.0
      %1725 = vmatpush1.msra.mxu0 0.0
      %1726 = vmatprep.subr.mxu0 0.0
      %1727 = vmatpush1.msra.mxu0 0.0
      %1728 = vmatprep.subr.mxu0 0.0
      %1729 = vmatpush1.msra.mxu0 0.0
      %1730 = vmatprep.subr.mxu0 0.0
      %1731 = vmatpush1.msra.mxu0 0.0
      %1732 = vmatprep.subr.mxu0 0.0
      %1733 = vmatpush1.msra.mxu0 0.0
      %1734 = vmatprep.subr.mxu0 0.0
      %1735 = vmatpush1.msra.mxu0 0.0
      %1736 = vmatprep.mubr.f32.mxu0 0.0
      %1737 = vmatmul.mubr.f32.gmra.mrb[0].mxu0 %v263
      %v1738 = vpop.f32.mrb[0].mxu0
      %v1739 = vadd.f32 %v213, %v1738
      %v1740 = vpop.f32.mrb[0].mxu0
      %1741 = vmatprep.mubr.f32.mxu0 0.0
      %1742 = vmatmul.mubr.f32.gmra.mrb[0].mxu0 %v266
      %v1743 = vpop.f32.mrb[0].mxu0
      %v1744 = vadd.f32 %v218, %v1743
      %v1745 = vpop.f32.mrb[0].mxu0
      %1746 = vdwg.mxu0
      %v1747 = vmax.f32 %v1739, 0.0
      %v1748 = vmax.f32 %v1744, 0.0
      %s1749 = scalar_lea.vmem %s192, 240
      %v1750 = vld [vmem:[%s1749] sm:$0xff]
      %v1751 = vld [vmem:[%s1749 + $0x8] sm:$0xf]
      %v1753 = vsel %vm268, %v1751, 0
      %1755 = vmatprep.subr.mxu0 0.0
      %1756 = vmatpush1.msra.mxu0 %v1750
      %1757 = vmatprep.subr.mxu0 0.0
      %1758 = vmatpush1.msra.mxu0 %v1753
      %1759 = vmatprep.subr.mxu0 0.0
      %1760 = vmatpush1.msra.mxu0 0.0
      %1761 = vmatprep.subr.mxu0 0.0
      %1762 = vmatpush1.msra.mxu0 0.0
      %1763 = vmatprep.subr.mxu0 0.0
      %1764 = vmatpush1.msra.mxu0 0.0
      %1765 = vmatprep.subr.mxu0 0.0
      %1766 = vmatpush1.msra.mxu0 0.0
      %1767 = vmatprep.subr.mxu0 0.0
      %1768 = vmatpush1.msra.mxu0 0.0
      %1769 = vmatprep.subr.mxu0 0.0
      %1770 = vmatpush1.msra.mxu0 0.0
      %1771 = vmatprep.subr.mxu0 0.0
      %1772 = vmatpush1.msra.mxu0 0.0
      %1773 = vmatprep.subr.mxu0 0.0
      %1774 = vmatpush1.msra.mxu0 0.0
      %1775 = vmatprep.subr.mxu0 0.0
      %1776 = vmatpush1.msra.mxu0 0.0
      %1777 = vmatprep.subr.mxu0 0.0
      %1778 = vmatpush1.msra.mxu0 0.0
      %1779 = vmatprep.subr.mxu0 0.0
      %1780 = vmatpush1.msra.mxu0 0.0
      %1781 = vmatprep.subr.mxu0 0.0
      %1782 = vmatpush1.msra.mxu0 0.0
      %1783 = vmatprep.subr.mxu0 0.0
      %1784 = vmatpush1.msra.mxu0 0.0
      %1785 = vmatprep.subr.mxu0 0.0
      %1786 = vmatpush1.msra.mxu0 0.0
      %1787 = vmatprep.subr.mxu0 0.0
      %1788 = vmatpush1.msra.mxu0 0.0
      %1789 = vmatprep.subr.mxu0 0.0
      %1790 = vmatpush1.msra.mxu0 0.0
      %1791 = vmatprep.subr.mxu0 0.0
      %1792 = vmatpush1.msra.mxu0 0.0
      %1793 = vmatprep.subr.mxu0 0.0
      %1794 = vmatpush1.msra.mxu0 0.0
      %1795 = vmatprep.subr.mxu0 0.0
      %1796 = vmatpush1.msra.mxu0 0.0
      %1797 = vmatprep.subr.mxu0 0.0
      %1798 = vmatpush1.msra.mxu0 0.0
      %1799 = vmatprep.subr.mxu0 0.0
      %1800 = vmatpush1.msra.mxu0 0.0
      %1801 = vmatprep.subr.mxu0 0.0
      %1802 = vmatpush1.msra.mxu0 0.0
      %1803 = vmatprep.subr.mxu0 0.0
      %1804 = vmatpush1.msra.mxu0 0.0
      %1805 = vmatprep.subr.mxu0 0.0
      %1806 = vmatpush1.msra.mxu0 0.0
      %1807 = vmatprep.subr.mxu0 0.0
      %1808 = vmatpush1.msra.mxu0 0.0
      %1809 = vmatprep.subr.mxu0 0.0
      %1810 = vmatpush1.msra.mxu0 0.0
      %1811 = vmatprep.subr.mxu0 0.0
      %1812 = vmatpush1.msra.mxu0 0.0
      %1813 = vmatprep.subr.mxu0 0.0
      %1814 = vmatpush1.msra.mxu0 0.0
      %1815 = vmatprep.subr.mxu0 0.0
      %1816 = vmatpush1.msra.mxu0 0.0
      %1817 = vmatprep.subr.mxu0 0.0
      %1818 = vmatpush1.msra.mxu0 0.0
      %1819 = vmatprep.mubr.f32.mxu0 0.0
      %1820 = vmatmul.mubr.f32.gmra.mrb[0].mxu0 %v263
      %v1821 = vpop.f32.mrb[0].mxu0
      %v1822 = vadd.f32 %v213, %v1821
      %v1823 = vpop.f32.mrb[0].mxu0
      %1824 = vmatprep.mubr.f32.mxu0 0.0
      %1825 = vmatmul.mubr.f32.gmra.mrb[0].mxu0 %v266
      %v1826 = vpop.f32.mrb[0].mxu0
      %v1827 = vadd.f32 %v218, %v1826
      %v1828 = vpop.f32.mrb[0].mxu0
      %1829 = vdwg.mxu0
      %v1830 = vmax.f32 %v1822, 0.0
      %v1831 = vmax.f32 %v1827, 0.0
      %1832 = vmatprep.subr.mxu0 0.0
      %1833 = vmatpush1.msra.mxu0 %v1581
      %1834 = vmatprep.subr.mxu0 0.0
      %1835 = vmatpush1.msra.mxu0 %v1582
      %1836 = vmatprep.subr.mxu0 0.0
      %1837 = vmatpush1.msra.mxu0 %v1664
      %1838 = vmatprep.subr.mxu0 0.0
      %1839 = vmatpush1.msra.mxu0 %v1665
      %1840 = vmatprep.subr.mxu0 0.0
      %1841 = vmatpush1.msra.mxu0 %v1747
      %1842 = vmatprep.subr.mxu0 0.0
      %1843 = vmatpush1.msra.mxu0 %v1748
      %1844 = vmatprep.subr.mxu0 0.0
      %1845 = vmatpush1.msra.mxu0 %v1830
      %1846 = vmatprep.subr.mxu0 0.0
      %1847 = vmatpush1.msra.mxu0 %v1831
      %1848 = vmatprep.subr.mxu0 0.0
      %1849 = vmatpush1.msra.mxu0 0.0
      %1850 = vmatprep.subr.mxu0 0.0
      %1851 = vmatpush1.msra.mxu0 0.0
      %1852 = vmatprep.subr.mxu0 0.0
      %1853 = vmatpush1.msra.mxu0 0.0
      %1854 = vmatprep.subr.mxu0 0.0
      %1855 = vmatpush1.msra.mxu0 0.0
      %1856 = vmatprep.subr.mxu0 0.0
      %1857 = vmatpush1.msra.mxu0 0.0
      %1858 = vmatprep.subr.mxu0 0.0
      %1859 = vmatpush1.msra.mxu0 0.0
      %1860 = vmatprep.subr.mxu0 0.0
      %1861 = vmatpush1.msra.mxu0 0.0
      %1862 = vmatprep.subr.mxu0 0.0
      %1863 = vmatpush1.msra.mxu0 0.0
      %1864 = vmatprep.subr.mxu0 0.0
      %1865 = vmatpush1.msra.mxu0 0.0
      %1866 = vmatprep.subr.mxu0 0.0
      %1867 = vmatpush1.msra.mxu0 0.0
      %1868 = vmatprep.subr.mxu0 0.0
      %1869 = vmatpush1.msra.mxu0 0.0
      %1870 = vmatprep.subr.mxu0 0.0
      %1871 = vmatpush1.msra.mxu0 0.0
      %1872 = vmatprep.subr.mxu0 0.0
      %1873 = vmatpush1.msra.mxu0 0.0
      %1874 = vmatprep.subr.mxu0 0.0
      %1875 = vmatpush1.msra.mxu0 0.0
      %1876 = vmatprep.subr.mxu0 0.0
      %1877 = vmatpush1.msra.mxu0 0.0
      %1878 = vmatprep.subr.mxu0 0.0
      %1879 = vmatpush1.msra.mxu0 0.0
      %1880 = vmatprep.subr.mxu0 0.0
      %1881 = vmatpush1.msra.mxu0 0.0
      %1882 = vmatprep.subr.mxu0 0.0
      %1883 = vmatpush1.msra.mxu0 0.0
      %1884 = vmatprep.subr.mxu0 0.0
      %1885 = vmatpush1.msra.mxu0 0.0
      %1886 = vmatprep.subr.mxu0 0.0
      %1887 = vmatpush1.msra.mxu0 0.0
      %1888 = vmatprep.subr.mxu0 0.0
      %1889 = vmatpush1.msra.mxu0 0.0
      %1890 = vmatprep.subr.mxu0 0.0
      %1891 = vmatpush1.msra.mxu0 0.0
      %1892 = vmatprep.subr.mxu0 0.0
      %1893 = vmatpush1.msra.mxu0 0.0
      %1894 = vmatprep.subr.mxu0 0.0
      %1895 = vmatpush1.msra.mxu0 0.0
      %1896 = vmatprep.mubr.f32.mxu0 0.0
      %1897 = vmatmul.mubr.f32.gmra.mrb[0].mxu0 %v600
      %v1898 = vpop.f32.mrb[0].mxu0
      %v1899 = vadd.f32 %v226, %v1898
      %v1900 = vpop.f32.mrb[0].mxu0
      %1901 = vmatprep.mubr.f32.mxu0 0.0
      %1902 = vmatmul.mubr.f32.gmra.mrb[0].mxu0 %v603
      %v1903 = vpop.f32.mrb[0].mxu0
      %v1904 = vadd.f32 %v231, %v1903
      %v1905 = vpop.f32.mrb[0].mxu0
      %1906 = vdwg.mxu0
      %v1907 = vmax.f32 %v1899, 0.0
      %v1908 = vmax.f32 %v1904, 0.0
      %s1909 = scalar_lea.vmem %s192, 256
      %v1910 = vld [vmem:[%s1909] sm:$0xff]
      %v1911 = vld [vmem:[%s1909 + $0x8] sm:$0xf]
      %v1913 = vsel %vm268, %v1911, 0
      %1915 = vmatprep.subr.mxu0 0.0
      %1916 = vmatpush1.msra.mxu0 %v1910
      %1917 = vmatprep.subr.mxu0 0.0
      %1918 = vmatpush1.msra.mxu0 %v1913
      %1919 = vmatprep.subr.mxu0 0.0
      %1920 = vmatpush1.msra.mxu0 0.0
      %1921 = vmatprep.subr.mxu0 0.0
      %1922 = vmatpush1.msra.mxu0 0.0
      %1923 = vmatprep.subr.mxu0 0.0
      %1924 = vmatpush1.msra.mxu0 0.0
      %1925 = vmatprep.subr.mxu0 0.0
      %1926 = vmatpush1.msra.mxu0 0.0
      %1927 = vmatprep.subr.mxu0 0.0
      %1928 = vmatpush1.msra.mxu0 0.0
      %1929 = vmatprep.subr.mxu0 0.0
      %1930 = vmatpush1.msra.mxu0 0.0
      %1931 = vmatprep.subr.mxu0 0.0
      %1932 = vmatpush1.msra.mxu0 0.0
      %1933 = vmatprep.subr.mxu0 0.0
      %1934 = vmatpush1.msra.mxu0 0.0
      %1935 = vmatprep.subr.mxu0 0.0
      %1936 = vmatpush1.msra.mxu0 0.0
      %1937 = vmatprep.subr.mxu0 0.0
      %1938 = vmatpush1.msra.mxu0 0.0
      %1939 = vmatprep.subr.mxu0 0.0
      %1940 = vmatpush1.msra.mxu0 0.0
      %1941 = vmatprep.subr.mxu0 0.0
      %1942 = vmatpush1.msra.mxu0 0.0
      %1943 = vmatprep.subr.mxu0 0.0
      %1944 = vmatpush1.msra.mxu0 0.0
      %1945 = vmatprep.subr.mxu0 0.0
      %1946 = vmatpush1.msra.mxu0 0.0
      %1947 = vmatprep.subr.mxu0 0.0
      %1948 = vmatpush1.msra.mxu0 0.0
      %1949 = vmatprep.subr.mxu0 0.0
      %1950 = vmatpush1.msra.mxu0 0.0
      %1951 = vmatprep.subr.mxu0 0.0
      %1952 = vmatpush1.msra.mxu0 0.0
      %1953 = vmatprep.subr.mxu0 0.0
      %1954 = vmatpush1.msra.mxu0 0.0
      %1955 = vmatprep.subr.mxu0 0.0
      %1956 = vmatpush1.msra.mxu0 0.0
      %1957 = vmatprep.subr.mxu0 0.0
      %1958 = vmatpush1.msra.mxu0 0.0
      %1959 = vmatprep.subr.mxu0 0.0
      %1960 = vmatpush1.msra.mxu0 0.0
      %1961 = vmatprep.subr.mxu0 0.0
      %1962 = vmatpush1.msra.mxu0 0.0
      %1963 = vmatprep.subr.mxu0 0.0
      %1964 = vmatpush1.msra.mxu0 0.0
      %1965 = vmatprep.subr.mxu0 0.0
      %1966 = vmatpush1.msra.mxu0 0.0
      %1967 = vmatprep.subr.mxu0 0.0
      %1968 = vmatpush1.msra.mxu0 0.0
      %1969 = vmatprep.subr.mxu0 0.0
      %1970 = vmatpush1.msra.mxu0 0.0
      %1971 = vmatprep.subr.mxu0 0.0
      %1972 = vmatpush1.msra.mxu0 0.0
      %1973 = vmatprep.subr.mxu0 0.0
      %1974 = vmatpush1.msra.mxu0 0.0
      %1975 = vmatprep.subr.mxu0 0.0
      %1976 = vmatpush1.msra.mxu0 0.0
      %1977 = vmatprep.subr.mxu0 0.0
      %1978 = vmatpush1.msra.mxu0 0.0
      %1979 = vmatprep.mubr.f32.mxu0 0.0
      %1980 = vmatmul.mubr.f32.gmra.mrb[0].mxu0 %v263
      %v1981 = vpop.f32.mrb[0].mxu0
      %v1982 = vadd.f32 %v213, %v1981
      %v1983 = vpop.f32.mrb[0].mxu0
      %1984 = vmatprep.mubr.f32.mxu0 0.0
      %1985 = vmatmul.mubr.f32.gmra.mrb[0].mxu0 %v266
      %v1986 = vpop.f32.mrb[0].mxu0
      %v1987 = vadd.f32 %v218, %v1986
      %v1988 = vpop.f32.mrb[0].mxu0
      %1989 = vdwg.mxu0
      %v1990 = vmax.f32 %v1982, 0.0
      %v1991 = vmax.f32 %v1987, 0.0
      %s1992 = scalar_lea.vmem %s192, 272
      %v1993 = vld [vmem:[%s1992] sm:$0xff]
      %v1994 = vld [vmem:[%s1992 + $0x8] sm:$0xf]
      %v1996 = vsel %vm268, %v1994, 0
      %1998 = vmatprep.subr.mxu0 0.0
      %1999 = vmatpush1.msra.mxu0 %v1993
      %2000 = vmatprep.subr.mxu0 0.0
      %2001 = vmatpush1.msra.mxu0 %v1996
      %2002 = vmatprep.subr.mxu0 0.0
      %2003 = vmatpush1.msra.mxu0 0.0
      %2004 = vmatprep.subr.mxu0 0.0
      %2005 = vmatpush1.msra.mxu0 0.0
      %2006 = vmatprep.subr.mxu0 0.0
      %2007 = vmatpush1.msra.mxu0 0.0
      %2008 = vmatprep.subr.mxu0 0.0
      %2009 = vmatpush1.msra.mxu0 0.0
      %2010 = vmatprep.subr.mxu0 0.0
      %2011 = vmatpush1.msra.mxu0 0.0
      %2012 = vmatprep.subr.mxu0 0.0
      %2013 = vmatpush1.msra.mxu0 0.0
      %2014 = vmatprep.subr.mxu0 0.0
      %2015 = vmatpush1.msra.mxu0 0.0
      %2016 = vmatprep.subr.mxu0 0.0
      %2017 = vmatpush1.msra.mxu0 0.0
      %2018 = vmatprep.subr.mxu0 0.0
      %2019 = vmatpush1.msra.mxu0 0.0
      %2020 = vmatprep.subr.mxu0 0.0
      %2021 = vmatpush1.msra.mxu0 0.0
      %2022 = vmatprep.subr.mxu0 0.0
      %2023 = vmatpush1.msra.mxu0 0.0
      %2024 = vmatprep.subr.mxu0 0.0
      %2025 = vmatpush1.msra.mxu0 0.0
      %2026 = vmatprep.subr.mxu0 0.0
      %2027 = vmatpush1.msra.mxu0 0.0
      %2028 = vmatprep.subr.mxu0 0.0
      %2029 = vmatpush1.msra.mxu0 0.0
      %2030 = vmatprep.subr.mxu0 0.0
      %2031 = vmatpush1.msra.mxu0 0.0
      %2032 = vmatprep.subr.mxu0 0.0
      %2033 = vmatpush1.msra.mxu0 0.0
      %2034 = vmatprep.subr.mxu0 0.0
      %2035 = vmatpush1.msra.mxu0 0.0
      %2036 = vmatprep.subr.mxu0 0.0
      %2037 = vmatpush1.msra.mxu0 0.0
      %2038 = vmatprep.subr.mxu0 0.0
      %2039 = vmatpush1.msra.mxu0 0.0
      %2040 = vmatprep.subr.mxu0 0.0
      %2041 = vmatpush1.msra.mxu0 0.0
      %2042 = vmatprep.subr.mxu0 0.0
      %2043 = vmatpush1.msra.mxu0 0.0
      %2044 = vmatprep.subr.mxu0 0.0
      %2045 = vmatpush1.msra.mxu0 0.0
      %2046 = vmatprep.subr.mxu0 0.0
      %2047 = vmatpush1.msra.mxu0 0.0
      %2048 = vmatprep.subr.mxu0 0.0
      %2049 = vmatpush1.msra.mxu0 0.0
      %2050 = vmatprep.subr.mxu0 0.0
      %2051 = vmatpush1.msra.mxu0 0.0
      %2052 = vmatprep.subr.mxu0 0.0
      %2053 = vmatpush1.msra.mxu0 0.0
      %2054 = vmatprep.subr.mxu0 0.0
      %2055 = vmatpush1.msra.mxu0 0.0
      %2056 = vmatprep.subr.mxu0 0.0
      %2057 = vmatpush1.msra.mxu0 0.0
      %2058 = vmatprep.subr.mxu0 0.0
      %2059 = vmatpush1.msra.mxu0 0.0
      %2060 = vmatprep.subr.mxu0 0.0
      %2061 = vmatpush1.msra.mxu0 0.0
      %2062 = vmatprep.mubr.f32.mxu0 0.0
      %2063 = vmatmul.mubr.f32.gmra.mrb[0].mxu0 %v263
      %v2064 = vpop.f32.mrb[0].mxu0
      %v2065 = vadd.f32 %v213, %v2064
      %v2066 = vpop.f32.mrb[0].mxu0
      %2067 = vmatprep.mubr.f32.mxu0 0.0
      %2068 = vmatmul.mubr.f32.gmra.mrb[0].mxu0 %v266
      %v2069 = vpop.f32.mrb[0].mxu0
      %v2070 = vadd.f32 %v218, %v2069
      %v2071 = vpop.f32.mrb[0].mxu0
      %2072 = vdwg.mxu0
      %v2073 = vmax.f32 %v2065, 0.0
      %v2074 = vmax.f32 %v2070, 0.0
      %s2075 = scalar_lea.vmem %s192, 288
      %v2076 = vld [vmem:[%s2075] sm:$0xff]
      %v2077 = vld [vmem:[%s2075 + $0x8] sm:$0xf]
      %v2079 = vsel %vm268, %v2077, 0
      %2081 = vmatprep.subr.mxu0 0.0
      %2082 = vmatpush1.msra.mxu0 %v2076
      %2083 = vmatprep.subr.mxu0 0.0
      %2084 = vmatpush1.msra.mxu0 %v2079
      %2085 = vmatprep.subr.mxu0 0.0
      %2086 = vmatpush1.msra.mxu0 0.0
      %2087 = vmatprep.subr.mxu0 0.0
      %2088 = vmatpush1.msra.mxu0 0.0
      %2089 = vmatprep.subr.mxu0 0.0
      %2090 = vmatpush1.msra.mxu0 0.0
      %2091 = vmatprep.subr.mxu0 0.0
      %2092 = vmatpush1.msra.mxu0 0.0
      %2093 = vmatprep.subr.mxu0 0.0
      %2094 = vmatpush1.msra.mxu0 0.0
      %2095 = vmatprep.subr.mxu0 0.0
      %2096 = vmatpush1.msra.mxu0 0.0
      %2097 = vmatprep.subr.mxu0 0.0
      %2098 = vmatpush1.msra.mxu0 0.0
      %2099 = vmatprep.subr.mxu0 0.0
      %2100 = vmatpush1.msra.mxu0 0.0
      %2101 = vmatprep.subr.mxu0 0.0
      %2102 = vmatpush1.msra.mxu0 0.0
      %2103 = vmatprep.subr.mxu0 0.0
      %2104 = vmatpush1.msra.mxu0 0.0
      %2105 = vmatprep.subr.mxu0 0.0
      %2106 = vmatpush1.msra.mxu0 0.0
      %2107 = vmatprep.subr.mxu0 0.0
      %2108 = vmatpush1.msra.mxu0 0.0
      %2109 = vmatprep.subr.mxu0 0.0
      %2110 = vmatpush1.msra.mxu0 0.0
      %2111 = vmatprep.subr.mxu0 0.0
      %2112 = vmatpush1.msra.mxu0 0.0
      %2113 = vmatprep.subr.mxu0 0.0
      %2114 = vmatpush1.msra.mxu0 0.0
      %2115 = vmatprep.subr.mxu0 0.0
      %2116 = vmatpush1.msra.mxu0 0.0
      %2117 = vmatprep.subr.mxu0 0.0
      %2118 = vmatpush1.msra.mxu0 0.0
      %2119 = vmatprep.subr.mxu0 0.0
      %2120 = vmatpush1.msra.mxu0 0.0
      %2121 = vmatprep.subr.mxu0 0.0
      %2122 = vmatpush1.msra.mxu0 0.0
      %2123 = vmatprep.subr.mxu0 0.0
      %2124 = vmatpush1.msra.mxu0 0.0
      %2125 = vmatprep.subr.mxu0 0.0
      %2126 = vmatpush1.msra.mxu0 0.0
      %2127 = vmatprep.subr.mxu0 0.0
      %2128 = vmatpush1.msra.mxu0 0.0
      %2129 = vmatprep.subr.mxu0 0.0
      %2130 = vmatpush1.msra.mxu0 0.0
      %2131 = vmatprep.subr.mxu0 0.0
      %2132 = vmatpush1.msra.mxu0 0.0
      %2133 = vmatprep.subr.mxu0 0.0
      %2134 = vmatpush1.msra.mxu0 0.0
      %2135 = vmatprep.subr.mxu0 0.0
      %2136 = vmatpush1.msra.mxu0 0.0
      %2137 = vmatprep.subr.mxu0 0.0
      %2138 = vmatpush1.msra.mxu0 0.0
      %2139 = vmatprep.subr.mxu0 0.0
      %2140 = vmatpush1.msra.mxu0 0.0
      %2141 = vmatprep.subr.mxu0 0.0
      %2142 = vmatpush1.msra.mxu0 0.0
      %2143 = vmatprep.subr.mxu0 0.0
      %2144 = vmatpush1.msra.mxu0 0.0
      %2145 = vmatprep.mubr.f32.mxu0 0.0
      %2146 = vmatmul.mubr.f32.gmra.mrb[0].mxu0 %v263
      %v2147 = vpop.f32.mrb[0].mxu0
      %v2148 = vadd.f32 %v213, %v2147
      %v2149 = vpop.f32.mrb[0].mxu0
      %2150 = vmatprep.mubr.f32.mxu0 0.0
      %2151 = vmatmul.mubr.f32.gmra.mrb[0].mxu0 %v266
      %v2152 = vpop.f32.mrb[0].mxu0
      %v2153 = vadd.f32 %v218, %v2152
      %v2154 = vpop.f32.mrb[0].mxu0
      %2155 = vdwg.mxu0
      %v2156 = vmax.f32 %v2148, 0.0
      %v2157 = vmax.f32 %v2153, 0.0
      %s2158 = scalar_lea.vmem %s192, 304
      %v2159 = vld [vmem:[%s2158] sm:$0xff]
      %v2160 = vld [vmem:[%s2158 + $0x8] sm:$0xf]
      %v2162 = vsel %vm268, %v2160, 0
      %2164 = vmatprep.subr.mxu0 0.0
      %2165 = vmatpush1.msra.mxu0 %v2159
      %2166 = vmatprep.subr.mxu0 0.0
      %2167 = vmatpush1.msra.mxu0 %v2162
      %2168 = vmatprep.subr.mxu0 0.0
      %2169 = vmatpush1.msra.mxu0 0.0
      %2170 = vmatprep.subr.mxu0 0.0
      %2171 = vmatpush1.msra.mxu0 0.0
      %2172 = vmatprep.subr.mxu0 0.0
      %2173 = vmatpush1.msra.mxu0 0.0
      %2174 = vmatprep.subr.mxu0 0.0
      %2175 = vmatpush1.msra.mxu0 0.0
      %2176 = vmatprep.subr.mxu0 0.0
      %2177 = vmatpush1.msra.mxu0 0.0
      %2178 = vmatprep.subr.mxu0 0.0
      %2179 = vmatpush1.msra.mxu0 0.0
      %2180 = vmatprep.subr.mxu0 0.0
      %2181 = vmatpush1.msra.mxu0 0.0
      %2182 = vmatprep.subr.mxu0 0.0
      %2183 = vmatpush1.msra.mxu0 0.0
      %2184 = vmatprep.subr.mxu0 0.0
      %2185 = vmatpush1.msra.mxu0 0.0
      %2186 = vmatprep.subr.mxu0 0.0
      %2187 = vmatpush1.msra.mxu0 0.0
      %2188 = vmatprep.subr.mxu0 0.0
      %2189 = vmatpush1.msra.mxu0 0.0
      %2190 = vmatprep.subr.mxu0 0.0
      %2191 = vmatpush1.msra.mxu0 0.0
      %2192 = vmatprep.subr.mxu0 0.0
      %2193 = vmatpush1.msra.mxu0 0.0
      %2194 = vmatprep.subr.mxu0 0.0
      %2195 = vmatpush1.msra.mxu0 0.0
      %2196 = vmatprep.subr.mxu0 0.0
      %2197 = vmatpush1.msra.mxu0 0.0
      %2198 = vmatprep.subr.mxu0 0.0
      %2199 = vmatpush1.msra.mxu0 0.0
      %2200 = vmatprep.subr.mxu0 0.0
      %2201 = vmatpush1.msra.mxu0 0.0
      %2202 = vmatprep.subr.mxu0 0.0
      %2203 = vmatpush1.msra.mxu0 0.0
      %2204 = vmatprep.subr.mxu0 0.0
      %2205 = vmatpush1.msra.mxu0 0.0
      %2206 = vmatprep.subr.mxu0 0.0
      %2207 = vmatpush1.msra.mxu0 0.0
      %2208 = vmatprep.subr.mxu0 0.0
      %2209 = vmatpush1.msra.mxu0 0.0
      %2210 = vmatprep.subr.mxu0 0.0
      %2211 = vmatpush1.msra.mxu0 0.0
      %2212 = vmatprep.subr.mxu0 0.0
      %2213 = vmatpush1.msra.mxu0 0.0
      %2214 = vmatprep.subr.mxu0 0.0
      %2215 = vmatpush1.msra.mxu0 0.0
      %2216 = vmatprep.subr.mxu0 0.0
      %2217 = vmatpush1.msra.mxu0 0.0
      %2218 = vmatprep.subr.mxu0 0.0
      %2219 = vmatpush1.msra.mxu0 0.0
      %2220 = vmatprep.subr.mxu0 0.0
      %2221 = vmatpush1.msra.mxu0 0.0
      %2222 = vmatprep.subr.mxu0 0.0
      %2223 = vmatpush1.msra.mxu0 0.0
      %2224 = vmatprep.subr.mxu0 0.0
      %2225 = vmatpush1.msra.mxu0 0.0
      %2226 = vmatprep.subr.mxu0 0.0
      %2227 = vmatpush1.msra.mxu0 0.0
      %2228 = vmatprep.mubr.f32.mxu0 0.0
      %2229 = vmatmul.mubr.f32.gmra.mrb[0].mxu0 %v263
      %v2230 = vpop.f32.mrb[0].mxu0
      %v2231 = vadd.f32 %v213, %v2230
      %v2232 = vpop.f32.mrb[0].mxu0
      %2233 = vmatprep.mubr.f32.mxu0 0.0
      %2234 = vmatmul.mubr.f32.gmra.mrb[0].mxu0 %v266
      %v2235 = vpop.f32.mrb[0].mxu0
      %v2236 = vadd.f32 %v218, %v2235
      %v2237 = vpop.f32.mrb[0].mxu0
      %2238 = vdwg.mxu0
      %v2239 = vmax.f32 %v2231, 0.0
      %v2240 = vmax.f32 %v2236, 0.0
      %2241 = vmatprep.subr.mxu0 0.0
      %2242 = vmatpush1.msra.mxu0 %v1990
      %2243 = vmatprep.subr.mxu0 0.0
      %2244 = vmatpush1.msra.mxu0 %v1991
      %2245 = vmatprep.subr.mxu0 0.0
      %2246 = vmatpush1.msra.mxu0 %v2073
      %2247 = vmatprep.subr.mxu0 0.0
      %2248 = vmatpush1.msra.mxu0 %v2074
      %2249 = vmatprep.subr.mxu0 0.0
      %2250 = vmatpush1.msra.mxu0 %v2156
      %2251 = vmatprep.subr.mxu0 0.0
      %2252 = vmatpush1.msra.mxu0 %v2157
      %2253 = vmatprep.subr.mxu0 0.0
      %2254 = vmatpush1.msra.mxu0 %v2239
      %2255 = vmatprep.subr.mxu0 0.0
      %2256 = vmatpush1.msra.mxu0 %v2240
      %2257 = vmatprep.subr.mxu0 0.0
      %2258 = vmatpush1.msra.mxu0 0.0
      %2259 = vmatprep.subr.mxu0 0.0
      %2260 = vmatpush1.msra.mxu0 0.0
      %2261 = vmatprep.subr.mxu0 0.0
      %2262 = vmatpush1.msra.mxu0 0.0
      %2263 = vmatprep.subr.mxu0 0.0
      %2264 = vmatpush1.msra.mxu0 0.0
      %2265 = vmatprep.subr.mxu0 0.0
      %2266 = vmatpush1.msra.mxu0 0.0
      %2267 = vmatprep.subr.mxu0 0.0
      %2268 = vmatpush1.msra.mxu0 0.0
      %2269 = vmatprep.subr.mxu0 0.0
      %2270 = vmatpush1.msra.mxu0 0.0
      %2271 = vmatprep.subr.mxu0 0.0
      %2272 = vmatpush1.msra.mxu0 0.0
      %2273 = vmatprep.subr.mxu0 0.0
      %2274 = vmatpush1.msra.mxu0 0.0
      %2275 = vmatprep.subr.mxu0 0.0
      %2276 = vmatpush1.msra.mxu0 0.0
      %2277 = vmatprep.subr.mxu0 0.0
      %2278 = vmatpush1.msra.mxu0 0.0
      %2279 = vmatprep.subr.mxu0 0.0
      %2280 = vmatpush1.msra.mxu0 0.0
      %2281 = vmatprep.subr.mxu0 0.0
      %2282 = vmatpush1.msra.mxu0 0.0
      %2283 = vmatprep.subr.mxu0 0.0
      %2284 = vmatpush1.msra.mxu0 0.0
      %2285 = vmatprep.subr.mxu0 0.0
      %2286 = vmatpush1.msra.mxu0 0.0
      %2287 = vmatprep.subr.mxu0 0.0
      %2288 = vmatpush1.msra.mxu0 0.0
      %2289 = vmatprep.subr.mxu0 0.0
      %2290 = vmatpush1.msra.mxu0 0.0
      %2291 = vmatprep.subr.mxu0 0.0
      %2292 = vmatpush1.msra.mxu0 0.0
      %2293 = vmatprep.subr.mxu0 0.0
      %2294 = vmatpush1.msra.mxu0 0.0
      %2295 = vmatprep.subr.mxu0 0.0
      %2296 = vmatpush1.msra.mxu0 0.0
      %2297 = vmatprep.subr.mxu0 0.0
      %2298 = vmatpush1.msra.mxu0 0.0
      %2299 = vmatprep.subr.mxu0 0.0
      %2300 = vmatpush1.msra.mxu0 0.0
      %2301 = vmatprep.subr.mxu0 0.0
      %2302 = vmatpush1.msra.mxu0 0.0
      %2303 = vmatprep.subr.mxu0 0.0
      %2304 = vmatpush1.msra.mxu0 0.0
      %2305 = vmatprep.mubr.f32.mxu0 0.0
      %2306 = vmatmul.mubr.f32.gmra.mrb[0].mxu0 %v600
      %v2307 = vpop.f32.mrb[0].mxu0
      %v2308 = vadd.f32 %v226, %v2307
      %v2309 = vpop.f32.mrb[0].mxu0
      %2310 = vmatprep.mubr.f32.mxu0 0.0
      %2311 = vmatmul.mubr.f32.gmra.mrb[0].mxu0 %v603
      %v2312 = vpop.f32.mrb[0].mxu0
      %v2313 = vadd.f32 %v231, %v2312
      %v2314 = vpop.f32.mrb[0].mxu0
      %2315 = vdwg.mxu0
      %v2316 = vmax.f32 %v2308, 0.0
      %v2317 = vmax.f32 %v2313, 0.0
      %s2318 = scalar_lea.vmem %s192, 320
      %v2319 = vld [vmem:[%s2318] sm:$0xff]
      %v2320 = vld [vmem:[%s2318 + $0x8] sm:$0xf]
      %v2322 = vsel %vm268, %v2320, 0
      %2324 = vmatprep.subr.mxu0 0.0
      %2325 = vmatpush1.msra.mxu0 %v2319
      %2326 = vmatprep.subr.mxu0 0.0
      %2327 = vmatpush1.msra.mxu0 %v2322
      %2328 = vmatprep.subr.mxu0 0.0
      %2329 = vmatpush1.msra.mxu0 0.0
      %2330 = vmatprep.subr.mxu0 0.0
      %2331 = vmatpush1.msra.mxu0 0.0
      %2332 = vmatprep.subr.mxu0 0.0
      %2333 = vmatpush1.msra.mxu0 0.0
      %2334 = vmatprep.subr.mxu0 0.0
      %2335 = vmatpush1.msra.mxu0 0.0
      %2336 = vmatprep.subr.mxu0 0.0
      %2337 = vmatpush1.msra.mxu0 0.0
      %2338 = vmatprep.subr.mxu0 0.0
      %2339 = vmatpush1.msra.mxu0 0.0
      %2340 = vmatprep.subr.mxu0 0.0
      %2341 = vmatpush1.msra.mxu0 0.0
      %2342 = vmatprep.subr.mxu0 0.0
      %2343 = vmatpush1.msra.mxu0 0.0
      %2344 = vmatprep.subr.mxu0 0.0
      %2345 = vmatpush1.msra.mxu0 0.0
      %2346 = vmatprep.subr.mxu0 0.0
      %2347 = vmatpush1.msra.mxu0 0.0
      %2348 = vmatprep.subr.mxu0 0.0
      %2349 = vmatpush1.msra.mxu0 0.0
      %2350 = vmatprep.subr.mxu0 0.0
      %2351 = vmatpush1.msra.mxu0 0.0
      %2352 = vmatprep.subr.mxu0 0.0
      %2353 = vmatpush1.msra.mxu0 0.0
      %2354 = vmatprep.subr.mxu0 0.0
      %2355 = vmatpush1.msra.mxu0 0.0
      %2356 = vmatprep.subr.mxu0 0.0
      %2357 = vmatpush1.msra.mxu0 0.0
      %2358 = vmatprep.subr.mxu0 0.0
      %2359 = vmatpush1.msra.mxu0 0.0
      %2360 = vmatprep.subr.mxu0 0.0
      %2361 = vmatpush1.msra.mxu0 0.0
      %2362 = vmatprep.subr.mxu0 0.0
      %2363 = vmatpush1.msra.mxu0 0.0
      %2364 = vmatprep.subr.mxu0 0.0
      %2365 = vmatpush1.msra.mxu0 0.0
      %2366 = vmatprep.subr.mxu0 0.0
      %2367 = vmatpush1.msra.mxu0 0.0
      %2368 = vmatprep.subr.mxu0 0.0
      %2369 = vmatpush1.msra.mxu0 0.0
      %2370 = vmatprep.subr.mxu0 0.0
      %2371 = vmatpush1.msra.mxu0 0.0
      %2372 = vmatprep.subr.mxu0 0.0
      %2373 = vmatpush1.msra.mxu0 0.0
      %2374 = vmatprep.subr.mxu0 0.0
      %2375 = vmatpush1.msra.mxu0 0.0
      %2376 = vmatprep.subr.mxu0 0.0
      %2377 = vmatpush1.msra.mxu0 0.0
      %2378 = vmatprep.subr.mxu0 0.0
      %2379 = vmatpush1.msra.mxu0 0.0
      %2380 = vmatprep.subr.mxu0 0.0
      %2381 = vmatpush1.msra.mxu0 0.0
      %2382 = vmatprep.subr.mxu0 0.0
      %2383 = vmatpush1.msra.mxu0 0.0
      %2384 = vmatprep.subr.mxu0 0.0
      %2385 = vmatpush1.msra.mxu0 0.0
      %2386 = vmatprep.subr.mxu0 0.0
      %2387 = vmatpush1.msra.mxu0 0.0
      %2388 = vmatprep.mubr.f32.mxu0 0.0
      %2389 = vmatmul.mubr.f32.gmra.mrb[0].mxu0 %v263
      %v2390 = vpop.f32.mrb[0].mxu0
      %v2391 = vadd.f32 %v213, %v2390
      %v2392 = vpop.f32.mrb[0].mxu0
      %2393 = vmatprep.mubr.f32.mxu0 0.0
      %2394 = vmatmul.mubr.f32.gmra.mrb[0].mxu0 %v266
      %v2395 = vpop.f32.mrb[0].mxu0
      %v2396 = vadd.f32 %v218, %v2395
      %v2397 = vpop.f32.mrb[0].mxu0
      %2398 = vdwg.mxu0
      %v2399 = vmax.f32 %v2391, 0.0
      %v2400 = vmax.f32 %v2396, 0.0
      %s2401 = scalar_lea.vmem %s192, 336
      %v2402 = vld [vmem:[%s2401] sm:$0xff]
      %v2403 = vld [vmem:[%s2401 + $0x8] sm:$0xf]
      %v2405 = vsel %vm268, %v2403, 0
      %2407 = vmatprep.subr.mxu0 0.0
      %2408 = vmatpush1.msra.mxu0 %v2402
      %2409 = vmatprep.subr.mxu0 0.0
      %2410 = vmatpush1.msra.mxu0 %v2405
      %2411 = vmatprep.subr.mxu0 0.0
      %2412 = vmatpush1.msra.mxu0 0.0
      %2413 = vmatprep.subr.mxu0 0.0
      %2414 = vmatpush1.msra.mxu0 0.0
      %2415 = vmatprep.subr.mxu0 0.0
      %2416 = vmatpush1.msra.mxu0 0.0
      %2417 = vmatprep.subr.mxu0 0.0
      %2418 = vmatpush1.msra.mxu0 0.0
      %2419 = vmatprep.subr.mxu0 0.0
      %2420 = vmatpush1.msra.mxu0 0.0
      %2421 = vmatprep.subr.mxu0 0.0
      %2422 = vmatpush1.msra.mxu0 0.0
      %2423 = vmatprep.subr.mxu0 0.0
      %2424 = vmatpush1.msra.mxu0 0.0
      %2425 = vmatprep.subr.mxu0 0.0
      %2426 = vmatpush1.msra.mxu0 0.0
      %2427 = vmatprep.subr.mxu0 0.0
      %2428 = vmatpush1.msra.mxu0 0.0
      %2429 = vmatprep.subr.mxu0 0.0
      %2430 = vmatpush1.msra.mxu0 0.0
      %2431 = vmatprep.subr.mxu0 0.0
      %2432 = vmatpush1.msra.mxu0 0.0
      %2433 = vmatprep.subr.mxu0 0.0
      %2434 = vmatpush1.msra.mxu0 0.0
      %2435 = vmatprep.subr.mxu0 0.0
      %2436 = vmatpush1.msra.mxu0 0.0
      %2437 = vmatprep.subr.mxu0 0.0
      %2438 = vmatpush1.msra.mxu0 0.0
      %2439 = vmatprep.subr.mxu0 0.0
      %2440 = vmatpush1.msra.mxu0 0.0
      %2441 = vmatprep.subr.mxu0 0.0
      %2442 = vmatpush1.msra.mxu0 0.0
      %2443 = vmatprep.subr.mxu0 0.0
      %2444 = vmatpush1.msra.mxu0 0.0
      %2445 = vmatprep.subr.mxu0 0.0
      %2446 = vmatpush1.msra.mxu0 0.0
      %2447 = vmatprep.subr.mxu0 0.0
      %2448 = vmatpush1.msra.mxu0 0.0
      %2449 = vmatprep.subr.mxu0 0.0
      %2450 = vmatpush1.msra.mxu0 0.0
      %2451 = vmatprep.subr.mxu0 0.0
      %2452 = vmatpush1.msra.mxu0 0.0
      %2453 = vmatprep.subr.mxu0 0.0
      %2454 = vmatpush1.msra.mxu0 0.0
      %2455 = vmatprep.subr.mxu0 0.0
      %2456 = vmatpush1.msra.mxu0 0.0
      %2457 = vmatprep.subr.mxu0 0.0
      %2458 = vmatpush1.msra.mxu0 0.0
      %2459 = vmatprep.subr.mxu0 0.0
      %2460 = vmatpush1.msra.mxu0 0.0
      %2461 = vmatprep.subr.mxu0 0.0
      %2462 = vmatpush1.msra.mxu0 0.0
      %2463 = vmatprep.subr.mxu0 0.0
      %2464 = vmatpush1.msra.mxu0 0.0
      %2465 = vmatprep.subr.mxu0 0.0
      %2466 = vmatpush1.msra.mxu0 0.0
      %2467 = vmatprep.subr.mxu0 0.0
      %2468 = vmatpush1.msra.mxu0 0.0
      %2469 = vmatprep.subr.mxu0 0.0
      %2470 = vmatpush1.msra.mxu0 0.0
      %2471 = vmatprep.mubr.f32.mxu0 0.0
      %2472 = vmatmul.mubr.f32.gmra.mrb[0].mxu0 %v263
      %v2473 = vpop.f32.mrb[0].mxu0
      %v2474 = vadd.f32 %v213, %v2473
      %v2475 = vpop.f32.mrb[0].mxu0
      %2476 = vmatprep.mubr.f32.mxu0 0.0
      %2477 = vmatmul.mubr.f32.gmra.mrb[0].mxu0 %v266
      %v2478 = vpop.f32.mrb[0].mxu0
      %v2479 = vadd.f32 %v218, %v2478
      %v2480 = vpop.f32.mrb[0].mxu0
      %2481 = vdwg.mxu0
      %v2482 = vmax.f32 %v2474, 0.0
      %v2483 = vmax.f32 %v2479, 0.0
      %s2484 = scalar_lea.vmem %s192, 352
      %v2485 = vld [vmem:[%s2484] sm:$0xff]
      %v2486 = vld [vmem:[%s2484 + $0x8] sm:$0xf]
      %v2488 = vsel %vm268, %v2486, 0
      %2490 = vmatprep.subr.mxu0 0.0
      %2491 = vmatpush1.msra.mxu0 %v2485
      %2492 = vmatprep.subr.mxu0 0.0
      %2493 = vmatpush1.msra.mxu0 %v2488
      %2494 = vmatprep.subr.mxu0 0.0
      %2495 = vmatpush1.msra.mxu0 0.0
      %2496 = vmatprep.subr.mxu0 0.0
      %2497 = vmatpush1.msra.mxu0 0.0
      %2498 = vmatprep.subr.mxu0 0.0
      %2499 = vmatpush1.msra.mxu0 0.0
      %2500 = vmatprep.subr.mxu0 0.0
      %2501 = vmatpush1.msra.mxu0 0.0
      %2502 = vmatprep.subr.mxu0 0.0
      %2503 = vmatpush1.msra.mxu0 0.0
      %2504 = vmatprep.subr.mxu0 0.0
      %2505 = vmatpush1.msra.mxu0 0.0
      %2506 = vmatprep.subr.mxu0 0.0
      %2507 = vmatpush1.msra.mxu0 0.0
      %2508 = vmatprep.subr.mxu0 0.0
      %2509 = vmatpush1.msra.mxu0 0.0
      %2510 = vmatprep.subr.mxu0 0.0
      %2511 = vmatpush1.msra.mxu0 0.0
      %2512 = vmatprep.subr.mxu0 0.0
      %2513 = vmatpush1.msra.mxu0 0.0
      %2514 = vmatprep.subr.mxu0 0.0
      %2515 = vmatpush1.msra.mxu0 0.0
      %2516 = vmatprep.subr.mxu0 0.0
      %2517 = vmatpush1.msra.mxu0 0.0
      %2518 = vmatprep.subr.mxu0 0.0
      %2519 = vmatpush1.msra.mxu0 0.0
      %2520 = vmatprep.subr.mxu0 0.0
      %2521 = vmatpush1.msra.mxu0 0.0
      %2522 = vmatprep.subr.mxu0 0.0
      %2523 = vmatpush1.msra.mxu0 0.0
      %2524 = vmatprep.subr.mxu0 0.0
      %2525 = vmatpush1.msra.mxu0 0.0
      %2526 = vmatprep.subr.mxu0 0.0
      %2527 = vmatpush1.msra.mxu0 0.0
      %2528 = vmatprep.subr.mxu0 0.0
      %2529 = vmatpush1.msra.mxu0 0.0
      %2530 = vmatprep.subr.mxu0 0.0
      %2531 = vmatpush1.msra.mxu0 0.0
      %2532 = vmatprep.subr.mxu0 0.0
      %2533 = vmatpush1.msra.mxu0 0.0
      %2534 = vmatprep.subr.mxu0 0.0
      %2535 = vmatpush1.msra.mxu0 0.0
      %2536 = vmatprep.subr.mxu0 0.0
      %2537 = vmatpush1.msra.mxu0 0.0
      %2538 = vmatprep.subr.mxu0 0.0
      %2539 = vmatpush1.msra.mxu0 0.0
      %2540 = vmatprep.subr.mxu0 0.0
      %2541 = vmatpush1.msra.mxu0 0.0
      %2542 = vmatprep.subr.mxu0 0.0
      %2543 = vmatpush1.msra.mxu0 0.0
      %2544 = vmatprep.subr.mxu0 0.0
      %2545 = vmatpush1.msra.mxu0 0.0
      %2546 = vmatprep.subr.mxu0 0.0
      %2547 = vmatpush1.msra.mxu0 0.0
      %2548 = vmatprep.subr.mxu0 0.0
      %2549 = vmatpush1.msra.mxu0 0.0
      %2550 = vmatprep.subr.mxu0 0.0
      %2551 = vmatpush1.msra.mxu0 0.0
      %2552 = vmatprep.subr.mxu0 0.0
      %2553 = vmatpush1.msra.mxu0 0.0
      %2554 = vmatprep.mubr.f32.mxu0 0.0
      %2555 = vmatmul.mubr.f32.gmra.mrb[0].mxu0 %v263
      %v2556 = vpop.f32.mrb[0].mxu0
      %v2557 = vadd.f32 %v213, %v2556
      %v2558 = vpop.f32.mrb[0].mxu0
      %2559 = vmatprep.mubr.f32.mxu0 0.0
      %2560 = vmatmul.mubr.f32.gmra.mrb[0].mxu0 %v266
      %v2561 = vpop.f32.mrb[0].mxu0
      %v2562 = vadd.f32 %v218, %v2561
      %v2563 = vpop.f32.mrb[0].mxu0
      %2564 = vdwg.mxu0
      %v2565 = vmax.f32 %v2557, 0.0
      %v2566 = vmax.f32 %v2562, 0.0
      %s2567 = scalar_lea.vmem %s192, 368
      %v2568 = vld [vmem:[%s2567] sm:$0xff]
      %v2569 = vld [vmem:[%s2567 + $0x8] sm:$0xf]
      %v2571 = vsel %vm268, %v2569, 0
      %2573 = vmatprep.subr.mxu0 0.0
      %2574 = vmatpush1.msra.mxu0 %v2568
      %2575 = vmatprep.subr.mxu0 0.0
      %2576 = vmatpush1.msra.mxu0 %v2571
      %2577 = vmatprep.subr.mxu0 0.0
      %2578 = vmatpush1.msra.mxu0 0.0
      %2579 = vmatprep.subr.mxu0 0.0
      %2580 = vmatpush1.msra.mxu0 0.0
      %2581 = vmatprep.subr.mxu0 0.0
      %2582 = vmatpush1.msra.mxu0 0.0
      %2583 = vmatprep.subr.mxu0 0.0
      %2584 = vmatpush1.msra.mxu0 0.0
      %2585 = vmatprep.subr.mxu0 0.0
      %2586 = vmatpush1.msra.mxu0 0.0
      %2587 = vmatprep.subr.mxu0 0.0
      %2588 = vmatpush1.msra.mxu0 0.0
      %2589 = vmatprep.subr.mxu0 0.0
      %2590 = vmatpush1.msra.mxu0 0.0
      %2591 = vmatprep.subr.mxu0 0.0
      %2592 = vmatpush1.msra.mxu0 0.0
      %2593 = vmatprep.subr.mxu0 0.0
      %2594 = vmatpush1.msra.mxu0 0.0
      %2595 = vmatprep.subr.mxu0 0.0
      %2596 = vmatpush1.msra.mxu0 0.0
      %2597 = vmatprep.subr.mxu0 0.0
      %2598 = vmatpush1.msra.mxu0 0.0
      %2599 = vmatprep.subr.mxu0 0.0
      %2600 = vmatpush1.msra.mxu0 0.0
      %2601 = vmatprep.subr.mxu0 0.0
      %2602 = vmatpush1.msra.mxu0 0.0
      %2603 = vmatprep.subr.mxu0 0.0
      %2604 = vmatpush1.msra.mxu0 0.0
      %2605 = vmatprep.subr.mxu0 0.0
      %2606 = vmatpush1.msra.mxu0 0.0
      %2607 = vmatprep.subr.mxu0 0.0
      %2608 = vmatpush1.msra.mxu0 0.0
      %2609 = vmatprep.subr.mxu0 0.0
      %2610 = vmatpush1.msra.mxu0 0.0
      %2611 = vmatprep.subr.mxu0 0.0
      %2612 = vmatpush1.msra.mxu0 0.0
      %2613 = vmatprep.subr.mxu0 0.0
      %2614 = vmatpush1.msra.mxu0 0.0
      %2615 = vmatprep.subr.mxu0 0.0
      %2616 = vmatpush1.msra.mxu0 0.0
      %2617 = vmatprep.subr.mxu0 0.0
      %2618 = vmatpush1.msra.mxu0 0.0
      %2619 = vmatprep.subr.mxu0 0.0
      %2620 = vmatpush1.msra.mxu0 0.0
      %2621 = vmatprep.subr.mxu0 0.0
      %2622 = vmatpush1.msra.mxu0 0.0
      %2623 = vmatprep.subr.mxu0 0.0
      %2624 = vmatpush1.msra.mxu0 0.0
      %2625 = vmatprep.subr.mxu0 0.0
      %2626 = vmatpush1.msra.mxu0 0.0
      %2627 = vmatprep.subr.mxu0 0.0
      %2628 = vmatpush1.msra.mxu0 0.0
      %2629 = vmatprep.subr.mxu0 0.0
      %2630 = vmatpush1.msra.mxu0 0.0
      %2631 = vmatprep.subr.mxu0 0.0
      %2632 = vmatpush1.msra.mxu0 0.0
      %2633 = vmatprep.subr.mxu0 0.0
      %2634 = vmatpush1.msra.mxu0 0.0
      %2635 = vmatprep.subr.mxu0 0.0
      %2636 = vmatpush1.msra.mxu0 0.0
      %2637 = vmatprep.mubr.f32.mxu0 0.0
      %2638 = vmatmul.mubr.f32.gmra.mrb[0].mxu0 %v263
      %v2639 = vpop.f32.mrb[0].mxu0
      %v2640 = vadd.f32 %v213, %v2639
      %v2641 = vpop.f32.mrb[0].mxu0
      %2642 = vmatprep.mubr.f32.mxu0 0.0
      %2643 = vmatmul.mubr.f32.gmra.mrb[0].mxu0 %v266
      %v2644 = vpop.f32.mrb[0].mxu0
      %v2645 = vadd.f32 %v218, %v2644
      %v2646 = vpop.f32.mrb[0].mxu0
      %2647 = vdwg.mxu0
      %v2648 = vmax.f32 %v2640, 0.0
      %v2649 = vmax.f32 %v2645, 0.0
      %2650 = vmatprep.subr.mxu0 0.0
      %2651 = vmatpush1.msra.mxu0 %v2399
      %2652 = vmatprep.subr.mxu0 0.0
      %2653 = vmatpush1.msra.mxu0 %v2400
      %2654 = vmatprep.subr.mxu0 0.0
      %2655 = vmatpush1.msra.mxu0 %v2482
      %2656 = vmatprep.subr.mxu0 0.0
      %2657 = vmatpush1.msra.mxu0 %v2483
      %2658 = vmatprep.subr.mxu0 0.0
      %2659 = vmatpush1.msra.mxu0 %v2565
      %2660 = vmatprep.subr.mxu0 0.0
      %2661 = vmatpush1.msra.mxu0 %v2566
      %2662 = vmatprep.subr.mxu0 0.0
      %2663 = vmatpush1.msra.mxu0 %v2648
      %2664 = vmatprep.subr.mxu0 0.0
      %2665 = vmatpush1.msra.mxu0 %v2649
      %2666 = vmatprep.subr.mxu0 0.0
      %2667 = vmatpush1.msra.mxu0 0.0
      %2668 = vmatprep.subr.mxu0 0.0
      %2669 = vmatpush1.msra.mxu0 0.0
      %2670 = vmatprep.subr.mxu0 0.0
      %2671 = vmatpush1.msra.mxu0 0.0
      %2672 = vmatprep.subr.mxu0 0.0
      %2673 = vmatpush1.msra.mxu0 0.0
      %2674 = vmatprep.subr.mxu0 0.0
      %2675 = vmatpush1.msra.mxu0 0.0
      %2676 = vmatprep.subr.mxu0 0.0
      %2677 = vmatpush1.msra.mxu0 0.0
      %2678 = vmatprep.subr.mxu0 0.0
      %2679 = vmatpush1.msra.mxu0 0.0
      %2680 = vmatprep.subr.mxu0 0.0
      %2681 = vmatpush1.msra.mxu0 0.0
      %2682 = vmatprep.subr.mxu0 0.0
      %2683 = vmatpush1.msra.mxu0 0.0
      %2684 = vmatprep.subr.mxu0 0.0
      %2685 = vmatpush1.msra.mxu0 0.0
      %2686 = vmatprep.subr.mxu0 0.0
      %2687 = vmatpush1.msra.mxu0 0.0
      %2688 = vmatprep.subr.mxu0 0.0
      %2689 = vmatpush1.msra.mxu0 0.0
      %2690 = vmatprep.subr.mxu0 0.0
      %2691 = vmatpush1.msra.mxu0 0.0
      %2692 = vmatprep.subr.mxu0 0.0
      %2693 = vmatpush1.msra.mxu0 0.0
      %2694 = vmatprep.subr.mxu0 0.0
      %2695 = vmatpush1.msra.mxu0 0.0
      %2696 = vmatprep.subr.mxu0 0.0
      %2697 = vmatpush1.msra.mxu0 0.0
      %2698 = vmatprep.subr.mxu0 0.0
      %2699 = vmatpush1.msra.mxu0 0.0
      %2700 = vmatprep.subr.mxu0 0.0
      %2701 = vmatpush1.msra.mxu0 0.0
      %2702 = vmatprep.subr.mxu0 0.0
      %2703 = vmatpush1.msra.mxu0 0.0
      %2704 = vmatprep.subr.mxu0 0.0
      %2705 = vmatpush1.msra.mxu0 0.0
      %2706 = vmatprep.subr.mxu0 0.0
      %2707 = vmatpush1.msra.mxu0 0.0
      %2708 = vmatprep.subr.mxu0 0.0
      %2709 = vmatpush1.msra.mxu0 0.0
      %2710 = vmatprep.subr.mxu0 0.0
      %2711 = vmatpush1.msra.mxu0 0.0
      %2712 = vmatprep.subr.mxu0 0.0
      %2713 = vmatpush1.msra.mxu0 0.0
      %2714 = vmatprep.mubr.f32.mxu0 0.0
      %2715 = vmatmul.mubr.f32.gmra.mrb[0].mxu0 %v600
      %v2716 = vpop.f32.mrb[0].mxu0
      %v2717 = vadd.f32 %v226, %v2716
      %v2718 = vpop.f32.mrb[0].mxu0
      %2719 = vmatprep.mubr.f32.mxu0 0.0
      %2720 = vmatmul.mubr.f32.gmra.mrb[0].mxu0 %v603
      %v2721 = vpop.f32.mrb[0].mxu0
      %v2722 = vadd.f32 %v231, %v2721
      %v2723 = vpop.f32.mrb[0].mxu0
      %2724 = vdwg.mxu0
      %v2725 = vmax.f32 %v2717, 0.0
      %v2726 = vmax.f32 %v2722, 0.0
      %s2727 = scalar_lea.vmem %s192, 384
      %v2728 = vld [vmem:[%s2727] sm:$0xff]
      %v2729 = vld [vmem:[%s2727 + $0x8] sm:$0xf]
      %v2731 = vsel %vm268, %v2729, 0
      %2733 = vmatprep.subr.mxu0 0.0
      %2734 = vmatpush1.msra.mxu0 %v2728
      %2735 = vmatprep.subr.mxu0 0.0
      %2736 = vmatpush1.msra.mxu0 %v2731
      %2737 = vmatprep.subr.mxu0 0.0
      %2738 = vmatpush1.msra.mxu0 0.0
      %2739 = vmatprep.subr.mxu0 0.0
      %2740 = vmatpush1.msra.mxu0 0.0
      %2741 = vmatprep.subr.mxu0 0.0
      %2742 = vmatpush1.msra.mxu0 0.0
      %2743 = vmatprep.subr.mxu0 0.0
      %2744 = vmatpush1.msra.mxu0 0.0
      %2745 = vmatprep.subr.mxu0 0.0
      %2746 = vmatpush1.msra.mxu0 0.0
      %2747 = vmatprep.subr.mxu0 0.0
      %2748 = vmatpush1.msra.mxu0 0.0
      %2749 = vmatprep.subr.mxu0 0.0
      %2750 = vmatpush1.msra.mxu0 0.0
      %2751 = vmatprep.subr.mxu0 0.0
      %2752 = vmatpush1.msra.mxu0 0.0
      %2753 = vmatprep.subr.mxu0 0.0
      %2754 = vmatpush1.msra.mxu0 0.0
      %2755 = vmatprep.subr.mxu0 0.0
      %2756 = vmatpush1.msra.mxu0 0.0
      %2757 = vmatprep.subr.mxu0 0.0
      %2758 = vmatpush1.msra.mxu0 0.0
      %2759 = vmatprep.subr.mxu0 0.0
      %2760 = vmatpush1.msra.mxu0 0.0
      %2761 = vmatprep.subr.mxu0 0.0
      %2762 = vmatpush1.msra.mxu0 0.0
      %2763 = vmatprep.subr.mxu0 0.0
      %2764 = vmatpush1.msra.mxu0 0.0
      %2765 = vmatprep.subr.mxu0 0.0
      %2766 = vmatpush1.msra.mxu0 0.0
      %2767 = vmatprep.subr.mxu0 0.0
      %2768 = vmatpush1.msra.mxu0 0.0
      %2769 = vmatprep.subr.mxu0 0.0
      %2770 = vmatpush1.msra.mxu0 0.0
      %2771 = vmatprep.subr.mxu0 0.0
      %2772 = vmatpush1.msra.mxu0 0.0
      %2773 = vmatprep.subr.mxu0 0.0
      %2774 = vmatpush1.msra.mxu0 0.0
      %2775 = vmatprep.subr.mxu0 0.0
      %2776 = vmatpush1.msra.mxu0 0.0
      %2777 = vmatprep.subr.mxu0 0.0
      %2778 = vmatpush1.msra.mxu0 0.0
      %2779 = vmatprep.subr.mxu0 0.0
      %2780 = vmatpush1.msra.mxu0 0.0
      %2781 = vmatprep.subr.mxu0 0.0
      %2782 = vmatpush1.msra.mxu0 0.0
      %2783 = vmatprep.subr.mxu0 0.0
      %2784 = vmatpush1.msra.mxu0 0.0
      %2785 = vmatprep.subr.mxu0 0.0
      %2786 = vmatpush1.msra.mxu0 0.0
      %2787 = vmatprep.subr.mxu0 0.0
      %2788 = vmatpush1.msra.mxu0 0.0
      %2789 = vmatprep.subr.mxu0 0.0
      %2790 = vmatpush1.msra.mxu0 0.0
      %2791 = vmatprep.subr.mxu0 0.0
      %2792 = vmatpush1.msra.mxu0 0.0
      %2793 = vmatprep.subr.mxu0 0.0
      %2794 = vmatpush1.msra.mxu0 0.0
      %2795 = vmatprep.subr.mxu0 0.0
      %2796 = vmatpush1.msra.mxu0 0.0
      %2797 = vmatprep.mubr.f32.mxu0 0.0
      %2798 = vmatmul.mubr.f32.gmra.mrb[0].mxu0 %v263
      %v2799 = vpop.f32.mrb[0].mxu0
      %v2800 = vadd.f32 %v213, %v2799
      %v2801 = vpop.f32.mrb[0].mxu0
      %2802 = vmatprep.mubr.f32.mxu0 0.0
      %2803 = vmatmul.mubr.f32.gmra.mrb[0].mxu0 %v266
      %v2804 = vpop.f32.mrb[0].mxu0
      %v2805 = vadd.f32 %v218, %v2804
      %v2806 = vpop.f32.mrb[0].mxu0
      %2807 = vdwg.mxu0
      %v2808 = vmax.f32 %v2800, 0.0
      %v2809 = vmax.f32 %v2805, 0.0
      %s2810 = scalar_lea.vmem %s192, 400
      %v2811 = vld [vmem:[%s2810] sm:$0xff]
      %v2812 = vld [vmem:[%s2810 + $0x8] sm:$0xf]
      %v2814 = vsel %vm268, %v2812, 0
      %2816 = vmatprep.subr.mxu0 0.0
      %2817 = vmatpush1.msra.mxu0 %v2811
      %2818 = vmatprep.subr.mxu0 0.0
      %2819 = vmatpush1.msra.mxu0 %v2814
      %2820 = vmatprep.subr.mxu0 0.0
      %2821 = vmatpush1.msra.mxu0 0.0
      %2822 = vmatprep.subr.mxu0 0.0
      %2823 = vmatpush1.msra.mxu0 0.0
      %2824 = vmatprep.subr.mxu0 0.0
      %2825 = vmatpush1.msra.mxu0 0.0
      %2826 = vmatprep.subr.mxu0 0.0
      %2827 = vmatpush1.msra.mxu0 0.0
      %2828 = vmatprep.subr.mxu0 0.0
      %2829 = vmatpush1.msra.mxu0 0.0
      %2830 = vmatprep.subr.mxu0 0.0
      %2831 = vmatpush1.msra.mxu0 0.0
      %2832 = vmatprep.subr.mxu0 0.0
      %2833 = vmatpush1.msra.mxu0 0.0
      %2834 = vmatprep.subr.mxu0 0.0
      %2835 = vmatpush1.msra.mxu0 0.0
      %2836 = vmatprep.subr.mxu0 0.0
      %2837 = vmatpush1.msra.mxu0 0.0
      %2838 = vmatprep.subr.mxu0 0.0
      %2839 = vmatpush1.msra.mxu0 0.0
      %2840 = vmatprep.subr.mxu0 0.0
      %2841 = vmatpush1.msra.mxu0 0.0
      %2842 = vmatprep.subr.mxu0 0.0
      %2843 = vmatpush1.msra.mxu0 0.0
      %2844 = vmatprep.subr.mxu0 0.0
      %2845 = vmatpush1.msra.mxu0 0.0
      %2846 = vmatprep.subr.mxu0 0.0
      %2847 = vmatpush1.msra.mxu0 0.0
      %2848 = vmatprep.subr.mxu0 0.0
      %2849 = vmatpush1.msra.mxu0 0.0
      %2850 = vmatprep.subr.mxu0 0.0
      %2851 = vmatpush1.msra.mxu0 0.0
      %2852 = vmatprep.subr.mxu0 0.0
      %2853 = vmatpush1.msra.mxu0 0.0
      %2854 = vmatprep.subr.mxu0 0.0
      %2855 = vmatpush1.msra.mxu0 0.0
      %2856 = vmatprep.subr.mxu0 0.0
      %2857 = vmatpush1.msra.mxu0 0.0
      %2858 = vmatprep.subr.mxu0 0.0
      %2859 = vmatpush1.msra.mxu0 0.0
      %2860 = vmatprep.subr.mxu0 0.0
      %2861 = vmatpush1.msra.mxu0 0.0
      %2862 = vmatprep.subr.mxu0 0.0
      %2863 = vmatpush1.msra.mxu0 0.0
      %2864 = vmatprep.subr.mxu0 0.0
      %2865 = vmatpush1.msra.mxu0 0.0
      %2866 = vmatprep.subr.mxu0 0.0
      %2867 = vmatpush1.msra.mxu0 0.0
      %2868 = vmatprep.subr.mxu0 0.0
      %2869 = vmatpush1.msra.mxu0 0.0
      %2870 = vmatprep.subr.mxu0 0.0
      %2871 = vmatpush1.msra.mxu0 0.0
      %2872 = vmatprep.subr.mxu0 0.0
      %2873 = vmatpush1.msra.mxu0 0.0
      %2874 = vmatprep.subr.mxu0 0.0
      %2875 = vmatpush1.msra.mxu0 0.0
      %2876 = vmatprep.subr.mxu0 0.0
      %2877 = vmatpush1.msra.mxu0 0.0
      %2878 = vmatprep.subr.mxu0 0.0
      %2879 = vmatpush1.msra.mxu0 0.0
      %2880 = vmatprep.mubr.f32.mxu0 0.0
      %2881 = vmatmul.mubr.f32.gmra.mrb[0].mxu0 %v263
      %v2882 = vpop.f32.mrb[0].mxu0
      %v2883 = vadd.f32 %v213, %v2882
      %v2884 = vpop.f32.mrb[0].mxu0
      %2885 = vmatprep.mubr.f32.mxu0 0.0
      %2886 = vmatmul.mubr.f32.gmra.mrb[0].mxu0 %v266
      %v2887 = vpop.f32.mrb[0].mxu0
      %v2888 = vadd.f32 %v218, %v2887
      %v2889 = vpop.f32.mrb[0].mxu0
      %2890 = vdwg.mxu0
      %v2891 = vmax.f32 %v2883, 0.0
      %v2892 = vmax.f32 %v2888, 0.0
      %s2893 = scalar_lea.vmem %s192, 416
      %v2894 = vld [vmem:[%s2893] sm:$0xff]
      %v2895 = vld [vmem:[%s2893 + $0x8] sm:$0xf]
      %v2897 = vsel %vm268, %v2895, 0
      %2899 = vmatprep.subr.mxu0 0.0
      %2900 = vmatpush1.msra.mxu0 %v2894
      %2901 = vmatprep.subr.mxu0 0.0
      %2902 = vmatpush1.msra.mxu0 %v2897
      %2903 = vmatprep.subr.mxu0 0.0
      %2904 = vmatpush1.msra.mxu0 0.0
      %2905 = vmatprep.subr.mxu0 0.0
      %2906 = vmatpush1.msra.mxu0 0.0
      %2907 = vmatprep.subr.mxu0 0.0
      %2908 = vmatpush1.msra.mxu0 0.0
      %2909 = vmatprep.subr.mxu0 0.0
      %2910 = vmatpush1.msra.mxu0 0.0
      %2911 = vmatprep.subr.mxu0 0.0
      %2912 = vmatpush1.msra.mxu0 0.0
      %2913 = vmatprep.subr.mxu0 0.0
      %2914 = vmatpush1.msra.mxu0 0.0
      %2915 = vmatprep.subr.mxu0 0.0
      %2916 = vmatpush1.msra.mxu0 0.0
      %2917 = vmatprep.subr.mxu0 0.0
      %2918 = vmatpush1.msra.mxu0 0.0
      %2919 = vmatprep.subr.mxu0 0.0
      %2920 = vmatpush1.msra.mxu0 0.0
      %2921 = vmatprep.subr.mxu0 0.0
      %2922 = vmatpush1.msra.mxu0 0.0
      %2923 = vmatprep.subr.mxu0 0.0
      %2924 = vmatpush1.msra.mxu0 0.0
      %2925 = vmatprep.subr.mxu0 0.0
      %2926 = vmatpush1.msra.mxu0 0.0
      %2927 = vmatprep.subr.mxu0 0.0
      %2928 = vmatpush1.msra.mxu0 0.0
      %2929 = vmatprep.subr.mxu0 0.0
      %2930 = vmatpush1.msra.mxu0 0.0
      %2931 = vmatprep.subr.mxu0 0.0
      %2932 = vmatpush1.msra.mxu0 0.0
      %2933 = vmatprep.subr.mxu0 0.0
      %2934 = vmatpush1.msra.mxu0 0.0
      %2935 = vmatprep.subr.mxu0 0.0
      %2936 = vmatpush1.msra.mxu0 0.0
      %2937 = vmatprep.subr.mxu0 0.0
      %2938 = vmatpush1.msra.mxu0 0.0
      %2939 = vmatprep.subr.mxu0 0.0
      %2940 = vmatpush1.msra.mxu0 0.0
      %2941 = vmatprep.subr.mxu0 0.0
      %2942 = vmatpush1.msra.mxu0 0.0
      %2943 = vmatprep.subr.mxu0 0.0
      %2944 = vmatpush1.msra.mxu0 0.0
      %2945 = vmatprep.subr.mxu0 0.0
      %2946 = vmatpush1.msra.mxu0 0.0
      %2947 = vmatprep.subr.mxu0 0.0
      %2948 = vmatpush1.msra.mxu0 0.0
      %2949 = vmatprep.subr.mxu0 0.0
      %2950 = vmatpush1.msra.mxu0 0.0
      %2951 = vmatprep.subr.mxu0 0.0
      %2952 = vmatpush1.msra.mxu0 0.0
      %2953 = vmatprep.subr.mxu0 0.0
      %2954 = vmatpush1.msra.mxu0 0.0
      %2955 = vmatprep.subr.mxu0 0.0
      %2956 = vmatpush1.msra.mxu0 0.0
      %2957 = vmatprep.subr.mxu0 0.0
      %2958 = vmatpush1.msra.mxu0 0.0
      %2959 = vmatprep.subr.mxu0 0.0
      %2960 = vmatpush1.msra.mxu0 0.0
      %2961 = vmatprep.subr.mxu0 0.0
      %2962 = vmatpush1.msra.mxu0 0.0
      %2963 = vmatprep.mubr.f32.mxu0 0.0
      %2964 = vmatmul.mubr.f32.gmra.mrb[0].mxu0 %v263
      %v2965 = vpop.f32.mrb[0].mxu0
      %v2966 = vadd.f32 %v213, %v2965
      %v2967 = vpop.f32.mrb[0].mxu0
      %2968 = vmatprep.mubr.f32.mxu0 0.0
      %2969 = vmatmul.mubr.f32.gmra.mrb[0].mxu0 %v266
      %v2970 = vpop.f32.mrb[0].mxu0
      %v2971 = vadd.f32 %v218, %v2970
      %v2972 = vpop.f32.mrb[0].mxu0
      %2973 = vdwg.mxu0
      %v2974 = vmax.f32 %v2966, 0.0
      %v2975 = vmax.f32 %v2971, 0.0
      %s2976 = scalar_lea.vmem %s192, 432
      %v2977 = vld [vmem:[%s2976] sm:$0xff]
      %v2978 = vld [vmem:[%s2976 + $0x8] sm:$0xf]
      %v2980 = vsel %vm268, %v2978, 0
      %2982 = vmatprep.subr.mxu0 0.0
      %2983 = vmatpush1.msra.mxu0 %v2977
      %2984 = vmatprep.subr.mxu0 0.0
      %2985 = vmatpush1.msra.mxu0 %v2980
      %2986 = vmatprep.subr.mxu0 0.0
      %2987 = vmatpush1.msra.mxu0 0.0
      %2988 = vmatprep.subr.mxu0 0.0
      %2989 = vmatpush1.msra.mxu0 0.0
      %2990 = vmatprep.subr.mxu0 0.0
      %2991 = vmatpush1.msra.mxu0 0.0
      %2992 = vmatprep.subr.mxu0 0.0
      %2993 = vmatpush1.msra.mxu0 0.0
      %2994 = vmatprep.subr.mxu0 0.0
      %2995 = vmatpush1.msra.mxu0 0.0
      %2996 = vmatprep.subr.mxu0 0.0
      %2997 = vmatpush1.msra.mxu0 0.0
      %2998 = vmatprep.subr.mxu0 0.0
      %2999 = vmatpush1.msra.mxu0 0.0
      %3000 = vmatprep.subr.mxu0 0.0
      %3001 = vmatpush1.msra.mxu0 0.0
      %3002 = vmatprep.subr.mxu0 0.0
      %3003 = vmatpush1.msra.mxu0 0.0
      %3004 = vmatprep.subr.mxu0 0.0
      %3005 = vmatpush1.msra.mxu0 0.0
      %3006 = vmatprep.subr.mxu0 0.0
      %3007 = vmatpush1.msra.mxu0 0.0
      %3008 = vmatprep.subr.mxu0 0.0
      %3009 = vmatpush1.msra.mxu0 0.0
      %3010 = vmatprep.subr.mxu0 0.0
      %3011 = vmatpush1.msra.mxu0 0.0
      %3012 = vmatprep.subr.mxu0 0.0
      %3013 = vmatpush1.msra.mxu0 0.0
      %3014 = vmatprep.subr.mxu0 0.0
      %3015 = vmatpush1.msra.mxu0 0.0
      %3016 = vmatprep.subr.mxu0 0.0
      %3017 = vmatpush1.msra.mxu0 0.0
      %3018 = vmatprep.subr.mxu0 0.0
      %3019 = vmatpush1.msra.mxu0 0.0
      %3020 = vmatprep.subr.mxu0 0.0
      %3021 = vmatpush1.msra.mxu0 0.0
      %3022 = vmatprep.subr.mxu0 0.0
      %3023 = vmatpush1.msra.mxu0 0.0
      %3024 = vmatprep.subr.mxu0 0.0
      %3025 = vmatpush1.msra.mxu0 0.0
      %3026 = vmatprep.subr.mxu0 0.0
      %3027 = vmatpush1.msra.mxu0 0.0
      %3028 = vmatprep.subr.mxu0 0.0
      %3029 = vmatpush1.msra.mxu0 0.0
      %3030 = vmatprep.subr.mxu0 0.0
      %3031 = vmatpush1.msra.mxu0 0.0
      %3032 = vmatprep.subr.mxu0 0.0
      %3033 = vmatpush1.msra.mxu0 0.0
      %3034 = vmatprep.subr.mxu0 0.0
      %3035 = vmatpush1.msra.mxu0 0.0
      %3036 = vmatprep.subr.mxu0 0.0
      %3037 = vmatpush1.msra.mxu0 0.0
      %3038 = vmatprep.subr.mxu0 0.0
      %3039 = vmatpush1.msra.mxu0 0.0
      %3040 = vmatprep.subr.mxu0 0.0
      %3041 = vmatpush1.msra.mxu0 0.0
      %3042 = vmatprep.subr.mxu0 0.0
      %3043 = vmatpush1.msra.mxu0 0.0
      %3044 = vmatprep.subr.mxu0 0.0
      %3045 = vmatpush1.msra.mxu0 0.0
      %3046 = vmatprep.mubr.f32.mxu0 0.0
      %3047 = vmatmul.mubr.f32.gmra.mrb[0].mxu0 %v263
      %v3048 = vpop.f32.mrb[0].mxu0
      %v3049 = vadd.f32 %v213, %v3048
      %v3050 = vpop.f32.mrb[0].mxu0
      %3051 = vmatprep.mubr.f32.mxu0 0.0
      %3052 = vmatmul.mubr.f32.gmra.mrb[0].mxu0 %v266
      %v3053 = vpop.f32.mrb[0].mxu0
      %v3054 = vadd.f32 %v218, %v3053
      %v3055 = vpop.f32.mrb[0].mxu0
      %3056 = vdwg.mxu0
      %v3057 = vmax.f32 %v3049, 0.0
      %v3058 = vmax.f32 %v3054, 0.0
      %3059 = vmatprep.subr.mxu0 0.0
      %3060 = vmatpush1.msra.mxu0 %v2808
      %3061 = vmatprep.subr.mxu0 0.0
      %3062 = vmatpush1.msra.mxu0 %v2809
      %3063 = vmatprep.subr.mxu0 0.0
      %3064 = vmatpush1.msra.mxu0 %v2891
      %3065 = vmatprep.subr.mxu0 0.0
      %3066 = vmatpush1.msra.mxu0 %v2892
      %3067 = vmatprep.subr.mxu0 0.0
      %3068 = vmatpush1.msra.mxu0 %v2974
      %3069 = vmatprep.subr.mxu0 0.0
      %3070 = vmatpush1.msra.mxu0 %v2975
      %3071 = vmatprep.subr.mxu0 0.0
      %3072 = vmatpush1.msra.mxu0 %v3057
      %3073 = vmatprep.subr.mxu0 0.0
      %3074 = vmatpush1.msra.mxu0 %v3058
      %3075 = vmatprep.subr.mxu0 0.0
      %3076 = vmatpush1.msra.mxu0 0.0
      %3077 = vmatprep.subr.mxu0 0.0
      %3078 = vmatpush1.msra.mxu0 0.0
      %3079 = vmatprep.subr.mxu0 0.0
      %3080 = vmatpush1.msra.mxu0 0.0
      %3081 = vmatprep.subr.mxu0 0.0
      %3082 = vmatpush1.msra.mxu0 0.0
      %3083 = vmatprep.subr.mxu0 0.0
      %3084 = vmatpush1.msra.mxu0 0.0
      %3085 = vmatprep.subr.mxu0 0.0
      %3086 = vmatpush1.msra.mxu0 0.0
      %3087 = vmatprep.subr.mxu0 0.0
      %3088 = vmatpush1.msra.mxu0 0.0
      %3089 = vmatprep.subr.mxu0 0.0
      %3090 = vmatpush1.msra.mxu0 0.0
      %3091 = vmatprep.subr.mxu0 0.0
      %3092 = vmatpush1.msra.mxu0 0.0
      %3093 = vmatprep.subr.mxu0 0.0
      %3094 = vmatpush1.msra.mxu0 0.0
      %3095 = vmatprep.subr.mxu0 0.0
      %3096 = vmatpush1.msra.mxu0 0.0
      %3097 = vmatprep.subr.mxu0 0.0
      %3098 = vmatpush1.msra.mxu0 0.0
      %3099 = vmatprep.subr.mxu0 0.0
      %3100 = vmatpush1.msra.mxu0 0.0
      %3101 = vmatprep.subr.mxu0 0.0
      %3102 = vmatpush1.msra.mxu0 0.0
      %3103 = vmatprep.subr.mxu0 0.0
      %3104 = vmatpush1.msra.mxu0 0.0
      %3105 = vmatprep.subr.mxu0 0.0
      %3106 = vmatpush1.msra.mxu0 0.0
      %3107 = vmatprep.subr.mxu0 0.0
      %3108 = vmatpush1.msra.mxu0 0.0
      %3109 = vmatprep.subr.mxu0 0.0
      %3110 = vmatpush1.msra.mxu0 0.0
      %3111 = vmatprep.subr.mxu0 0.0
      %3112 = vmatpush1.msra.mxu0 0.0
      %3113 = vmatprep.subr.mxu0 0.0
      %3114 = vmatpush1.msra.mxu0 0.0
      %3115 = vmatprep.subr.mxu0 0.0
      %3116 = vmatpush1.msra.mxu0 0.0
      %3117 = vmatprep.subr.mxu0 0.0
      %3118 = vmatpush1.msra.mxu0 0.0
      %3119 = vmatprep.subr.mxu0 0.0
      %3120 = vmatpush1.msra.mxu0 0.0
      %3121 = vmatprep.subr.mxu0 0.0
      %3122 = vmatpush1.msra.mxu0 0.0
      %3123 = vmatprep.mubr.f32.mxu0 0.0
      %3124 = vmatmul.mubr.f32.gmra.mrb[0].mxu0 %v600
      %v3125 = vpop.f32.mrb[0].mxu0
      %v3126 = vadd.f32 %v226, %v3125
      %v3127 = vpop.f32.mrb[0].mxu0
      %3128 = vmatprep.mubr.f32.mxu0 0.0
      %3129 = vmatmul.mubr.f32.gmra.mrb[0].mxu0 %v603
      %v3130 = vpop.f32.mrb[0].mxu0
      %v3131 = vadd.f32 %v231, %v3130
      %v3132 = vpop.f32.mrb[0].mxu0
      %3133 = vdwg.mxu0
      %v3134 = vmax.f32 %v3126, 0.0
      %v3135 = vmax.f32 %v3131, 0.0
      %s3136 = scalar_lea.vmem %s192, 448
      %v3137 = vld [vmem:[%s3136] sm:$0xff]
      %v3138 = vld [vmem:[%s3136 + $0x8] sm:$0xf]
      %v3140 = vsel %vm268, %v3138, 0
      %3142 = vmatprep.subr.mxu0 0.0
      %3143 = vmatpush1.msra.mxu0 %v3137
      %3144 = vmatprep.subr.mxu0 0.0
      %3145 = vmatpush1.msra.mxu0 %v3140
      %3146 = vmatprep.subr.mxu0 0.0
      %3147 = vmatpush1.msra.mxu0 0.0
      %3148 = vmatprep.subr.mxu0 0.0
      %3149 = vmatpush1.msra.mxu0 0.0
      %3150 = vmatprep.subr.mxu0 0.0
      %3151 = vmatpush1.msra.mxu0 0.0
      %3152 = vmatprep.subr.mxu0 0.0
      %3153 = vmatpush1.msra.mxu0 0.0
      %3154 = vmatprep.subr.mxu0 0.0
      %3155 = vmatpush1.msra.mxu0 0.0
      %3156 = vmatprep.subr.mxu0 0.0
      %3157 = vmatpush1.msra.mxu0 0.0
      %3158 = vmatprep.subr.mxu0 0.0
      %3159 = vmatpush1.msra.mxu0 0.0
      %3160 = vmatprep.subr.mxu0 0.0
      %3161 = vmatpush1.msra.mxu0 0.0
      %3162 = vmatprep.subr.mxu0 0.0
      %3163 = vmatpush1.msra.mxu0 0.0
      %3164 = vmatprep.subr.mxu0 0.0
      %3165 = vmatpush1.msra.mxu0 0.0
      %3166 = vmatprep.subr.mxu0 0.0
      %3167 = vmatpush1.msra.mxu0 0.0
      %3168 = vmatprep.subr.mxu0 0.0
      %3169 = vmatpush1.msra.mxu0 0.0
      %3170 = vmatprep.subr.mxu0 0.0
      %3171 = vmatpush1.msra.mxu0 0.0
      %3172 = vmatprep.subr.mxu0 0.0
      %3173 = vmatpush1.msra.mxu0 0.0
      %3174 = vmatprep.subr.mxu0 0.0
      %3175 = vmatpush1.msra.mxu0 0.0
      %3176 = vmatprep.subr.mxu0 0.0
      %3177 = vmatpush1.msra.mxu0 0.0
      %3178 = vmatprep.subr.mxu0 0.0
      %3179 = vmatpush1.msra.mxu0 0.0
      %3180 = vmatprep.subr.mxu0 0.0
      %3181 = vmatpush1.msra.mxu0 0.0
      %3182 = vmatprep.subr.mxu0 0.0
      %3183 = vmatpush1.msra.mxu0 0.0
      %3184 = vmatprep.subr.mxu0 0.0
      %3185 = vmatpush1.msra.mxu0 0.0
      %3186 = vmatprep.subr.mxu0 0.0
      %3187 = vmatpush1.msra.mxu0 0.0
      %3188 = vmatprep.subr.mxu0 0.0
      %3189 = vmatpush1.msra.mxu0 0.0
      %3190 = vmatprep.subr.mxu0 0.0
      %3191 = vmatpush1.msra.mxu0 0.0
      %3192 = vmatprep.subr.mxu0 0.0
      %3193 = vmatpush1.msra.mxu0 0.0
      %3194 = vmatprep.subr.mxu0 0.0
      %3195 = vmatpush1.msra.mxu0 0.0
      %3196 = vmatprep.subr.mxu0 0.0
      %3197 = vmatpush1.msra.mxu0 0.0
      %3198 = vmatprep.subr.mxu0 0.0
      %3199 = vmatpush1.msra.mxu0 0.0
      %3200 = vmatprep.subr.mxu0 0.0
      %3201 = vmatpush1.msra.mxu0 0.0
      %3202 = vmatprep.subr.mxu0 0.0
      %3203 = vmatpush1.msra.mxu0 0.0
      %3204 = vmatprep.subr.mxu0 0.0
      %3205 = vmatpush1.msra.mxu0 0.0
      %3206 = vmatprep.mubr.f32.mxu0 0.0
      %3207 = vmatmul.mubr.f32.gmra.mrb[0].mxu0 %v263
      %v3208 = vpop.f32.mrb[0].mxu0
      %v3209 = vadd.f32 %v213, %v3208
      %v3210 = vpop.f32.mrb[0].mxu0
      %3211 = vmatprep.mubr.f32.mxu0 0.0
      %3212 = vmatmul.mubr.f32.gmra.mrb[0].mxu0 %v266
      %v3213 = vpop.f32.mrb[0].mxu0
      %v3214 = vadd.f32 %v218, %v3213
      %v3215 = vpop.f32.mrb[0].mxu0
      %3216 = vdwg.mxu0
      %v3217 = vmax.f32 %v3209, 0.0
      %v3218 = vmax.f32 %v3214, 0.0
      %s3219 = scalar_lea.vmem %s192, 464
      %v3220 = vld [vmem:[%s3219] sm:$0xff]
      %v3221 = vld [vmem:[%s3219 + $0x8] sm:$0xf]
      %v3223 = vsel %vm268, %v3221, 0
      %3225 = vmatprep.subr.mxu0 0.0
      %3226 = vmatpush1.msra.mxu0 %v3220
      %3227 = vmatprep.subr.mxu0 0.0
      %3228 = vmatpush1.msra.mxu0 %v3223
      %3229 = vmatprep.subr.mxu0 0.0
      %3230 = vmatpush1.msra.mxu0 0.0
      %3231 = vmatprep.subr.mxu0 0.0
      %3232 = vmatpush1.msra.mxu0 0.0
      %3233 = vmatprep.subr.mxu0 0.0
      %3234 = vmatpush1.msra.mxu0 0.0
      %3235 = vmatprep.subr.mxu0 0.0
      %3236 = vmatpush1.msra.mxu0 0.0
      %3237 = vmatprep.subr.mxu0 0.0
      %3238 = vmatpush1.msra.mxu0 0.0
      %3239 = vmatprep.subr.mxu0 0.0
      %3240 = vmatpush1.msra.mxu0 0.0
      %3241 = vmatprep.subr.mxu0 0.0
      %3242 = vmatpush1.msra.mxu0 0.0
      %3243 = vmatprep.subr.mxu0 0.0
      %3244 = vmatpush1.msra.mxu0 0.0
      %3245 = vmatprep.subr.mxu0 0.0
      %3246 = vmatpush1.msra.mxu0 0.0
      %3247 = vmatprep.subr.mxu0 0.0
      %3248 = vmatpush1.msra.mxu0 0.0
      %3249 = vmatprep.subr.mxu0 0.0
      %3250 = vmatpush1.msra.mxu0 0.0
      %3251 = vmatprep.subr.mxu0 0.0
      %3252 = vmatpush1.msra.mxu0 0.0
      %3253 = vmatprep.subr.mxu0 0.0
      %3254 = vmatpush1.msra.mxu0 0.0
      %3255 = vmatprep.subr.mxu0 0.0
      %3256 = vmatpush1.msra.mxu0 0.0
      %3257 = vmatprep.subr.mxu0 0.0
      %3258 = vmatpush1.msra.mxu0 0.0
      %3259 = vmatprep.subr.mxu0 0.0
      %3260 = vmatpush1.msra.mxu0 0.0
      %3261 = vmatprep.subr.mxu0 0.0
      %3262 = vmatpush1.msra.mxu0 0.0
      %3263 = vmatprep.subr.mxu0 0.0
      %3264 = vmatpush1.msra.mxu0 0.0
      %3265 = vmatprep.subr.mxu0 0.0
      %3266 = vmatpush1.msra.mxu0 0.0
      %3267 = vmatprep.subr.mxu0 0.0
      %3268 = vmatpush1.msra.mxu0 0.0
      %3269 = vmatprep.subr.mxu0 0.0
      %3270 = vmatpush1.msra.mxu0 0.0
      %3271 = vmatprep.subr.mxu0 0.0
      %3272 = vmatpush1.msra.mxu0 0.0
      %3273 = vmatprep.subr.mxu0 0.0
      %3274 = vmatpush1.msra.mxu0 0.0
      %3275 = vmatprep.subr.mxu0 0.0
      %3276 = vmatpush1.msra.mxu0 0.0
      %3277 = vmatprep.subr.mxu0 0.0
      %3278 = vmatpush1.msra.mxu0 0.0
      %3279 = vmatprep.subr.mxu0 0.0
      %3280 = vmatpush1.msra.mxu0 0.0
      %3281 = vmatprep.subr.mxu0 0.0
      %3282 = vmatpush1.msra.mxu0 0.0
      %3283 = vmatprep.subr.mxu0 0.0
      %3284 = vmatpush1.msra.mxu0 0.0
      %3285 = vmatprep.subr.mxu0 0.0
      %3286 = vmatpush1.msra.mxu0 0.0
      %3287 = vmatprep.subr.mxu0 0.0
      %3288 = vmatpush1.msra.mxu0 0.0
      %3289 = vmatprep.mubr.f32.mxu0 0.0
      %3290 = vmatmul.mubr.f32.gmra.mrb[0].mxu0 %v263
      %v3291 = vpop.f32.mrb[0].mxu0
      %v3292 = vadd.f32 %v213, %v3291
      %v3293 = vpop.f32.mrb[0].mxu0
      %3294 = vmatprep.mubr.f32.mxu0 0.0
      %3295 = vmatmul.mubr.f32.gmra.mrb[0].mxu0 %v266
      %v3296 = vpop.f32.mrb[0].mxu0
      %v3297 = vadd.f32 %v218, %v3296
      %v3298 = vpop.f32.mrb[0].mxu0
      %3299 = vdwg.mxu0
      %v3300 = vmax.f32 %v3292, 0.0
      %v3301 = vmax.f32 %v3297, 0.0
      %s3302 = scalar_lea.vmem %s192, 480
      %v3303 = vld [vmem:[%s3302] sm:$0xff]
      %v3304 = vld [vmem:[%s3302 + $0x8] sm:$0xf]
      %v3306 = vsel %vm268, %v3304, 0
      %3308 = vmatprep.subr.mxu0 0.0
      %3309 = vmatpush1.msra.mxu0 %v3303
      %3310 = vmatprep.subr.mxu0 0.0
      %3311 = vmatpush1.msra.mxu0 %v3306
      %3312 = vmatprep.subr.mxu0 0.0
      %3313 = vmatpush1.msra.mxu0 0.0
      %3314 = vmatprep.subr.mxu0 0.0
      %3315 = vmatpush1.msra.mxu0 0.0
      %3316 = vmatprep.subr.mxu0 0.0
      %3317 = vmatpush1.msra.mxu0 0.0
      %3318 = vmatprep.subr.mxu0 0.0
      %3319 = vmatpush1.msra.mxu0 0.0
      %3320 = vmatprep.subr.mxu0 0.0
      %3321 = vmatpush1.msra.mxu0 0.0
      %3322 = vmatprep.subr.mxu0 0.0
      %3323 = vmatpush1.msra.mxu0 0.0
      %3324 = vmatprep.subr.mxu0 0.0
      %3325 = vmatpush1.msra.mxu0 0.0
      %3326 = vmatprep.subr.mxu0 0.0
      %3327 = vmatpush1.msra.mxu0 0.0
      %3328 = vmatprep.subr.mxu0 0.0
      %3329 = vmatpush1.msra.mxu0 0.0
      %3330 = vmatprep.subr.mxu0 0.0
      %3331 = vmatpush1.msra.mxu0 0.0
      %3332 = vmatprep.subr.mxu0 0.0
      %3333 = vmatpush1.msra.mxu0 0.0
      %3334 = vmatprep.subr.mxu0 0.0
      %3335 = vmatpush1.msra.mxu0 0.0
      %3336 = vmatprep.subr.mxu0 0.0
      %3337 = vmatpush1.msra.mxu0 0.0
      %3338 = vmatprep.subr.mxu0 0.0
      %3339 = vmatpush1.msra.mxu0 0.0
      %3340 = vmatprep.subr.mxu0 0.0
      %3341 = vmatpush1.msra.mxu0 0.0
      %3342 = vmatprep.subr.mxu0 0.0
      %3343 = vmatpush1.msra.mxu0 0.0
      %3344 = vmatprep.subr.mxu0 0.0
      %3345 = vmatpush1.msra.mxu0 0.0
      %3346 = vmatprep.subr.mxu0 0.0
      %3347 = vmatpush1.msra.mxu0 0.0
      %3348 = vmatprep.subr.mxu0 0.0
      %3349 = vmatpush1.msra.mxu0 0.0
      %3350 = vmatprep.subr.mxu0 0.0
      %3351 = vmatpush1.msra.mxu0 0.0
      %3352 = vmatprep.subr.mxu0 0.0
      %3353 = vmatpush1.msra.mxu0 0.0
      %3354 = vmatprep.subr.mxu0 0.0
      %3355 = vmatpush1.msra.mxu0 0.0
      %3356 = vmatprep.subr.mxu0 0.0
      %3357 = vmatpush1.msra.mxu0 0.0
      %3358 = vmatprep.subr.mxu0 0.0
      %3359 = vmatpush1.msra.mxu0 0.0
      %3360 = vmatprep.subr.mxu0 0.0
      %3361 = vmatpush1.msra.mxu0 0.0
      %3362 = vmatprep.subr.mxu0 0.0
      %3363 = vmatpush1.msra.mxu0 0.0
      %3364 = vmatprep.subr.mxu0 0.0
      %3365 = vmatpush1.msra.mxu0 0.0
      %3366 = vmatprep.subr.mxu0 0.0
      %3367 = vmatpush1.msra.mxu0 0.0
      %3368 = vmatprep.subr.mxu0 0.0
      %3369 = vmatpush1.msra.mxu0 0.0
      %3370 = vmatprep.subr.mxu0 0.0
      %3371 = vmatpush1.msra.mxu0 0.0
      %3372 = vmatprep.mubr.f32.mxu0 0.0
      %3373 = vmatmul.mubr.f32.gmra.mrb[0].mxu0 %v263
      %v3374 = vpop.f32.mrb[0].mxu0
      %v3375 = vadd.f32 %v213, %v3374
      %v3376 = vpop.f32.mrb[0].mxu0
      %3377 = vmatprep.mubr.f32.mxu0 0.0
      %3378 = vmatmul.mubr.f32.gmra.mrb[0].mxu0 %v266
      %v3379 = vpop.f32.mrb[0].mxu0
      %v3380 = vadd.f32 %v218, %v3379
      %v3381 = vpop.f32.mrb[0].mxu0
      %3382 = vdwg.mxu0
      %v3383 = vmax.f32 %v3375, 0.0
      %v3384 = vmax.f32 %v3380, 0.0
      %s3385 = scalar_lea.vmem %s192, 496
      %v3386 = vld [vmem:[%s3385] sm:$0xff]
      %v3387 = vld [vmem:[%s3385 + $0x8] sm:$0xf]
      %v3389 = vsel %vm268, %v3387, 0
      %3391 = vmatprep.subr.mxu0 0.0
      %3392 = vmatpush1.msra.mxu0 %v3386
      %3393 = vmatprep.subr.mxu0 0.0
      %3394 = vmatpush1.msra.mxu0 %v3389
      %3395 = vmatprep.subr.mxu0 0.0
      %3396 = vmatpush1.msra.mxu0 0.0
      %3397 = vmatprep.subr.mxu0 0.0
      %3398 = vmatpush1.msra.mxu0 0.0
      %3399 = vmatprep.subr.mxu0 0.0
      %3400 = vmatpush1.msra.mxu0 0.0
      %3401 = vmatprep.subr.mxu0 0.0
      %3402 = vmatpush1.msra.mxu0 0.0
      %3403 = vmatprep.subr.mxu0 0.0
      %3404 = vmatpush1.msra.mxu0 0.0
      %3405 = vmatprep.subr.mxu0 0.0
      %3406 = vmatpush1.msra.mxu0 0.0
      %3407 = vmatprep.subr.mxu0 0.0
      %3408 = vmatpush1.msra.mxu0 0.0
      %3409 = vmatprep.subr.mxu0 0.0
      %3410 = vmatpush1.msra.mxu0 0.0
      %3411 = vmatprep.subr.mxu0 0.0
      %3412 = vmatpush1.msra.mxu0 0.0
      %3413 = vmatprep.subr.mxu0 0.0
      %3414 = vmatpush1.msra.mxu0 0.0
      %3415 = vmatprep.subr.mxu0 0.0
      %3416 = vmatpush1.msra.mxu0 0.0
      %3417 = vmatprep.subr.mxu0 0.0
      %3418 = vmatpush1.msra.mxu0 0.0
      %3419 = vmatprep.subr.mxu0 0.0
      %3420 = vmatpush1.msra.mxu0 0.0
      %3421 = vmatprep.subr.mxu0 0.0
      %3422 = vmatpush1.msra.mxu0 0.0
      %3423 = vmatprep.subr.mxu0 0.0
      %3424 = vmatpush1.msra.mxu0 0.0
      %3425 = vmatprep.subr.mxu0 0.0
      %3426 = vmatpush1.msra.mxu0 0.0
      %3427 = vmatprep.subr.mxu0 0.0
      %3428 = vmatpush1.msra.mxu0 0.0
      %3429 = vmatprep.subr.mxu0 0.0
      %3430 = vmatpush1.msra.mxu0 0.0
      %3431 = vmatprep.subr.mxu0 0.0
      %3432 = vmatpush1.msra.mxu0 0.0
      %3433 = vmatprep.subr.mxu0 0.0
      %3434 = vmatpush1.msra.mxu0 0.0
      %3435 = vmatprep.subr.mxu0 0.0
      %3436 = vmatpush1.msra.mxu0 0.0
      %3437 = vmatprep.subr.mxu0 0.0
      %3438 = vmatpush1.msra.mxu0 0.0
      %3439 = vmatprep.subr.mxu0 0.0
      %3440 = vmatpush1.msra.mxu0 0.0
      %3441 = vmatprep.subr.mxu0 0.0
      %3442 = vmatpush1.msra.mxu0 0.0
      %3443 = vmatprep.subr.mxu0 0.0
      %3444 = vmatpush1.msra.mxu0 0.0
      %3445 = vmatprep.subr.mxu0 0.0
      %3446 = vmatpush1.msra.mxu0 0.0
      %3447 = vmatprep.subr.mxu0 0.0
      %3448 = vmatpush1.msra.mxu0 0.0
      %3449 = vmatprep.subr.mxu0 0.0
      %3450 = vmatpush1.msra.mxu0 0.0
      %3451 = vmatprep.subr.mxu0 0.0
      %3452 = vmatpush1.msra.mxu0 0.0
      %3453 = vmatprep.subr.mxu0 0.0
      %3454 = vmatpush1.msra.mxu0 0.0
      %3455 = vmatprep.mubr.f32.mxu0 0.0
      %3456 = vmatmul.mubr.f32.gmra.mrb[0].mxu0 %v263
      %v3457 = vpop.f32.mrb[0].mxu0
      %v3458 = vadd.f32 %v213, %v3457
      %v3459 = vpop.f32.mrb[0].mxu0
      %3460 = vmatprep.mubr.f32.mxu0 0.0
      %3461 = vmatmul.mubr.f32.gmra.mrb[0].mxu0 %v266
      %v3462 = vpop.f32.mrb[0].mxu0
      %v3463 = vadd.f32 %v218, %v3462
      %v3464 = vpop.f32.mrb[0].mxu0
      %3465 = vdwg.mxu0
      %v3466 = vmax.f32 %v3458, 0.0
      %v3467 = vmax.f32 %v3463, 0.0
      %3468 = vmatprep.subr.mxu0 0.0
      %3469 = vmatpush1.msra.mxu0 %v3217
      %3470 = vmatprep.subr.mxu0 0.0
      %3471 = vmatpush1.msra.mxu0 %v3218
      %3472 = vmatprep.subr.mxu0 0.0
      %3473 = vmatpush1.msra.mxu0 %v3300
      %3474 = vmatprep.subr.mxu0 0.0
      %3475 = vmatpush1.msra.mxu0 %v3301
      %3476 = vmatprep.subr.mxu0 0.0
      %3477 = vmatpush1.msra.mxu0 %v3383
      %3478 = vmatprep.subr.mxu0 0.0
      %3479 = vmatpush1.msra.mxu0 %v3384
      %3480 = vmatprep.subr.mxu0 0.0
      %3481 = vmatpush1.msra.mxu0 %v3466
      %3482 = vmatprep.subr.mxu0 0.0
      %3483 = vmatpush1.msra.mxu0 %v3467
      %3484 = vmatprep.subr.mxu0 0.0
      %3485 = vmatpush1.msra.mxu0 0.0
      %3486 = vmatprep.subr.mxu0 0.0
      %3487 = vmatpush1.msra.mxu0 0.0
      %3488 = vmatprep.subr.mxu0 0.0
      %3489 = vmatpush1.msra.mxu0 0.0
      %3490 = vmatprep.subr.mxu0 0.0
      %3491 = vmatpush1.msra.mxu0 0.0
      %3492 = vmatprep.subr.mxu0 0.0
      %3493 = vmatpush1.msra.mxu0 0.0
      %3494 = vmatprep.subr.mxu0 0.0
      %3495 = vmatpush1.msra.mxu0 0.0
      %3496 = vmatprep.subr.mxu0 0.0
      %3497 = vmatpush1.msra.mxu0 0.0
      %3498 = vmatprep.subr.mxu0 0.0
      %3499 = vmatpush1.msra.mxu0 0.0
      %3500 = vmatprep.subr.mxu0 0.0
      %3501 = vmatpush1.msra.mxu0 0.0
      %3502 = vmatprep.subr.mxu0 0.0
      %3503 = vmatpush1.msra.mxu0 0.0
      %3504 = vmatprep.subr.mxu0 0.0
      %3505 = vmatpush1.msra.mxu0 0.0
      %3506 = vmatprep.subr.mxu0 0.0
      %3507 = vmatpush1.msra.mxu0 0.0
      %3508 = vmatprep.subr.mxu0 0.0
      %3509 = vmatpush1.msra.mxu0 0.0
      %3510 = vmatprep.subr.mxu0 0.0
      %3511 = vmatpush1.msra.mxu0 0.0
      %3512 = vmatprep.subr.mxu0 0.0
      %3513 = vmatpush1.msra.mxu0 0.0
      %3514 = vmatprep.subr.mxu0 0.0
      %3515 = vmatpush1.msra.mxu0 0.0
      %3516 = vmatprep.subr.mxu0 0.0
      %3517 = vmatpush1.msra.mxu0 0.0
      %3518 = vmatprep.subr.mxu0 0.0
      %3519 = vmatpush1.msra.mxu0 0.0
      %3520 = vmatprep.subr.mxu0 0.0
      %3521 = vmatpush1.msra.mxu0 0.0
      %3522 = vmatprep.subr.mxu0 0.0
      %3523 = vmatpush1.msra.mxu0 0.0
      %3524 = vmatprep.subr.mxu0 0.0
      %3525 = vmatpush1.msra.mxu0 0.0
      %3526 = vmatprep.subr.mxu0 0.0
      %3527 = vmatpush1.msra.mxu0 0.0
      %3528 = vmatprep.subr.mxu0 0.0
      %3529 = vmatpush1.msra.mxu0 0.0
      %3530 = vmatprep.subr.mxu0 0.0
      %3531 = vmatpush1.msra.mxu0 0.0
      %3532 = vmatprep.mubr.f32.mxu0 0.0
      %3533 = vmatmul.mubr.f32.gmra.mrb[0].mxu0 %v600
      %v3534 = vpop.f32.mrb[0].mxu0
      %v3535 = vadd.f32 %v226, %v3534
      %v3536 = vpop.f32.mrb[0].mxu0
      %3537 = vmatprep.mubr.f32.mxu0 0.0
      %3538 = vmatmul.mubr.f32.gmra.mrb[0].mxu0 %v603
      %v3539 = vpop.f32.mrb[0].mxu0
      %v3540 = vadd.f32 %v231, %v3539
      %v3541 = vpop.f32.mrb[0].mxu0
      %3542 = vdwg.mxu0
      %v3543 = vmax.f32 %v3535, 0.0
      %v3544 = vmax.f32 %v3540, 0.0
      %s3545 = scalar_lea.vmem %s192, 512
      %v3546 = vld [vmem:[%s3545] sm:$0xff]
      %v3547 = vld [vmem:[%s3545 + $0x8] sm:$0xf]
      %v3549 = vsel %vm268, %v3547, 0
      %3551 = vmatprep.subr.mxu0 0.0
      %3552 = vmatpush1.msra.mxu0 %v3546
      %3553 = vmatprep.subr.mxu0 0.0
      %3554 = vmatpush1.msra.mxu0 %v3549
      %3555 = vmatprep.subr.mxu0 0.0
      %3556 = vmatpush1.msra.mxu0 0.0
      %3557 = vmatprep.subr.mxu0 0.0
      %3558 = vmatpush1.msra.mxu0 0.0
      %3559 = vmatprep.subr.mxu0 0.0
      %3560 = vmatpush1.msra.mxu0 0.0
      %3561 = vmatprep.subr.mxu0 0.0
      %3562 = vmatpush1.msra.mxu0 0.0
      %3563 = vmatprep.subr.mxu0 0.0
      %3564 = vmatpush1.msra.mxu0 0.0
      %3565 = vmatprep.subr.mxu0 0.0
      %3566 = vmatpush1.msra.mxu0 0.0
      %3567 = vmatprep.subr.mxu0 0.0
      %3568 = vmatpush1.msra.mxu0 0.0
      %3569 = vmatprep.subr.mxu0 0.0
      %3570 = vmatpush1.msra.mxu0 0.0
      %3571 = vmatprep.subr.mxu0 0.0
      %3572 = vmatpush1.msra.mxu0 0.0
      %3573 = vmatprep.subr.mxu0 0.0
      %3574 = vmatpush1.msra.mxu0 0.0
      %3575 = vmatprep.subr.mxu0 0.0
      %3576 = vmatpush1.msra.mxu0 0.0
      %3577 = vmatprep.subr.mxu0 0.0
      %3578 = vmatpush1.msra.mxu0 0.0
      %3579 = vmatprep.subr.mxu0 0.0
      %3580 = vmatpush1.msra.mxu0 0.0
      %3581 = vmatprep.subr.mxu0 0.0
      %3582 = vmatpush1.msra.mxu0 0.0
      %3583 = vmatprep.subr.mxu0 0.0
      %3584 = vmatpush1.msra.mxu0 0.0
      %3585 = vmatprep.subr.mxu0 0.0
      %3586 = vmatpush1.msra.mxu0 0.0
      %3587 = vmatprep.subr.mxu0 0.0
      %3588 = vmatpush1.msra.mxu0 0.0
      %3589 = vmatprep.subr.mxu0 0.0
      %3590 = vmatpush1.msra.mxu0 0.0
      %3591 = vmatprep.subr.mxu0 0.0
      %3592 = vmatpush1.msra.mxu0 0.0
      %3593 = vmatprep.subr.mxu0 0.0
      %3594 = vmatpush1.msra.mxu0 0.0
      %3595 = vmatprep.subr.mxu0 0.0
      %3596 = vmatpush1.msra.mxu0 0.0
      %3597 = vmatprep.subr.mxu0 0.0
      %3598 = vmatpush1.msra.mxu0 0.0
      %3599 = vmatprep.subr.mxu0 0.0
      %3600 = vmatpush1.msra.mxu0 0.0
      %3601 = vmatprep.subr.mxu0 0.0
      %3602 = vmatpush1.msra.mxu0 0.0
      %3603 = vmatprep.subr.mxu0 0.0
      %3604 = vmatpush1.msra.mxu0 0.0
      %3605 = vmatprep.subr.mxu0 0.0
      %3606 = vmatpush1.msra.mxu0 0.0
      %3607 = vmatprep.subr.mxu0 0.0
      %3608 = vmatpush1.msra.mxu0 0.0
      %3609 = vmatprep.subr.mxu0 0.0
      %3610 = vmatpush1.msra.mxu0 0.0
      %3611 = vmatprep.subr.mxu0 0.0
      %3612 = vmatpush1.msra.mxu0 0.0
      %3613 = vmatprep.subr.mxu0 0.0
      %3614 = vmatpush1.msra.mxu0 0.0
      %3615 = vmatprep.mubr.f32.mxu0 0.0
      %3616 = vmatmul.mubr.f32.gmra.mrb[0].mxu0 %v263
      %v3617 = vpop.f32.mrb[0].mxu0
      %v3618 = vadd.f32 %v213, %v3617
      %v3619 = vpop.f32.mrb[0].mxu0
      %3620 = vmatprep.mubr.f32.mxu0 0.0
      %3621 = vmatmul.mubr.f32.gmra.mrb[0].mxu0 %v266
      %v3622 = vpop.f32.mrb[0].mxu0
      %v3623 = vadd.f32 %v218, %v3622
      %v3624 = vpop.f32.mrb[0].mxu0
      %3625 = vdwg.mxu0
      %v3626 = vmax.f32 %v3618, 0.0
      %v3627 = vmax.f32 %v3623, 0.0
      %s3628 = scalar_lea.vmem %s192, 528
      %v3629 = vld [vmem:[%s3628] sm:$0xff]
      %v3630 = vld [vmem:[%s3628 + $0x8] sm:$0xf]
      %v3632 = vsel %vm268, %v3630, 0
      %3634 = vmatprep.subr.mxu0 0.0
      %3635 = vmatpush1.msra.mxu0 %v3629
      %3636 = vmatprep.subr.mxu0 0.0
      %3637 = vmatpush1.msra.mxu0 %v3632
      %3638 = vmatprep.subr.mxu0 0.0
      %3639 = vmatpush1.msra.mxu0 0.0
      %3640 = vmatprep.subr.mxu0 0.0
      %3641 = vmatpush1.msra.mxu0 0.0
      %3642 = vmatprep.subr.mxu0 0.0
      %3643 = vmatpush1.msra.mxu0 0.0
      %3644 = vmatprep.subr.mxu0 0.0
      %3645 = vmatpush1.msra.mxu0 0.0
      %3646 = vmatprep.subr.mxu0 0.0
      %3647 = vmatpush1.msra.mxu0 0.0
      %3648 = vmatprep.subr.mxu0 0.0
      %3649 = vmatpush1.msra.mxu0 0.0
      %3650 = vmatprep.subr.mxu0 0.0
      %3651 = vmatpush1.msra.mxu0 0.0
      %3652 = vmatprep.subr.mxu0 0.0
      %3653 = vmatpush1.msra.mxu0 0.0
      %3654 = vmatprep.subr.mxu0 0.0
      %3655 = vmatpush1.msra.mxu0 0.0
      %3656 = vmatprep.subr.mxu0 0.0
      %3657 = vmatpush1.msra.mxu0 0.0
      %3658 = vmatprep.subr.mxu0 0.0
      %3659 = vmatpush1.msra.mxu0 0.0
      %3660 = vmatprep.subr.mxu0 0.0
      %3661 = vmatpush1.msra.mxu0 0.0
      %3662 = vmatprep.subr.mxu0 0.0
      %3663 = vmatpush1.msra.mxu0 0.0
      %3664 = vmatprep.subr.mxu0 0.0
      %3665 = vmatpush1.msra.mxu0 0.0
      %3666 = vmatprep.subr.mxu0 0.0
      %3667 = vmatpush1.msra.mxu0 0.0
      %3668 = vmatprep.subr.mxu0 0.0
      %3669 = vmatpush1.msra.mxu0 0.0
      %3670 = vmatprep.subr.mxu0 0.0
      %3671 = vmatpush1.msra.mxu0 0.0
      %3672 = vmatprep.subr.mxu0 0.0
      %3673 = vmatpush1.msra.mxu0 0.0
      %3674 = vmatprep.subr.mxu0 0.0
      %3675 = vmatpush1.msra.mxu0 0.0
      %3676 = vmatprep.subr.mxu0 0.0
      %3677 = vmatpush1.msra.mxu0 0.0
      %3678 = vmatprep.subr.mxu0 0.0
      %3679 = vmatpush1.msra.mxu0 0.0
      %3680 = vmatprep.subr.mxu0 0.0
      %3681 = vmatpush1.msra.mxu0 0.0
      %3682 = vmatprep.subr.mxu0 0.0
      %3683 = vmatpush1.msra.mxu0 0.0
      %3684 = vmatprep.subr.mxu0 0.0
      %3685 = vmatpush1.msra.mxu0 0.0
      %3686 = vmatprep.subr.mxu0 0.0
      %3687 = vmatpush1.msra.mxu0 0.0
      %3688 = vmatprep.subr.mxu0 0.0
      %3689 = vmatpush1.msra.mxu0 0.0
      %3690 = vmatprep.subr.mxu0 0.0
      %3691 = vmatpush1.msra.mxu0 0.0
      %3692 = vmatprep.subr.mxu0 0.0
      %3693 = vmatpush1.msra.mxu0 0.0
      %3694 = vmatprep.subr.mxu0 0.0
      %3695 = vmatpush1.msra.mxu0 0.0
      %3696 = vmatprep.subr.mxu0 0.0
      %3697 = vmatpush1.msra.mxu0 0.0
      %3698 = vmatprep.mubr.f32.mxu0 0.0
      %3699 = vmatmul.mubr.f32.gmra.mrb[0].mxu0 %v263
      %v3700 = vpop.f32.mrb[0].mxu0
      %v3701 = vadd.f32 %v213, %v3700
      %v3702 = vpop.f32.mrb[0].mxu0
      %3703 = vmatprep.mubr.f32.mxu0 0.0
      %3704 = vmatmul.mubr.f32.gmra.mrb[0].mxu0 %v266
      %v3705 = vpop.f32.mrb[0].mxu0
      %v3706 = vadd.f32 %v218, %v3705
      %v3707 = vpop.f32.mrb[0].mxu0
      %3708 = vdwg.mxu0
      %v3709 = vmax.f32 %v3701, 0.0
      %v3710 = vmax.f32 %v3706, 0.0
      %s3711 = scalar_lea.vmem %s192, 544
      %v3712 = vld [vmem:[%s3711] sm:$0xff]
      %v3713 = vld [vmem:[%s3711 + $0x8] sm:$0xf]
      %v3715 = vsel %vm268, %v3713, 0
      %3717 = vmatprep.subr.mxu0 0.0
      %3718 = vmatpush1.msra.mxu0 %v3712
      %3719 = vmatprep.subr.mxu0 0.0
      %3720 = vmatpush1.msra.mxu0 %v3715
      %3721 = vmatprep.subr.mxu0 0.0
      %3722 = vmatpush1.msra.mxu0 0.0
      %3723 = vmatprep.subr.mxu0 0.0
      %3724 = vmatpush1.msra.mxu0 0.0
      %3725 = vmatprep.subr.mxu0 0.0
      %3726 = vmatpush1.msra.mxu0 0.0
      %3727 = vmatprep.subr.mxu0 0.0
      %3728 = vmatpush1.msra.mxu0 0.0
      %3729 = vmatprep.subr.mxu0 0.0
      %3730 = vmatpush1.msra.mxu0 0.0
      %3731 = vmatprep.subr.mxu0 0.0
      %3732 = vmatpush1.msra.mxu0 0.0
      %3733 = vmatprep.subr.mxu0 0.0
      %3734 = vmatpush1.msra.mxu0 0.0
      %3735 = vmatprep.subr.mxu0 0.0
      %3736 = vmatpush1.msra.mxu0 0.0
      %3737 = vmatprep.subr.mxu0 0.0
      %3738 = vmatpush1.msra.mxu0 0.0
      %3739 = vmatprep.subr.mxu0 0.0
      %3740 = vmatpush1.msra.mxu0 0.0
      %3741 = vmatprep.subr.mxu0 0.0
      %3742 = vmatpush1.msra.mxu0 0.0
      %3743 = vmatprep.subr.mxu0 0.0
      %3744 = vmatpush1.msra.mxu0 0.0
      %3745 = vmatprep.subr.mxu0 0.0
      %3746 = vmatpush1.msra.mxu0 0.0
      %3747 = vmatprep.subr.mxu0 0.0
      %3748 = vmatpush1.msra.mxu0 0.0
      %3749 = vmatprep.subr.mxu0 0.0
      %3750 = vmatpush1.msra.mxu0 0.0
      %3751 = vmatprep.subr.mxu0 0.0
      %3752 = vmatpush1.msra.mxu0 0.0
      %3753 = vmatprep.subr.mxu0 0.0
      %3754 = vmatpush1.msra.mxu0 0.0
      %3755 = vmatprep.subr.mxu0 0.0
      %3756 = vmatpush1.msra.mxu0 0.0
      %3757 = vmatprep.subr.mxu0 0.0
      %3758 = vmatpush1.msra.mxu0 0.0
      %3759 = vmatprep.subr.mxu0 0.0
      %3760 = vmatpush1.msra.mxu0 0.0
      %3761 = vmatprep.subr.mxu0 0.0
      %3762 = vmatpush1.msra.mxu0 0.0
      %3763 = vmatprep.subr.mxu0 0.0
      %3764 = vmatpush1.msra.mxu0 0.0
      %3765 = vmatprep.subr.mxu0 0.0
      %3766 = vmatpush1.msra.mxu0 0.0
      %3767 = vmatprep.subr.mxu0 0.0
      %3768 = vmatpush1.msra.mxu0 0.0
      %3769 = vmatprep.subr.mxu0 0.0
      %3770 = vmatpush1.msra.mxu0 0.0
      %3771 = vmatprep.subr.mxu0 0.0
      %3772 = vmatpush1.msra.mxu0 0.0
      %3773 = vmatprep.subr.mxu0 0.0
      %3774 = vmatpush1.msra.mxu0 0.0
      %3775 = vmatprep.subr.mxu0 0.0
      %3776 = vmatpush1.msra.mxu0 0.0
      %3777 = vmatprep.subr.mxu0 0.0
      %3778 = vmatpush1.msra.mxu0 0.0
      %3779 = vmatprep.subr.mxu0 0.0
      %3780 = vmatpush1.msra.mxu0 0.0
      %3781 = vmatprep.mubr.f32.mxu0 0.0
      %3782 = vmatmul.mubr.f32.gmra.mrb[0].mxu0 %v263
      %v3783 = vpop.f32.mrb[0].mxu0
      %v3784 = vadd.f32 %v213, %v3783
      %v3785 = vpop.f32.mrb[0].mxu0
      %3786 = vmatprep.mubr.f32.mxu0 0.0
      %3787 = vmatmul.mubr.f32.gmra.mrb[0].mxu0 %v266
      %v3788 = vpop.f32.mrb[0].mxu0
      %v3789 = vadd.f32 %v218, %v3788
      %v3790 = vpop.f32.mrb[0].mxu0
      %3791 = vdwg.mxu0
      %v3792 = vmax.f32 %v3784, 0.0
      %v3793 = vmax.f32 %v3789, 0.0
      %s3794 = scalar_lea.vmem %s192, 560
      %v3795 = vld [vmem:[%s3794] sm:$0xff]
      %v3796 = vld [vmem:[%s3794 + $0x8] sm:$0xf]
      %v3798 = vsel %vm268, %v3796, 0
      %3800 = vmatprep.subr.mxu0 0.0
      %3801 = vmatpush1.msra.mxu0 %v3795
      %3802 = vmatprep.subr.mxu0 0.0
      %3803 = vmatpush1.msra.mxu0 %v3798
      %3804 = vmatprep.subr.mxu0 0.0
      %3805 = vmatpush1.msra.mxu0 0.0
      %3806 = vmatprep.subr.mxu0 0.0
      %3807 = vmatpush1.msra.mxu0 0.0
      %3808 = vmatprep.subr.mxu0 0.0
      %3809 = vmatpush1.msra.mxu0 0.0
      %3810 = vmatprep.subr.mxu0 0.0
      %3811 = vmatpush1.msra.mxu0 0.0
      %3812 = vmatprep.subr.mxu0 0.0
      %3813 = vmatpush1.msra.mxu0 0.0
      %3814 = vmatprep.subr.mxu0 0.0
      %3815 = vmatpush1.msra.mxu0 0.0
      %3816 = vmatprep.subr.mxu0 0.0
      %3817 = vmatpush1.msra.mxu0 0.0
      %3818 = vmatprep.subr.mxu0 0.0
      %3819 = vmatpush1.msra.mxu0 0.0
      %3820 = vmatprep.subr.mxu0 0.0
      %3821 = vmatpush1.msra.mxu0 0.0
      %3822 = vmatprep.subr.mxu0 0.0
      %3823 = vmatpush1.msra.mxu0 0.0
      %3824 = vmatprep.subr.mxu0 0.0
      %3825 = vmatpush1.msra.mxu0 0.0
      %3826 = vmatprep.subr.mxu0 0.0
      %3827 = vmatpush1.msra.mxu0 0.0
      %3828 = vmatprep.subr.mxu0 0.0
      %3829 = vmatpush1.msra.mxu0 0.0
      %3830 = vmatprep.subr.mxu0 0.0
      %3831 = vmatpush1.msra.mxu0 0.0
      %3832 = vmatprep.subr.mxu0 0.0
      %3833 = vmatpush1.msra.mxu0 0.0
      %3834 = vmatprep.subr.mxu0 0.0
      %3835 = vmatpush1.msra.mxu0 0.0
      %3836 = vmatprep.subr.mxu0 0.0
      %3837 = vmatpush1.msra.mxu0 0.0
      %3838 = vmatprep.subr.mxu0 0.0
      %3839 = vmatpush1.msra.mxu0 0.0
      %3840 = vmatprep.subr.mxu0 0.0
      %3841 = vmatpush1.msra.mxu0 0.0
      %3842 = vmatprep.subr.mxu0 0.0
      %3843 = vmatpush1.msra.mxu0 0.0
      %3844 = vmatprep.subr.mxu0 0.0
      %3845 = vmatpush1.msra.mxu0 0.0
      %3846 = vmatprep.subr.mxu0 0.0
      %3847 = vmatpush1.msra.mxu0 0.0
      %3848 = vmatprep.subr.mxu0 0.0
      %3849 = vmatpush1.msra.mxu0 0.0
      %3850 = vmatprep.subr.mxu0 0.0
      %3851 = vmatpush1.msra.mxu0 0.0
      %3852 = vmatprep.subr.mxu0 0.0
      %3853 = vmatpush1.msra.mxu0 0.0
      %3854 = vmatprep.subr.mxu0 0.0
      %3855 = vmatpush1.msra.mxu0 0.0
      %3856 = vmatprep.subr.mxu0 0.0
      %3857 = vmatpush1.msra.mxu0 0.0
      %3858 = vmatprep.subr.mxu0 0.0
      %3859 = vmatpush1.msra.mxu0 0.0
      %3860 = vmatprep.subr.mxu0 0.0
      %3861 = vmatpush1.msra.mxu0 0.0
      %3862 = vmatprep.subr.mxu0 0.0
      %3863 = vmatpush1.msra.mxu0 0.0
      %3864 = vmatprep.mubr.f32.mxu0 0.0
      %3865 = vmatmul.mubr.f32.gmra.mrb[0].mxu0 %v263
      %v3866 = vpop.f32.mrb[0].mxu0
      %v3867 = vadd.f32 %v213, %v3866
      %v3868 = vpop.f32.mrb[0].mxu0
      %3869 = vmatprep.mubr.f32.mxu0 0.0
      %3870 = vmatmul.mubr.f32.gmra.mrb[0].mxu0 %v266
      %v3871 = vpop.f32.mrb[0].mxu0
      %v3872 = vadd.f32 %v218, %v3871
      %v3873 = vpop.f32.mrb[0].mxu0
      %3874 = vdwg.mxu0
      %v3875 = vmax.f32 %v3867, 0.0
      %v3876 = vmax.f32 %v3872, 0.0
      %3877 = vmatprep.subr.mxu0 0.0
      %3878 = vmatpush1.msra.mxu0 %v3626
      %3879 = vmatprep.subr.mxu0 0.0
      %3880 = vmatpush1.msra.mxu0 %v3627
      %3881 = vmatprep.subr.mxu0 0.0
      %3882 = vmatpush1.msra.mxu0 %v3709
      %3883 = vmatprep.subr.mxu0 0.0
      %3884 = vmatpush1.msra.mxu0 %v3710
      %3885 = vmatprep.subr.mxu0 0.0
      %3886 = vmatpush1.msra.mxu0 %v3792
      %3887 = vmatprep.subr.mxu0 0.0
      %3888 = vmatpush1.msra.mxu0 %v3793
      %3889 = vmatprep.subr.mxu0 0.0
      %3890 = vmatpush1.msra.mxu0 %v3875
      %3891 = vmatprep.subr.mxu0 0.0
      %3892 = vmatpush1.msra.mxu0 %v3876
      %3893 = vmatprep.subr.mxu0 0.0
      %3894 = vmatpush1.msra.mxu0 0.0
      %3895 = vmatprep.subr.mxu0 0.0
      %3896 = vmatpush1.msra.mxu0 0.0
      %3897 = vmatprep.subr.mxu0 0.0
      %3898 = vmatpush1.msra.mxu0 0.0
      %3899 = vmatprep.subr.mxu0 0.0
      %3900 = vmatpush1.msra.mxu0 0.0
      %3901 = vmatprep.subr.mxu0 0.0
      %3902 = vmatpush1.msra.mxu0 0.0
      %3903 = vmatprep.subr.mxu0 0.0
      %3904 = vmatpush1.msra.mxu0 0.0
      %3905 = vmatprep.subr.mxu0 0.0
      %3906 = vmatpush1.msra.mxu0 0.0
      %3907 = vmatprep.subr.mxu0 0.0
      %3908 = vmatpush1.msra.mxu0 0.0
      %3909 = vmatprep.subr.mxu0 0.0
      %3910 = vmatpush1.msra.mxu0 0.0
      %3911 = vmatprep.subr.mxu0 0.0
      %3912 = vmatpush1.msra.mxu0 0.0
      %3913 = vmatprep.subr.mxu0 0.0
      %3914 = vmatpush1.msra.mxu0 0.0
      %3915 = vmatprep.subr.mxu0 0.0
      %3916 = vmatpush1.msra.mxu0 0.0
      %3917 = vmatprep.subr.mxu0 0.0
      %3918 = vmatpush1.msra.mxu0 0.0
      %3919 = vmatprep.subr.mxu0 0.0
      %3920 = vmatpush1.msra.mxu0 0.0
      %3921 = vmatprep.subr.mxu0 0.0
      %3922 = vmatpush1.msra.mxu0 0.0
      %3923 = vmatprep.subr.mxu0 0.0
      %3924 = vmatpush1.msra.mxu0 0.0
      %3925 = vmatprep.subr.mxu0 0.0
      %3926 = vmatpush1.msra.mxu0 0.0
      %3927 = vmatprep.subr.mxu0 0.0
      %3928 = vmatpush1.msra.mxu0 0.0
      %3929 = vmatprep.subr.mxu0 0.0
      %3930 = vmatpush1.msra.mxu0 0.0
      %3931 = vmatprep.subr.mxu0 0.0
      %3932 = vmatpush1.msra.mxu0 0.0
      %3933 = vmatprep.subr.mxu0 0.0
      %3934 = vmatpush1.msra.mxu0 0.0
      %3935 = vmatprep.subr.mxu0 0.0
      %3936 = vmatpush1.msra.mxu0 0.0
      %3937 = vmatprep.subr.mxu0 0.0
      %3938 = vmatpush1.msra.mxu0 0.0
      %3939 = vmatprep.subr.mxu0 0.0
      %3940 = vmatpush1.msra.mxu0 0.0
      %3941 = vmatprep.mubr.f32.mxu0 0.0
      %3942 = vmatmul.mubr.f32.gmra.mrb[0].mxu0 %v600
      %v3943 = vpop.f32.mrb[0].mxu0
      %v3944 = vadd.f32 %v226, %v3943
      %v3945 = vpop.f32.mrb[0].mxu0
      %3946 = vmatprep.mubr.f32.mxu0 0.0
      %3947 = vmatmul.mubr.f32.gmra.mrb[0].mxu0 %v603
      %v3948 = vpop.f32.mrb[0].mxu0
      %v3949 = vadd.f32 %v231, %v3948
      %v3950 = vpop.f32.mrb[0].mxu0
      %3951 = vdwg.mxu0
      %v3952 = vmax.f32 %v3944, 0.0
      %v3953 = vmax.f32 %v3949, 0.0
      %s3954 = scalar_lea.vmem %s192, 576
      %v3955 = vld [vmem:[%s3954] sm:$0xff]
      %v3956 = vld [vmem:[%s3954 + $0x8] sm:$0xf]
      %v3958 = vsel %vm268, %v3956, 0
      %3960 = vmatprep.subr.mxu0 0.0
      %3961 = vmatpush1.msra.mxu0 %v3955
      %3962 = vmatprep.subr.mxu0 0.0
      %3963 = vmatpush1.msra.mxu0 %v3958
      %3964 = vmatprep.subr.mxu0 0.0
      %3965 = vmatpush1.msra.mxu0 0.0
      %3966 = vmatprep.subr.mxu0 0.0
      %3967 = vmatpush1.msra.mxu0 0.0
      %3968 = vmatprep.subr.mxu0 0.0
      %3969 = vmatpush1.msra.mxu0 0.0
      %3970 = vmatprep.subr.mxu0 0.0
      %3971 = vmatpush1.msra.mxu0 0.0
      %3972 = vmatprep.subr.mxu0 0.0
      %3973 = vmatpush1.msra.mxu0 0.0
      %3974 = vmatprep.subr.mxu0 0.0
      %3975 = vmatpush1.msra.mxu0 0.0
      %3976 = vmatprep.subr.mxu0 0.0
      %3977 = vmatpush1.msra.mxu0 0.0
      %3978 = vmatprep.subr.mxu0 0.0
      %3979 = vmatpush1.msra.mxu0 0.0
      %3980 = vmatprep.subr.mxu0 0.0
      %3981 = vmatpush1.msra.mxu0 0.0
      %3982 = vmatprep.subr.mxu0 0.0
      %3983 = vmatpush1.msra.mxu0 0.0
      %3984 = vmatprep.subr.mxu0 0.0
      %3985 = vmatpush1.msra.mxu0 0.0
      %3986 = vmatprep.subr.mxu0 0.0
      %3987 = vmatpush1.msra.mxu0 0.0
      %3988 = vmatprep.subr.mxu0 0.0
      %3989 = vmatpush1.msra.mxu0 0.0
      %3990 = vmatprep.subr.mxu0 0.0
      %3991 = vmatpush1.msra.mxu0 0.0
      %3992 = vmatprep.subr.mxu0 0.0
      %3993 = vmatpush1.msra.mxu0 0.0
      %3994 = vmatprep.subr.mxu0 0.0
      %3995 = vmatpush1.msra.mxu0 0.0
      %3996 = vmatprep.subr.mxu0 0.0
      %3997 = vmatpush1.msra.mxu0 0.0
      %3998 = vmatprep.subr.mxu0 0.0
      %3999 = vmatpush1.msra.mxu0 0.0
      %4000 = vmatprep.subr.mxu0 0.0
      %4001 = vmatpush1.msra.mxu0 0.0
      %4002 = vmatprep.subr.mxu0 0.0
      %4003 = vmatpush1.msra.mxu0 0.0
      %4004 = vmatprep.subr.mxu0 0.0
      %4005 = vmatpush1.msra.mxu0 0.0
      %4006 = vmatprep.subr.mxu0 0.0
      %4007 = vmatpush1.msra.mxu0 0.0
      %4008 = vmatprep.subr.mxu0 0.0
      %4009 = vmatpush1.msra.mxu0 0.0
      %4010 = vmatprep.subr.mxu0 0.0
      %4011 = vmatpush1.msra.mxu0 0.0
      %4012 = vmatprep.subr.mxu0 0.0
      %4013 = vmatpush1.msra.mxu0 0.0
      %4014 = vmatprep.subr.mxu0 0.0
      %4015 = vmatpush1.msra.mxu0 0.0
      %4016 = vmatprep.subr.mxu0 0.0
      %4017 = vmatpush1.msra.mxu0 0.0
      %4018 = vmatprep.subr.mxu0 0.0
      %4019 = vmatpush1.msra.mxu0 0.0
      %4020 = vmatprep.subr.mxu0 0.0
      %4021 = vmatpush1.msra.mxu0 0.0
      %4022 = vmatprep.subr.mxu0 0.0
      %4023 = vmatpush1.msra.mxu0 0.0
      %4024 = vmatprep.mubr.f32.mxu0 0.0
      %4025 = vmatmul.mubr.f32.gmra.mrb[0].mxu0 %v263
      %v4026 = vpop.f32.mrb[0].mxu0
      %v4027 = vadd.f32 %v213, %v4026
      %v4028 = vpop.f32.mrb[0].mxu0
      %4029 = vmatprep.mubr.f32.mxu0 0.0
      %4030 = vmatmul.mubr.f32.gmra.mrb[0].mxu0 %v266
      %v4031 = vpop.f32.mrb[0].mxu0
      %v4032 = vadd.f32 %v218, %v4031
      %v4033 = vpop.f32.mrb[0].mxu0
      %4034 = vdwg.mxu0
      %v4035 = vmax.f32 %v4027, 0.0
      %v4036 = vmax.f32 %v4032, 0.0
      %s4037 = scalar_lea.vmem %s192, 592
      %v4038 = vld [vmem:[%s4037] sm:$0xff]
      %v4039 = vld [vmem:[%s4037 + $0x8] sm:$0xf]
      %v4041 = vsel %vm268, %v4039, 0
      %4043 = vmatprep.subr.mxu0 0.0
      %4044 = vmatpush1.msra.mxu0 %v4038
      %4045 = vmatprep.subr.mxu0 0.0
      %4046 = vmatpush1.msra.mxu0 %v4041
      %4047 = vmatprep.subr.mxu0 0.0
      %4048 = vmatpush1.msra.mxu0 0.0
      %4049 = vmatprep.subr.mxu0 0.0
      %4050 = vmatpush1.msra.mxu0 0.0
      %4051 = vmatprep.subr.mxu0 0.0
      %4052 = vmatpush1.msra.mxu0 0.0
      %4053 = vmatprep.subr.mxu0 0.0
      %4054 = vmatpush1.msra.mxu0 0.0
      %4055 = vmatprep.subr.mxu0 0.0
      %4056 = vmatpush1.msra.mxu0 0.0
      %4057 = vmatprep.subr.mxu0 0.0
      %4058 = vmatpush1.msra.mxu0 0.0
      %4059 = vmatprep.subr.mxu0 0.0
      %4060 = vmatpush1.msra.mxu0 0.0
      %4061 = vmatprep.subr.mxu0 0.0
      %4062 = vmatpush1.msra.mxu0 0.0
      %4063 = vmatprep.subr.mxu0 0.0
      %4064 = vmatpush1.msra.mxu0 0.0
      %4065 = vmatprep.subr.mxu0 0.0
      %4066 = vmatpush1.msra.mxu0 0.0
      %4067 = vmatprep.subr.mxu0 0.0
      %4068 = vmatpush1.msra.mxu0 0.0
      %4069 = vmatprep.subr.mxu0 0.0
      %4070 = vmatpush1.msra.mxu0 0.0
      %4071 = vmatprep.subr.mxu0 0.0
      %4072 = vmatpush1.msra.mxu0 0.0
      %4073 = vmatprep.subr.mxu0 0.0
      %4074 = vmatpush1.msra.mxu0 0.0
      %4075 = vmatprep.subr.mxu0 0.0
      %4076 = vmatpush1.msra.mxu0 0.0
      %4077 = vmatprep.subr.mxu0 0.0
      %4078 = vmatpush1.msra.mxu0 0.0
      %4079 = vmatprep.subr.mxu0 0.0
      %4080 = vmatpush1.msra.mxu0 0.0
      %4081 = vmatprep.subr.mxu0 0.0
      %4082 = vmatpush1.msra.mxu0 0.0
      %4083 = vmatprep.subr.mxu0 0.0
      %4084 = vmatpush1.msra.mxu0 0.0
      %4085 = vmatprep.subr.mxu0 0.0
      %4086 = vmatpush1.msra.mxu0 0.0
      %4087 = vmatprep.subr.mxu0 0.0
      %4088 = vmatpush1.msra.mxu0 0.0
      %4089 = vmatprep.subr.mxu0 0.0
      %4090 = vmatpush1.msra.mxu0 0.0
      %4091 = vmatprep.subr.mxu0 0.0
      %4092 = vmatpush1.msra.mxu0 0.0
      %4093 = vmatprep.subr.mxu0 0.0
      %4094 = vmatpush1.msra.mxu0 0.0
      %4095 = vmatprep.subr.mxu0 0.0
      %4096 = vmatpush1.msra.mxu0 0.0
      %4097 = vmatprep.subr.mxu0 0.0
      %4098 = vmatpush1.msra.mxu0 0.0
      %4099 = vmatprep.subr.mxu0 0.0
      %4100 = vmatpush1.msra.mxu0 0.0
      %4101 = vmatprep.subr.mxu0 0.0
      %4102 = vmatpush1.msra.mxu0 0.0
      %4103 = vmatprep.subr.mxu0 0.0
      %4104 = vmatpush1.msra.mxu0 0.0
      %4105 = vmatprep.subr.mxu0 0.0
      %4106 = vmatpush1.msra.mxu0 0.0
      %4107 = vmatprep.mubr.f32.mxu0 0.0
      %4108 = vmatmul.mubr.f32.gmra.mrb[0].mxu0 %v263
      %v4109 = vpop.f32.mrb[0].mxu0
      %v4110 = vadd.f32 %v213, %v4109
      %v4111 = vpop.f32.mrb[0].mxu0
      %4112 = vmatprep.mubr.f32.mxu0 0.0
      %4113 = vmatmul.mubr.f32.gmra.mrb[0].mxu0 %v266
      %v4114 = vpop.f32.mrb[0].mxu0
      %v4115 = vadd.f32 %v218, %v4114
      %v4116 = vpop.f32.mrb[0].mxu0
      %4117 = vdwg.mxu0
      %v4118 = vmax.f32 %v4110, 0.0
      %v4119 = vmax.f32 %v4115, 0.0
      %s4120 = scalar_lea.vmem %s192, 608
      %v4121 = vld [vmem:[%s4120] sm:$0xff]
      %v4122 = vld [vmem:[%s4120 + $0x8] sm:$0xf]
      %v4124 = vsel %vm268, %v4122, 0
      %4126 = vmatprep.subr.mxu0 0.0
      %4127 = vmatpush1.msra.mxu0 %v4121
      %4128 = vmatprep.subr.mxu0 0.0
      %4129 = vmatpush1.msra.mxu0 %v4124
      %4130 = vmatprep.subr.mxu0 0.0
      %4131 = vmatpush1.msra.mxu0 0.0
      %4132 = vmatprep.subr.mxu0 0.0
      %4133 = vmatpush1.msra.mxu0 0.0
      %4134 = vmatprep.subr.mxu0 0.0
      %4135 = vmatpush1.msra.mxu0 0.0
      %4136 = vmatprep.subr.mxu0 0.0
      %4137 = vmatpush1.msra.mxu0 0.0
      %4138 = vmatprep.subr.mxu0 0.0
      %4139 = vmatpush1.msra.mxu0 0.0
      %4140 = vmatprep.subr.mxu0 0.0
      %4141 = vmatpush1.msra.mxu0 0.0
      %4142 = vmatprep.subr.mxu0 0.0
      %4143 = vmatpush1.msra.mxu0 0.0
      %4144 = vmatprep.subr.mxu0 0.0
      %4145 = vmatpush1.msra.mxu0 0.0
      %4146 = vmatprep.subr.mxu0 0.0
      %4147 = vmatpush1.msra.mxu0 0.0
      %4148 = vmatprep.subr.mxu0 0.0
      %4149 = vmatpush1.msra.mxu0 0.0
      %4150 = vmatprep.subr.mxu0 0.0
      %4151 = vmatpush1.msra.mxu0 0.0
      %4152 = vmatprep.subr.mxu0 0.0
      %4153 = vmatpush1.msra.mxu0 0.0
      %4154 = vmatprep.subr.mxu0 0.0
      %4155 = vmatpush1.msra.mxu0 0.0
      %4156 = vmatprep.subr.mxu0 0.0
      %4157 = vmatpush1.msra.mxu0 0.0
      %4158 = vmatprep.subr.mxu0 0.0
      %4159 = vmatpush1.msra.mxu0 0.0
      %4160 = vmatprep.subr.mxu0 0.0
      %4161 = vmatpush1.msra.mxu0 0.0
      %4162 = vmatprep.subr.mxu0 0.0
      %4163 = vmatpush1.msra.mxu0 0.0
      %4164 = vmatprep.subr.mxu0 0.0
      %4165 = vmatpush1.msra.mxu0 0.0
      %4166 = vmatprep.subr.mxu0 0.0
      %4167 = vmatpush1.msra.mxu0 0.0
      %4168 = vmatprep.subr.mxu0 0.0
      %4169 = vmatpush1.msra.mxu0 0.0
      %4170 = vmatprep.subr.mxu0 0.0
      %4171 = vmatpush1.msra.mxu0 0.0
      %4172 = vmatprep.subr.mxu0 0.0
      %4173 = vmatpush1.msra.mxu0 0.0
      %4174 = vmatprep.subr.mxu0 0.0
      %4175 = vmatpush1.msra.mxu0 0.0
      %4176 = vmatprep.subr.mxu0 0.0
      %4177 = vmatpush1.msra.mxu0 0.0
      %4178 = vmatprep.subr.mxu0 0.0
      %4179 = vmatpush1.msra.mxu0 0.0
      %4180 = vmatprep.subr.mxu0 0.0
      %4181 = vmatpush1.msra.mxu0 0.0
      %4182 = vmatprep.subr.mxu0 0.0
      %4183 = vmatpush1.msra.mxu0 0.0
      %4184 = vmatprep.subr.mxu0 0.0
      %4185 = vmatpush1.msra.mxu0 0.0
      %4186 = vmatprep.subr.mxu0 0.0
      %4187 = vmatpush1.msra.mxu0 0.0
      %4188 = vmatprep.subr.mxu0 0.0
      %4189 = vmatpush1.msra.mxu0 0.0
      %4190 = vmatprep.mubr.f32.mxu0 0.0
      %4191 = vmatmul.mubr.f32.gmra.mrb[0].mxu0 %v263
      %v4192 = vpop.f32.mrb[0].mxu0
      %v4193 = vadd.f32 %v213, %v4192
      %v4194 = vpop.f32.mrb[0].mxu0
      %4195 = vmatprep.mubr.f32.mxu0 0.0
      %4196 = vmatmul.mubr.f32.gmra.mrb[0].mxu0 %v266
      %v4197 = vpop.f32.mrb[0].mxu0
      %v4198 = vadd.f32 %v218, %v4197
      %v4199 = vpop.f32.mrb[0].mxu0
      %4200 = vdwg.mxu0
      %v4201 = vmax.f32 %v4193, 0.0
      %v4202 = vmax.f32 %v4198, 0.0
      %s4203 = scalar_lea.vmem %s192, 624
      %v4204 = vld [vmem:[%s4203] sm:$0xff]
      %v4205 = vld [vmem:[%s4203 + $0x8] sm:$0xf]
      %v4207 = vsel %vm268, %v4205, 0
      %4209 = vmatprep.subr.mxu0 0.0
      %4210 = vmatpush1.msra.mxu0 %v4204
      %4211 = vmatprep.subr.mxu0 0.0
      %4212 = vmatpush1.msra.mxu0 %v4207
      %4213 = vmatprep.subr.mxu0 0.0
      %4214 = vmatpush1.msra.mxu0 0.0
      %4215 = vmatprep.subr.mxu0 0.0
      %4216 = vmatpush1.msra.mxu0 0.0
      %4217 = vmatprep.subr.mxu0 0.0
      %4218 = vmatpush1.msra.mxu0 0.0
      %4219 = vmatprep.subr.mxu0 0.0
      %4220 = vmatpush1.msra.mxu0 0.0
      %4221 = vmatprep.subr.mxu0 0.0
      %4222 = vmatpush1.msra.mxu0 0.0
      %4223 = vmatprep.subr.mxu0 0.0
      %4224 = vmatpush1.msra.mxu0 0.0
      %4225 = vmatprep.subr.mxu0 0.0
      %4226 = vmatpush1.msra.mxu0 0.0
      %4227 = vmatprep.subr.mxu0 0.0
      %4228 = vmatpush1.msra.mxu0 0.0
      %4229 = vmatprep.subr.mxu0 0.0
      %4230 = vmatpush1.msra.mxu0 0.0
      %4231 = vmatprep.subr.mxu0 0.0
      %4232 = vmatpush1.msra.mxu0 0.0
      %4233 = vmatprep.subr.mxu0 0.0
      %4234 = vmatpush1.msra.mxu0 0.0
      %4235 = vmatprep.subr.mxu0 0.0
      %4236 = vmatpush1.msra.mxu0 0.0
      %4237 = vmatprep.subr.mxu0 0.0
      %4238 = vmatpush1.msra.mxu0 0.0
      %4239 = vmatprep.subr.mxu0 0.0
      %4240 = vmatpush1.msra.mxu0 0.0
      %4241 = vmatprep.subr.mxu0 0.0
      %4242 = vmatpush1.msra.mxu0 0.0
      %4243 = vmatprep.subr.mxu0 0.0
      %4244 = vmatpush1.msra.mxu0 0.0
      %4245 = vmatprep.subr.mxu0 0.0
      %4246 = vmatpush1.msra.mxu0 0.0
      %4247 = vmatprep.subr.mxu0 0.0
      %4248 = vmatpush1.msra.mxu0 0.0
      %4249 = vmatprep.subr.mxu0 0.0
      %4250 = vmatpush1.msra.mxu0 0.0
      %4251 = vmatprep.subr.mxu0 0.0
      %4252 = vmatpush1.msra.mxu0 0.0
      %4253 = vmatprep.subr.mxu0 0.0
      %4254 = vmatpush1.msra.mxu0 0.0
      %4255 = vmatprep.subr.mxu0 0.0
      %4256 = vmatpush1.msra.mxu0 0.0
      %4257 = vmatprep.subr.mxu0 0.0
      %4258 = vmatpush1.msra.mxu0 0.0
      %4259 = vmatprep.subr.mxu0 0.0
      %4260 = vmatpush1.msra.mxu0 0.0
      %4261 = vmatprep.subr.mxu0 0.0
      %4262 = vmatpush1.msra.mxu0 0.0
      %4263 = vmatprep.subr.mxu0 0.0
      %4264 = vmatpush1.msra.mxu0 0.0
      %4265 = vmatprep.subr.mxu0 0.0
      %4266 = vmatpush1.msra.mxu0 0.0
      %4267 = vmatprep.subr.mxu0 0.0
      %4268 = vmatpush1.msra.mxu0 0.0
      %4269 = vmatprep.subr.mxu0 0.0
      %4270 = vmatpush1.msra.mxu0 0.0
      %4271 = vmatprep.subr.mxu0 0.0
      %4272 = vmatpush1.msra.mxu0 0.0
      %4273 = vmatprep.mubr.f32.mxu0 0.0
      %4274 = vmatmul.mubr.f32.gmra.mrb[0].mxu0 %v263
      %v4275 = vpop.f32.mrb[0].mxu0
      %v4276 = vadd.f32 %v213, %v4275
      %v4277 = vpop.f32.mrb[0].mxu0
      %4278 = vmatprep.mubr.f32.mxu0 0.0
      %4279 = vmatmul.mubr.f32.gmra.mrb[0].mxu0 %v266
      %v4280 = vpop.f32.mrb[0].mxu0
      %v4281 = vadd.f32 %v218, %v4280
      %v4282 = vpop.f32.mrb[0].mxu0
      %4283 = vdwg.mxu0
      %v4284 = vmax.f32 %v4276, 0.0
      %v4285 = vmax.f32 %v4281, 0.0
      %4286 = vmatprep.subr.mxu0 0.0
      %4287 = vmatpush1.msra.mxu0 %v4035
      %4288 = vmatprep.subr.mxu0 0.0
      %4289 = vmatpush1.msra.mxu0 %v4036
      %4290 = vmatprep.subr.mxu0 0.0
      %4291 = vmatpush1.msra.mxu0 %v4118
      %4292 = vmatprep.subr.mxu0 0.0
      %4293 = vmatpush1.msra.mxu0 %v4119
      %4294 = vmatprep.subr.mxu0 0.0
      %4295 = vmatpush1.msra.mxu0 %v4201
      %4296 = vmatprep.subr.mxu0 0.0
      %4297 = vmatpush1.msra.mxu0 %v4202
      %4298 = vmatprep.subr.mxu0 0.0
      %4299 = vmatpush1.msra.mxu0 %v4284
      %4300 = vmatprep.subr.mxu0 0.0
      %4301 = vmatpush1.msra.mxu0 %v4285
      %4302 = vmatprep.subr.mxu0 0.0
      %4303 = vmatpush1.msra.mxu0 0.0
      %4304 = vmatprep.subr.mxu0 0.0
      %4305 = vmatpush1.msra.mxu0 0.0
      %4306 = vmatprep.subr.mxu0 0.0
      %4307 = vmatpush1.msra.mxu0 0.0
      %4308 = vmatprep.subr.mxu0 0.0
      %4309 = vmatpush1.msra.mxu0 0.0
      %4310 = vmatprep.subr.mxu0 0.0
      %4311 = vmatpush1.msra.mxu0 0.0
      %4312 = vmatprep.subr.mxu0 0.0
      %4313 = vmatpush1.msra.mxu0 0.0
      %4314 = vmatprep.subr.mxu0 0.0
      %4315 = vmatpush1.msra.mxu0 0.0
      %4316 = vmatprep.subr.mxu0 0.0
      %4317 = vmatpush1.msra.mxu0 0.0
      %4318 = vmatprep.subr.mxu0 0.0
      %4319 = vmatpush1.msra.mxu0 0.0
      %4320 = vmatprep.subr.mxu0 0.0
      %4321 = vmatpush1.msra.mxu0 0.0
      %4322 = vmatprep.subr.mxu0 0.0
      %4323 = vmatpush1.msra.mxu0 0.0
      %4324 = vmatprep.subr.mxu0 0.0
      %4325 = vmatpush1.msra.mxu0 0.0
      %4326 = vmatprep.subr.mxu0 0.0
      %4327 = vmatpush1.msra.mxu0 0.0
      %4328 = vmatprep.subr.mxu0 0.0
      %4329 = vmatpush1.msra.mxu0 0.0
      %4330 = vmatprep.subr.mxu0 0.0
      %4331 = vmatpush1.msra.mxu0 0.0
      %4332 = vmatprep.subr.mxu0 0.0
      %4333 = vmatpush1.msra.mxu0 0.0
      %4334 = vmatprep.subr.mxu0 0.0
      %4335 = vmatpush1.msra.mxu0 0.0
      %4336 = vmatprep.subr.mxu0 0.0
      %4337 = vmatpush1.msra.mxu0 0.0
      %4338 = vmatprep.subr.mxu0 0.0
      %4339 = vmatpush1.msra.mxu0 0.0
      %4340 = vmatprep.subr.mxu0 0.0
      %4341 = vmatpush1.msra.mxu0 0.0
      %4342 = vmatprep.subr.mxu0 0.0
      %4343 = vmatpush1.msra.mxu0 0.0
      %4344 = vmatprep.subr.mxu0 0.0
      %4345 = vmatpush1.msra.mxu0 0.0
      %4346 = vmatprep.subr.mxu0 0.0
      %4347 = vmatpush1.msra.mxu0 0.0
      %4348 = vmatprep.subr.mxu0 0.0
      %4349 = vmatpush1.msra.mxu0 0.0
      %4350 = vmatprep.mubr.f32.mxu0 0.0
      %4351 = vmatmul.mubr.f32.gmra.mrb[0].mxu0 %v600
      %v4352 = vpop.f32.mrb[0].mxu0
      %v4353 = vadd.f32 %v226, %v4352
      %v4354 = vpop.f32.mrb[0].mxu0
      %4355 = vmatprep.mubr.f32.mxu0 0.0
      %4356 = vmatmul.mubr.f32.gmra.mrb[0].mxu0 %v603
      %v4357 = vpop.f32.mrb[0].mxu0
      %v4358 = vadd.f32 %v231, %v4357
      %v4359 = vpop.f32.mrb[0].mxu0
      %4360 = vdwg.mxu0
      %v4361 = vmax.f32 %v4353, 0.0
      %v4362 = vmax.f32 %v4358, 0.0
      %s4363 = scalar_lea.vmem %s192, 640
      %v4364 = vld [vmem:[%s4363] sm:$0xff]
      %v4365 = vld [vmem:[%s4363 + $0x8] sm:$0xf]
      %v4367 = vsel %vm268, %v4365, 0
      %4369 = vmatprep.subr.mxu0 0.0
      %4370 = vmatpush1.msra.mxu0 %v4364
      %4371 = vmatprep.subr.mxu0 0.0
      %4372 = vmatpush1.msra.mxu0 %v4367
      %4373 = vmatprep.subr.mxu0 0.0
      %4374 = vmatpush1.msra.mxu0 0.0
      %4375 = vmatprep.subr.mxu0 0.0
      %4376 = vmatpush1.msra.mxu0 0.0
      %4377 = vmatprep.subr.mxu0 0.0
      %4378 = vmatpush1.msra.mxu0 0.0
      %4379 = vmatprep.subr.mxu0 0.0
      %4380 = vmatpush1.msra.mxu0 0.0
      %4381 = vmatprep.subr.mxu0 0.0
      %4382 = vmatpush1.msra.mxu0 0.0
      %4383 = vmatprep.subr.mxu0 0.0
      %4384 = vmatpush1.msra.mxu0 0.0
      %4385 = vmatprep.subr.mxu0 0.0
      %4386 = vmatpush1.msra.mxu0 0.0
      %4387 = vmatprep.subr.mxu0 0.0
      %4388 = vmatpush1.msra.mxu0 0.0
      %4389 = vmatprep.subr.mxu0 0.0
      %4390 = vmatpush1.msra.mxu0 0.0
      %4391 = vmatprep.subr.mxu0 0.0
      %4392 = vmatpush1.msra.mxu0 0.0
      %4393 = vmatprep.subr.mxu0 0.0
      %4394 = vmatpush1.msra.mxu0 0.0
      %4395 = vmatprep.subr.mxu0 0.0
      %4396 = vmatpush1.msra.mxu0 0.0
      %4397 = vmatprep.subr.mxu0 0.0
      %4398 = vmatpush1.msra.mxu0 0.0
      %4399 = vmatprep.subr.mxu0 0.0
      %4400 = vmatpush1.msra.mxu0 0.0
      %4401 = vmatprep.subr.mxu0 0.0
      %4402 = vmatpush1.msra.mxu0 0.0
      %4403 = vmatprep.subr.mxu0 0.0
      %4404 = vmatpush1.msra.mxu0 0.0
      %4405 = vmatprep.subr.mxu0 0.0
      %4406 = vmatpush1.msra.mxu0 0.0
      %4407 = vmatprep.subr.mxu0 0.0
      %4408 = vmatpush1.msra.mxu0 0.0
      %4409 = vmatprep.subr.mxu0 0.0
      %4410 = vmatpush1.msra.mxu0 0.0
      %4411 = vmatprep.subr.mxu0 0.0
      %4412 = vmatpush1.msra.mxu0 0.0
      %4413 = vmatprep.subr.mxu0 0.0
      %4414 = vmatpush1.msra.mxu0 0.0
      %4415 = vmatprep.subr.mxu0 0.0
      %4416 = vmatpush1.msra.mxu0 0.0
      %4417 = vmatprep.subr.mxu0 0.0
      %4418 = vmatpush1.msra.mxu0 0.0
      %4419 = vmatprep.subr.mxu0 0.0
      %4420 = vmatpush1.msra.mxu0 0.0
      %4421 = vmatprep.subr.mxu0 0.0
      %4422 = vmatpush1.msra.mxu0 0.0
      %4423 = vmatprep.subr.mxu0 0.0
      %4424 = vmatpush1.msra.mxu0 0.0
      %4425 = vmatprep.subr.mxu0 0.0
      %4426 = vmatpush1.msra.mxu0 0.0
      %4427 = vmatprep.subr.mxu0 0.0
      %4428 = vmatpush1.msra.mxu0 0.0
      %4429 = vmatprep.subr.mxu0 0.0
      %4430 = vmatpush1.msra.mxu0 0.0
      %4431 = vmatprep.subr.mxu0 0.0
      %4432 = vmatpush1.msra.mxu0 0.0
      %4433 = vmatprep.mubr.f32.mxu0 0.0
      %4434 = vmatmul.mubr.f32.gmra.mrb[0].mxu0 %v263
      %v4435 = vpop.f32.mrb[0].mxu0
      %v4436 = vadd.f32 %v213, %v4435
      %v4437 = vpop.f32.mrb[0].mxu0
      %4438 = vmatprep.mubr.f32.mxu0 0.0
      %4439 = vmatmul.mubr.f32.gmra.mrb[0].mxu0 %v266
      %v4440 = vpop.f32.mrb[0].mxu0
      %v4441 = vadd.f32 %v218, %v4440
      %v4442 = vpop.f32.mrb[0].mxu0
      %4443 = vdwg.mxu0
      %v4444 = vmax.f32 %v4436, 0.0
      %v4445 = vmax.f32 %v4441, 0.0
      %s4446 = scalar_lea.vmem %s192, 656
      %v4447 = vld [vmem:[%s4446] sm:$0xff]
      %v4448 = vld [vmem:[%s4446 + $0x8] sm:$0xf]
      %v4450 = vsel %vm268, %v4448, 0
      %4452 = vmatprep.subr.mxu0 0.0
      %4453 = vmatpush1.msra.mxu0 %v4447
      %4454 = vmatprep.subr.mxu0 0.0
      %4455 = vmatpush1.msra.mxu0 %v4450
      %4456 = vmatprep.subr.mxu0 0.0
      %4457 = vmatpush1.msra.mxu0 0.0
      %4458 = vmatprep.subr.mxu0 0.0
      %4459 = vmatpush1.msra.mxu0 0.0
      %4460 = vmatprep.subr.mxu0 0.0
      %4461 = vmatpush1.msra.mxu0 0.0
      %4462 = vmatprep.subr.mxu0 0.0
      %4463 = vmatpush1.msra.mxu0 0.0
      %4464 = vmatprep.subr.mxu0 0.0
      %4465 = vmatpush1.msra.mxu0 0.0
      %4466 = vmatprep.subr.mxu0 0.0
      %4467 = vmatpush1.msra.mxu0 0.0
      %4468 = vmatprep.subr.mxu0 0.0
      %4469 = vmatpush1.msra.mxu0 0.0
      %4470 = vmatprep.subr.mxu0 0.0
      %4471 = vmatpush1.msra.mxu0 0.0
      %4472 = vmatprep.subr.mxu0 0.0
      %4473 = vmatpush1.msra.mxu0 0.0
      %4474 = vmatprep.subr.mxu0 0.0
      %4475 = vmatpush1.msra.mxu0 0.0
      %4476 = vmatprep.subr.mxu0 0.0
      %4477 = vmatpush1.msra.mxu0 0.0
      %4478 = vmatprep.subr.mxu0 0.0
      %4479 = vmatpush1.msra.mxu0 0.0
      %4480 = vmatprep.subr.mxu0 0.0
      %4481 = vmatpush1.msra.mxu0 0.0
      %4482 = vmatprep.subr.mxu0 0.0
      %4483 = vmatpush1.msra.mxu0 0.0
      %4484 = vmatprep.subr.mxu0 0.0
      %4485 = vmatpush1.msra.mxu0 0.0
      %4486 = vmatprep.subr.mxu0 0.0
      %4487 = vmatpush1.msra.mxu0 0.0
      %4488 = vmatprep.subr.mxu0 0.0
      %4489 = vmatpush1.msra.mxu0 0.0
      %4490 = vmatprep.subr.mxu0 0.0
      %4491 = vmatpush1.msra.mxu0 0.0
      %4492 = vmatprep.subr.mxu0 0.0
      %4493 = vmatpush1.msra.mxu0 0.0
      %4494 = vmatprep.subr.mxu0 0.0
      %4495 = vmatpush1.msra.mxu0 0.0
      %4496 = vmatprep.subr.mxu0 0.0
      %4497 = vmatpush1.msra.mxu0 0.0
      %4498 = vmatprep.subr.mxu0 0.0
      %4499 = vmatpush1.msra.mxu0 0.0
      %4500 = vmatprep.subr.mxu0 0.0
      %4501 = vmatpush1.msra.mxu0 0.0
      %4502 = vmatprep.subr.mxu0 0.0
      %4503 = vmatpush1.msra.mxu0 0.0
      %4504 = vmatprep.subr.mxu0 0.0
      %4505 = vmatpush1.msra.mxu0 0.0
      %4506 = vmatprep.subr.mxu0 0.0
      %4507 = vmatpush1.msra.mxu0 0.0
      %4508 = vmatprep.subr.mxu0 0.0
      %4509 = vmatpush1.msra.mxu0 0.0
      %4510 = vmatprep.subr.mxu0 0.0
      %4511 = vmatpush1.msra.mxu0 0.0
      %4512 = vmatprep.subr.mxu0 0.0
      %4513 = vmatpush1.msra.mxu0 0.0
      %4514 = vmatprep.subr.mxu0 0.0
      %4515 = vmatpush1.msra.mxu0 0.0
      %4516 = vmatprep.mubr.f32.mxu0 0.0
      %4517 = vmatmul.mubr.f32.gmra.mrb[0].mxu0 %v263
      %v4518 = vpop.f32.mrb[0].mxu0
      %v4519 = vadd.f32 %v213, %v4518
      %v4520 = vpop.f32.mrb[0].mxu0
      %4521 = vmatprep.mubr.f32.mxu0 0.0
      %4522 = vmatmul.mubr.f32.gmra.mrb[0].mxu0 %v266
      %v4523 = vpop.f32.mrb[0].mxu0
      %v4524 = vadd.f32 %v218, %v4523
      %v4525 = vpop.f32.mrb[0].mxu0
      %4526 = vdwg.mxu0
      %v4527 = vmax.f32 %v4519, 0.0
      %v4528 = vmax.f32 %v4524, 0.0
      %s4529 = scalar_lea.vmem %s192, 672
      %v4530 = vld [vmem:[%s4529] sm:$0xff]
      %v4531 = vld [vmem:[%s4529 + $0x8] sm:$0xf]
      %v4533 = vsel %vm268, %v4531, 0
      %4535 = vmatprep.subr.mxu0 0.0
      %4536 = vmatpush1.msra.mxu0 %v4530
      %4537 = vmatprep.subr.mxu0 0.0
      %4538 = vmatpush1.msra.mxu0 %v4533
      %4539 = vmatprep.subr.mxu0 0.0
      %4540 = vmatpush1.msra.mxu0 0.0
      %4541 = vmatprep.subr.mxu0 0.0
      %4542 = vmatpush1.msra.mxu0 0.0
      %4543 = vmatprep.subr.mxu0 0.0
      %4544 = vmatpush1.msra.mxu0 0.0
      %4545 = vmatprep.subr.mxu0 0.0
      %4546 = vmatpush1.msra.mxu0 0.0
      %4547 = vmatprep.subr.mxu0 0.0
      %4548 = vmatpush1.msra.mxu0 0.0
      %4549 = vmatprep.subr.mxu0 0.0
      %4550 = vmatpush1.msra.mxu0 0.0
      %4551 = vmatprep.subr.mxu0 0.0
      %4552 = vmatpush1.msra.mxu0 0.0
      %4553 = vmatprep.subr.mxu0 0.0
      %4554 = vmatpush1.msra.mxu0 0.0
      %4555 = vmatprep.subr.mxu0 0.0
      %4556 = vmatpush1.msra.mxu0 0.0
      %4557 = vmatprep.subr.mxu0 0.0
      %4558 = vmatpush1.msra.mxu0 0.0
      %4559 = vmatprep.subr.mxu0 0.0
      %4560 = vmatpush1.msra.mxu0 0.0
      %4561 = vmatprep.subr.mxu0 0.0
      %4562 = vmatpush1.msra.mxu0 0.0
      %4563 = vmatprep.subr.mxu0 0.0
      %4564 = vmatpush1.msra.mxu0 0.0
      %4565 = vmatprep.subr.mxu0 0.0
      %4566 = vmatpush1.msra.mxu0 0.0
      %4567 = vmatprep.subr.mxu0 0.0
      %4568 = vmatpush1.msra.mxu0 0.0
      %4569 = vmatprep.subr.mxu0 0.0
      %4570 = vmatpush1.msra.mxu0 0.0
      %4571 = vmatprep.subr.mxu0 0.0
      %4572 = vmatpush1.msra.mxu0 0.0
      %4573 = vmatprep.subr.mxu0 0.0
      %4574 = vmatpush1.msra.mxu0 0.0
      %4575 = vmatprep.subr.mxu0 0.0
      %4576 = vmatpush1.msra.mxu0 0.0
      %4577 = vmatprep.subr.mxu0 0.0
      %4578 = vmatpush1.msra.mxu0 0.0
      %4579 = vmatprep.subr.mxu0 0.0
      %4580 = vmatpush1.msra.mxu0 0.0
      %4581 = vmatprep.subr.mxu0 0.0
      %4582 = vmatpush1.msra.mxu0 0.0
      %4583 = vmatprep.subr.mxu0 0.0
      %4584 = vmatpush1.msra.mxu0 0.0
      %4585 = vmatprep.subr.mxu0 0.0
      %4586 = vmatpush1.msra.mxu0 0.0
      %4587 = vmatprep.subr.mxu0 0.0
      %4588 = vmatpush1.msra.mxu0 0.0
      %4589 = vmatprep.subr.mxu0 0.0
      %4590 = vmatpush1.msra.mxu0 0.0
      %4591 = vmatprep.subr.mxu0 0.0
      %4592 = vmatpush1.msra.mxu0 0.0
      %4593 = vmatprep.subr.mxu0 0.0
      %4594 = vmatpush1.msra.mxu0 0.0
      %4595 = vmatprep.subr.mxu0 0.0
      %4596 = vmatpush1.msra.mxu0 0.0
      %4597 = vmatprep.subr.mxu0 0.0
      %4598 = vmatpush1.msra.mxu0 0.0
      %4599 = vmatprep.mubr.f32.mxu0 0.0
      %4600 = vmatmul.mubr.f32.gmra.mrb[0].mxu0 %v263
      %v4601 = vpop.f32.mrb[0].mxu0
      %v4602 = vadd.f32 %v213, %v4601
      %v4603 = vpop.f32.mrb[0].mxu0
      %4604 = vmatprep.mubr.f32.mxu0 0.0
      %4605 = vmatmul.mubr.f32.gmra.mrb[0].mxu0 %v266
      %v4606 = vpop.f32.mrb[0].mxu0
      %v4607 = vadd.f32 %v218, %v4606
      %v4608 = vpop.f32.mrb[0].mxu0
      %4609 = vdwg.mxu0
      %v4610 = vmax.f32 %v4602, 0.0
      %v4611 = vmax.f32 %v4607, 0.0
      %s4612 = scalar_lea.vmem %s192, 688
      %v4613 = vld [vmem:[%s4612] sm:$0xff]
      %v4614 = vld [vmem:[%s4612 + $0x8] sm:$0xf]
      %v4616 = vsel %vm268, %v4614, 0
      %4618 = vmatprep.subr.mxu0 0.0
      %4619 = vmatpush1.msra.mxu0 %v4613
      %4620 = vmatprep.subr.mxu0 0.0
      %4621 = vmatpush1.msra.mxu0 %v4616
      %4622 = vmatprep.subr.mxu0 0.0
      %4623 = vmatpush1.msra.mxu0 0.0
      %4624 = vmatprep.subr.mxu0 0.0
      %4625 = vmatpush1.msra.mxu0 0.0
      %4626 = vmatprep.subr.mxu0 0.0
      %4627 = vmatpush1.msra.mxu0 0.0
      %4628 = vmatprep.subr.mxu0 0.0
      %4629 = vmatpush1.msra.mxu0 0.0
      %4630 = vmatprep.subr.mxu0 0.0
      %4631 = vmatpush1.msra.mxu0 0.0
      %4632 = vmatprep.subr.mxu0 0.0
      %4633 = vmatpush1.msra.mxu0 0.0
      %4634 = vmatprep.subr.mxu0 0.0
      %4635 = vmatpush1.msra.mxu0 0.0
      %4636 = vmatprep.subr.mxu0 0.0
      %4637 = vmatpush1.msra.mxu0 0.0
      %4638 = vmatprep.subr.mxu0 0.0
      %4639 = vmatpush1.msra.mxu0 0.0
      %4640 = vmatprep.subr.mxu0 0.0
      %4641 = vmatpush1.msra.mxu0 0.0
      %4642 = vmatprep.subr.mxu0 0.0
      %4643 = vmatpush1.msra.mxu0 0.0
      %4644 = vmatprep.subr.mxu0 0.0
      %4645 = vmatpush1.msra.mxu0 0.0
      %4646 = vmatprep.subr.mxu0 0.0
      %4647 = vmatpush1.msra.mxu0 0.0
      %4648 = vmatprep.subr.mxu0 0.0
      %4649 = vmatpush1.msra.mxu0 0.0
      %4650 = vmatprep.subr.mxu0 0.0
      %4651 = vmatpush1.msra.mxu0 0.0
      %4652 = vmatprep.subr.mxu0 0.0
      %4653 = vmatpush1.msra.mxu0 0.0
      %4654 = vmatprep.subr.mxu0 0.0
      %4655 = vmatpush1.msra.mxu0 0.0
      %4656 = vmatprep.subr.mxu0 0.0
      %4657 = vmatpush1.msra.mxu0 0.0
      %4658 = vmatprep.subr.mxu0 0.0
      %4659 = vmatpush1.msra.mxu0 0.0
      %4660 = vmatprep.subr.mxu0 0.0
      %4661 = vmatpush1.msra.mxu0 0.0
      %4662 = vmatprep.subr.mxu0 0.0
      %4663 = vmatpush1.msra.mxu0 0.0
      %4664 = vmatprep.subr.mxu0 0.0
      %4665 = vmatpush1.msra.mxu0 0.0
      %4666 = vmatprep.subr.mxu0 0.0
      %4667 = vmatpush1.msra.mxu0 0.0
      %4668 = vmatprep.subr.mxu0 0.0
      %4669 = vmatpush1.msra.mxu0 0.0
      %4670 = vmatprep.subr.mxu0 0.0
      %4671 = vmatpush1.msra.mxu0 0.0
      %4672 = vmatprep.subr.mxu0 0.0
      %4673 = vmatpush1.msra.mxu0 0.0
      %4674 = vmatprep.subr.mxu0 0.0
      %4675 = vmatpush1.msra.mxu0 0.0
      %4676 = vmatprep.subr.mxu0 0.0
      %4677 = vmatpush1.msra.mxu0 0.0
      %4678 = vmatprep.subr.mxu0 0.0
      %4679 = vmatpush1.msra.mxu0 0.0
      %4680 = vmatprep.subr.mxu0 0.0
      %4681 = vmatpush1.msra.mxu0 0.0
      %4682 = vmatprep.mubr.f32.mxu0 0.0
      %4683 = vmatmul.mubr.f32.gmra.mrb[0].mxu0 %v263
      %v4684 = vpop.f32.mrb[0].mxu0
      %v4685 = vadd.f32 %v213, %v4684
      %v4686 = vpop.f32.mrb[0].mxu0
      %4687 = vmatprep.mubr.f32.mxu0 0.0
      %4688 = vmatmul.mubr.f32.gmra.mrb[0].mxu0 %v266
      %v4689 = vpop.f32.mrb[0].mxu0
      %v4690 = vadd.f32 %v218, %v4689
      %v4691 = vpop.f32.mrb[0].mxu0
      %4692 = vdwg.mxu0
      %v4693 = vmax.f32 %v4685, 0.0
      %v4694 = vmax.f32 %v4690, 0.0
      %4695 = vmatprep.subr.mxu0 0.0
      %4696 = vmatpush1.msra.mxu0 %v4444
      %4697 = vmatprep.subr.mxu0 0.0
      %4698 = vmatpush1.msra.mxu0 %v4445
      %4699 = vmatprep.subr.mxu0 0.0
      %4700 = vmatpush1.msra.mxu0 %v4527
      %4701 = vmatprep.subr.mxu0 0.0
      %4702 = vmatpush1.msra.mxu0 %v4528
      %4703 = vmatprep.subr.mxu0 0.0
      %4704 = vmatpush1.msra.mxu0 %v4610
      %4705 = vmatprep.subr.mxu0 0.0
      %4706 = vmatpush1.msra.mxu0 %v4611
      %4707 = vmatprep.subr.mxu0 0.0
      %4708 = vmatpush1.msra.mxu0 %v4693
      %4709 = vmatprep.subr.mxu0 0.0
      %4710 = vmatpush1.msra.mxu0 %v4694
      %4711 = vmatprep.subr.mxu0 0.0
      %4712 = vmatpush1.msra.mxu0 0.0
      %4713 = vmatprep.subr.mxu0 0.0
      %4714 = vmatpush1.msra.mxu0 0.0
      %4715 = vmatprep.subr.mxu0 0.0
      %4716 = vmatpush1.msra.mxu0 0.0
      %4717 = vmatprep.subr.mxu0 0.0
      %4718 = vmatpush1.msra.mxu0 0.0
      %4719 = vmatprep.subr.mxu0 0.0
      %4720 = vmatpush1.msra.mxu0 0.0
      %4721 = vmatprep.subr.mxu0 0.0
      %4722 = vmatpush1.msra.mxu0 0.0
      %4723 = vmatprep.subr.mxu0 0.0
      %4724 = vmatpush1.msra.mxu0 0.0
      %4725 = vmatprep.subr.mxu0 0.0
      %4726 = vmatpush1.msra.mxu0 0.0
      %4727 = vmatprep.subr.mxu0 0.0
      %4728 = vmatpush1.msra.mxu0 0.0
      %4729 = vmatprep.subr.mxu0 0.0
      %4730 = vmatpush1.msra.mxu0 0.0
      %4731 = vmatprep.subr.mxu0 0.0
      %4732 = vmatpush1.msra.mxu0 0.0
      %4733 = vmatprep.subr.mxu0 0.0
      %4734 = vmatpush1.msra.mxu0 0.0
      %4735 = vmatprep.subr.mxu0 0.0
      %4736 = vmatpush1.msra.mxu0 0.0
      %4737 = vmatprep.subr.mxu0 0.0
      %4738 = vmatpush1.msra.mxu0 0.0
      %4739 = vmatprep.subr.mxu0 0.0
      %4740 = vmatpush1.msra.mxu0 0.0
      %4741 = vmatprep.subr.mxu0 0.0
      %4742 = vmatpush1.msra.mxu0 0.0
      %4743 = vmatprep.subr.mxu0 0.0
      %4744 = vmatpush1.msra.mxu0 0.0
      %4745 = vmatprep.subr.mxu0 0.0
      %4746 = vmatpush1.msra.mxu0 0.0
      %4747 = vmatprep.subr.mxu0 0.0
      %4748 = vmatpush1.msra.mxu0 0.0
      %4749 = vmatprep.subr.mxu0 0.0
      %4750 = vmatpush1.msra.mxu0 0.0
      %4751 = vmatprep.subr.mxu0 0.0
      %4752 = vmatpush1.msra.mxu0 0.0
      %4753 = vmatprep.subr.mxu0 0.0
      %4754 = vmatpush1.msra.mxu0 0.0
      %4755 = vmatprep.subr.mxu0 0.0
      %4756 = vmatpush1.msra.mxu0 0.0
      %4757 = vmatprep.subr.mxu0 0.0
      %4758 = vmatpush1.msra.mxu0 0.0
      %4759 = vmatprep.mubr.f32.mxu0 0.0
      %4760 = vmatmul.mubr.f32.gmra.mrb[0].mxu0 %v600
      %v4761 = vpop.f32.mrb[0].mxu0
      %v4762 = vadd.f32 %v226, %v4761
      %v4763 = vpop.f32.mrb[0].mxu0
      %4764 = vmatprep.mubr.f32.mxu0 0.0
      %4765 = vmatmul.mubr.f32.gmra.mrb[0].mxu0 %v603
      %v4766 = vpop.f32.mrb[0].mxu0
      %v4767 = vadd.f32 %v231, %v4766
      %v4768 = vpop.f32.mrb[0].mxu0
      %4769 = vdwg.mxu0
      %v4770 = vmax.f32 %v4762, 0.0
      %v4771 = vmax.f32 %v4767, 0.0
      %s4772 = scalar_lea.vmem %s192, 704
      %v4773 = vld [vmem:[%s4772] sm:$0xff]
      %v4774 = vld [vmem:[%s4772 + $0x8] sm:$0xf]
      %v4776 = vsel %vm268, %v4774, 0
      %4778 = vmatprep.subr.mxu0 0.0
      %4779 = vmatpush1.msra.mxu0 %v4773
      %4780 = vmatprep.subr.mxu0 0.0
      %4781 = vmatpush1.msra.mxu0 %v4776
      %4782 = vmatprep.subr.mxu0 0.0
      %4783 = vmatpush1.msra.mxu0 0.0
      %4784 = vmatprep.subr.mxu0 0.0
      %4785 = vmatpush1.msra.mxu0 0.0
      %4786 = vmatprep.subr.mxu0 0.0
      %4787 = vmatpush1.msra.mxu0 0.0
      %4788 = vmatprep.subr.mxu0 0.0
      %4789 = vmatpush1.msra.mxu0 0.0
      %4790 = vmatprep.subr.mxu0 0.0
      %4791 = vmatpush1.msra.mxu0 0.0
      %4792 = vmatprep.subr.mxu0 0.0
      %4793 = vmatpush1.msra.mxu0 0.0
      %4794 = vmatprep.subr.mxu0 0.0
      %4795 = vmatpush1.msra.mxu0 0.0
      %4796 = vmatprep.subr.mxu0 0.0
      %4797 = vmatpush1.msra.mxu0 0.0
      %4798 = vmatprep.subr.mxu0 0.0
      %4799 = vmatpush1.msra.mxu0 0.0
      %4800 = vmatprep.subr.mxu0 0.0
      %4801 = vmatpush1.msra.mxu0 0.0
      %4802 = vmatprep.subr.mxu0 0.0
      %4803 = vmatpush1.msra.mxu0 0.0
      %4804 = vmatprep.subr.mxu0 0.0
      %4805 = vmatpush1.msra.mxu0 0.0
      %4806 = vmatprep.subr.mxu0 0.0
      %4807 = vmatpush1.msra.mxu0 0.0
      %4808 = vmatprep.subr.mxu0 0.0
      %4809 = vmatpush1.msra.mxu0 0.0
      %4810 = vmatprep.subr.mxu0 0.0
      %4811 = vmatpush1.msra.mxu0 0.0
      %4812 = vmatprep.subr.mxu0 0.0
      %4813 = vmatpush1.msra.mxu0 0.0
      %4814 = vmatprep.subr.mxu0 0.0
      %4815 = vmatpush1.msra.mxu0 0.0
      %4816 = vmatprep.subr.mxu0 0.0
      %4817 = vmatpush1.msra.mxu0 0.0
      %4818 = vmatprep.subr.mxu0 0.0
      %4819 = vmatpush1.msra.mxu0 0.0
      %4820 = vmatprep.subr.mxu0 0.0
      %4821 = vmatpush1.msra.mxu0 0.0
      %4822 = vmatprep.subr.mxu0 0.0
      %4823 = vmatpush1.msra.mxu0 0.0
      %4824 = vmatprep.subr.mxu0 0.0
      %4825 = vmatpush1.msra.mxu0 0.0
      %4826 = vmatprep.subr.mxu0 0.0
      %4827 = vmatpush1.msra.mxu0 0.0
      %4828 = vmatprep.subr.mxu0 0.0
      %4829 = vmatpush1.msra.mxu0 0.0
      %4830 = vmatprep.subr.mxu0 0.0
      %4831 = vmatpush1.msra.mxu0 0.0
      %4832 = vmatprep.subr.mxu0 0.0
      %4833 = vmatpush1.msra.mxu0 0.0
      %4834 = vmatprep.subr.mxu0 0.0
      %4835 = vmatpush1.msra.mxu0 0.0
      %4836 = vmatprep.subr.mxu0 0.0
      %4837 = vmatpush1.msra.mxu0 0.0
      %4838 = vmatprep.subr.mxu0 0.0
      %4839 = vmatpush1.msra.mxu0 0.0
      %4840 = vmatprep.subr.mxu0 0.0
      %4841 = vmatpush1.msra.mxu0 0.0
      %4842 = vmatprep.mubr.f32.mxu0 0.0
      %4843 = vmatmul.mubr.f32.gmra.mrb[0].mxu0 %v263
      %v4844 = vpop.f32.mrb[0].mxu0
      %v4845 = vadd.f32 %v213, %v4844
      %v4846 = vpop.f32.mrb[0].mxu0
      %4847 = vmatprep.mubr.f32.mxu0 0.0
      %4848 = vmatmul.mubr.f32.gmra.mrb[0].mxu0 %v266
      %v4849 = vpop.f32.mrb[0].mxu0
      %v4850 = vadd.f32 %v218, %v4849
      %v4851 = vpop.f32.mrb[0].mxu0
      %4852 = vdwg.mxu0
      %v4853 = vmax.f32 %v4845, 0.0
      %v4854 = vmax.f32 %v4850, 0.0
      %s4855 = scalar_lea.vmem %s192, 720
      %v4856 = vld [vmem:[%s4855] sm:$0xff]
      %v4857 = vld [vmem:[%s4855 + $0x8] sm:$0xf]
      %v4859 = vsel %vm268, %v4857, 0
      %4861 = vmatprep.subr.mxu0 0.0
      %4862 = vmatpush1.msra.mxu0 %v4856
      %4863 = vmatprep.subr.mxu0 0.0
      %4864 = vmatpush1.msra.mxu0 %v4859
      %4865 = vmatprep.subr.mxu0 0.0
      %4866 = vmatpush1.msra.mxu0 0.0
      %4867 = vmatprep.subr.mxu0 0.0
      %4868 = vmatpush1.msra.mxu0 0.0
      %4869 = vmatprep.subr.mxu0 0.0
      %4870 = vmatpush1.msra.mxu0 0.0
      %4871 = vmatprep.subr.mxu0 0.0
      %4872 = vmatpush1.msra.mxu0 0.0
      %4873 = vmatprep.subr.mxu0 0.0
      %4874 = vmatpush1.msra.mxu0 0.0
      %4875 = vmatprep.subr.mxu0 0.0
      %4876 = vmatpush1.msra.mxu0 0.0
      %4877 = vmatprep.subr.mxu0 0.0
      %4878 = vmatpush1.msra.mxu0 0.0
      %4879 = vmatprep.subr.mxu0 0.0
      %4880 = vmatpush1.msra.mxu0 0.0
      %4881 = vmatprep.subr.mxu0 0.0
      %4882 = vmatpush1.msra.mxu0 0.0
      %4883 = vmatprep.subr.mxu0 0.0
      %4884 = vmatpush1.msra.mxu0 0.0
      %4885 = vmatprep.subr.mxu0 0.0
      %4886 = vmatpush1.msra.mxu0 0.0
      %4887 = vmatprep.subr.mxu0 0.0
      %4888 = vmatpush1.msra.mxu0 0.0
      %4889 = vmatprep.subr.mxu0 0.0
      %4890 = vmatpush1.msra.mxu0 0.0
      %4891 = vmatprep.subr.mxu0 0.0
      %4892 = vmatpush1.msra.mxu0 0.0
      %4893 = vmatprep.subr.mxu0 0.0
      %4894 = vmatpush1.msra.mxu0 0.0
      %4895 = vmatprep.subr.mxu0 0.0
      %4896 = vmatpush1.msra.mxu0 0.0
      %4897 = vmatprep.subr.mxu0 0.0
      %4898 = vmatpush1.msra.mxu0 0.0
      %4899 = vmatprep.subr.mxu0 0.0
      %4900 = vmatpush1.msra.mxu0 0.0
      %4901 = vmatprep.subr.mxu0 0.0
      %4902 = vmatpush1.msra.mxu0 0.0
      %4903 = vmatprep.subr.mxu0 0.0
      %4904 = vmatpush1.msra.mxu0 0.0
      %4905 = vmatprep.subr.mxu0 0.0
      %4906 = vmatpush1.msra.mxu0 0.0
      %4907 = vmatprep.subr.mxu0 0.0
      %4908 = vmatpush1.msra.mxu0 0.0
      %4909 = vmatprep.subr.mxu0 0.0
      %4910 = vmatpush1.msra.mxu0 0.0
      %4911 = vmatprep.subr.mxu0 0.0
      %4912 = vmatpush1.msra.mxu0 0.0
      %4913 = vmatprep.subr.mxu0 0.0
      %4914 = vmatpush1.msra.mxu0 0.0
      %4915 = vmatprep.subr.mxu0 0.0
      %4916 = vmatpush1.msra.mxu0 0.0
      %4917 = vmatprep.subr.mxu0 0.0
      %4918 = vmatpush1.msra.mxu0 0.0
      %4919 = vmatprep.subr.mxu0 0.0
      %4920 = vmatpush1.msra.mxu0 0.0
      %4921 = vmatprep.subr.mxu0 0.0
      %4922 = vmatpush1.msra.mxu0 0.0
      %4923 = vmatprep.subr.mxu0 0.0
      %4924 = vmatpush1.msra.mxu0 0.0
      %4925 = vmatprep.mubr.f32.mxu0 0.0
      %4926 = vmatmul.mubr.f32.gmra.mrb[0].mxu0 %v263
      %v4927 = vpop.f32.mrb[0].mxu0
      %v4928 = vadd.f32 %v213, %v4927
      %v4929 = vpop.f32.mrb[0].mxu0
      %4930 = vmatprep.mubr.f32.mxu0 0.0
      %4931 = vmatmul.mubr.f32.gmra.mrb[0].mxu0 %v266
      %v4932 = vpop.f32.mrb[0].mxu0
      %v4933 = vadd.f32 %v218, %v4932
      %v4934 = vpop.f32.mrb[0].mxu0
      %4935 = vdwg.mxu0
      %v4936 = vmax.f32 %v4928, 0.0
      %v4937 = vmax.f32 %v4933, 0.0
      %s4938 = scalar_lea.vmem %s192, 736
      %v4939 = vld [vmem:[%s4938] sm:$0xff]
      %v4940 = vld [vmem:[%s4938 + $0x8] sm:$0xf]
      %v4942 = vsel %vm268, %v4940, 0
      %4944 = vmatprep.subr.mxu0 0.0
      %4945 = vmatpush1.msra.mxu0 %v4939
      %4946 = vmatprep.subr.mxu0 0.0
      %4947 = vmatpush1.msra.mxu0 %v4942
      %4948 = vmatprep.subr.mxu0 0.0
      %4949 = vmatpush1.msra.mxu0 0.0
      %4950 = vmatprep.subr.mxu0 0.0
      %4951 = vmatpush1.msra.mxu0 0.0
      %4952 = vmatprep.subr.mxu0 0.0
      %4953 = vmatpush1.msra.mxu0 0.0
      %4954 = vmatprep.subr.mxu0 0.0
      %4955 = vmatpush1.msra.mxu0 0.0
      %4956 = vmatprep.subr.mxu0 0.0
      %4957 = vmatpush1.msra.mxu0 0.0
      %4958 = vmatprep.subr.mxu0 0.0
      %4959 = vmatpush1.msra.mxu0 0.0
      %4960 = vmatprep.subr.mxu0 0.0
      %4961 = vmatpush1.msra.mxu0 0.0
      %4962 = vmatprep.subr.mxu0 0.0
      %4963 = vmatpush1.msra.mxu0 0.0
      %4964 = vmatprep.subr.mxu0 0.0
      %4965 = vmatpush1.msra.mxu0 0.0
      %4966 = vmatprep.subr.mxu0 0.0
      %4967 = vmatpush1.msra.mxu0 0.0
      %4968 = vmatprep.subr.mxu0 0.0
      %4969 = vmatpush1.msra.mxu0 0.0
      %4970 = vmatprep.subr.mxu0 0.0
      %4971 = vmatpush1.msra.mxu0 0.0
      %4972 = vmatprep.subr.mxu0 0.0
      %4973 = vmatpush1.msra.mxu0 0.0
      %4974 = vmatprep.subr.mxu0 0.0
      %4975 = vmatpush1.msra.mxu0 0.0
      %4976 = vmatprep.subr.mxu0 0.0
      %4977 = vmatpush1.msra.mxu0 0.0
      %4978 = vmatprep.subr.mxu0 0.0
      %4979 = vmatpush1.msra.mxu0 0.0
      %4980 = vmatprep.subr.mxu0 0.0
      %4981 = vmatpush1.msra.mxu0 0.0
      %4982 = vmatprep.subr.mxu0 0.0
      %4983 = vmatpush1.msra.mxu0 0.0
      %4984 = vmatprep.subr.mxu0 0.0
      %4985 = vmatpush1.msra.mxu0 0.0
      %4986 = vmatprep.subr.mxu0 0.0
      %4987 = vmatpush1.msra.mxu0 0.0
      %4988 = vmatprep.subr.mxu0 0.0
      %4989 = vmatpush1.msra.mxu0 0.0
      %4990 = vmatprep.subr.mxu0 0.0
      %4991 = vmatpush1.msra.mxu0 0.0
      %4992 = vmatprep.subr.mxu0 0.0
      %4993 = vmatpush1.msra.mxu0 0.0
      %4994 = vmatprep.subr.mxu0 0.0
      %4995 = vmatpush1.msra.mxu0 0.0
      %4996 = vmatprep.subr.mxu0 0.0
      %4997 = vmatpush1.msra.mxu0 0.0
      %4998 = vmatprep.subr.mxu0 0.0
      %4999 = vmatpush1.msra.mxu0 0.0
      %5000 = vmatprep.subr.mxu0 0.0
      %5001 = vmatpush1.msra.mxu0 0.0
      %5002 = vmatprep.subr.mxu0 0.0
      %5003 = vmatpush1.msra.mxu0 0.0
      %5004 = vmatprep.subr.mxu0 0.0
      %5005 = vmatpush1.msra.mxu0 0.0
      %5006 = vmatprep.subr.mxu0 0.0
      %5007 = vmatpush1.msra.mxu0 0.0
      %5008 = vmatprep.mubr.f32.mxu0 0.0
      %5009 = vmatmul.mubr.f32.gmra.mrb[0].mxu0 %v263
      %v5010 = vpop.f32.mrb[0].mxu0
      %v5011 = vadd.f32 %v213, %v5010
      %v5012 = vpop.f32.mrb[0].mxu0
      %5013 = vmatprep.mubr.f32.mxu0 0.0
      %5014 = vmatmul.mubr.f32.gmra.mrb[0].mxu0 %v266
      %v5015 = vpop.f32.mrb[0].mxu0
      %v5016 = vadd.f32 %v218, %v5015
      %v5017 = vpop.f32.mrb[0].mxu0
      %5018 = vdwg.mxu0
      %v5019 = vmax.f32 %v5011, 0.0
      %v5020 = vmax.f32 %v5016, 0.0
      %s5021 = scalar_lea.vmem %s192, 752
      %v5022 = vld [vmem:[%s5021] sm:$0xff]
      %v5023 = vld [vmem:[%s5021 + $0x8] sm:$0xf]
      %v5025 = vsel %vm268, %v5023, 0
      %5027 = vmatprep.subr.mxu0 0.0
      %5028 = vmatpush1.msra.mxu0 %v5022
      %5029 = vmatprep.subr.mxu0 0.0
      %5030 = vmatpush1.msra.mxu0 %v5025
      %5031 = vmatprep.subr.mxu0 0.0
      %5032 = vmatpush1.msra.mxu0 0.0
      %5033 = vmatprep.subr.mxu0 0.0
      %5034 = vmatpush1.msra.mxu0 0.0
      %5035 = vmatprep.subr.mxu0 0.0
      %5036 = vmatpush1.msra.mxu0 0.0
      %5037 = vmatprep.subr.mxu0 0.0
      %5038 = vmatpush1.msra.mxu0 0.0
      %5039 = vmatprep.subr.mxu0 0.0
      %5040 = vmatpush1.msra.mxu0 0.0
      %5041 = vmatprep.subr.mxu0 0.0
      %5042 = vmatpush1.msra.mxu0 0.0
      %5043 = vmatprep.subr.mxu0 0.0
      %5044 = vmatpush1.msra.mxu0 0.0
      %5045 = vmatprep.subr.mxu0 0.0
      %5046 = vmatpush1.msra.mxu0 0.0
      %5047 = vmatprep.subr.mxu0 0.0
      %5048 = vmatpush1.msra.mxu0 0.0
      %5049 = vmatprep.subr.mxu0 0.0
      %5050 = vmatpush1.msra.mxu0 0.0
      %5051 = vmatprep.subr.mxu0 0.0
      %5052 = vmatpush1.msra.mxu0 0.0
      %5053 = vmatprep.subr.mxu0 0.0
      %5054 = vmatpush1.msra.mxu0 0.0
      %5055 = vmatprep.subr.mxu0 0.0
      %5056 = vmatpush1.msra.mxu0 0.0
      %5057 = vmatprep.subr.mxu0 0.0
      %5058 = vmatpush1.msra.mxu0 0.0
      %5059 = vmatprep.subr.mxu0 0.0
      %5060 = vmatpush1.msra.mxu0 0.0
      %5061 = vmatprep.subr.mxu0 0.0
      %5062 = vmatpush1.msra.mxu0 0.0
      %5063 = vmatprep.subr.mxu0 0.0
      %5064 = vmatpush1.msra.mxu0 0.0
      %5065 = vmatprep.subr.mxu0 0.0
      %5066 = vmatpush1.msra.mxu0 0.0
      %5067 = vmatprep.subr.mxu0 0.0
      %5068 = vmatpush1.msra.mxu0 0.0
      %5069 = vmatprep.subr.mxu0 0.0
      %5070 = vmatpush1.msra.mxu0 0.0
      %5071 = vmatprep.subr.mxu0 0.0
      %5072 = vmatpush1.msra.mxu0 0.0
      %5073 = vmatprep.subr.mxu0 0.0
      %5074 = vmatpush1.msra.mxu0 0.0
      %5075 = vmatprep.subr.mxu0 0.0
      %5076 = vmatpush1.msra.mxu0 0.0
      %5077 = vmatprep.subr.mxu0 0.0
      %5078 = vmatpush1.msra.mxu0 0.0
      %5079 = vmatprep.subr.mxu0 0.0
      %5080 = vmatpush1.msra.mxu0 0.0
      %5081 = vmatprep.subr.mxu0 0.0
      %5082 = vmatpush1.msra.mxu0 0.0
      %5083 = vmatprep.subr.mxu0 0.0
      %5084 = vmatpush1.msra.mxu0 0.0
      %5085 = vmatprep.subr.mxu0 0.0
      %5086 = vmatpush1.msra.mxu0 0.0
      %5087 = vmatprep.subr.mxu0 0.0
      %5088 = vmatpush1.msra.mxu0 0.0
      %5089 = vmatprep.subr.mxu0 0.0
      %5090 = vmatpush1.msra.mxu0 0.0
      %5091 = vmatprep.mubr.f32.mxu0 0.0
      %5092 = vmatmul.mubr.f32.gmra.mrb[0].mxu0 %v263
      %v5093 = vpop.f32.mrb[0].mxu0
      %v5094 = vadd.f32 %v213, %v5093
      %v5095 = vpop.f32.mrb[0].mxu0
      %5096 = vmatprep.mubr.f32.mxu0 0.0
      %5097 = vmatmul.mubr.f32.gmra.mrb[0].mxu0 %v266
      %v5098 = vpop.f32.mrb[0].mxu0
      %v5099 = vadd.f32 %v218, %v5098
      %v5100 = vpop.f32.mrb[0].mxu0
      %5101 = vdwg.mxu0
      %v5102 = vmax.f32 %v5094, 0.0
      %v5103 = vmax.f32 %v5099, 0.0
      %5104 = vmatprep.subr.mxu0 0.0
      %5105 = vmatpush1.msra.mxu0 %v4853
      %5106 = vmatprep.subr.mxu0 0.0
      %5107 = vmatpush1.msra.mxu0 %v4854
      %5108 = vmatprep.subr.mxu0 0.0
      %5109 = vmatpush1.msra.mxu0 %v4936
      %5110 = vmatprep.subr.mxu0 0.0
      %5111 = vmatpush1.msra.mxu0 %v4937
      %5112 = vmatprep.subr.mxu0 0.0
      %5113 = vmatpush1.msra.mxu0 %v5019
      %5114 = vmatprep.subr.mxu0 0.0
      %5115 = vmatpush1.msra.mxu0 %v5020
      %5116 = vmatprep.subr.mxu0 0.0
      %5117 = vmatpush1.msra.mxu0 %v5102
      %5118 = vmatprep.subr.mxu0 0.0
      %5119 = vmatpush1.msra.mxu0 %v5103
      %5120 = vmatprep.subr.mxu0 0.0
      %5121 = vmatpush1.msra.mxu0 0.0
      %5122 = vmatprep.subr.mxu0 0.0
      %5123 = vmatpush1.msra.mxu0 0.0
      %5124 = vmatprep.subr.mxu0 0.0
      %5125 = vmatpush1.msra.mxu0 0.0
      %5126 = vmatprep.subr.mxu0 0.0
      %5127 = vmatpush1.msra.mxu0 0.0
      %5128 = vmatprep.subr.mxu0 0.0
      %5129 = vmatpush1.msra.mxu0 0.0
      %5130 = vmatprep.subr.mxu0 0.0
      %5131 = vmatpush1.msra.mxu0 0.0
      %5132 = vmatprep.subr.mxu0 0.0
      %5133 = vmatpush1.msra.mxu0 0.0
      %5134 = vmatprep.subr.mxu0 0.0
      %5135 = vmatpush1.msra.mxu0 0.0
      %5136 = vmatprep.subr.mxu0 0.0
      %5137 = vmatpush1.msra.mxu0 0.0
      %5138 = vmatprep.subr.mxu0 0.0
      %5139 = vmatpush1.msra.mxu0 0.0
      %5140 = vmatprep.subr.mxu0 0.0
      %5141 = vmatpush1.msra.mxu0 0.0
      %5142 = vmatprep.subr.mxu0 0.0
      %5143 = vmatpush1.msra.mxu0 0.0
      %5144 = vmatprep.subr.mxu0 0.0
      %5145 = vmatpush1.msra.mxu0 0.0
      %5146 = vmatprep.subr.mxu0 0.0
      %5147 = vmatpush1.msra.mxu0 0.0
      %5148 = vmatprep.subr.mxu0 0.0
      %5149 = vmatpush1.msra.mxu0 0.0
      %5150 = vmatprep.subr.mxu0 0.0
      %5151 = vmatpush1.msra.mxu0 0.0
      %5152 = vmatprep.subr.mxu0 0.0
      %5153 = vmatpush1.msra.mxu0 0.0
      %5154 = vmatprep.subr.mxu0 0.0
      %5155 = vmatpush1.msra.mxu0 0.0
      %5156 = vmatprep.subr.mxu0 0.0
      %5157 = vmatpush1.msra.mxu0 0.0
      %5158 = vmatprep.subr.mxu0 0.0
      %5159 = vmatpush1.msra.mxu0 0.0
      %5160 = vmatprep.subr.mxu0 0.0
      %5161 = vmatpush1.msra.mxu0 0.0
      %5162 = vmatprep.subr.mxu0 0.0
      %5163 = vmatpush1.msra.mxu0 0.0
      %5164 = vmatprep.subr.mxu0 0.0
      %5165 = vmatpush1.msra.mxu0 0.0
      %5166 = vmatprep.subr.mxu0 0.0
      %5167 = vmatpush1.msra.mxu0 0.0
      %5168 = vmatprep.mubr.f32.mxu0 0.0
      %5169 = vmatmul.mubr.f32.gmra.mrb[0].mxu0 %v600
      %v5170 = vpop.f32.mrb[0].mxu0
      %v5171 = vadd.f32 %v226, %v5170
      %v5172 = vpop.f32.mrb[0].mxu0
      %5173 = vmatprep.mubr.f32.mxu0 0.0
      %5174 = vmatmul.mubr.f32.gmra.mrb[0].mxu0 %v603
      %v5175 = vpop.f32.mrb[0].mxu0
      %v5176 = vadd.f32 %v231, %v5175
      %v5177 = vpop.f32.mrb[0].mxu0
      %5178 = vdwg.mxu0
      %v5179 = vmax.f32 %v5171, 0.0
      %v5180 = vmax.f32 %v5176, 0.0
      %s5181 = scalar_lea.vmem %s192, 768
      %v5182 = vld [vmem:[%s5181] sm:$0xff]
      %v5183 = vld [vmem:[%s5181 + $0x8] sm:$0xf]
      %v5185 = vsel %vm268, %v5183, 0
      %5187 = vmatprep.subr.mxu0 0.0
      %5188 = vmatpush1.msra.mxu0 %v5182
      %5189 = vmatprep.subr.mxu0 0.0
      %5190 = vmatpush1.msra.mxu0 %v5185
      %5191 = vmatprep.subr.mxu0 0.0
      %5192 = vmatpush1.msra.mxu0 0.0
      %5193 = vmatprep.subr.mxu0 0.0
      %5194 = vmatpush1.msra.mxu0 0.0
      %5195 = vmatprep.subr.mxu0 0.0
      %5196 = vmatpush1.msra.mxu0 0.0
      %5197 = vmatprep.subr.mxu0 0.0
      %5198 = vmatpush1.msra.mxu0 0.0
      %5199 = vmatprep.subr.mxu0 0.0
      %5200 = vmatpush1.msra.mxu0 0.0
      %5201 = vmatprep.subr.mxu0 0.0
      %5202 = vmatpush1.msra.mxu0 0.0
      %5203 = vmatprep.subr.mxu0 0.0
      %5204 = vmatpush1.msra.mxu0 0.0
      %5205 = vmatprep.subr.mxu0 0.0
      %5206 = vmatpush1.msra.mxu0 0.0
      %5207 = vmatprep.subr.mxu0 0.0
      %5208 = vmatpush1.msra.mxu0 0.0
      %5209 = vmatprep.subr.mxu0 0.0
      %5210 = vmatpush1.msra.mxu0 0.0
      %5211 = vmatprep.subr.mxu0 0.0
      %5212 = vmatpush1.msra.mxu0 0.0
      %5213 = vmatprep.subr.mxu0 0.0
      %5214 = vmatpush1.msra.mxu0 0.0
      %5215 = vmatprep.subr.mxu0 0.0
      %5216 = vmatpush1.msra.mxu0 0.0
      %5217 = vmatprep.subr.mxu0 0.0
      %5218 = vmatpush1.msra.mxu0 0.0
      %5219 = vmatprep.subr.mxu0 0.0
      %5220 = vmatpush1.msra.mxu0 0.0
      %5221 = vmatprep.subr.mxu0 0.0
      %5222 = vmatpush1.msra.mxu0 0.0
      %5223 = vmatprep.subr.mxu0 0.0
      %5224 = vmatpush1.msra.mxu0 0.0
      %5225 = vmatprep.subr.mxu0 0.0
      %5226 = vmatpush1.msra.mxu0 0.0
      %5227 = vmatprep.subr.mxu0 0.0
      %5228 = vmatpush1.msra.mxu0 0.0
      %5229 = vmatprep.subr.mxu0 0.0
      %5230 = vmatpush1.msra.mxu0 0.0
      %5231 = vmatprep.subr.mxu0 0.0
      %5232 = vmatpush1.msra.mxu0 0.0
      %5233 = vmatprep.subr.mxu0 0.0
      %5234 = vmatpush1.msra.mxu0 0.0
      %5235 = vmatprep.subr.mxu0 0.0
      %5236 = vmatpush1.msra.mxu0 0.0
      %5237 = vmatprep.subr.mxu0 0.0
      %5238 = vmatpush1.msra.mxu0 0.0
      %5239 = vmatprep.subr.mxu0 0.0
      %5240 = vmatpush1.msra.mxu0 0.0
      %5241 = vmatprep.subr.mxu0 0.0
      %5242 = vmatpush1.msra.mxu0 0.0
      %5243 = vmatprep.subr.mxu0 0.0
      %5244 = vmatpush1.msra.mxu0 0.0
      %5245 = vmatprep.subr.mxu0 0.0
      %5246 = vmatpush1.msra.mxu0 0.0
      %5247 = vmatprep.subr.mxu0 0.0
      %5248 = vmatpush1.msra.mxu0 0.0
      %5249 = vmatprep.subr.mxu0 0.0
      %5250 = vmatpush1.msra.mxu0 0.0
      %5251 = vmatprep.mubr.f32.mxu0 0.0
      %5252 = vmatmul.mubr.f32.gmra.mrb[0].mxu0 %v263
      %v5253 = vpop.f32.mrb[0].mxu0
      %v5254 = vadd.f32 %v213, %v5253
      %v5255 = vpop.f32.mrb[0].mxu0
      %5256 = vmatprep.mubr.f32.mxu0 0.0
      %5257 = vmatmul.mubr.f32.gmra.mrb[0].mxu0 %v266
      %v5258 = vpop.f32.mrb[0].mxu0
      %v5259 = vadd.f32 %v218, %v5258
      %v5260 = vpop.f32.mrb[0].mxu0
      %5261 = vdwg.mxu0
      %v5262 = vmax.f32 %v5254, 0.0
      %v5263 = vmax.f32 %v5259, 0.0
      %s5264 = scalar_lea.vmem %s192, 784
      %v5265 = vld [vmem:[%s5264] sm:$0xff]
      %v5266 = vld [vmem:[%s5264 + $0x8] sm:$0xf]
      %v5268 = vsel %vm268, %v5266, 0
      %5270 = vmatprep.subr.mxu0 0.0
      %5271 = vmatpush1.msra.mxu0 %v5265
      %5272 = vmatprep.subr.mxu0 0.0
      %5273 = vmatpush1.msra.mxu0 %v5268
      %5274 = vmatprep.subr.mxu0 0.0
      %5275 = vmatpush1.msra.mxu0 0.0
      %5276 = vmatprep.subr.mxu0 0.0
      %5277 = vmatpush1.msra.mxu0 0.0
      %5278 = vmatprep.subr.mxu0 0.0
      %5279 = vmatpush1.msra.mxu0 0.0
      %5280 = vmatprep.subr.mxu0 0.0
      %5281 = vmatpush1.msra.mxu0 0.0
      %5282 = vmatprep.subr.mxu0 0.0
      %5283 = vmatpush1.msra.mxu0 0.0
      %5284 = vmatprep.subr.mxu0 0.0
      %5285 = vmatpush1.msra.mxu0 0.0
      %5286 = vmatprep.subr.mxu0 0.0
      %5287 = vmatpush1.msra.mxu0 0.0
      %5288 = vmatprep.subr.mxu0 0.0
      %5289 = vmatpush1.msra.mxu0 0.0
      %5290 = vmatprep.subr.mxu0 0.0
      %5291 = vmatpush1.msra.mxu0 0.0
      %5292 = vmatprep.subr.mxu0 0.0
      %5293 = vmatpush1.msra.mxu0 0.0
      %5294 = vmatprep.subr.mxu0 0.0
      %5295 = vmatpush1.msra.mxu0 0.0
      %5296 = vmatprep.subr.mxu0 0.0
      %5297 = vmatpush1.msra.mxu0 0.0
      %5298 = vmatprep.subr.mxu0 0.0
      %5299 = vmatpush1.msra.mxu0 0.0
      %5300 = vmatprep.subr.mxu0 0.0
      %5301 = vmatpush1.msra.mxu0 0.0
      %5302 = vmatprep.subr.mxu0 0.0
      %5303 = vmatpush1.msra.mxu0 0.0
      %5304 = vmatprep.subr.mxu0 0.0
      %5305 = vmatpush1.msra.mxu0 0.0
      %5306 = vmatprep.subr.mxu0 0.0
      %5307 = vmatpush1.msra.mxu0 0.0
      %5308 = vmatprep.subr.mxu0 0.0
      %5309 = vmatpush1.msra.mxu0 0.0
      %5310 = vmatprep.subr.mxu0 0.0
      %5311 = vmatpush1.msra.mxu0 0.0
      %5312 = vmatprep.subr.mxu0 0.0
      %5313 = vmatpush1.msra.mxu0 0.0
      %5314 = vmatprep.subr.mxu0 0.0
      %5315 = vmatpush1.msra.mxu0 0.0
      %5316 = vmatprep.subr.mxu0 0.0
      %5317 = vmatpush1.msra.mxu0 0.0
      %5318 = vmatprep.subr.mxu0 0.0
      %5319 = vmatpush1.msra.mxu0 0.0
      %5320 = vmatprep.subr.mxu0 0.0
      %5321 = vmatpush1.msra.mxu0 0.0
      %5322 = vmatprep.subr.mxu0 0.0
      %5323 = vmatpush1.msra.mxu0 0.0
      %5324 = vmatprep.subr.mxu0 0.0
      %5325 = vmatpush1.msra.mxu0 0.0
      %5326 = vmatprep.subr.mxu0 0.0
      %5327 = vmatpush1.msra.mxu0 0.0
      %5328 = vmatprep.subr.mxu0 0.0
      %5329 = vmatpush1.msra.mxu0 0.0
      %5330 = vmatprep.subr.mxu0 0.0
      %5331 = vmatpush1.msra.mxu0 0.0
      %5332 = vmatprep.subr.mxu0 0.0
      %5333 = vmatpush1.msra.mxu0 0.0
      %5334 = vmatprep.mubr.f32.mxu0 0.0
      %5335 = vmatmul.mubr.f32.gmra.mrb[0].mxu0 %v263
      %v5336 = vpop.f32.mrb[0].mxu0
      %v5337 = vadd.f32 %v213, %v5336
      %v5338 = vpop.f32.mrb[0].mxu0
      %5339 = vmatprep.mubr.f32.mxu0 0.0
      %5340 = vmatmul.mubr.f32.gmra.mrb[0].mxu0 %v266
      %v5341 = vpop.f32.mrb[0].mxu0
      %v5342 = vadd.f32 %v218, %v5341
      %v5343 = vpop.f32.mrb[0].mxu0
      %5344 = vdwg.mxu0
      %v5345 = vmax.f32 %v5337, 0.0
      %v5346 = vmax.f32 %v5342, 0.0
      %s5347 = scalar_lea.vmem %s192, 800
      %v5348 = vld [vmem:[%s5347] sm:$0xff]
      %v5349 = vld [vmem:[%s5347 + $0x8] sm:$0xf]
      %v5351 = vsel %vm268, %v5349, 0
      %5353 = vmatprep.subr.mxu0 0.0
      %5354 = vmatpush1.msra.mxu0 %v5348
      %5355 = vmatprep.subr.mxu0 0.0
      %5356 = vmatpush1.msra.mxu0 %v5351
      %5357 = vmatprep.subr.mxu0 0.0
      %5358 = vmatpush1.msra.mxu0 0.0
      %5359 = vmatprep.subr.mxu0 0.0
      %5360 = vmatpush1.msra.mxu0 0.0
      %5361 = vmatprep.subr.mxu0 0.0
      %5362 = vmatpush1.msra.mxu0 0.0
      %5363 = vmatprep.subr.mxu0 0.0
      %5364 = vmatpush1.msra.mxu0 0.0
      %5365 = vmatprep.subr.mxu0 0.0
      %5366 = vmatpush1.msra.mxu0 0.0
      %5367 = vmatprep.subr.mxu0 0.0
      %5368 = vmatpush1.msra.mxu0 0.0
      %5369 = vmatprep.subr.mxu0 0.0
      %5370 = vmatpush1.msra.mxu0 0.0
      %5371 = vmatprep.subr.mxu0 0.0
      %5372 = vmatpush1.msra.mxu0 0.0
      %5373 = vmatprep.subr.mxu0 0.0
      %5374 = vmatpush1.msra.mxu0 0.0
      %5375 = vmatprep.subr.mxu0 0.0
      %5376 = vmatpush1.msra.mxu0 0.0
      %5377 = vmatprep.subr.mxu0 0.0
      %5378 = vmatpush1.msra.mxu0 0.0
      %5379 = vmatprep.subr.mxu0 0.0
      %5380 = vmatpush1.msra.mxu0 0.0
      %5381 = vmatprep.subr.mxu0 0.0
      %5382 = vmatpush1.msra.mxu0 0.0
      %5383 = vmatprep.subr.mxu0 0.0
      %5384 = vmatpush1.msra.mxu0 0.0
      %5385 = vmatprep.subr.mxu0 0.0
      %5386 = vmatpush1.msra.mxu0 0.0
      %5387 = vmatprep.subr.mxu0 0.0
      %5388 = vmatpush1.msra.mxu0 0.0
      %5389 = vmatprep.subr.mxu0 0.0
      %5390 = vmatpush1.msra.mxu0 0.0
      %5391 = vmatprep.subr.mxu0 0.0
      %5392 = vmatpush1.msra.mxu0 0.0
      %5393 = vmatprep.subr.mxu0 0.0
      %5394 = vmatpush1.msra.mxu0 0.0
      %5395 = vmatprep.subr.mxu0 0.0
      %5396 = vmatpush1.msra.mxu0 0.0
      %5397 = vmatprep.subr.mxu0 0.0
      %5398 = vmatpush1.msra.mxu0 0.0
      %5399 = vmatprep.subr.mxu0 0.0
      %5400 = vmatpush1.msra.mxu0 0.0
      %5401 = vmatprep.subr.mxu0 0.0
      %5402 = vmatpush1.msra.mxu0 0.0
      %5403 = vmatprep.subr.mxu0 0.0
      %5404 = vmatpush1.msra.mxu0 0.0
      %5405 = vmatprep.subr.mxu0 0.0
      %5406 = vmatpush1.msra.mxu0 0.0
      %5407 = vmatprep.subr.mxu0 0.0
      %5408 = vmatpush1.msra.mxu0 0.0
      %5409 = vmatprep.subr.mxu0 0.0
      %5410 = vmatpush1.msra.mxu0 0.0
      %5411 = vmatprep.subr.mxu0 0.0
      %5412 = vmatpush1.msra.mxu0 0.0
      %5413 = vmatprep.subr.mxu0 0.0
      %5414 = vmatpush1.msra.mxu0 0.0
      %5415 = vmatprep.subr.mxu0 0.0
      %5416 = vmatpush1.msra.mxu0 0.0
      %5417 = vmatprep.mubr.f32.mxu0 0.0
      %5418 = vmatmul.mubr.f32.gmra.mrb[0].mxu0 %v263
      %v5419 = vpop.f32.mrb[0].mxu0
      %v5420 = vadd.f32 %v213, %v5419
      %v5421 = vpop.f32.mrb[0].mxu0
      %5422 = vmatprep.mubr.f32.mxu0 0.0
      %5423 = vmatmul.mubr.f32.gmra.mrb[0].mxu0 %v266
      %v5424 = vpop.f32.mrb[0].mxu0
      %v5425 = vadd.f32 %v218, %v5424
      %v5426 = vpop.f32.mrb[0].mxu0
      %5427 = vdwg.mxu0
      %v5428 = vmax.f32 %v5420, 0.0
      %v5429 = vmax.f32 %v5425, 0.0
      %s5430 = scalar_lea.vmem %s192, 816
      %v5431 = vld [vmem:[%s5430] sm:$0xff]
      %v5432 = vld [vmem:[%s5430 + $0x8] sm:$0xf]
      %v5434 = vsel %vm268, %v5432, 0
      %5436 = vmatprep.subr.mxu0 0.0
      %5437 = vmatpush1.msra.mxu0 %v5431
      %5438 = vmatprep.subr.mxu0 0.0
      %5439 = vmatpush1.msra.mxu0 %v5434
      %5440 = vmatprep.subr.mxu0 0.0
      %5441 = vmatpush1.msra.mxu0 0.0
      %5442 = vmatprep.subr.mxu0 0.0
      %5443 = vmatpush1.msra.mxu0 0.0
      %5444 = vmatprep.subr.mxu0 0.0
      %5445 = vmatpush1.msra.mxu0 0.0
      %5446 = vmatprep.subr.mxu0 0.0
      %5447 = vmatpush1.msra.mxu0 0.0
      %5448 = vmatprep.subr.mxu0 0.0
      %5449 = vmatpush1.msra.mxu0 0.0
      %5450 = vmatprep.subr.mxu0 0.0
      %5451 = vmatpush1.msra.mxu0 0.0
      %5452 = vmatprep.subr.mxu0 0.0
      %5453 = vmatpush1.msra.mxu0 0.0
      %5454 = vmatprep.subr.mxu0 0.0
      %5455 = vmatpush1.msra.mxu0 0.0
      %5456 = vmatprep.subr.mxu0 0.0
      %5457 = vmatpush1.msra.mxu0 0.0
      %5458 = vmatprep.subr.mxu0 0.0
      %5459 = vmatpush1.msra.mxu0 0.0
      %5460 = vmatprep.subr.mxu0 0.0
      %5461 = vmatpush1.msra.mxu0 0.0
      %5462 = vmatprep.subr.mxu0 0.0
      %5463 = vmatpush1.msra.mxu0 0.0
      %5464 = vmatprep.subr.mxu0 0.0
      %5465 = vmatpush1.msra.mxu0 0.0
      %5466 = vmatprep.subr.mxu0 0.0
      %5467 = vmatpush1.msra.mxu0 0.0
      %5468 = vmatprep.subr.mxu0 0.0
      %5469 = vmatpush1.msra.mxu0 0.0
      %5470 = vmatprep.subr.mxu0 0.0
      %5471 = vmatpush1.msra.mxu0 0.0
      %5472 = vmatprep.subr.mxu0 0.0
      %5473 = vmatpush1.msra.mxu0 0.0
      %5474 = vmatprep.subr.mxu0 0.0
      %5475 = vmatpush1.msra.mxu0 0.0
      %5476 = vmatprep.subr.mxu0 0.0
      %5477 = vmatpush1.msra.mxu0 0.0
      %5478 = vmatprep.subr.mxu0 0.0
      %5479 = vmatpush1.msra.mxu0 0.0
      %5480 = vmatprep.subr.mxu0 0.0
      %5481 = vmatpush1.msra.mxu0 0.0
      %5482 = vmatprep.subr.mxu0 0.0
      %5483 = vmatpush1.msra.mxu0 0.0
      %5484 = vmatprep.subr.mxu0 0.0
      %5485 = vmatpush1.msra.mxu0 0.0
      %5486 = vmatprep.subr.mxu0 0.0
      %5487 = vmatpush1.msra.mxu0 0.0
      %5488 = vmatprep.subr.mxu0 0.0
      %5489 = vmatpush1.msra.mxu0 0.0
      %5490 = vmatprep.subr.mxu0 0.0
      %5491 = vmatpush1.msra.mxu0 0.0
      %5492 = vmatprep.subr.mxu0 0.0
      %5493 = vmatpush1.msra.mxu0 0.0
      %5494 = vmatprep.subr.mxu0 0.0
      %5495 = vmatpush1.msra.mxu0 0.0
      %5496 = vmatprep.subr.mxu0 0.0
      %5497 = vmatpush1.msra.mxu0 0.0
      %5498 = vmatprep.subr.mxu0 0.0
      %5499 = vmatpush1.msra.mxu0 0.0
      %5500 = vmatprep.mubr.f32.mxu0 0.0
      %5501 = vmatmul.mubr.f32.gmra.mrb[0].mxu0 %v263
      %v5502 = vpop.f32.mrb[0].mxu0
      %v5503 = vadd.f32 %v213, %v5502
      %v5504 = vpop.f32.mrb[0].mxu0
      %5505 = vmatprep.mubr.f32.mxu0 0.0
      %5506 = vmatmul.mubr.f32.gmra.mrb[0].mxu0 %v266
      %v5507 = vpop.f32.mrb[0].mxu0
      %v5508 = vadd.f32 %v218, %v5507
      %v5509 = vpop.f32.mrb[0].mxu0
      %5510 = vdwg.mxu0
      %v5511 = vmax.f32 %v5503, 0.0
      %v5512 = vmax.f32 %v5508, 0.0
      %5513 = vmatprep.subr.mxu0 0.0
      %5514 = vmatpush1.msra.mxu0 %v5262
      %5515 = vmatprep.subr.mxu0 0.0
      %5516 = vmatpush1.msra.mxu0 %v5263
      %5517 = vmatprep.subr.mxu0 0.0
      %5518 = vmatpush1.msra.mxu0 %v5345
      %5519 = vmatprep.subr.mxu0 0.0
      %5520 = vmatpush1.msra.mxu0 %v5346
      %5521 = vmatprep.subr.mxu0 0.0
      %5522 = vmatpush1.msra.mxu0 %v5428
      %5523 = vmatprep.subr.mxu0 0.0
      %5524 = vmatpush1.msra.mxu0 %v5429
      %5525 = vmatprep.subr.mxu0 0.0
      %5526 = vmatpush1.msra.mxu0 %v5511
      %5527 = vmatprep.subr.mxu0 0.0
      %5528 = vmatpush1.msra.mxu0 %v5512
      %5529 = vmatprep.subr.mxu0 0.0
      %5530 = vmatpush1.msra.mxu0 0.0
      %5531 = vmatprep.subr.mxu0 0.0
      %5532 = vmatpush1.msra.mxu0 0.0
      %5533 = vmatprep.subr.mxu0 0.0
      %5534 = vmatpush1.msra.mxu0 0.0
      %5535 = vmatprep.subr.mxu0 0.0
      %5536 = vmatpush1.msra.mxu0 0.0
      %5537 = vmatprep.subr.mxu0 0.0
      %5538 = vmatpush1.msra.mxu0 0.0
      %5539 = vmatprep.subr.mxu0 0.0
      %5540 = vmatpush1.msra.mxu0 0.0
      %5541 = vmatprep.subr.mxu0 0.0
      %5542 = vmatpush1.msra.mxu0 0.0
      %5543 = vmatprep.subr.mxu0 0.0
      %5544 = vmatpush1.msra.mxu0 0.0
      %5545 = vmatprep.subr.mxu0 0.0
      %5546 = vmatpush1.msra.mxu0 0.0
      %5547 = vmatprep.subr.mxu0 0.0
      %5548 = vmatpush1.msra.mxu0 0.0
      %5549 = vmatprep.subr.mxu0 0.0
      %5550 = vmatpush1.msra.mxu0 0.0
      %5551 = vmatprep.subr.mxu0 0.0
      %5552 = vmatpush1.msra.mxu0 0.0
      %5553 = vmatprep.subr.mxu0 0.0
      %5554 = vmatpush1.msra.mxu0 0.0
      %5555 = vmatprep.subr.mxu0 0.0
      %5556 = vmatpush1.msra.mxu0 0.0
      %5557 = vmatprep.subr.mxu0 0.0
      %5558 = vmatpush1.msra.mxu0 0.0
      %5559 = vmatprep.subr.mxu0 0.0
      %5560 = vmatpush1.msra.mxu0 0.0
      %5561 = vmatprep.subr.mxu0 0.0
      %5562 = vmatpush1.msra.mxu0 0.0
      %5563 = vmatprep.subr.mxu0 0.0
      %5564 = vmatpush1.msra.mxu0 0.0
      %5565 = vmatprep.subr.mxu0 0.0
      %5566 = vmatpush1.msra.mxu0 0.0
      %5567 = vmatprep.subr.mxu0 0.0
      %5568 = vmatpush1.msra.mxu0 0.0
      %5569 = vmatprep.subr.mxu0 0.0
      %5570 = vmatpush1.msra.mxu0 0.0
      %5571 = vmatprep.subr.mxu0 0.0
      %5572 = vmatpush1.msra.mxu0 0.0
      %5573 = vmatprep.subr.mxu0 0.0
      %5574 = vmatpush1.msra.mxu0 0.0
      %5575 = vmatprep.subr.mxu0 0.0
      %5576 = vmatpush1.msra.mxu0 0.0
      %5577 = vmatprep.mubr.f32.mxu0 0.0
      %5578 = vmatmul.mubr.f32.gmra.mrb[0].mxu0 %v600
      %v5579 = vpop.f32.mrb[0].mxu0
      %v5580 = vadd.f32 %v226, %v5579
      %v5581 = vpop.f32.mrb[0].mxu0
      %5582 = vmatprep.mubr.f32.mxu0 0.0
      %5583 = vmatmul.mubr.f32.gmra.mrb[0].mxu0 %v603
      %v5584 = vpop.f32.mrb[0].mxu0
      %v5585 = vadd.f32 %v231, %v5584
      %v5586 = vpop.f32.mrb[0].mxu0
      %5587 = vdwg.mxu0
      %v5588 = vmax.f32 %v5580, 0.0
      %v5589 = vmax.f32 %v5585, 0.0
      %s5590 = scalar_lea.vmem %s192, 832
      %v5591 = vld [vmem:[%s5590] sm:$0xff]
      %v5592 = vld [vmem:[%s5590 + $0x8] sm:$0xf]
      %v5594 = vsel %vm268, %v5592, 0
      %5596 = vmatprep.subr.mxu0 0.0
      %5597 = vmatpush1.msra.mxu0 %v5591
      %5598 = vmatprep.subr.mxu0 0.0
      %5599 = vmatpush1.msra.mxu0 %v5594
      %5600 = vmatprep.subr.mxu0 0.0
      %5601 = vmatpush1.msra.mxu0 0.0
      %5602 = vmatprep.subr.mxu0 0.0
      %5603 = vmatpush1.msra.mxu0 0.0
      %5604 = vmatprep.subr.mxu0 0.0
      %5605 = vmatpush1.msra.mxu0 0.0
      %5606 = vmatprep.subr.mxu0 0.0
      %5607 = vmatpush1.msra.mxu0 0.0
      %5608 = vmatprep.subr.mxu0 0.0
      %5609 = vmatpush1.msra.mxu0 0.0
      %5610 = vmatprep.subr.mxu0 0.0
      %5611 = vmatpush1.msra.mxu0 0.0
      %5612 = vmatprep.subr.mxu0 0.0
      %5613 = vmatpush1.msra.mxu0 0.0
      %5614 = vmatprep.subr.mxu0 0.0
      %5615 = vmatpush1.msra.mxu0 0.0
      %5616 = vmatprep.subr.mxu0 0.0
      %5617 = vmatpush1.msra.mxu0 0.0
      %5618 = vmatprep.subr.mxu0 0.0
      %5619 = vmatpush1.msra.mxu0 0.0
      %5620 = vmatprep.subr.mxu0 0.0
      %5621 = vmatpush1.msra.mxu0 0.0
      %5622 = vmatprep.subr.mxu0 0.0
      %5623 = vmatpush1.msra.mxu0 0.0
      %5624 = vmatprep.subr.mxu0 0.0
      %5625 = vmatpush1.msra.mxu0 0.0
      %5626 = vmatprep.subr.mxu0 0.0
      %5627 = vmatpush1.msra.mxu0 0.0
      %5628 = vmatprep.subr.mxu0 0.0
      %5629 = vmatpush1.msra.mxu0 0.0
      %5630 = vmatprep.subr.mxu0 0.0
      %5631 = vmatpush1.msra.mxu0 0.0
      %5632 = vmatprep.subr.mxu0 0.0
      %5633 = vmatpush1.msra.mxu0 0.0
      %5634 = vmatprep.subr.mxu0 0.0
      %5635 = vmatpush1.msra.mxu0 0.0
      %5636 = vmatprep.subr.mxu0 0.0
      %5637 = vmatpush1.msra.mxu0 0.0
      %5638 = vmatprep.subr.mxu0 0.0
      %5639 = vmatpush1.msra.mxu0 0.0
      %5640 = vmatprep.subr.mxu0 0.0
      %5641 = vmatpush1.msra.mxu0 0.0
      %5642 = vmatprep.subr.mxu0 0.0
      %5643 = vmatpush1.msra.mxu0 0.0
      %5644 = vmatprep.subr.mxu0 0.0
      %5645 = vmatpush1.msra.mxu0 0.0
      %5646 = vmatprep.subr.mxu0 0.0
      %5647 = vmatpush1.msra.mxu0 0.0
      %5648 = vmatprep.subr.mxu0 0.0
      %5649 = vmatpush1.msra.mxu0 0.0
      %5650 = vmatprep.subr.mxu0 0.0
      %5651 = vmatpush1.msra.mxu0 0.0
      %5652 = vmatprep.subr.mxu0 0.0
      %5653 = vmatpush1.msra.mxu0 0.0
      %5654 = vmatprep.subr.mxu0 0.0
      %5655 = vmatpush1.msra.mxu0 0.0
      %5656 = vmatprep.subr.mxu0 0.0
      %5657 = vmatpush1.msra.mxu0 0.0
      %5658 = vmatprep.subr.mxu0 0.0
      %5659 = vmatpush1.msra.mxu0 0.0
      %5660 = vmatprep.mubr.f32.mxu0 0.0
      %5661 = vmatmul.mubr.f32.gmra.mrb[0].mxu0 %v263
      %v5662 = vpop.f32.mrb[0].mxu0
      %v5663 = vadd.f32 %v213, %v5662
      %v5664 = vpop.f32.mrb[0].mxu0
      %5665 = vmatprep.mubr.f32.mxu0 0.0
      %5666 = vmatmul.mubr.f32.gmra.mrb[0].mxu0 %v266
      %v5667 = vpop.f32.mrb[0].mxu0
      %v5668 = vadd.f32 %v218, %v5667
      %v5669 = vpop.f32.mrb[0].mxu0
      %5670 = vdwg.mxu0
      %v5671 = vmax.f32 %v5663, 0.0
      %v5672 = vmax.f32 %v5668, 0.0
      %s5673 = scalar_lea.vmem %s192, 848
      %v5674 = vld [vmem:[%s5673] sm:$0xff]
      %v5675 = vld [vmem:[%s5673 + $0x8] sm:$0xf]
      %v5677 = vsel %vm268, %v5675, 0
      %5679 = vmatprep.subr.mxu0 0.0
      %5680 = vmatpush1.msra.mxu0 %v5674
      %5681 = vmatprep.subr.mxu0 0.0
      %5682 = vmatpush1.msra.mxu0 %v5677
      %5683 = vmatprep.subr.mxu0 0.0
      %5684 = vmatpush1.msra.mxu0 0.0
      %5685 = vmatprep.subr.mxu0 0.0
      %5686 = vmatpush1.msra.mxu0 0.0
      %5687 = vmatprep.subr.mxu0 0.0
      %5688 = vmatpush1.msra.mxu0 0.0
      %5689 = vmatprep.subr.mxu0 0.0
      %5690 = vmatpush1.msra.mxu0 0.0
      %5691 = vmatprep.subr.mxu0 0.0
      %5692 = vmatpush1.msra.mxu0 0.0
      %5693 = vmatprep.subr.mxu0 0.0
      %5694 = vmatpush1.msra.mxu0 0.0
      %5695 = vmatprep.subr.mxu0 0.0
      %5696 = vmatpush1.msra.mxu0 0.0
      %5697 = vmatprep.subr.mxu0 0.0
      %5698 = vmatpush1.msra.mxu0 0.0
      %5699 = vmatprep.subr.mxu0 0.0
      %5700 = vmatpush1.msra.mxu0 0.0
      %5701 = vmatprep.subr.mxu0 0.0
      %5702 = vmatpush1.msra.mxu0 0.0
      %5703 = vmatprep.subr.mxu0 0.0
      %5704 = vmatpush1.msra.mxu0 0.0
      %5705 = vmatprep.subr.mxu0 0.0
      %5706 = vmatpush1.msra.mxu0 0.0
      %5707 = vmatprep.subr.mxu0 0.0
      %5708 = vmatpush1.msra.mxu0 0.0
      %5709 = vmatprep.subr.mxu0 0.0
      %5710 = vmatpush1.msra.mxu0 0.0
      %5711 = vmatprep.subr.mxu0 0.0
      %5712 = vmatpush1.msra.mxu0 0.0
      %5713 = vmatprep.subr.mxu0 0.0
      %5714 = vmatpush1.msra.mxu0 0.0
      %5715 = vmatprep.subr.mxu0 0.0
      %5716 = vmatpush1.msra.mxu0 0.0
      %5717 = vmatprep.subr.mxu0 0.0
      %5718 = vmatpush1.msra.mxu0 0.0
      %5719 = vmatprep.subr.mxu0 0.0
      %5720 = vmatpush1.msra.mxu0 0.0
      %5721 = vmatprep.subr.mxu0 0.0
      %5722 = vmatpush1.msra.mxu0 0.0
      %5723 = vmatprep.subr.mxu0 0.0
      %5724 = vmatpush1.msra.mxu0 0.0
      %5725 = vmatprep.subr.mxu0 0.0
      %5726 = vmatpush1.msra.mxu0 0.0
      %5727 = vmatprep.subr.mxu0 0.0
      %5728 = vmatpush1.msra.mxu0 0.0
      %5729 = vmatprep.subr.mxu0 0.0
      %5730 = vmatpush1.msra.mxu0 0.0
      %5731 = vmatprep.subr.mxu0 0.0
      %5732 = vmatpush1.msra.mxu0 0.0
      %5733 = vmatprep.subr.mxu0 0.0
      %5734 = vmatpush1.msra.mxu0 0.0
      %5735 = vmatprep.subr.mxu0 0.0
      %5736 = vmatpush1.msra.mxu0 0.0
      %5737 = vmatprep.subr.mxu0 0.0
      %5738 = vmatpush1.msra.mxu0 0.0
      %5739 = vmatprep.subr.mxu0 0.0
      %5740 = vmatpush1.msra.mxu0 0.0
      %5741 = vmatprep.subr.mxu0 0.0
      %5742 = vmatpush1.msra.mxu0 0.0
      %5743 = vmatprep.mubr.f32.mxu0 0.0
      %5744 = vmatmul.mubr.f32.gmra.mrb[0].mxu0 %v263
      %v5745 = vpop.f32.mrb[0].mxu0
      %v5746 = vadd.f32 %v213, %v5745
      %v5747 = vpop.f32.mrb[0].mxu0
      %5748 = vmatprep.mubr.f32.mxu0 0.0
      %5749 = vmatmul.mubr.f32.gmra.mrb[0].mxu0 %v266
      %v5750 = vpop.f32.mrb[0].mxu0
      %v5751 = vadd.f32 %v218, %v5750
      %v5752 = vpop.f32.mrb[0].mxu0
      %5753 = vdwg.mxu0
      %v5754 = vmax.f32 %v5746, 0.0
      %v5755 = vmax.f32 %v5751, 0.0
      %s5756 = scalar_lea.vmem %s192, 864
      %v5757 = vld [vmem:[%s5756] sm:$0xff]
      %v5758 = vld [vmem:[%s5756 + $0x8] sm:$0xf]
      %v5760 = vsel %vm268, %v5758, 0
      %5762 = vmatprep.subr.mxu0 0.0
      %5763 = vmatpush1.msra.mxu0 %v5757
      %5764 = vmatprep.subr.mxu0 0.0
      %5765 = vmatpush1.msra.mxu0 %v5760
      %5766 = vmatprep.subr.mxu0 0.0
      %5767 = vmatpush1.msra.mxu0 0.0
      %5768 = vmatprep.subr.mxu0 0.0
      %5769 = vmatpush1.msra.mxu0 0.0
      %5770 = vmatprep.subr.mxu0 0.0
      %5771 = vmatpush1.msra.mxu0 0.0
      %5772 = vmatprep.subr.mxu0 0.0
      %5773 = vmatpush1.msra.mxu0 0.0
      %5774 = vmatprep.subr.mxu0 0.0
      %5775 = vmatpush1.msra.mxu0 0.0
      %5776 = vmatprep.subr.mxu0 0.0
      %5777 = vmatpush1.msra.mxu0 0.0
      %5778 = vmatprep.subr.mxu0 0.0
      %5779 = vmatpush1.msra.mxu0 0.0
      %5780 = vmatprep.subr.mxu0 0.0
      %5781 = vmatpush1.msra.mxu0 0.0
      %5782 = vmatprep.subr.mxu0 0.0
      %5783 = vmatpush1.msra.mxu0 0.0
      %5784 = vmatprep.subr.mxu0 0.0
      %5785 = vmatpush1.msra.mxu0 0.0
      %5786 = vmatprep.subr.mxu0 0.0
      %5787 = vmatpush1.msra.mxu0 0.0
      %5788 = vmatprep.subr.mxu0 0.0
      %5789 = vmatpush1.msra.mxu0 0.0
      %5790 = vmatprep.subr.mxu0 0.0
      %5791 = vmatpush1.msra.mxu0 0.0
      %5792 = vmatprep.subr.mxu0 0.0
      %5793 = vmatpush1.msra.mxu0 0.0
      %5794 = vmatprep.subr.mxu0 0.0
      %5795 = vmatpush1.msra.mxu0 0.0
      %5796 = vmatprep.subr.mxu0 0.0
      %5797 = vmatpush1.msra.mxu0 0.0
      %5798 = vmatprep.subr.mxu0 0.0
      %5799 = vmatpush1.msra.mxu0 0.0
      %5800 = vmatprep.subr.mxu0 0.0
      %5801 = vmatpush1.msra.mxu0 0.0
      %5802 = vmatprep.subr.mxu0 0.0
      %5803 = vmatpush1.msra.mxu0 0.0
      %5804 = vmatprep.subr.mxu0 0.0
      %5805 = vmatpush1.msra.mxu0 0.0
      %5806 = vmatprep.subr.mxu0 0.0
      %5807 = vmatpush1.msra.mxu0 0.0
      %5808 = vmatprep.subr.mxu0 0.0
      %5809 = vmatpush1.msra.mxu0 0.0
      %5810 = vmatprep.subr.mxu0 0.0
      %5811 = vmatpush1.msra.mxu0 0.0
      %5812 = vmatprep.subr.mxu0 0.0
      %5813 = vmatpush1.msra.mxu0 0.0
      %5814 = vmatprep.subr.mxu0 0.0
      %5815 = vmatpush1.msra.mxu0 0.0
      %5816 = vmatprep.subr.mxu0 0.0
      %5817 = vmatpush1.msra.mxu0 0.0
      %5818 = vmatprep.subr.mxu0 0.0
      %5819 = vmatpush1.msra.mxu0 0.0
      %5820 = vmatprep.subr.mxu0 0.0
      %5821 = vmatpush1.msra.mxu0 0.0
      %5822 = vmatprep.subr.mxu0 0.0
      %5823 = vmatpush1.msra.mxu0 0.0
      %5824 = vmatprep.subr.mxu0 0.0
      %5825 = vmatpush1.msra.mxu0 0.0
      %5826 = vmatprep.mubr.f32.mxu0 0.0
      %5827 = vmatmul.mubr.f32.gmra.mrb[0].mxu0 %v263
      %v5828 = vpop.f32.mrb[0].mxu0
      %v5829 = vadd.f32 %v213, %v5828
      %v5830 = vpop.f32.mrb[0].mxu0
      %5831 = vmatprep.mubr.f32.mxu0 0.0
      %5832 = vmatmul.mubr.f32.gmra.mrb[0].mxu0 %v266
      %v5833 = vpop.f32.mrb[0].mxu0
      %v5834 = vadd.f32 %v218, %v5833
      %v5835 = vpop.f32.mrb[0].mxu0
      %5836 = vdwg.mxu0
      %v5837 = vmax.f32 %v5829, 0.0
      %v5838 = vmax.f32 %v5834, 0.0
      %s5839 = scalar_lea.vmem %s192, 880
      %v5840 = vld [vmem:[%s5839] sm:$0xff]
      %v5841 = vld [vmem:[%s5839 + $0x8] sm:$0xf]
      %v5843 = vsel %vm268, %v5841, 0
      %5845 = vmatprep.subr.mxu0 0.0
      %5846 = vmatpush1.msra.mxu0 %v5840
      %5847 = vmatprep.subr.mxu0 0.0
      %5848 = vmatpush1.msra.mxu0 %v5843
      %5849 = vmatprep.subr.mxu0 0.0
      %5850 = vmatpush1.msra.mxu0 0.0
      %5851 = vmatprep.subr.mxu0 0.0
      %5852 = vmatpush1.msra.mxu0 0.0
      %5853 = vmatprep.subr.mxu0 0.0
      %5854 = vmatpush1.msra.mxu0 0.0
      %5855 = vmatprep.subr.mxu0 0.0
      %5856 = vmatpush1.msra.mxu0 0.0
      %5857 = vmatprep.subr.mxu0 0.0
      %5858 = vmatpush1.msra.mxu0 0.0
      %5859 = vmatprep.subr.mxu0 0.0
      %5860 = vmatpush1.msra.mxu0 0.0
      %5861 = vmatprep.subr.mxu0 0.0
      %5862 = vmatpush1.msra.mxu0 0.0
      %5863 = vmatprep.subr.mxu0 0.0
      %5864 = vmatpush1.msra.mxu0 0.0
      %5865 = vmatprep.subr.mxu0 0.0
      %5866 = vmatpush1.msra.mxu0 0.0
      %5867 = vmatprep.subr.mxu0 0.0
      %5868 = vmatpush1.msra.mxu0 0.0
      %5869 = vmatprep.subr.mxu0 0.0
      %5870 = vmatpush1.msra.mxu0 0.0
      %5871 = vmatprep.subr.mxu0 0.0
      %5872 = vmatpush1.msra.mxu0 0.0
      %5873 = vmatprep.subr.mxu0 0.0
      %5874 = vmatpush1.msra.mxu0 0.0
      %5875 = vmatprep.subr.mxu0 0.0
      %5876 = vmatpush1.msra.mxu0 0.0
      %5877 = vmatprep.subr.mxu0 0.0
      %5878 = vmatpush1.msra.mxu0 0.0
      %5879 = vmatprep.subr.mxu0 0.0
      %5880 = vmatpush1.msra.mxu0 0.0
      %5881 = vmatprep.subr.mxu0 0.0
      %5882 = vmatpush1.msra.mxu0 0.0
      %5883 = vmatprep.subr.mxu0 0.0
      %5884 = vmatpush1.msra.mxu0 0.0
      %5885 = vmatprep.subr.mxu0 0.0
      %5886 = vmatpush1.msra.mxu0 0.0
      %5887 = vmatprep.subr.mxu0 0.0
      %5888 = vmatpush1.msra.mxu0 0.0
      %5889 = vmatprep.subr.mxu0 0.0
      %5890 = vmatpush1.msra.mxu0 0.0
      %5891 = vmatprep.subr.mxu0 0.0
      %5892 = vmatpush1.msra.mxu0 0.0
      %5893 = vmatprep.subr.mxu0 0.0
      %5894 = vmatpush1.msra.mxu0 0.0
      %5895 = vmatprep.subr.mxu0 0.0
      %5896 = vmatpush1.msra.mxu0 0.0
      %5897 = vmatprep.subr.mxu0 0.0
      %5898 = vmatpush1.msra.mxu0 0.0
      %5899 = vmatprep.subr.mxu0 0.0
      %5900 = vmatpush1.msra.mxu0 0.0
      %5901 = vmatprep.subr.mxu0 0.0
      %5902 = vmatpush1.msra.mxu0 0.0
      %5903 = vmatprep.subr.mxu0 0.0
      %5904 = vmatpush1.msra.mxu0 0.0
      %5905 = vmatprep.subr.mxu0 0.0
      %5906 = vmatpush1.msra.mxu0 0.0
      %5907 = vmatprep.subr.mxu0 0.0
      %5908 = vmatpush1.msra.mxu0 0.0
      %5909 = vmatprep.mubr.f32.mxu0 0.0
      %5910 = vmatmul.mubr.f32.gmra.mrb[0].mxu0 %v263
      %v5911 = vpop.f32.mrb[0].mxu0
      %v5912 = vadd.f32 %v213, %v5911
      %v5913 = vpop.f32.mrb[0].mxu0
      %5914 = vmatprep.mubr.f32.mxu0 0.0
      %5915 = vmatmul.mubr.f32.gmra.mrb[0].mxu0 %v266
      %v5916 = vpop.f32.mrb[0].mxu0
      %v5917 = vadd.f32 %v218, %v5916
      %v5918 = vpop.f32.mrb[0].mxu0
      %5919 = vdwg.mxu0
      %v5920 = vmax.f32 %v5912, 0.0
      %v5921 = vmax.f32 %v5917, 0.0
      %5922 = vmatprep.subr.mxu0 0.0
      %5923 = vmatpush1.msra.mxu0 %v5671
      %5924 = vmatprep.subr.mxu0 0.0
      %5925 = vmatpush1.msra.mxu0 %v5672
      %5926 = vmatprep.subr.mxu0 0.0
      %5927 = vmatpush1.msra.mxu0 %v5754
      %5928 = vmatprep.subr.mxu0 0.0
      %5929 = vmatpush1.msra.mxu0 %v5755
      %5930 = vmatprep.subr.mxu0 0.0
      %5931 = vmatpush1.msra.mxu0 %v5837
      %5932 = vmatprep.subr.mxu0 0.0
      %5933 = vmatpush1.msra.mxu0 %v5838
      %5934 = vmatprep.subr.mxu0 0.0
      %5935 = vmatpush1.msra.mxu0 %v5920
      %5936 = vmatprep.subr.mxu0 0.0
      %5937 = vmatpush1.msra.mxu0 %v5921
      %5938 = vmatprep.subr.mxu0 0.0
      %5939 = vmatpush1.msra.mxu0 0.0
      %5940 = vmatprep.subr.mxu0 0.0
      %5941 = vmatpush1.msra.mxu0 0.0
      %5942 = vmatprep.subr.mxu0 0.0
      %5943 = vmatpush1.msra.mxu0 0.0
      %5944 = vmatprep.subr.mxu0 0.0
      %5945 = vmatpush1.msra.mxu0 0.0
      %5946 = vmatprep.subr.mxu0 0.0
      %5947 = vmatpush1.msra.mxu0 0.0
      %5948 = vmatprep.subr.mxu0 0.0
      %5949 = vmatpush1.msra.mxu0 0.0
      %5950 = vmatprep.subr.mxu0 0.0
      %5951 = vmatpush1.msra.mxu0 0.0
      %5952 = vmatprep.subr.mxu0 0.0
      %5953 = vmatpush1.msra.mxu0 0.0
      %5954 = vmatprep.subr.mxu0 0.0
      %5955 = vmatpush1.msra.mxu0 0.0
      %5956 = vmatprep.subr.mxu0 0.0
      %5957 = vmatpush1.msra.mxu0 0.0
      %5958 = vmatprep.subr.mxu0 0.0
      %5959 = vmatpush1.msra.mxu0 0.0
      %5960 = vmatprep.subr.mxu0 0.0
      %5961 = vmatpush1.msra.mxu0 0.0
      %5962 = vmatprep.subr.mxu0 0.0
      %5963 = vmatpush1.msra.mxu0 0.0
      %5964 = vmatprep.subr.mxu0 0.0
      %5965 = vmatpush1.msra.mxu0 0.0
      %5966 = vmatprep.subr.mxu0 0.0
      %5967 = vmatpush1.msra.mxu0 0.0
      %5968 = vmatprep.subr.mxu0 0.0
      %5969 = vmatpush1.msra.mxu0 0.0
      %5970 = vmatprep.subr.mxu0 0.0
      %5971 = vmatpush1.msra.mxu0 0.0
      %5972 = vmatprep.subr.mxu0 0.0
      %5973 = vmatpush1.msra.mxu0 0.0
      %5974 = vmatprep.subr.mxu0 0.0
      %5975 = vmatpush1.msra.mxu0 0.0
      %5976 = vmatprep.subr.mxu0 0.0
      %5977 = vmatpush1.msra.mxu0 0.0
      %5978 = vmatprep.subr.mxu0 0.0
      %5979 = vmatpush1.msra.mxu0 0.0
      %5980 = vmatprep.subr.mxu0 0.0
      %5981 = vmatpush1.msra.mxu0 0.0
      %5982 = vmatprep.subr.mxu0 0.0
      %5983 = vmatpush1.msra.mxu0 0.0
      %5984 = vmatprep.subr.mxu0 0.0
      %5985 = vmatpush1.msra.mxu0 0.0
      %5986 = vmatprep.mubr.f32.mxu0 0.0
      %5987 = vmatmul.mubr.f32.gmra.mrb[0].mxu0 %v600
      %v5988 = vpop.f32.mrb[0].mxu0
      %v5989 = vadd.f32 %v226, %v5988
      %v5990 = vpop.f32.mrb[0].mxu0
      %5991 = vmatprep.mubr.f32.mxu0 0.0
      %5992 = vmatmul.mubr.f32.gmra.mrb[0].mxu0 %v603
      %v5993 = vpop.f32.mrb[0].mxu0
      %v5994 = vadd.f32 %v231, %v5993
      %v5995 = vpop.f32.mrb[0].mxu0
      %5996 = vdwg.mxu0
      %v5997 = vmax.f32 %v5989, 0.0
      %v5998 = vmax.f32 %v5994, 0.0
      %s5999 = scalar_lea.vmem %s192, 896
      %v6000 = vld [vmem:[%s5999] sm:$0xff]
      %v6001 = vld [vmem:[%s5999 + $0x8] sm:$0xf]
      %v6003 = vsel %vm268, %v6001, 0
      %6005 = vmatprep.subr.mxu0 0.0
      %6006 = vmatpush1.msra.mxu0 %v6000
      %6007 = vmatprep.subr.mxu0 0.0
      %6008 = vmatpush1.msra.mxu0 %v6003
      %6009 = vmatprep.subr.mxu0 0.0
      %6010 = vmatpush1.msra.mxu0 0.0
      %6011 = vmatprep.subr.mxu0 0.0
      %6012 = vmatpush1.msra.mxu0 0.0
      %6013 = vmatprep.subr.mxu0 0.0
      %6014 = vmatpush1.msra.mxu0 0.0
      %6015 = vmatprep.subr.mxu0 0.0
      %6016 = vmatpush1.msra.mxu0 0.0
      %6017 = vmatprep.subr.mxu0 0.0
      %6018 = vmatpush1.msra.mxu0 0.0
      %6019 = vmatprep.subr.mxu0 0.0
      %6020 = vmatpush1.msra.mxu0 0.0
      %6021 = vmatprep.subr.mxu0 0.0
      %6022 = vmatpush1.msra.mxu0 0.0
      %6023 = vmatprep.subr.mxu0 0.0
      %6024 = vmatpush1.msra.mxu0 0.0
      %6025 = vmatprep.subr.mxu0 0.0
      %6026 = vmatpush1.msra.mxu0 0.0
      %6027 = vmatprep.subr.mxu0 0.0
      %6028 = vmatpush1.msra.mxu0 0.0
      %6029 = vmatprep.subr.mxu0 0.0
      %6030 = vmatpush1.msra.mxu0 0.0
      %6031 = vmatprep.subr.mxu0 0.0
      %6032 = vmatpush1.msra.mxu0 0.0
      %6033 = vmatprep.subr.mxu0 0.0
      %6034 = vmatpush1.msra.mxu0 0.0
      %6035 = vmatprep.subr.mxu0 0.0
      %6036 = vmatpush1.msra.mxu0 0.0
      %6037 = vmatprep.subr.mxu0 0.0
      %6038 = vmatpush1.msra.mxu0 0.0
      %6039 = vmatprep.subr.mxu0 0.0
      %6040 = vmatpush1.msra.mxu0 0.0
      %6041 = vmatprep.subr.mxu0 0.0
      %6042 = vmatpush1.msra.mxu0 0.0
      %6043 = vmatprep.subr.mxu0 0.0
      %6044 = vmatpush1.msra.mxu0 0.0
      %6045 = vmatprep.subr.mxu0 0.0
      %6046 = vmatpush1.msra.mxu0 0.0
      %6047 = vmatprep.subr.mxu0 0.0
      %6048 = vmatpush1.msra.mxu0 0.0
      %6049 = vmatprep.subr.mxu0 0.0
      %6050 = vmatpush1.msra.mxu0 0.0
      %6051 = vmatprep.subr.mxu0 0.0
      %6052 = vmatpush1.msra.mxu0 0.0
      %6053 = vmatprep.subr.mxu0 0.0
      %6054 = vmatpush1.msra.mxu0 0.0
      %6055 = vmatprep.subr.mxu0 0.0
      %6056 = vmatpush1.msra.mxu0 0.0
      %6057 = vmatprep.subr.mxu0 0.0
      %6058 = vmatpush1.msra.mxu0 0.0
      %6059 = vmatprep.subr.mxu0 0.0
      %6060 = vmatpush1.msra.mxu0 0.0
      %6061 = vmatprep.subr.mxu0 0.0
      %6062 = vmatpush1.msra.mxu0 0.0
      %6063 = vmatprep.subr.mxu0 0.0
      %6064 = vmatpush1.msra.mxu0 0.0
      %6065 = vmatprep.subr.mxu0 0.0
      %6066 = vmatpush1.msra.mxu0 0.0
      %6067 = vmatprep.subr.mxu0 0.0
      %6068 = vmatpush1.msra.mxu0 0.0
      %6069 = vmatprep.mubr.f32.mxu0 0.0
      %6070 = vmatmul.mubr.f32.gmra.mrb[0].mxu0 %v263
      %v6071 = vpop.f32.mrb[0].mxu0
      %v6072 = vadd.f32 %v213, %v6071
      %v6073 = vpop.f32.mrb[0].mxu0
      %6074 = vmatprep.mubr.f32.mxu0 0.0
      %6075 = vmatmul.mubr.f32.gmra.mrb[0].mxu0 %v266
      %v6076 = vpop.f32.mrb[0].mxu0
      %v6077 = vadd.f32 %v218, %v6076
      %v6078 = vpop.f32.mrb[0].mxu0
      %6079 = vdwg.mxu0
      %v6080 = vmax.f32 %v6072, 0.0
      %v6081 = vmax.f32 %v6077, 0.0
      %s6082 = scalar_lea.vmem %s192, 912
      %v6083 = vld [vmem:[%s6082] sm:$0xff]
      %v6084 = vld [vmem:[%s6082 + $0x8] sm:$0xf]
      %v6086 = vsel %vm268, %v6084, 0
      %6088 = vmatprep.subr.mxu0 0.0
      %6089 = vmatpush1.msra.mxu0 %v6083
      %6090 = vmatprep.subr.mxu0 0.0
      %6091 = vmatpush1.msra.mxu0 %v6086
      %6092 = vmatprep.subr.mxu0 0.0
      %6093 = vmatpush1.msra.mxu0 0.0
      %6094 = vmatprep.subr.mxu0 0.0
      %6095 = vmatpush1.msra.mxu0 0.0
      %6096 = vmatprep.subr.mxu0 0.0
      %6097 = vmatpush1.msra.mxu0 0.0
      %6098 = vmatprep.subr.mxu0 0.0
      %6099 = vmatpush1.msra.mxu0 0.0
      %6100 = vmatprep.subr.mxu0 0.0
      %6101 = vmatpush1.msra.mxu0 0.0
      %6102 = vmatprep.subr.mxu0 0.0
      %6103 = vmatpush1.msra.mxu0 0.0
      %6104 = vmatprep.subr.mxu0 0.0
      %6105 = vmatpush1.msra.mxu0 0.0
      %6106 = vmatprep.subr.mxu0 0.0
      %6107 = vmatpush1.msra.mxu0 0.0
      %6108 = vmatprep.subr.mxu0 0.0
      %6109 = vmatpush1.msra.mxu0 0.0
      %6110 = vmatprep.subr.mxu0 0.0
      %6111 = vmatpush1.msra.mxu0 0.0
      %6112 = vmatprep.subr.mxu0 0.0
      %6113 = vmatpush1.msra.mxu0 0.0
      %6114 = vmatprep.subr.mxu0 0.0
      %6115 = vmatpush1.msra.mxu0 0.0
      %6116 = vmatprep.subr.mxu0 0.0
      %6117 = vmatpush1.msra.mxu0 0.0
      %6118 = vmatprep.subr.mxu0 0.0
      %6119 = vmatpush1.msra.mxu0 0.0
      %6120 = vmatprep.subr.mxu0 0.0
      %6121 = vmatpush1.msra.mxu0 0.0
      %6122 = vmatprep.subr.mxu0 0.0
      %6123 = vmatpush1.msra.mxu0 0.0
      %6124 = vmatprep.subr.mxu0 0.0
      %6125 = vmatpush1.msra.mxu0 0.0
      %6126 = vmatprep.subr.mxu0 0.0
      %6127 = vmatpush1.msra.mxu0 0.0
      %6128 = vmatprep.subr.mxu0 0.0
      %6129 = vmatpush1.msra.mxu0 0.0
      %6130 = vmatprep.subr.mxu0 0.0
      %6131 = vmatpush1.msra.mxu0 0.0
      %6132 = vmatprep.subr.mxu0 0.0
      %6133 = vmatpush1.msra.mxu0 0.0
      %6134 = vmatprep.subr.mxu0 0.0
      %6135 = vmatpush1.msra.mxu0 0.0
      %6136 = vmatprep.subr.mxu0 0.0
      %6137 = vmatpush1.msra.mxu0 0.0
      %6138 = vmatprep.subr.mxu0 0.0
      %6139 = vmatpush1.msra.mxu0 0.0
      %6140 = vmatprep.subr.mxu0 0.0
      %6141 = vmatpush1.msra.mxu0 0.0
      %6142 = vmatprep.subr.mxu0 0.0
      %6143 = vmatpush1.msra.mxu0 0.0
      %6144 = vmatprep.subr.mxu0 0.0
      %6145 = vmatpush1.msra.mxu0 0.0
      %6146 = vmatprep.subr.mxu0 0.0
      %6147 = vmatpush1.msra.mxu0 0.0
      %6148 = vmatprep.subr.mxu0 0.0
      %6149 = vmatpush1.msra.mxu0 0.0
      %6150 = vmatprep.subr.mxu0 0.0
      %6151 = vmatpush1.msra.mxu0 0.0
      %6152 = vmatprep.mubr.f32.mxu0 0.0
      %6153 = vmatmul.mubr.f32.gmra.mrb[0].mxu0 %v263
      %v6154 = vpop.f32.mrb[0].mxu0
      %v6155 = vadd.f32 %v213, %v6154
      %v6156 = vpop.f32.mrb[0].mxu0
      %6157 = vmatprep.mubr.f32.mxu0 0.0
      %6158 = vmatmul.mubr.f32.gmra.mrb[0].mxu0 %v266
      %v6159 = vpop.f32.mrb[0].mxu0
      %v6160 = vadd.f32 %v218, %v6159
      %v6161 = vpop.f32.mrb[0].mxu0
      %6162 = vdwg.mxu0
      %v6163 = vmax.f32 %v6155, 0.0
      %v6164 = vmax.f32 %v6160, 0.0
      %s6165 = scalar_lea.vmem %s192, 928
      %v6166 = vld [vmem:[%s6165] sm:$0xff]
      %v6167 = vld [vmem:[%s6165 + $0x8] sm:$0xf]
      %v6169 = vsel %vm268, %v6167, 0
      %6171 = vmatprep.subr.mxu0 0.0
      %6172 = vmatpush1.msra.mxu0 %v6166
      %6173 = vmatprep.subr.mxu0 0.0
      %6174 = vmatpush1.msra.mxu0 %v6169
      %6175 = vmatprep.subr.mxu0 0.0
      %6176 = vmatpush1.msra.mxu0 0.0
      %6177 = vmatprep.subr.mxu0 0.0
      %6178 = vmatpush1.msra.mxu0 0.0
      %6179 = vmatprep.subr.mxu0 0.0
      %6180 = vmatpush1.msra.mxu0 0.0
      %6181 = vmatprep.subr.mxu0 0.0
      %6182 = vmatpush1.msra.mxu0 0.0
      %6183 = vmatprep.subr.mxu0 0.0
      %6184 = vmatpush1.msra.mxu0 0.0
      %6185 = vmatprep.subr.mxu0 0.0
      %6186 = vmatpush1.msra.mxu0 0.0
      %6187 = vmatprep.subr.mxu0 0.0
      %6188 = vmatpush1.msra.mxu0 0.0
      %6189 = vmatprep.subr.mxu0 0.0
      %6190 = vmatpush1.msra.mxu0 0.0
      %6191 = vmatprep.subr.mxu0 0.0
      %6192 = vmatpush1.msra.mxu0 0.0
      %6193 = vmatprep.subr.mxu0 0.0
      %6194 = vmatpush1.msra.mxu0 0.0
      %6195 = vmatprep.subr.mxu0 0.0
      %6196 = vmatpush1.msra.mxu0 0.0
      %6197 = vmatprep.subr.mxu0 0.0
      %6198 = vmatpush1.msra.mxu0 0.0
      %6199 = vmatprep.subr.mxu0 0.0
      %6200 = vmatpush1.msra.mxu0 0.0
      %6201 = vmatprep.subr.mxu0 0.0
      %6202 = vmatpush1.msra.mxu0 0.0
      %6203 = vmatprep.subr.mxu0 0.0
      %6204 = vmatpush1.msra.mxu0 0.0
      %6205 = vmatprep.subr.mxu0 0.0
      %6206 = vmatpush1.msra.mxu0 0.0
      %6207 = vmatprep.subr.mxu0 0.0
      %6208 = vmatpush1.msra.mxu0 0.0
      %6209 = vmatprep.subr.mxu0 0.0
      %6210 = vmatpush1.msra.mxu0 0.0
      %6211 = vmatprep.subr.mxu0 0.0
      %6212 = vmatpush1.msra.mxu0 0.0
      %6213 = vmatprep.subr.mxu0 0.0
      %6214 = vmatpush1.msra.mxu0 0.0
      %6215 = vmatprep.subr.mxu0 0.0
      %6216 = vmatpush1.msra.mxu0 0.0
      %6217 = vmatprep.subr.mxu0 0.0
      %6218 = vmatpush1.msra.mxu0 0.0
      %6219 = vmatprep.subr.mxu0 0.0
      %6220 = vmatpush1.msra.mxu0 0.0
      %6221 = vmatprep.subr.mxu0 0.0
      %6222 = vmatpush1.msra.mxu0 0.0
      %6223 = vmatprep.subr.mxu0 0.0
      %6224 = vmatpush1.msra.mxu0 0.0
      %6225 = vmatprep.subr.mxu0 0.0
      %6226 = vmatpush1.msra.mxu0 0.0
      %6227 = vmatprep.subr.mxu0 0.0
      %6228 = vmatpush1.msra.mxu0 0.0
      %6229 = vmatprep.subr.mxu0 0.0
      %6230 = vmatpush1.msra.mxu0 0.0
      %6231 = vmatprep.subr.mxu0 0.0
      %6232 = vmatpush1.msra.mxu0 0.0
      %6233 = vmatprep.subr.mxu0 0.0
      %6234 = vmatpush1.msra.mxu0 0.0
      %6235 = vmatprep.mubr.f32.mxu0 0.0
      %6236 = vmatmul.mubr.f32.gmra.mrb[0].mxu0 %v263
      %v6237 = vpop.f32.mrb[0].mxu0
      %v6238 = vadd.f32 %v213, %v6237
      %v6239 = vpop.f32.mrb[0].mxu0
      %6240 = vmatprep.mubr.f32.mxu0 0.0
      %6241 = vmatmul.mubr.f32.gmra.mrb[0].mxu0 %v266
      %v6242 = vpop.f32.mrb[0].mxu0
      %v6243 = vadd.f32 %v218, %v6242
      %v6244 = vpop.f32.mrb[0].mxu0
      %6245 = vdwg.mxu0
      %v6246 = vmax.f32 %v6238, 0.0
      %v6247 = vmax.f32 %v6243, 0.0
      %s6248 = scalar_lea.vmem %s192, 944
      %v6249 = vld [vmem:[%s6248] sm:$0xff]
      %v6250 = vld [vmem:[%s6248 + $0x8] sm:$0xf]
      %v6252 = vsel %vm268, %v6250, 0
      %6254 = vmatprep.subr.mxu0 0.0
      %6255 = vmatpush1.msra.mxu0 %v6249
      %6256 = vmatprep.subr.mxu0 0.0
      %6257 = vmatpush1.msra.mxu0 %v6252
      %6258 = vmatprep.subr.mxu0 0.0
      %6259 = vmatpush1.msra.mxu0 0.0
      %6260 = vmatprep.subr.mxu0 0.0
      %6261 = vmatpush1.msra.mxu0 0.0
      %6262 = vmatprep.subr.mxu0 0.0
      %6263 = vmatpush1.msra.mxu0 0.0
      %6264 = vmatprep.subr.mxu0 0.0
      %6265 = vmatpush1.msra.mxu0 0.0
      %6266 = vmatprep.subr.mxu0 0.0
      %6267 = vmatpush1.msra.mxu0 0.0
      %6268 = vmatprep.subr.mxu0 0.0
      %6269 = vmatpush1.msra.mxu0 0.0
      %6270 = vmatprep.subr.mxu0 0.0
      %6271 = vmatpush1.msra.mxu0 0.0
      %6272 = vmatprep.subr.mxu0 0.0
      %6273 = vmatpush1.msra.mxu0 0.0
      %6274 = vmatprep.subr.mxu0 0.0
      %6275 = vmatpush1.msra.mxu0 0.0
      %6276 = vmatprep.subr.mxu0 0.0
      %6277 = vmatpush1.msra.mxu0 0.0
      %6278 = vmatprep.subr.mxu0 0.0
      %6279 = vmatpush1.msra.mxu0 0.0
      %6280 = vmatprep.subr.mxu0 0.0
      %6281 = vmatpush1.msra.mxu0 0.0
      %6282 = vmatprep.subr.mxu0 0.0
      %6283 = vmatpush1.msra.mxu0 0.0
      %6284 = vmatprep.subr.mxu0 0.0
      %6285 = vmatpush1.msra.mxu0 0.0
      %6286 = vmatprep.subr.mxu0 0.0
      %6287 = vmatpush1.msra.mxu0 0.0
      %6288 = vmatprep.subr.mxu0 0.0
      %6289 = vmatpush1.msra.mxu0 0.0
      %6290 = vmatprep.subr.mxu0 0.0
      %6291 = vmatpush1.msra.mxu0 0.0
      %6292 = vmatprep.subr.mxu0 0.0
      %6293 = vmatpush1.msra.mxu0 0.0
      %6294 = vmatprep.subr.mxu0 0.0
      %6295 = vmatpush1.msra.mxu0 0.0
      %6296 = vmatprep.subr.mxu0 0.0
      %6297 = vmatpush1.msra.mxu0 0.0
      %6298 = vmatprep.subr.mxu0 0.0
      %6299 = vmatpush1.msra.mxu0 0.0
      %6300 = vmatprep.subr.mxu0 0.0
      %6301 = vmatpush1.msra.mxu0 0.0
      %6302 = vmatprep.subr.mxu0 0.0
      %6303 = vmatpush1.msra.mxu0 0.0
      %6304 = vmatprep.subr.mxu0 0.0
      %6305 = vmatpush1.msra.mxu0 0.0
      %6306 = vmatprep.subr.mxu0 0.0
      %6307 = vmatpush1.msra.mxu0 0.0
      %6308 = vmatprep.subr.mxu0 0.0
      %6309 = vmatpush1.msra.mxu0 0.0
      %6310 = vmatprep.subr.mxu0 0.0
      %6311 = vmatpush1.msra.mxu0 0.0
      %6312 = vmatprep.subr.mxu0 0.0
      %6313 = vmatpush1.msra.mxu0 0.0
      %6314 = vmatprep.subr.mxu0 0.0
      %6315 = vmatpush1.msra.mxu0 0.0
      %6316 = vmatprep.subr.mxu0 0.0
      %6317 = vmatpush1.msra.mxu0 0.0
      %6318 = vmatprep.mubr.f32.mxu0 0.0
      %6319 = vmatmul.mubr.f32.gmra.mrb[0].mxu0 %v263
      %v6320 = vpop.f32.mrb[0].mxu0
      %v6321 = vadd.f32 %v213, %v6320
      %v6322 = vpop.f32.mrb[0].mxu0
      %6323 = vmatprep.mubr.f32.mxu0 0.0
      %6324 = vmatmul.mubr.f32.gmra.mrb[0].mxu0 %v266
      %v6325 = vpop.f32.mrb[0].mxu0
      %v6326 = vadd.f32 %v218, %v6325
      %v6327 = vpop.f32.mrb[0].mxu0
      %6328 = vdwg.mxu0
      %v6329 = vmax.f32 %v6321, 0.0
      %v6330 = vmax.f32 %v6326, 0.0
      %6331 = vmatprep.subr.mxu0 0.0
      %6332 = vmatpush1.msra.mxu0 %v6080
      %6333 = vmatprep.subr.mxu0 0.0
      %6334 = vmatpush1.msra.mxu0 %v6081
      %6335 = vmatprep.subr.mxu0 0.0
      %6336 = vmatpush1.msra.mxu0 %v6163
      %6337 = vmatprep.subr.mxu0 0.0
      %6338 = vmatpush1.msra.mxu0 %v6164
      %6339 = vmatprep.subr.mxu0 0.0
      %6340 = vmatpush1.msra.mxu0 %v6246
      %6341 = vmatprep.subr.mxu0 0.0
      %6342 = vmatpush1.msra.mxu0 %v6247
      %6343 = vmatprep.subr.mxu0 0.0
      %6344 = vmatpush1.msra.mxu0 %v6329
      %6345 = vmatprep.subr.mxu0 0.0
      %6346 = vmatpush1.msra.mxu0 %v6330
      %6347 = vmatprep.subr.mxu0 0.0
      %6348 = vmatpush1.msra.mxu0 0.0
      %6349 = vmatprep.subr.mxu0 0.0
      %6350 = vmatpush1.msra.mxu0 0.0
      %6351 = vmatprep.subr.mxu0 0.0
      %6352 = vmatpush1.msra.mxu0 0.0
      %6353 = vmatprep.subr.mxu0 0.0
      %6354 = vmatpush1.msra.mxu0 0.0
      %6355 = vmatprep.subr.mxu0 0.0
      %6356 = vmatpush1.msra.mxu0 0.0
      %6357 = vmatprep.subr.mxu0 0.0
      %6358 = vmatpush1.msra.mxu0 0.0
      %6359 = vmatprep.subr.mxu0 0.0
      %6360 = vmatpush1.msra.mxu0 0.0
      %6361 = vmatprep.subr.mxu0 0.0
      %6362 = vmatpush1.msra.mxu0 0.0
      %6363 = vmatprep.subr.mxu0 0.0
      %6364 = vmatpush1.msra.mxu0 0.0
      %6365 = vmatprep.subr.mxu0 0.0
      %6366 = vmatpush1.msra.mxu0 0.0
      %6367 = vmatprep.subr.mxu0 0.0
      %6368 = vmatpush1.msra.mxu0 0.0
      %6369 = vmatprep.subr.mxu0 0.0
      %6370 = vmatpush1.msra.mxu0 0.0
      %6371 = vmatprep.subr.mxu0 0.0
      %6372 = vmatpush1.msra.mxu0 0.0
      %6373 = vmatprep.subr.mxu0 0.0
      %6374 = vmatpush1.msra.mxu0 0.0
      %6375 = vmatprep.subr.mxu0 0.0
      %6376 = vmatpush1.msra.mxu0 0.0
      %6377 = vmatprep.subr.mxu0 0.0
      %6378 = vmatpush1.msra.mxu0 0.0
      %6379 = vmatprep.subr.mxu0 0.0
      %6380 = vmatpush1.msra.mxu0 0.0
      %6381 = vmatprep.subr.mxu0 0.0
      %6382 = vmatpush1.msra.mxu0 0.0
      %6383 = vmatprep.subr.mxu0 0.0
      %6384 = vmatpush1.msra.mxu0 0.0
      %6385 = vmatprep.subr.mxu0 0.0
      %6386 = vmatpush1.msra.mxu0 0.0
      %6387 = vmatprep.subr.mxu0 0.0
      %6388 = vmatpush1.msra.mxu0 0.0
      %6389 = vmatprep.subr.mxu0 0.0
      %6390 = vmatpush1.msra.mxu0 0.0
      %6391 = vmatprep.subr.mxu0 0.0
      %6392 = vmatpush1.msra.mxu0 0.0
      %6393 = vmatprep.subr.mxu0 0.0
      %6394 = vmatpush1.msra.mxu0 0.0
      %6395 = vmatprep.mubr.f32.mxu0 0.0
      %6396 = vmatmul.mubr.f32.gmra.mrb[0].mxu0 %v600
      %v6397 = vpop.f32.mrb[0].mxu0
      %v6398 = vadd.f32 %v226, %v6397
      %v6399 = vpop.f32.mrb[0].mxu0
      %6400 = vmatprep.mubr.f32.mxu0 0.0
      %6401 = vmatmul.mubr.f32.gmra.mrb[0].mxu0 %v603
      %v6402 = vpop.f32.mrb[0].mxu0
      %v6403 = vadd.f32 %v231, %v6402
      %v6404 = vpop.f32.mrb[0].mxu0
      %6405 = vdwg.mxu0
      %v6406 = vmax.f32 %v6398, 0.0
      %v6407 = vmax.f32 %v6403, 0.0
      %s6408 = scalar_lea.vmem %s192, 960
      %v6409 = vld [vmem:[%s6408] sm:$0xff]
      %v6410 = vld [vmem:[%s6408 + $0x8] sm:$0xf]
      %v6412 = vsel %vm268, %v6410, 0
      %6414 = vmatprep.subr.mxu0 0.0
      %6415 = vmatpush1.msra.mxu0 %v6409
      %6416 = vmatprep.subr.mxu0 0.0
      %6417 = vmatpush1.msra.mxu0 %v6412
      %6418 = vmatprep.subr.mxu0 0.0
      %6419 = vmatpush1.msra.mxu0 0.0
      %6420 = vmatprep.subr.mxu0 0.0
      %6421 = vmatpush1.msra.mxu0 0.0
      %6422 = vmatprep.subr.mxu0 0.0
      %6423 = vmatpush1.msra.mxu0 0.0
      %6424 = vmatprep.subr.mxu0 0.0
      %6425 = vmatpush1.msra.mxu0 0.0
      %6426 = vmatprep.subr.mxu0 0.0
      %6427 = vmatpush1.msra.mxu0 0.0
      %6428 = vmatprep.subr.mxu0 0.0
      %6429 = vmatpush1.msra.mxu0 0.0
      %6430 = vmatprep.subr.mxu0 0.0
      %6431 = vmatpush1.msra.mxu0 0.0
      %6432 = vmatprep.subr.mxu0 0.0
      %6433 = vmatpush1.msra.mxu0 0.0
      %6434 = vmatprep.subr.mxu0 0.0
      %6435 = vmatpush1.msra.mxu0 0.0
      %6436 = vmatprep.subr.mxu0 0.0
      %6437 = vmatpush1.msra.mxu0 0.0
      %6438 = vmatprep.subr.mxu0 0.0
      %6439 = vmatpush1.msra.mxu0 0.0
      %6440 = vmatprep.subr.mxu0 0.0
      %6441 = vmatpush1.msra.mxu0 0.0
      %6442 = vmatprep.subr.mxu0 0.0
      %6443 = vmatpush1.msra.mxu0 0.0
      %6444 = vmatprep.subr.mxu0 0.0
      %6445 = vmatpush1.msra.mxu0 0.0
      %6446 = vmatprep.subr.mxu0 0.0
      %6447 = vmatpush1.msra.mxu0 0.0
      %6448 = vmatprep.subr.mxu0 0.0
      %6449 = vmatpush1.msra.mxu0 0.0
      %6450 = vmatprep.subr.mxu0 0.0
      %6451 = vmatpush1.msra.mxu0 0.0
      %6452 = vmatprep.subr.mxu0 0.0
      %6453 = vmatpush1.msra.mxu0 0.0
      %6454 = vmatprep.subr.mxu0 0.0
      %6455 = vmatpush1.msra.mxu0 0.0
      %6456 = vmatprep.subr.mxu0 0.0
      %6457 = vmatpush1.msra.mxu0 0.0
      %6458 = vmatprep.subr.mxu0 0.0
      %6459 = vmatpush1.msra.mxu0 0.0
      %6460 = vmatprep.subr.mxu0 0.0
      %6461 = vmatpush1.msra.mxu0 0.0
      %6462 = vmatprep.subr.mxu0 0.0
      %6463 = vmatpush1.msra.mxu0 0.0
      %6464 = vmatprep.subr.mxu0 0.0
      %6465 = vmatpush1.msra.mxu0 0.0
      %6466 = vmatprep.subr.mxu0 0.0
      %6467 = vmatpush1.msra.mxu0 0.0
      %6468 = vmatprep.subr.mxu0 0.0
      %6469 = vmatpush1.msra.mxu0 0.0
      %6470 = vmatprep.subr.mxu0 0.0
      %6471 = vmatpush1.msra.mxu0 0.0
      %6472 = vmatprep.subr.mxu0 0.0
      %6473 = vmatpush1.msra.mxu0 0.0
      %6474 = vmatprep.subr.mxu0 0.0
      %6475 = vmatpush1.msra.mxu0 0.0
      %6476 = vmatprep.subr.mxu0 0.0
      %6477 = vmatpush1.msra.mxu0 0.0
      %6478 = vmatprep.mubr.f32.mxu0 0.0
      %6479 = vmatmul.mubr.f32.gmra.mrb[0].mxu0 %v263
      %v6480 = vpop.f32.mrb[0].mxu0
      %v6481 = vadd.f32 %v213, %v6480
      %v6482 = vpop.f32.mrb[0].mxu0
      %6483 = vmatprep.mubr.f32.mxu0 0.0
      %6484 = vmatmul.mubr.f32.gmra.mrb[0].mxu0 %v266
      %v6485 = vpop.f32.mrb[0].mxu0
      %v6486 = vadd.f32 %v218, %v6485
      %v6487 = vpop.f32.mrb[0].mxu0
      %6488 = vdwg.mxu0
      %v6489 = vmax.f32 %v6481, 0.0
      %v6490 = vmax.f32 %v6486, 0.0
      %s6491 = scalar_lea.vmem %s192, 976
      %v6492 = vld [vmem:[%s6491] sm:$0xff]
      %v6493 = vld [vmem:[%s6491 + $0x8] sm:$0xf]
      %v6495 = vsel %vm268, %v6493, 0
      %6497 = vmatprep.subr.mxu0 0.0
      %6498 = vmatpush1.msra.mxu0 %v6492
      %6499 = vmatprep.subr.mxu0 0.0
      %6500 = vmatpush1.msra.mxu0 %v6495
      %6501 = vmatprep.subr.mxu0 0.0
      %6502 = vmatpush1.msra.mxu0 0.0
      %6503 = vmatprep.subr.mxu0 0.0
      %6504 = vmatpush1.msra.mxu0 0.0
      %6505 = vmatprep.subr.mxu0 0.0
      %6506 = vmatpush1.msra.mxu0 0.0
      %6507 = vmatprep.subr.mxu0 0.0
      %6508 = vmatpush1.msra.mxu0 0.0
      %6509 = vmatprep.subr.mxu0 0.0
      %6510 = vmatpush1.msra.mxu0 0.0
      %6511 = vmatprep.subr.mxu0 0.0
      %6512 = vmatpush1.msra.mxu0 0.0
      %6513 = vmatprep.subr.mxu0 0.0
      %6514 = vmatpush1.msra.mxu0 0.0
      %6515 = vmatprep.subr.mxu0 0.0
      %6516 = vmatpush1.msra.mxu0 0.0
      %6517 = vmatprep.subr.mxu0 0.0
      %6518 = vmatpush1.msra.mxu0 0.0
      %6519 = vmatprep.subr.mxu0 0.0
      %6520 = vmatpush1.msra.mxu0 0.0
      %6521 = vmatprep.subr.mxu0 0.0
      %6522 = vmatpush1.msra.mxu0 0.0
      %6523 = vmatprep.subr.mxu0 0.0
      %6524 = vmatpush1.msra.mxu0 0.0
      %6525 = vmatprep.subr.mxu0 0.0
      %6526 = vmatpush1.msra.mxu0 0.0
      %6527 = vmatprep.subr.mxu0 0.0
      %6528 = vmatpush1.msra.mxu0 0.0
      %6529 = vmatprep.subr.mxu0 0.0
      %6530 = vmatpush1.msra.mxu0 0.0
      %6531 = vmatprep.subr.mxu0 0.0
      %6532 = vmatpush1.msra.mxu0 0.0
      %6533 = vmatprep.subr.mxu0 0.0
      %6534 = vmatpush1.msra.mxu0 0.0
      %6535 = vmatprep.subr.mxu0 0.0
      %6536 = vmatpush1.msra.mxu0 0.0
      %6537 = vmatprep.subr.mxu0 0.0
      %6538 = vmatpush1.msra.mxu0 0.0
      %6539 = vmatprep.subr.mxu0 0.0
      %6540 = vmatpush1.msra.mxu0 0.0
      %6541 = vmatprep.subr.mxu0 0.0
      %6542 = vmatpush1.msra.mxu0 0.0
      %6543 = vmatprep.subr.mxu0 0.0
      %6544 = vmatpush1.msra.mxu0 0.0
      %6545 = vmatprep.subr.mxu0 0.0
      %6546 = vmatpush1.msra.mxu0 0.0
      %6547 = vmatprep.subr.mxu0 0.0
      %6548 = vmatpush1.msra.mxu0 0.0
      %6549 = vmatprep.subr.mxu0 0.0
      %6550 = vmatpush1.msra.mxu0 0.0
      %6551 = vmatprep.subr.mxu0 0.0
      %6552 = vmatpush1.msra.mxu0 0.0
      %6553 = vmatprep.subr.mxu0 0.0
      %6554 = vmatpush1.msra.mxu0 0.0
      %6555 = vmatprep.subr.mxu0 0.0
      %6556 = vmatpush1.msra.mxu0 0.0
      %6557 = vmatprep.subr.mxu0 0.0
      %6558 = vmatpush1.msra.mxu0 0.0
      %6559 = vmatprep.subr.mxu0 0.0
      %6560 = vmatpush1.msra.mxu0 0.0
      %6561 = vmatprep.mubr.f32.mxu0 0.0
      %6562 = vmatmul.mubr.f32.gmra.mrb[0].mxu0 %v263
      %v6563 = vpop.f32.mrb[0].mxu0
      %v6564 = vadd.f32 %v213, %v6563
      %v6565 = vpop.f32.mrb[0].mxu0
      %6566 = vmatprep.mubr.f32.mxu0 0.0
      %6567 = vmatmul.mubr.f32.gmra.mrb[0].mxu0 %v266
      %v6568 = vpop.f32.mrb[0].mxu0
      %v6569 = vadd.f32 %v218, %v6568
      %v6570 = vpop.f32.mrb[0].mxu0
      %6571 = vdwg.mxu0
      %v6572 = vmax.f32 %v6564, 0.0
      %v6573 = vmax.f32 %v6569, 0.0
      %s6574 = scalar_lea.vmem %s192, 992
      %v6575 = vld [vmem:[%s6574] sm:$0xff]
      %v6576 = vld [vmem:[%s6574 + $0x8] sm:$0xf]
      %v6578 = vsel %vm268, %v6576, 0
      %6580 = vmatprep.subr.mxu0 0.0
      %6581 = vmatpush1.msra.mxu0 %v6575
      %6582 = vmatprep.subr.mxu0 0.0
      %6583 = vmatpush1.msra.mxu0 %v6578
      %6584 = vmatprep.subr.mxu0 0.0
      %6585 = vmatpush1.msra.mxu0 0.0
      %6586 = vmatprep.subr.mxu0 0.0
      %6587 = vmatpush1.msra.mxu0 0.0
      %6588 = vmatprep.subr.mxu0 0.0
      %6589 = vmatpush1.msra.mxu0 0.0
      %6590 = vmatprep.subr.mxu0 0.0
      %6591 = vmatpush1.msra.mxu0 0.0
      %6592 = vmatprep.subr.mxu0 0.0
      %6593 = vmatpush1.msra.mxu0 0.0
      %6594 = vmatprep.subr.mxu0 0.0
      %6595 = vmatpush1.msra.mxu0 0.0
      %6596 = vmatprep.subr.mxu0 0.0
      %6597 = vmatpush1.msra.mxu0 0.0
      %6598 = vmatprep.subr.mxu0 0.0
      %6599 = vmatpush1.msra.mxu0 0.0
      %6600 = vmatprep.subr.mxu0 0.0
      %6601 = vmatpush1.msra.mxu0 0.0
      %6602 = vmatprep.subr.mxu0 0.0
      %6603 = vmatpush1.msra.mxu0 0.0
      %6604 = vmatprep.subr.mxu0 0.0
      %6605 = vmatpush1.msra.mxu0 0.0
      %6606 = vmatprep.subr.mxu0 0.0
      %6607 = vmatpush1.msra.mxu0 0.0
      %6608 = vmatprep.subr.mxu0 0.0
      %6609 = vmatpush1.msra.mxu0 0.0
      %6610 = vmatprep.subr.mxu0 0.0
      %6611 = vmatpush1.msra.mxu0 0.0
      %6612 = vmatprep.subr.mxu0 0.0
      %6613 = vmatpush1.msra.mxu0 0.0
      %6614 = vmatprep.subr.mxu0 0.0
      %6615 = vmatpush1.msra.mxu0 0.0
      %6616 = vmatprep.subr.mxu0 0.0
      %6617 = vmatpush1.msra.mxu0 0.0
      %6618 = vmatprep.subr.mxu0 0.0
      %6619 = vmatpush1.msra.mxu0 0.0
      %6620 = vmatprep.subr.mxu0 0.0
      %6621 = vmatpush1.msra.mxu0 0.0
      %6622 = vmatprep.subr.mxu0 0.0
      %6623 = vmatpush1.msra.mxu0 0.0
      %6624 = vmatprep.subr.mxu0 0.0
      %6625 = vmatpush1.msra.mxu0 0.0
      %6626 = vmatprep.subr.mxu0 0.0
      %6627 = vmatpush1.msra.mxu0 0.0
      %6628 = vmatprep.subr.mxu0 0.0
      %6629 = vmatpush1.msra.mxu0 0.0
      %6630 = vmatprep.subr.mxu0 0.0
      %6631 = vmatpush1.msra.mxu0 0.0
      %6632 = vmatprep.subr.mxu0 0.0
      %6633 = vmatpush1.msra.mxu0 0.0
      %6634 = vmatprep.subr.mxu0 0.0
      %6635 = vmatpush1.msra.mxu0 0.0
      %6636 = vmatprep.subr.mxu0 0.0
      %6637 = vmatpush1.msra.mxu0 0.0
      %6638 = vmatprep.subr.mxu0 0.0
      %6639 = vmatpush1.msra.mxu0 0.0
      %6640 = vmatprep.subr.mxu0 0.0
      %6641 = vmatpush1.msra.mxu0 0.0
      %6642 = vmatprep.subr.mxu0 0.0
      %6643 = vmatpush1.msra.mxu0 0.0
      %6644 = vmatprep.mubr.f32.mxu0 0.0
      %6645 = vmatmul.mubr.f32.gmra.mrb[0].mxu0 %v263
      %v6646 = vpop.f32.mrb[0].mxu0
      %v6647 = vadd.f32 %v213, %v6646
      %v6648 = vpop.f32.mrb[0].mxu0
      %6649 = vmatprep.mubr.f32.mxu0 0.0
      %6650 = vmatmul.mubr.f32.gmra.mrb[0].mxu0 %v266
      %v6651 = vpop.f32.mrb[0].mxu0
      %v6652 = vadd.f32 %v218, %v6651
      %v6653 = vpop.f32.mrb[0].mxu0
      %6654 = vdwg.mxu0
      %v6655 = vmax.f32 %v6647, 0.0
      %v6656 = vmax.f32 %v6652, 0.0
      %s6657 = scalar_lea.vmem %s192, 1008
      %v6658 = vld [vmem:[%s6657] sm:$0xff]
      %v6659 = vld [vmem:[%s6657 + $0x8] sm:$0xf]
      %v6661 = vsel %vm268, %v6659, 0
      %6663 = vmatprep.subr.mxu0 0.0
      %6664 = vmatpush1.msra.mxu0 %v6658
      %6665 = vmatprep.subr.mxu0 0.0
      %6666 = vmatpush1.msra.mxu0 %v6661
      %6667 = vmatprep.subr.mxu0 0.0
      %6668 = vmatpush1.msra.mxu0 0.0
      %6669 = vmatprep.subr.mxu0 0.0
      %6670 = vmatpush1.msra.mxu0 0.0
      %6671 = vmatprep.subr.mxu0 0.0
      %6672 = vmatpush1.msra.mxu0 0.0
      %6673 = vmatprep.subr.mxu0 0.0
      %6674 = vmatpush1.msra.mxu0 0.0
      %6675 = vmatprep.subr.mxu0 0.0
      %6676 = vmatpush1.msra.mxu0 0.0
      %6677 = vmatprep.subr.mxu0 0.0
      %6678 = vmatpush1.msra.mxu0 0.0
      %6679 = vmatprep.subr.mxu0 0.0
      %6680 = vmatpush1.msra.mxu0 0.0
      %6681 = vmatprep.subr.mxu0 0.0
      %6682 = vmatpush1.msra.mxu0 0.0
      %6683 = vmatprep.subr.mxu0 0.0
      %6684 = vmatpush1.msra.mxu0 0.0
      %6685 = vmatprep.subr.mxu0 0.0
      %6686 = vmatpush1.msra.mxu0 0.0
      %6687 = vmatprep.subr.mxu0 0.0
      %6688 = vmatpush1.msra.mxu0 0.0
      %6689 = vmatprep.subr.mxu0 0.0
      %6690 = vmatpush1.msra.mxu0 0.0
      %6691 = vmatprep.subr.mxu0 0.0
      %6692 = vmatpush1.msra.mxu0 0.0
      %6693 = vmatprep.subr.mxu0 0.0
      %6694 = vmatpush1.msra.mxu0 0.0
      %6695 = vmatprep.subr.mxu0 0.0
      %6696 = vmatpush1.msra.mxu0 0.0
      %6697 = vmatprep.subr.mxu0 0.0
      %6698 = vmatpush1.msra.mxu0 0.0
      %6699 = vmatprep.subr.mxu0 0.0
      %6700 = vmatpush1.msra.mxu0 0.0
      %6701 = vmatprep.subr.mxu0 0.0
      %6702 = vmatpush1.msra.mxu0 0.0
      %6703 = vmatprep.subr.mxu0 0.0
      %6704 = vmatpush1.msra.mxu0 0.0
      %6705 = vmatprep.subr.mxu0 0.0
      %6706 = vmatpush1.msra.mxu0 0.0
      %6707 = vmatprep.subr.mxu0 0.0
      %6708 = vmatpush1.msra.mxu0 0.0
      %6709 = vmatprep.subr.mxu0 0.0
      %6710 = vmatpush1.msra.mxu0 0.0
      %6711 = vmatprep.subr.mxu0 0.0
      %6712 = vmatpush1.msra.mxu0 0.0
      %6713 = vmatprep.subr.mxu0 0.0
      %6714 = vmatpush1.msra.mxu0 0.0
      %6715 = vmatprep.subr.mxu0 0.0
      %6716 = vmatpush1.msra.mxu0 0.0
      %6717 = vmatprep.subr.mxu0 0.0
      %6718 = vmatpush1.msra.mxu0 0.0
      %6719 = vmatprep.subr.mxu0 0.0
      %6720 = vmatpush1.msra.mxu0 0.0
      %6721 = vmatprep.subr.mxu0 0.0
      %6722 = vmatpush1.msra.mxu0 0.0
      %6723 = vmatprep.subr.mxu0 0.0
      %6724 = vmatpush1.msra.mxu0 0.0
      %6725 = vmatprep.subr.mxu0 0.0
      %6726 = vmatpush1.msra.mxu0 0.0
      %6727 = vmatprep.mubr.f32.mxu0 0.0
      %6728 = vmatmul.mubr.f32.gmra.mrb[0].mxu0 %v263
      %v6729 = vpop.f32.mrb[0].mxu0
      %v6730 = vadd.f32 %v213, %v6729
      %v6731 = vpop.f32.mrb[0].mxu0
      %6732 = vmatprep.mubr.f32.mxu0 0.0
      %6733 = vmatmul.mubr.f32.gmra.mrb[0].mxu0 %v266
      %v6734 = vpop.f32.mrb[0].mxu0
      %v6735 = vadd.f32 %v218, %v6734
      %v6736 = vpop.f32.mrb[0].mxu0
      %6737 = vdwg.mxu0
      %v6738 = vmax.f32 %v6730, 0.0
      %v6739 = vmax.f32 %v6735, 0.0
      %6740 = vmatprep.subr.mxu0 0.0
      %6741 = vmatpush1.msra.mxu0 %v6489
      %6742 = vmatprep.subr.mxu0 0.0
      %6743 = vmatpush1.msra.mxu0 %v6490
      %6744 = vmatprep.subr.mxu0 0.0
      %6745 = vmatpush1.msra.mxu0 %v6572
      %6746 = vmatprep.subr.mxu0 0.0
      %6747 = vmatpush1.msra.mxu0 %v6573
      %6748 = vmatprep.subr.mxu0 0.0
      %6749 = vmatpush1.msra.mxu0 %v6655
      %6750 = vmatprep.subr.mxu0 0.0
      %6751 = vmatpush1.msra.mxu0 %v6656
      %6752 = vmatprep.subr.mxu0 0.0
      %6753 = vmatpush1.msra.mxu0 %v6738
      %6754 = vmatprep.subr.mxu0 0.0
      %6755 = vmatpush1.msra.mxu0 %v6739
      %6756 = vmatprep.subr.mxu0 0.0
      %6757 = vmatpush1.msra.mxu0 0.0
      %6758 = vmatprep.subr.mxu0 0.0
      %6759 = vmatpush1.msra.mxu0 0.0
      %6760 = vmatprep.subr.mxu0 0.0
      %6761 = vmatpush1.msra.mxu0 0.0
      %6762 = vmatprep.subr.mxu0 0.0
      %6763 = vmatpush1.msra.mxu0 0.0
      %6764 = vmatprep.subr.mxu0 0.0
      %6765 = vmatpush1.msra.mxu0 0.0
      %6766 = vmatprep.subr.mxu0 0.0
      %6767 = vmatpush1.msra.mxu0 0.0
      %6768 = vmatprep.subr.mxu0 0.0
      %6769 = vmatpush1.msra.mxu0 0.0
      %6770 = vmatprep.subr.mxu0 0.0
      %6771 = vmatpush1.msra.mxu0 0.0
      %6772 = vmatprep.subr.mxu0 0.0
      %6773 = vmatpush1.msra.mxu0 0.0
      %6774 = vmatprep.subr.mxu0 0.0
      %6775 = vmatpush1.msra.mxu0 0.0
      %6776 = vmatprep.subr.mxu0 0.0
      %6777 = vmatpush1.msra.mxu0 0.0
      %6778 = vmatprep.subr.mxu0 0.0
      %6779 = vmatpush1.msra.mxu0 0.0
      %6780 = vmatprep.subr.mxu0 0.0
      %6781 = vmatpush1.msra.mxu0 0.0
      %6782 = vmatprep.subr.mxu0 0.0
      %6783 = vmatpush1.msra.mxu0 0.0
      %6784 = vmatprep.subr.mxu0 0.0
      %6785 = vmatpush1.msra.mxu0 0.0
      %6786 = vmatprep.subr.mxu0 0.0
      %6787 = vmatpush1.msra.mxu0 0.0
      %6788 = vmatprep.subr.mxu0 0.0
      %6789 = vmatpush1.msra.mxu0 0.0
      %6790 = vmatprep.subr.mxu0 0.0
      %6791 = vmatpush1.msra.mxu0 0.0
      %6792 = vmatprep.subr.mxu0 0.0
      %6793 = vmatpush1.msra.mxu0 0.0
      %6794 = vmatprep.subr.mxu0 0.0
      %6795 = vmatpush1.msra.mxu0 0.0
      %6796 = vmatprep.subr.mxu0 0.0
      %6797 = vmatpush1.msra.mxu0 0.0
      %6798 = vmatprep.subr.mxu0 0.0
      %6799 = vmatpush1.msra.mxu0 0.0
      %6800 = vmatprep.subr.mxu0 0.0
      %6801 = vmatpush1.msra.mxu0 0.0
      %6802 = vmatprep.subr.mxu0 0.0
      %6803 = vmatpush1.msra.mxu0 0.0
      %6804 = vmatprep.mubr.f32.mxu0 0.0
      %6805 = vmatmul.mubr.f32.gmra.mrb[0].mxu0 %v600
      %v6806 = vpop.f32.mrb[0].mxu0
      %v6807 = vadd.f32 %v226, %v6806
      %v6808 = vpop.f32.mrb[0].mxu0
      %6809 = vmatprep.mubr.f32.mxu0 0.0
      %6810 = vmatmul.mubr.f32.gmra.mrb[0].mxu0 %v603
      %v6811 = vpop.f32.mrb[0].mxu0
      %v6812 = vadd.f32 %v231, %v6811
      %v6813 = vpop.f32.mrb[0].mxu0
      %6814 = vdwg.mxu0
      %v6815 = vmax.f32 %v6807, 0.0
      %v6816 = vmax.f32 %v6812, 0.0
      %v6818 = vsel %vm598, %v203, 0
      %v6821 = vsel %vm598, %v204, 0
      %6823 = vmatprep.subr.mxu0 0.0
      %6824 = vmatpush1.msra.mxu0 %v680
      %6825 = vmatprep.subr.mxu0 0.0
      %6826 = vmatpush1.msra.mxu0 %v681
      %6827 = vmatprep.subr.mxu0 0.0
      %6828 = vmatpush1.msra.mxu0 %v2316
      %6829 = vmatprep.subr.mxu0 0.0
      %6830 = vmatpush1.msra.mxu0 %v2317
      %6831 = vmatprep.subr.mxu0 0.0
      %6832 = vmatpush1.msra.mxu0 %v3952
      %6833 = vmatprep.subr.mxu0 0.0
      %6834 = vmatpush1.msra.mxu0 %v3953
      %6835 = vmatprep.subr.mxu0 0.0
      %6836 = vmatpush1.msra.mxu0 %v5588
      %6837 = vmatprep.subr.mxu0 0.0
      %6838 = vmatpush1.msra.mxu0 %v5589
      %6839 = vmatprep.subr.mxu0 0.0
      %6840 = vmatpush1.msra.mxu0 0.0
      %6841 = vmatprep.subr.mxu0 0.0
      %6842 = vmatpush1.msra.mxu0 0.0
      %6843 = vmatprep.subr.mxu0 0.0
      %6844 = vmatpush1.msra.mxu0 0.0
      %6845 = vmatprep.subr.mxu0 0.0
      %6846 = vmatpush1.msra.mxu0 0.0
      %6847 = vmatprep.subr.mxu0 0.0
      %6848 = vmatpush1.msra.mxu0 0.0
      %6849 = vmatprep.subr.mxu0 0.0
      %6850 = vmatpush1.msra.mxu0 0.0
      %6851 = vmatprep.subr.mxu0 0.0
      %6852 = vmatpush1.msra.mxu0 0.0
      %6853 = vmatprep.subr.mxu0 0.0
      %6854 = vmatpush1.msra.mxu0 0.0
      %6855 = vmatprep.subr.mxu0 0.0
      %6856 = vmatpush1.msra.mxu0 0.0
      %6857 = vmatprep.subr.mxu0 0.0
      %6858 = vmatpush1.msra.mxu0 0.0
      %6859 = vmatprep.subr.mxu0 0.0
      %6860 = vmatpush1.msra.mxu0 0.0
      %6861 = vmatprep.subr.mxu0 0.0
      %6862 = vmatpush1.msra.mxu0 0.0
      %6863 = vmatprep.subr.mxu0 0.0
      %6864 = vmatpush1.msra.mxu0 0.0
      %6865 = vmatprep.subr.mxu0 0.0
      %6866 = vmatpush1.msra.mxu0 0.0
      %6867 = vmatprep.subr.mxu0 0.0
      %6868 = vmatpush1.msra.mxu0 0.0
      %6869 = vmatprep.subr.mxu0 0.0
      %6870 = vmatpush1.msra.mxu0 0.0
      %6871 = vmatprep.subr.mxu0 0.0
      %6872 = vmatpush1.msra.mxu0 0.0
      %6873 = vmatprep.subr.mxu0 0.0
      %6874 = vmatpush1.msra.mxu0 0.0
      %6875 = vmatprep.subr.mxu0 0.0
      %6876 = vmatpush1.msra.mxu0 0.0
      %6877 = vmatprep.subr.mxu0 0.0
      %6878 = vmatpush1.msra.mxu0 0.0
      %6879 = vmatprep.subr.mxu0 0.0
      %6880 = vmatpush1.msra.mxu0 0.0
      %6881 = vmatprep.subr.mxu0 0.0
      %6882 = vmatpush1.msra.mxu0 0.0
      %6883 = vmatprep.subr.mxu0 0.0
      %6884 = vmatpush1.msra.mxu0 0.0
      %6885 = vmatprep.subr.mxu0 0.0
      %6886 = vmatpush1.msra.mxu0 0.0
      %6887 = vmatprep.mubr.f32.mxu0 0.0
      %6888 = vmatmul.mubr.f32.gmra.mrb[0].mxu0 %v6818
      %v6889 = vpop.f32.mrb[0].mxu0
      %v6890 = vadd.f32 %v239, %v6889
      %v6891 = vpop.f32.mrb[0].mxu0
      %6892 = vmatprep.mubr.f32.mxu0 0.0
      %6893 = vmatmul.mubr.f32.gmra.mrb[0].mxu0 %v6821
      %v6894 = vpop.f32.mrb[0].mxu0
      %v6895 = vadd.f32 %v244, %v6894
      %v6896 = vpop.f32.mrb[0].mxu0
      %6897 = vdwg.mxu0
      %v6898 = vmax.f32 %v6890, 0.0
      %v6899 = vmax.f32 %v6895, 0.0
      %6900 = vmatprep.subr.mxu0 0.0
      %6901 = vmatpush1.msra.mxu0 %v1089
      %6902 = vmatprep.subr.mxu0 0.0
      %6903 = vmatpush1.msra.mxu0 %v1090
      %6904 = vmatprep.subr.mxu0 0.0
      %6905 = vmatpush1.msra.mxu0 %v2725
      %6906 = vmatprep.subr.mxu0 0.0
      %6907 = vmatpush1.msra.mxu0 %v2726
      %6908 = vmatprep.subr.mxu0 0.0
      %6909 = vmatpush1.msra.mxu0 %v4361
      %6910 = vmatprep.subr.mxu0 0.0
      %6911 = vmatpush1.msra.mxu0 %v4362
      %6912 = vmatprep.subr.mxu0 0.0
      %6913 = vmatpush1.msra.mxu0 %v5997
      %6914 = vmatprep.subr.mxu0 0.0
      %6915 = vmatpush1.msra.mxu0 %v5998
      %6916 = vmatprep.subr.mxu0 0.0
      %6917 = vmatpush1.msra.mxu0 0.0
      %6918 = vmatprep.subr.mxu0 0.0
      %6919 = vmatpush1.msra.mxu0 0.0
      %6920 = vmatprep.subr.mxu0 0.0
      %6921 = vmatpush1.msra.mxu0 0.0
      %6922 = vmatprep.subr.mxu0 0.0
      %6923 = vmatpush1.msra.mxu0 0.0
      %6924 = vmatprep.subr.mxu0 0.0
      %6925 = vmatpush1.msra.mxu0 0.0
      %6926 = vmatprep.subr.mxu0 0.0
      %6927 = vmatpush1.msra.mxu0 0.0
      %6928 = vmatprep.subr.mxu0 0.0
      %6929 = vmatpush1.msra.mxu0 0.0
      %6930 = vmatprep.subr.mxu0 0.0
      %6931 = vmatpush1.msra.mxu0 0.0
      %6932 = vmatprep.subr.mxu0 0.0
      %6933 = vmatpush1.msra.mxu0 0.0
      %6934 = vmatprep.subr.mxu0 0.0
      %6935 = vmatpush1.msra.mxu0 0.0
      %6936 = vmatprep.subr.mxu0 0.0
      %6937 = vmatpush1.msra.mxu0 0.0
      %6938 = vmatprep.subr.mxu0 0.0
      %6939 = vmatpush1.msra.mxu0 0.0
      %6940 = vmatprep.subr.mxu0 0.0
      %6941 = vmatpush1.msra.mxu0 0.0
      %6942 = vmatprep.subr.mxu0 0.0
      %6943 = vmatpush1.msra.mxu0 0.0
      %6944 = vmatprep.subr.mxu0 0.0
      %6945 = vmatpush1.msra.mxu0 0.0
      %6946 = vmatprep.subr.mxu0 0.0
      %6947 = vmatpush1.msra.mxu0 0.0
      %6948 = vmatprep.subr.mxu0 0.0
      %6949 = vmatpush1.msra.mxu0 0.0
      %6950 = vmatprep.subr.mxu0 0.0
      %6951 = vmatpush1.msra.mxu0 0.0
      %6952 = vmatprep.subr.mxu0 0.0
      %6953 = vmatpush1.msra.mxu0 0.0
      %6954 = vmatprep.subr.mxu0 0.0
      %6955 = vmatpush1.msra.mxu0 0.0
      %6956 = vmatprep.subr.mxu0 0.0
      %6957 = vmatpush1.msra.mxu0 0.0
      %6958 = vmatprep.subr.mxu0 0.0
      %6959 = vmatpush1.msra.mxu0 0.0
      %6960 = vmatprep.subr.mxu0 0.0
      %6961 = vmatpush1.msra.mxu0 0.0
      %6962 = vmatprep.subr.mxu0 0.0
      %6963 = vmatpush1.msra.mxu0 0.0
      %6964 = vmatprep.mubr.f32.mxu0 0.0
      %6965 = vmatmul.mubr.f32.gmra.mrb[0].mxu0 %v6818
      %v6966 = vpop.f32.mrb[0].mxu0
      %v6967 = vadd.f32 %v239, %v6966
      %v6968 = vpop.f32.mrb[0].mxu0
      %6969 = vmatprep.mubr.f32.mxu0 0.0
      %6970 = vmatmul.mubr.f32.gmra.mrb[0].mxu0 %v6821
      %v6971 = vpop.f32.mrb[0].mxu0
      %v6972 = vadd.f32 %v244, %v6971
      %v6973 = vpop.f32.mrb[0].mxu0
      %6974 = vdwg.mxu0
      %v6975 = vmax.f32 %v6967, 0.0
      %v6976 = vmax.f32 %v6972, 0.0
      %6977 = vmatprep.subr.mxu0 0.0
      %6978 = vmatpush1.msra.mxu0 %v1498
      %6979 = vmatprep.subr.mxu0 0.0
      %6980 = vmatpush1.msra.mxu0 %v1499
      %6981 = vmatprep.subr.mxu0 0.0
      %6982 = vmatpush1.msra.mxu0 %v3134
      %6983 = vmatprep.subr.mxu0 0.0
      %6984 = vmatpush1.msra.mxu0 %v3135
      %6985 = vmatprep.subr.mxu0 0.0
      %6986 = vmatpush1.msra.mxu0 %v4770
      %6987 = vmatprep.subr.mxu0 0.0
      %6988 = vmatpush1.msra.mxu0 %v4771
      %6989 = vmatprep.subr.mxu0 0.0
      %6990 = vmatpush1.msra.mxu0 %v6406
      %6991 = vmatprep.subr.mxu0 0.0
      %6992 = vmatpush1.msra.mxu0 %v6407
      %6993 = vmatprep.subr.mxu0 0.0
      %6994 = vmatpush1.msra.mxu0 0.0
      %6995 = vmatprep.subr.mxu0 0.0
      %6996 = vmatpush1.msra.mxu0 0.0
      %6997 = vmatprep.subr.mxu0 0.0
      %6998 = vmatpush1.msra.mxu0 0.0
      %6999 = vmatprep.subr.mxu0 0.0
      %7000 = vmatpush1.msra.mxu0 0.0
      %7001 = vmatprep.subr.mxu0 0.0
      %7002 = vmatpush1.msra.mxu0 0.0
      %7003 = vmatprep.subr.mxu0 0.0
      %7004 = vmatpush1.msra.mxu0 0.0
      %7005 = vmatprep.subr.mxu0 0.0
      %7006 = vmatpush1.msra.mxu0 0.0
      %7007 = vmatprep.subr.mxu0 0.0
      %7008 = vmatpush1.msra.mxu0 0.0
      %7009 = vmatprep.subr.mxu0 0.0
      %7010 = vmatpush1.msra.mxu0 0.0
      %7011 = vmatprep.subr.mxu0 0.0
      %7012 = vmatpush1.msra.mxu0 0.0
      %7013 = vmatprep.subr.mxu0 0.0
      %7014 = vmatpush1.msra.mxu0 0.0
      %7015 = vmatprep.subr.mxu0 0.0
      %7016 = vmatpush1.msra.mxu0 0.0
      %7017 = vmatprep.subr.mxu0 0.0
      %7018 = vmatpush1.msra.mxu0 0.0
      %7019 = vmatprep.subr.mxu0 0.0
      %7020 = vmatpush1.msra.mxu0 0.0
      %7021 = vmatprep.subr.mxu0 0.0
      %7022 = vmatpush1.msra.mxu0 0.0
      %7023 = vmatprep.subr.mxu0 0.0
      %7024 = vmatpush1.msra.mxu0 0.0
      %7025 = vmatprep.subr.mxu0 0.0
      %7026 = vmatpush1.msra.mxu0 0.0
      %7027 = vmatprep.subr.mxu0 0.0
      %7028 = vmatpush1.msra.mxu0 0.0
      %7029 = vmatprep.subr.mxu0 0.0
      %7030 = vmatpush1.msra.mxu0 0.0
      %7031 = vmatprep.subr.mxu0 0.0
      %7032 = vmatpush1.msra.mxu0 0.0
      %7033 = vmatprep.subr.mxu0 0.0
      %7034 = vmatpush1.msra.mxu0 0.0
      %7035 = vmatprep.subr.mxu0 0.0
      %7036 = vmatpush1.msra.mxu0 0.0
      %7037 = vmatprep.subr.mxu0 0.0
      %7038 = vmatpush1.msra.mxu0 0.0
      %7039 = vmatprep.subr.mxu0 0.0
      %7040 = vmatpush1.msra.mxu0 0.0
      %7041 = vmatprep.mubr.f32.mxu0 0.0
      %7042 = vmatmul.mubr.f32.gmra.mrb[0].mxu0 %v6818
      %v7043 = vpop.f32.mrb[0].mxu0
      %v7044 = vadd.f32 %v239, %v7043
      %v7045 = vpop.f32.mrb[0].mxu0
      %7046 = vmatprep.mubr.f32.mxu0 0.0
      %7047 = vmatmul.mubr.f32.gmra.mrb[0].mxu0 %v6821
      %v7048 = vpop.f32.mrb[0].mxu0
      %v7049 = vadd.f32 %v244, %v7048
      %v7050 = vpop.f32.mrb[0].mxu0
      %7051 = vdwg.mxu0
      %v7052 = vmax.f32 %v7044, 0.0
      %v7053 = vmax.f32 %v7049, 0.0
      %7054 = vmatprep.subr.mxu0 0.0
      %7055 = vmatpush1.msra.mxu0 %v1907
      %7056 = vmatprep.subr.mxu0 0.0
      %7057 = vmatpush1.msra.mxu0 %v1908
      %7058 = vmatprep.subr.mxu0 0.0
      %7059 = vmatpush1.msra.mxu0 %v3543
      %7060 = vmatprep.subr.mxu0 0.0
      %7061 = vmatpush1.msra.mxu0 %v3544
      %7062 = vmatprep.subr.mxu0 0.0
      %7063 = vmatpush1.msra.mxu0 %v5179
      %7064 = vmatprep.subr.mxu0 0.0
      %7065 = vmatpush1.msra.mxu0 %v5180
      %7066 = vmatprep.subr.mxu0 0.0
      %7067 = vmatpush1.msra.mxu0 %v6815
      %7068 = vmatprep.subr.mxu0 0.0
      %7069 = vmatpush1.msra.mxu0 %v6816
      %7070 = vmatprep.subr.mxu0 0.0
      %7071 = vmatpush1.msra.mxu0 0.0
      %7072 = vmatprep.subr.mxu0 0.0
      %7073 = vmatpush1.msra.mxu0 0.0
      %7074 = vmatprep.subr.mxu0 0.0
      %7075 = vmatpush1.msra.mxu0 0.0
      %7076 = vmatprep.subr.mxu0 0.0
      %7077 = vmatpush1.msra.mxu0 0.0
      %7078 = vmatprep.subr.mxu0 0.0
      %7079 = vmatpush1.msra.mxu0 0.0
      %7080 = vmatprep.subr.mxu0 0.0
      %7081 = vmatpush1.msra.mxu0 0.0
      %7082 = vmatprep.subr.mxu0 0.0
      %7083 = vmatpush1.msra.mxu0 0.0
      %7084 = vmatprep.subr.mxu0 0.0
      %7085 = vmatpush1.msra.mxu0 0.0
      %7086 = vmatprep.subr.mxu0 0.0
      %7087 = vmatpush1.msra.mxu0 0.0
      %7088 = vmatprep.subr.mxu0 0.0
      %7089 = vmatpush1.msra.mxu0 0.0
      %7090 = vmatprep.subr.mxu0 0.0
      %7091 = vmatpush1.msra.mxu0 0.0
      %7092 = vmatprep.subr.mxu0 0.0
      %7093 = vmatpush1.msra.mxu0 0.0
      %7094 = vmatprep.subr.mxu0 0.0
      %7095 = vmatpush1.msra.mxu0 0.0
      %7096 = vmatprep.subr.mxu0 0.0
      %7097 = vmatpush1.msra.mxu0 0.0
      %7098 = vmatprep.subr.mxu0 0.0
      %7099 = vmatpush1.msra.mxu0 0.0
      %7100 = vmatprep.subr.mxu0 0.0
      %7101 = vmatpush1.msra.mxu0 0.0
      %7102 = vmatprep.subr.mxu0 0.0
      %7103 = vmatpush1.msra.mxu0 0.0
      %7104 = vmatprep.subr.mxu0 0.0
      %7105 = vmatpush1.msra.mxu0 0.0
      %7106 = vmatprep.subr.mxu0 0.0
      %7107 = vmatpush1.msra.mxu0 0.0
      %7108 = vmatprep.subr.mxu0 0.0
      %7109 = vmatpush1.msra.mxu0 0.0
      %7110 = vmatprep.subr.mxu0 0.0
      %7111 = vmatpush1.msra.mxu0 0.0
      %7112 = vmatprep.subr.mxu0 0.0
      %7113 = vmatpush1.msra.mxu0 0.0
      %7114 = vmatprep.subr.mxu0 0.0
      %7115 = vmatpush1.msra.mxu0 0.0
      %7116 = vmatprep.subr.mxu0 0.0
      %7117 = vmatpush1.msra.mxu0 0.0
      %7118 = vmatprep.mubr.f32.mxu0 0.0
      %7119 = vmatmul.mubr.f32.gmra.mrb[0].mxu0 %v6818
      %v7120 = vpop.f32.mrb[0].mxu0
      %v7121 = vadd.f32 %v239, %v7120
      %v7122 = vpop.f32.mrb[0].mxu0
      %7123 = vmatprep.mubr.f32.mxu0 0.0
      %7124 = vmatmul.mubr.f32.gmra.mrb[0].mxu0 %v6821
      %v7125 = vpop.f32.mrb[0].mxu0
      %v7126 = vadd.f32 %v244, %v7125
      %v7127 = vpop.f32.mrb[0].mxu0
      %7128 = vdwg.mxu0
      %v7129 = vmax.f32 %v7121, 0.0
      %v7130 = vmax.f32 %v7126, 0.0
      %v7132 = vsel %vm598, %v206, 0
      %v7135 = vsel %vm598, %v207, 0
      %7137 = vmatprep.subr.mxu0 0.0
      %7138 = vmatpush1.msra.mxu0 %v6898
      %7139 = vmatprep.subr.mxu0 0.0
      %7140 = vmatpush1.msra.mxu0 %v6899
      %7141 = vmatprep.subr.mxu0 0.0
      %7142 = vmatpush1.msra.mxu0 %v6975
      %7143 = vmatprep.subr.mxu0 0.0
      %7144 = vmatpush1.msra.mxu0 %v6976
      %7145 = vmatprep.subr.mxu0 0.0
      %7146 = vmatpush1.msra.mxu0 %v7052
      %7147 = vmatprep.subr.mxu0 0.0
      %7148 = vmatpush1.msra.mxu0 %v7053
      %7149 = vmatprep.subr.mxu0 0.0
      %7150 = vmatpush1.msra.mxu0 %v7129
      %7151 = vmatprep.subr.mxu0 0.0
      %7152 = vmatpush1.msra.mxu0 %v7130
      %7153 = vmatprep.subr.mxu0 0.0
      %7154 = vmatpush1.msra.mxu0 0.0
      %7155 = vmatprep.subr.mxu0 0.0
      %7156 = vmatpush1.msra.mxu0 0.0
      %7157 = vmatprep.subr.mxu0 0.0
      %7158 = vmatpush1.msra.mxu0 0.0
      %7159 = vmatprep.subr.mxu0 0.0
      %7160 = vmatpush1.msra.mxu0 0.0
      %7161 = vmatprep.subr.mxu0 0.0
      %7162 = vmatpush1.msra.mxu0 0.0
      %7163 = vmatprep.subr.mxu0 0.0
      %7164 = vmatpush1.msra.mxu0 0.0
      %7165 = vmatprep.subr.mxu0 0.0
      %7166 = vmatpush1.msra.mxu0 0.0
      %7167 = vmatprep.subr.mxu0 0.0
      %7168 = vmatpush1.msra.mxu0 0.0
      %7169 = vmatprep.subr.mxu0 0.0
      %7170 = vmatpush1.msra.mxu0 0.0
      %7171 = vmatprep.subr.mxu0 0.0
      %7172 = vmatpush1.msra.mxu0 0.0
      %7173 = vmatprep.subr.mxu0 0.0
      %7174 = vmatpush1.msra.mxu0 0.0
      %7175 = vmatprep.subr.mxu0 0.0
      %7176 = vmatpush1.msra.mxu0 0.0
      %7177 = vmatprep.subr.mxu0 0.0
      %7178 = vmatpush1.msra.mxu0 0.0
      %7179 = vmatprep.subr.mxu0 0.0
      %7180 = vmatpush1.msra.mxu0 0.0
      %7181 = vmatprep.subr.mxu0 0.0
      %7182 = vmatpush1.msra.mxu0 0.0
      %7183 = vmatprep.subr.mxu0 0.0
      %7184 = vmatpush1.msra.mxu0 0.0
      %7185 = vmatprep.subr.mxu0 0.0
      %7186 = vmatpush1.msra.mxu0 0.0
      %7187 = vmatprep.subr.mxu0 0.0
      %7188 = vmatpush1.msra.mxu0 0.0
      %7189 = vmatprep.subr.mxu0 0.0
      %7190 = vmatpush1.msra.mxu0 0.0
      %7191 = vmatprep.subr.mxu0 0.0
      %7192 = vmatpush1.msra.mxu0 0.0
      %7193 = vmatprep.subr.mxu0 0.0
      %7194 = vmatpush1.msra.mxu0 0.0
      %7195 = vmatprep.subr.mxu0 0.0
      %7196 = vmatpush1.msra.mxu0 0.0
      %7197 = vmatprep.subr.mxu0 0.0
      %7198 = vmatpush1.msra.mxu0 0.0
      %7199 = vmatprep.subr.mxu0 0.0
      %7200 = vmatpush1.msra.mxu0 0.0
      %7201 = vmatprep.mubr.f32.mxu0 0.0
      %7202 = vmatmul.mubr.f32.gmra.mrb[0].mxu0 %v7132
      %v7203 = vpop.f32.mrb[0].mxu0
      %v7204 = vadd.f32 %v252, %v7203
      %v7205 = vpop.f32.mrb[0].mxu0
      %7206 = vmatprep.mubr.f32.mxu0 0.0
      %7207 = vmatmul.mubr.f32.gmra.mrb[0].mxu0 %v7135
      %v7208 = vpop.f32.mrb[0].mxu0
      %v7209 = vadd.f32 %v257, %v7208
      %v7210 = vpop.f32.mrb[0].mxu0
      %7211 = vdwg.mxu0
      %v7212 = vmax.f32 %v7204, 0.0
      %v7213 = vmax.f32 %v7209, 0.0
      %vm7214 = vcmask 31744
      %7215 = vst.msk [vmem:[%s197] sm:$0xff] %vm7214, %v7212
      %7216 = vst.msk [vmem:[%s197 + $0x8] sm:$0xff] %vm7214, %v7213
      %p7217 = scmp.lt.s32.totalorder %s15, 1
      %s7218 = scalar_select %p7217, %s15, 1
      %s7219 = smul.addr %s7218, 2
      %s7220 = smul.addr %s7219, 8
      %s7221 = scalar_lea.vmem %s4, %s7220
      // Predicated region
      $region37: #{conv_module_forward.1} parent=35 // pred_check
        %p7222 = pneg %p122
      $region38: #{conv_module_forward.1} parent=35 // pred_check_branch
        %7224 = sbr.rel (%p7222) target = $region40
      $region39: #{conv_module_forward.1} parent=35 // pred_region
        _
      $region40: #{conv_module_forward.1} parent=35 // pred_fallthru
        _
    $region36: #{conv_module_forward.1} parent=5 // pred_fallthru
      _
    %p7225 = scmp.le.s32.totalorder 2, %s10
    // Predicated region
    $region41: #{conv_module_forward.1} parent=5 // pred_check
      %p7226 = pneg %p7225
    $region42: #{conv_module_forward.1} parent=5 // pred_check_branch
      %7228 = sbr.rel (%p7226) target = $region44
    $region43: #{conv_module_forward.1} parent=5 // pred_region
      %s7229 = ssub.s32 %s10, 2
      // Predicated region
      $region45: #{conv_module_forward.1} parent=43 // pred_check
        %p7230 = pneg %p128
      $region46: #{conv_module_forward.1} parent=43 // pred_check_branch
        %7232 = sbr.rel (%p7230) target = $region48
      $region47: #{conv_module_forward.1} parent=43 // pred_region
        %p7233 = scmp.lt.s32.totalorder %s16, 1
        %s7234 = scalar_select %p7233, %s16, 1
        %s7235 = smul.addr %s7234, 2
        %s7236 = smul.addr %s7235, 8
        %s7237 = scalar_lea.vmem %s4, %s7236
      $region48: #{conv_module_forward.1} parent=43 // pred_fallthru
        _
    $region44: #{conv_module_forward.1} parent=5 // pred_fallthru
      _
  $region6: #{conv_module_forward.1} parent=0 // loop_footer
    %s14 = sadd.s32 1, %s10
  $region7: #{conv_module_forward.1} parent=0 // loop_footer_branch
    %9 = sbr.rel target = $region3
  $region8: #{conv_module_forward.1} parent=0 // loop_exit
    _

</llo_original>
